<compile_context>
chip_gen: v5e
topology: v5e:2x2
jax: 0.10.0
libtpu: 0.0.40
codegen_flags: <defaults>
</compile_context>

<pallas_src>
import functools

import numpy as np

import jax
import jax.numpy as jnp
from jax.experimental import pallas as pl
from jax.experimental.pallas import tpu as pltpu

BN_EPS = 1e-5


# ----------------------------------------------------------------------------
# Pallas kernel: one fused decoder stage
#   [nearest-upsample] + Conv3x3(pad=1) + folded-BN affine (+ReLU)
#   (optionally) + 1x1 binary_pred conv + softmax over classes (NCHW output)
# ----------------------------------------------------------------------------
def _stage_kernel(*refs, H, W, cin, cout, sh, sw, plan, relu, ncls):
    if ncls:
        x_ref, g_ref, b_ref, p_ref, pb_ref, out_ref, pred_ref, xpad_ref = refs
    else:
        x_ref, g_ref, b_ref, out_ref, xpad_ref = refs

    Wo = W * sw

    # In-kernel zero row-padding of the lane-merged NHWC input.  The W-padding
    # and the nearest-upsample live inside the precomputed block-sparse weight
    # matrices, so no im2col / pad / repeat tensor ever touches HBM.
    zero_row = jnp.zeros((1, W * cin), xpad_ref.dtype)
    xpad_ref[pl.ds(0, 1), :] = zero_row
    xpad_ref[pl.ds(H + 1, 1), :] = zero_row
    xpad_ref[pl.ds(1, H), :] = x_ref[0]

    for r, taps in enumerate(plan):            # static unroll over row phases
        acc = None
        for gi, a in taps:                     # static unroll over row offsets
            xa = xpad_ref[pl.ds(a, H), :]      # (H, W*cin) bf16, lane-dense
            d = jnp.dot(xa, g_ref[gi], preferred_element_type=jnp.float32)
            acc = d if acc is None else acc + d
        y = acc + b_ref[...]                   # f32 epilogue (bias only; BN
        if relu:                               # scale folded into weights)
            y = jnp.maximum(y, 0.0)
        # Row-phase r occupies lane range [r*Wo*cout, (r+1)*Wo*cout) of the
        # (N, H, sh*Wo*cout) output, which is a free reshape of (N, H*sh, Wo*cout).
        out_ref[0, :, pl.ds(r * Wo * cout, Wo * cout)] = y.astype(out_ref.dtype)

        if ncls:
            # Fused binary_pred (1x1 conv) + per-pixel softmax over classes,
            # emitted directly in NCHW layout (no trailing XLA transpose).
            yb = y.astype(jnp.bfloat16)
            pb = pb_ref[...]                   # (1, ncls) f32
            logits = []
            for c in range(ncls):
                lc = jnp.dot(yb, p_ref[c], preferred_element_type=jnp.float32)
                logits.append(lc + pb[0:1, c:c + 1])
            m = logits[0]
            for lc in logits[1:]:
                m = jnp.maximum(m, lc)
            exps = [jnp.exp(lc - m) for lc in logits]
            den = exps[0]
            for e in exps[1:]:
                den = den + e
            inv = 1.0 / den
            for c in range(ncls):
                pred_ref[0, c, :, pl.ds(r * Wo, Wo)] = (
                    exps[c] * inv).astype(pred_ref.dtype)


# ----------------------------------------------------------------------------
# Kernel wrapper
# ----------------------------------------------------------------------------
def conv_stage(x, st, pred_p=None):
    """x: (N, H, W*cin) bf16 lane-merged NHWC.  Returns (N, H, sh*Wo*cout) bf16
    (free reshape of (N, H*sh, Wo*cout)) and, if pred_p is given, the fused
    softmax prediction in NCHW as (N, ncls, H, sh*Wo)."""
    N, H, WC = x.shape
    cin, cout, sh, sw = st["cin"], st["cout"], st["sh"], st["sw"]
    W = st["W"]
    assert H == st["H"] and WC == W * cin
    Wo = W * sw
    ncls = 0 if pred_p is None else pred_p["ncls"]

    kernel = functools.partial(
        _stage_kernel, H=H, W=W, cin=cin, cout=cout, sh=sh, sw=sw,
        plan=st["plan"], relu=st["relu"], ncls=ncls)

    in_specs = [
        pl.BlockSpec((1, H, W * cin), lambda n: (n, 0, 0)),
        pl.BlockSpec(st["g"].shape, lambda n: (0, 0, 0)),
        pl.BlockSpec(st["bias_row"].shape, lambda n: (0, 0)),
    ]
    inputs = [x, st["g"], st["bias_row"]]
    out_shape = jax.ShapeDtypeStruct((N, H, sh * Wo * cout), jnp.bfloat16)
    out_specs = pl.BlockSpec((1, H, sh * Wo * cout), lambda n: (n, 0, 0))

    if ncls:
        in_specs += [
            pl.BlockSpec(pred_p["P"].shape, lambda n: (0, 0, 0)),
            pl.BlockSpec(pred_p["b_row"].shape, lambda n: (0, 0)),
        ]
        inputs += [pred_p["P"], pred_p["b_row"]]
        out_shape = (out_shape,
                     jax.ShapeDtypeStruct((N, ncls, H, sh * Wo), jnp.float32))
        out_specs = (out_specs,
                     pl.BlockSpec((1, ncls, H, sh * Wo), lambda n: (n, 0, 0, 0)))

    return pl.pallas_call(
        kernel,
        grid=(N,),                              # 2 blocks -> both v7x TCs busy
        in_specs=in_specs,
        out_specs=out_specs,
        out_shape=out_shape,
        scratch_shapes=[pltpu.VMEM((H + 2, W * cin), jnp.bfloat16)],
        compiler_params=pltpu.CompilerParams(
            dimension_semantics=("parallel",),
            vmem_limit_bytes=32 * 1024 * 1024),
    )(*inputs)


# ----------------------------------------------------------------------------
# Host-side parameter preparation (BN folding + phase / block-sparse matrices)
# ----------------------------------------------------------------------------
def _fold_bn(key, cin, cout, conv_bias):
    ks = jax.random.split(key, 6)
    w = jax.random.normal(ks[0], (3, 3, cin, cout), jnp.float32) * 0.05
    b_conv = (jax.random.normal(ks[1], (cout,), jnp.float32) * 0.05
              if conv_bias else jnp.zeros((cout,), jnp.float32))
    gamma = 1.0 + 0.1 * jax.random.normal(ks[2], (cout,), jnp.float32)
    beta = 0.1 * jax.random.normal(ks[3], (cout,), jnp.float32)
    rmean = 0.1 * jax.random.normal(ks[4], (cout,), jnp.float32)
    rvar = jnp.abs(jax.random.normal(ks[5], (cout,), jnp.float32)) + 0.5
    scale = gamma / jnp.sqrt(rvar + BN_EPS)
    bias = beta - rmean * scale + scale * b_conv     # conv bias folded through BN
    w_eff = w * scale[None, None, None, :]           # BN scale folded into weights
    return np.asarray(w_eff), np.asarray(bias)


def _build_stage(w_eff, bias, H, W, sh, sw, relu):
    """Fold nearest-upsample(sh,sw) + Conv3x3(pad=1) into lane-dense matrices.

    out[n, h*sh + r, wo, :] = sum_a  x_pad[n, h + a, :(W*cin)] @ G[r, a]
    where x_pad is the input with one zero row above/below (built in-kernel)
    and G[r, a] is block-sparse of shape (W*cin, Wo*cout).
    """
    _, KW, cin, cout = w_eff.shape
    Wo = W * sw
    g_list, plan = [], []
    for r in range(sh):
        amap = {}
        for dy in range(3):
            a = (r + dy - 1) // sh + 1          # row offset into H-padded input
            amap.setdefault(a, []).append(dy)
        taps = []
        for a in sorted(amap):
            G = np.zeros((W * cin, Wo * cout), np.float32)
            for wo in range(Wo):
                for dx in range(KW):
                    wi = (wo + dx - 1) // sw    # source column (pad cols dropped)
                    if 0 <= wi < W:
                        for dy in amap[a]:
                            G[wi * cin:(wi + 1) * cin,
                              wo * cout:(wo + 1) * cout] += w_eff[dy, dx]
            taps.append((len(g_list), a))
            g_list.append(G)
        plan.append(tuple(taps))
    return {
        "g": jnp.asarray(np.stack(g_list, 0), jnp.bfloat16),
        "plan": tuple(plan),
        "bias_row": jnp.asarray(np.tile(bias, Wo)[None, :], jnp.float32),
        "w_eff": jnp.asarray(w_eff), "bias": jnp.asarray(bias),
        "H": H, "W": W, "cin": cin, "cout": cout,
        "sh": sh, "sw": sw, "relu": relu,
    }


def make_params(key, dims_last, num_classes, strides, in_hw,
                binary_loss_type="CrossEntropyLoss"):
    channels = [dims_last // 2 ** i for i in range(4)]
    up_strides = list(strides[::-1][:3]) + [(strides[0][0] // 2,
                                             strides[0][1] // 2)]
    ks = jax.random.split(key, 8)
    H, W = in_hw
    stages = []

    # linear_enc2binary: Conv2d(3x3, bias=True) + SyncBatchNorm, no activation
    w_eff, bias = _fold_bn(ks[0], dims_last, dims_last, conv_bias=True)
    stages.append(_build_stage(w_eff, bias, H, W, 1, 1, relu=False))

    # 4 decoder blocks (UNetBlock stand-in: upsample -> conv3x3 -> BN -> ReLU)
    cout = channels[0]
    for i in range(4):
        if i < 3:
            cin, cout = channels[i], channels[i + 1]
        else:
            cin = cout
        sh, sw = up_strides[i]
        w_eff, bias = _fold_bn(ks[1 + i], cin, cout, conv_bias=False)
        stages.append(_build_stage(w_eff, bias, H, W, sh, sw, relu=True))
        H, W = H * sh, W * sw

    # binary_pred: Conv2d(channels[-1] -> segm_num_cls, 1x1, bias=True)
    if binary_loss_type in ("CrossEntropyDiceLoss",
                            "BanlanceMultiClassCrossEntropyLoss"):
        ncls = num_classes - 2
    else:
        ncls = num_classes - 3
    w_pred = np.asarray(
        jax.random.normal(ks[5], (channels[-1], ncls), jnp.float32) * 0.05)
    b_pred = np.asarray(
        jax.random.normal(ks[6], (ncls,), jnp.float32) * 0.05)
    Wo, Co = W, channels[-1]
    P = np.zeros((ncls, Wo * Co, Wo), np.float32)
    for c in range(ncls):
        for wo in range(Wo):
            P[c, wo * Co:(wo + 1) * Co, wo] = w_pred[:, c]
    pred = {"ncls": ncls,
            "P": jnp.asarray(P, jnp.bfloat16),
            "b_row": jnp.asarray(b_pred[None, :], jnp.float32),
            "w": jnp.asarray(w_pred), "b": jnp.asarray(b_pred)}
    return {"stages": stages, "pred": pred}


# ----------------------------------------------------------------------------
# Forward (eval mode: returns softmax prediction (NCHW) + binary_feats (NHWC))
# ----------------------------------------------------------------------------
def binary_decoder_forward(x_nchw, params):
    N, C0, H0, W0 = x_nchw.shape
    # Single tiny layout change at the module boundary (NCHW -> lane-merged
    # NHWC rows).  All later inter-stage "reshapes" are free row-major collapses.
    x = jnp.transpose(x_nchw, (0, 2, 3, 1)).reshape(N, H0, W0 * C0)
    x = x.astype(jnp.bfloat16)

    feats = []
    stages = params["stages"]
    pred_flat = None
    for i, st in enumerate(stages):
        is_last = i == len(stages) - 1
        outs = conv_stage(x, st, pred_p=params["pred"] if is_last else None)
        if is_last:
            y, pred_flat = outs
        else:
            y = outs
        Ho, Wo, cout = st["H"] * st["sh"], st["W"] * st["sw"], st["cout"]
        x = y.reshape(N, Ho, Wo * cout)               # free reshape
        feats.append(x.reshape(N, Ho, Wo, cout))      # NHWC view, bf16

    ncls = params["pred"]["ncls"]
    pred = pred_flat.reshape(N, ncls, Ho, Wo)         # already NCHW
    return pred, feats


# ----------------------------------------------------------------------------
# Plain-JAX reference (same bf16 storage between stages) for self-checking
# ----------------------------------------------------------------------------
def reference_forward(x_nchw, params):
    x = jnp.transpose(x_nchw, (0, 2, 3, 1)).astype(jnp.bfloat16)
    feats = []
    for st in params["stages"]:
        if st["sh"] > 1 or st["sw"] > 1:
            x = jnp.repeat(jnp.repeat(x, st["sh"], axis=1), st["sw"], axis=2)
        y = jax.lax.conv_general_dilated(
            x, st["w_eff"].astype(jnp.bfloat16),
            window_strides=(1, 1), padding="SAME",
            dimension_numbers=("NHWC", "HWIO", "NHWC"),
            preferred_element_type=jnp.float32)
        y = y + st["bias"][None, None, None, :]
        if st["relu"]:
            y = jnp.maximum(y, 0.0)
        x = y.astype(jnp.bfloat16)
        feats.append(x)
    pr = params["pred"]
    logits = jnp.einsum("nhwc,ck->nhwk", x, pr["w"].astype(jnp.bfloat16),
                        preferred_element_type=jnp.float32)
    logits = logits + pr["b"][None, None, None, :]
    p = jax.nn.softmax(logits, axis=-1)
    return jnp.transpose(p, (0, 3, 1, 2)), feats


# ----------------------------------------------------------------------------
if __name__ == "__main__":
    key = jax.random.PRNGKey(0)
    k_param, k_x = jax.random.split(key)

    # Small synthetic config consistent with the module:
    dims_last = 32                       # dims[-1]; channels = [32, 16, 8, 4]
    num_classes = 5                      # segm_num_cls = num_classes - 3 = 2
    strides = [(2, 2), (2, 2), (2, 2)]   # last block stride = (1, 1)
    N, H, W = 2, 8, 8

    params = make_params(k_param, dims_last, num_classes, strides, (H, W))
    x = jax.random.normal(k_x, (N, dims_last, H, W), jnp.float32)

    fwd = jax.jit(lambda xx: binary_decoder_forward(xx, params))
    pred, feats = fwd(x)
    jax.block_until_ready(pred)
    for f in feats:
        jax.block_until_ready(f)

    # Sanity: shapes, softmax over the class dim sums to 1, 5 feature maps.
    assert pred.shape == (N, num_classes - 3, H * 8, W * 8), pred.shape
    s = jnp.sum(pred, axis=1)
    assert bool(jnp.allclose(s, jnp.ones_like(s), atol=1e-5))
    assert len(feats) == 5

    # Numerical check vs. plain-JAX reference (mirrors bf16 storage).
    ref_pred, ref_feats = jax.jit(lambda xx: reference_forward(xx, params))(x)
    assert bool(jnp.allclose(pred, ref_pred, atol=5e-2, rtol=5e-2)), \
        float(jnp.max(jnp.abs(pred - ref_pred)))
    for f, rf in zip(feats, ref_feats):
        a = f.astype(jnp.float32)
        b = rf.astype(jnp.float32)
        assert bool(jnp.allclose(a, b, atol=5e-2, rtol=5e-2)), \
            float(jnp.max(jnp.abs(a - b)))

    print("KERNEL_OK")
</pallas_src>

<mosaic_0001>
module attributes {stable_mosaic.version = 11 : i64} {
  func.func @_stage_kernel(%arg0: i32, %arg1: memref<1x8x256xbf16, #tpu.memory_space<vmem>>, %arg2: memref<3x256x256xbf16, #tpu.memory_space<vmem>>, %arg3: memref<1x256xf32, #tpu.memory_space<vmem>>, %arg4: memref<1x8x256xbf16, #tpu.memory_space<vmem>>, %arg5: memref<10x256xbf16, #tpu.memory_space<vmem>>) attributes {dimension_semantics = [#tpu.dimension_semantics<parallel>], iteration_bounds = array<i64: 2>, scalar_prefetch = 0 : i64, scratch_operands = 1 : i64, tpu.core_type = #tpu.core_type<tc>, window_params = [{transform_indices = @transform_0, window_bounds = array<i64: 1, 8, 256>}, {pipeline_mode = #tpu.pipeline_mode<synchronous>, transform_indices = @transform_1, window_bounds = array<i64: 3, 256, 256>}, {pipeline_mode = #tpu.pipeline_mode<synchronous>, transform_indices = @transform_2, window_bounds = array<i64: 1, 256>}, {transform_indices = @transform_3, window_bounds = array<i64: 1, 8, 256>}]} {
    %cst = arith.constant 0.000000e+00 : bf16
    %0 = vector.broadcast %cst : bf16 to vector<1x256xbf16>
    %c0 = arith.constant 0 : index
    %c0_0 = arith.constant 0 : index
    %1 = vector.load %arg5[%c0, %c0_0] : memref<10x256xbf16, #tpu.memory_space<vmem>>, vector<1x256xbf16>
    tpu.vector_store %arg5[%c0, %c0_0], %0 {strides = array<i32>} : memref<10x256xbf16, #tpu.memory_space<vmem>>, vector<1x256xbf16>,
    %c9 = arith.constant 9 : index
    %c0_1 = arith.constant 0 : index
    %2 = vector.load %arg5[%c9, %c0_1] : memref<10x256xbf16, #tpu.memory_space<vmem>>, vector<1x256xbf16>
    tpu.vector_store %arg5[%c9, %c0_1], %0 {strides = array<i32>} : memref<10x256xbf16, #tpu.memory_space<vmem>>, vector<1x256xbf16>,
    %c0_2 = arith.constant 0 : index
    %c0_3 = arith.constant 0 : index
    %c0_4 = arith.constant 0 : index
    %3 = vector.load %arg1[%c0_2, %c0_3, %c0_4] : memref<1x8x256xbf16, #tpu.memory_space<vmem>>, vector<1x8x256xbf16>
    %4 = vector.shape_cast %3 : vector<1x8x256xbf16> to vector<8x256xbf16>
    %c1 = arith.constant 1 : index
    %c0_5 = arith.constant 0 : index
    %5 = vector.load %arg5[%c1, %c0_5] : memref<10x256xbf16, #tpu.memory_space<vmem>>, vector<8x256xbf16>
    tpu.vector_store %arg5[%c1, %c0_5], %4 {strides = array<i32>} : memref<10x256xbf16, #tpu.memory_space<vmem>>, vector<8x256xbf16>,
    %c0_6 = arith.constant 0 : index
    %c0_7 = arith.constant 0 : index
    %6 = vector.load %arg5[%c0_6, %c0_7] : memref<10x256xbf16, #tpu.memory_space<vmem>>, vector<8x256xbf16>
    %c0_8 = arith.constant 0 : index
    %c0_9 = arith.constant 0 : index
    %c0_10 = arith.constant 0 : index
    %7 = vector.load %arg2[%c0_8, %c0_9, %c0_10] : memref<3x256x256xbf16, #tpu.memory_space<vmem>>, vector<1x256x256xbf16>
    %8 = vector.shape_cast %7 : vector<1x256x256xbf16> to vector<256x256xbf16>
    %cst_11 = arith.constant dense<0.000000e+00> : vector<8x256xf32>
    %9 = tpu.matmul %6, %8, %cst_11 {dimension_numbers = #tpu.dot_dimension_numbers<[1], [0], [0], [1], [0, 0, 1, 1], [], []>} : vector<8x256xbf16>, vector<256x256xbf16>, vector<8x256xf32> -> vector<8x256xf32>
    %c1_12 = arith.constant 1 : index
    %c0_13 = arith.constant 0 : index
    %10 = vector.load %arg5[%c1_12, %c0_13] : memref<10x256xbf16, #tpu.memory_space<vmem>>, vector<8x256xbf16>
    %c1_14 = arith.constant 1 : index
    %c0_15 = arith.constant 0 : index
    %c0_16 = arith.constant 0 : index
    %11 = vector.load %arg2[%c1_14, %c0_15, %c0_16] : memref<3x256x256xbf16, #tpu.memory_space<vmem>>, vector<1x256x256xbf16>
    %12 = vector.shape_cast %11 : vector<1x256x256xbf16> to vector<256x256xbf16>
    %cst_17 = arith.constant dense<0.000000e+00> : vector<8x256xf32>
    %13 = tpu.matmul %10, %12, %cst_17 {dimension_numbers = #tpu.dot_dimension_numbers<[1], [0], [0], [1], [0, 0, 1, 1], [], []>} : vector<8x256xbf16>, vector<256x256xbf16>, vector<8x256xf32> -> vector<8x256xf32>
    %14 = arith.addf %9, %13 : vector<8x256xf32>
    %c2 = arith.constant 2 : index
    %c0_18 = arith.constant 0 : index
    %15 = vector.load %arg5[%c2, %c0_18] : memref<10x256xbf16, #tpu.memory_space<vmem>>, vector<8x256xbf16>
    %c2_19 = arith.constant 2 : index
    %c0_20 = arith.constant 0 : index
    %c0_21 = arith.constant 0 : index
    %16 = vector.load %arg2[%c2_19, %c0_20, %c0_21] : memref<3x256x256xbf16, #tpu.memory_space<vmem>>, vector<1x256x256xbf16>
    %17 = vector.shape_cast %16 : vector<1x256x256xbf16> to vector<256x256xbf16>
    %cst_22 = arith.constant dense<0.000000e+00> : vector<8x256xf32>
    %18 = tpu.matmul %15, %17, %cst_22 {dimension_numbers = #tpu.dot_dimension_numbers<[1], [0], [0], [1], [0, 0, 1, 1], [], []>} : vector<8x256xbf16>, vector<256x256xbf16>, vector<8x256xf32> -> vector<8x256xf32>
    %19 = arith.addf %14, %18 : vector<8x256xf32>
    %c0_23 = arith.constant 0 : index
    %c0_24 = arith.constant 0 : index
    %20 = vector.load %arg3[%c0_23, %c0_24] : memref<1x256xf32, #tpu.memory_space<vmem>>, vector<1x256xf32>
    %21 = vector.broadcast %20 : vector<1x256xf32> to vector<8x256xf32>
    %22 = arith.addf %19, %21 : vector<8x256xf32>
    %23 = arith.truncf %22 : vector<8x256xf32> to vector<8x256xbf16>
    %c0_25 = arith.constant 0 : index
    %c0_26 = arith.constant 0 : index
    %c0_27 = arith.constant 0 : index
    %24 = vector.load %arg4[%c0_25, %c0_26, %c0_27] : memref<1x8x256xbf16, #tpu.memory_space<vmem>>, vector<1x8x256xbf16>
    %25 = vector.shape_cast %24 : vector<1x8x256xbf16> to vector<8x256xbf16>
    %26 = vector.shape_cast %23 : vector<8x256xbf16> to vector<1x8x256xbf16>
    tpu.vector_store %arg4[%c0_25, %c0_26, %c0_27], %26 {strides = array<i32>} : memref<1x8x256xbf16, #tpu.memory_space<vmem>>, vector<1x8x256xbf16>,
    return
  }
  func.func @transform_0(%arg0: i32) -> (i32, i32, i32) {
    %c0_i32 = arith.constant 0 : i32
    %c0_i32_0 = arith.constant 0 : i32
    %c0_i32_1 = arith.constant 0 : i32
    return %arg0, %c0_i32, %c0_i32_0 : i32, i32, i32
  }
  func.func @transform_1(%arg0: i32) -> (i32, i32, i32) {
    %c0_i32 = arith.constant 0 : i32
    %c0_i32_0 = arith.constant 0 : i32
    %c0_i32_1 = arith.constant 0 : i32
    %c0_i32_2 = arith.constant 0 : i32
    return %c0_i32, %c0_i32_0, %c0_i32_1 : i32, i32, i32
  }
  func.func @transform_2(%arg0: i32) -> (i32, i32) {
    %c0_i32 = arith.constant 0 : i32
    %c0_i32_0 = arith.constant 0 : i32
    %c0_i32_1 = arith.constant 0 : i32
    return %c0_i32, %c0_i32_0 : i32, i32
  }
  func.func @transform_3(%arg0: i32) -> (i32, i32, i32) {
    %c0_i32 = arith.constant 0 : i32
    %c0_i32_0 = arith.constant 0 : i32
    %c0_i32_1 = arith.constant 0 : i32
    return %arg0, %c0_i32, %c0_i32_0 : i32, i32, i32
  }
}

module attributes {stable_mosaic.version = 11 : i64} {
  func.func @_stage_kernel(%arg0: i32, %arg1: memref<1x8x256xbf16, #tpu.memory_space<vmem>>, %arg2: memref<4x256x256xbf16, #tpu.memory_space<vmem>>, %arg3: memref<1x256xf32, #tpu.memory_space<vmem>>, %arg4: memref<1x8x512xbf16, #tpu.memory_space<vmem>>, %arg5: memref<10x256xbf16, #tpu.memory_space<vmem>>) attributes {dimension_semantics = [#tpu.dimension_semantics<parallel>], iteration_bounds = array<i64: 2>, scalar_prefetch = 0 : i64, scratch_operands = 1 : i64, tpu.core_type = #tpu.core_type<tc>, window_params = [{transform_indices = @transform_0, window_bounds = array<i64: 1, 8, 256>}, {pipeline_mode = #tpu.pipeline_mode<synchronous>, transform_indices = @transform_1, window_bounds = array<i64: 4, 256, 256>}, {pipeline_mode = #tpu.pipeline_mode<synchronous>, transform_indices = @transform_2, window_bounds = array<i64: 1, 256>}, {transform_indices = @transform_3, window_bounds = array<i64: 1, 8, 512>}]} {
    %cst = arith.constant 0.000000e+00 : bf16
    %0 = vector.broadcast %cst : bf16 to vector<1x256xbf16>
    %c0 = arith.constant 0 : index
    %c0_0 = arith.constant 0 : index
    %1 = vector.load %arg5[%c0, %c0_0] : memref<10x256xbf16, #tpu.memory_space<vmem>>, vector<1x256xbf16>
    tpu.vector_store %arg5[%c0, %c0_0], %0 {strides = array<i32>} : memref<10x256xbf16, #tpu.memory_space<vmem>>, vector<1x256xbf16>,
    %c9 = arith.constant 9 : index
    %c0_1 = arith.constant 0 : index
    %2 = vector.load %arg5[%c9, %c0_1] : memref<10x256xbf16, #tpu.memory_space<vmem>>, vector<1x256xbf16>
    tpu.vector_store %arg5[%c9, %c0_1], %0 {strides = array<i32>} : memref<10x256xbf16, #tpu.memory_space<vmem>>, vector<1x256xbf16>,
    %c0_2 = arith.constant 0 : index
    %c0_3 = arith.constant 0 : index
    %c0_4 = arith.constant 0 : index
    %3 = vector.load %arg1[%c0_2, %c0_3, %c0_4] : memref<1x8x256xbf16, #tpu.memory_space<vmem>>, vector<1x8x256xbf16>
    %4 = vector.shape_cast %3 : vector<1x8x256xbf16> to vector<8x256xbf16>
    %c1 = arith.constant 1 : index
    %c0_5 = arith.constant 0 : index
    %5 = vector.load %arg5[%c1, %c0_5] : memref<10x256xbf16, #tpu.memory_space<vmem>>, vector<8x256xbf16>
    tpu.vector_store %arg5[%c1, %c0_5], %4 {strides = array<i32>} : memref<10x256xbf16, #tpu.memory_space<vmem>>, vector<8x256xbf16>,
    %c0_6 = arith.constant 0 : index
    %c0_7 = arith.constant 0 : index
    %6 = vector.load %arg5[%c0_6, %c0_7] : memref<10x256xbf16, #tpu.memory_space<vmem>>, vector<8x256xbf16>
    %c0_8 = arith.constant 0 : index
    %c0_9 = arith.constant 0 : index
    %c0_10 = arith.constant 0 : index
    %7 = vector.load %arg2[%c0_8, %c0_9, %c0_10] : memref<4x256x256xbf16, #tpu.memory_space<vmem>>, vector<1x256x256xbf16>
    %8 = vector.shape_cast %7 : vector<1x256x256xbf16> to vector<256x256xbf16>
    %cst_11 = arith.constant dense<0.000000e+00> : vector<8x256xf32>
    %9 = tpu.matmul %6, %8, %cst_11 {dimension_numbers = #tpu.dot_dimension_numbers<[1], [0], [0], [1], [0, 0, 1, 1], [], []>} : vector<8x256xbf16>, vector<256x256xbf16>, vector<8x256xf32> -> vector<8x256xf32>
    %c1_12 = arith.constant 1 : index
    %c0_13 = arith.constant 0 : index
    %10 = vector.load %arg5[%c1_12, %c0_13] : memref<10x256xbf16, #tpu.memory_space<vmem>>, vector<8x256xbf16>
    %c1_14 = arith.constant 1 : index
    %c0_15 = arith.constant 0 : index
    %c0_16 = arith.constant 0 : index
    %11 = vector.load %arg2[%c1_14, %c0_15, %c0_16] : memref<4x256x256xbf16, #tpu.memory_space<vmem>>, vector<1x256x256xbf16>
    %12 = vector.shape_cast %11 : vector<1x256x256xbf16> to vector<256x256xbf16>
    %cst_17 = arith.constant dense<0.000000e+00> : vector<8x256xf32>
    %13 = tpu.matmul %10, %12, %cst_17 {dimension_numbers = #tpu.dot_dimension_numbers<[1], [0], [0], [1], [0, 0, 1, 1], [], []>} : vector<8x256xbf16>, vector<256x256xbf16>, vector<8x256xf32> -> vector<8x256xf32>
    %14 = arith.addf %9, %13 : vector<8x256xf32>
    %c0_18 = arith.constant 0 : index
    %c0_19 = arith.constant 0 : index
    %15 = vector.load %arg3[%c0_18, %c0_19] : memref<1x256xf32, #tpu.memory_space<vmem>>, vector<1x256xf32>
    %16 = vector.broadcast %15 : vector<1x256xf32> to vector<8x256xf32>
    %17 = arith.addf %14, %16 : vector<8x256xf32>
    %cst_20 = arith.constant 0.000000e+00 : f32
    %18 = vector.broadcast %cst_20 : f32 to vector<8x256xf32>
    %19 = arith.maximumf %17, %18 : vector<8x256xf32>
    %20 = arith.truncf %19 : vector<8x256xf32> to vector<8x256xbf16>
    %c0_21 = arith.constant 0 : index
    %c0_22 = arith.constant 0 : index
    %c0_23 = arith.constant 0 : index
    %21 = vector.load %arg4[%c0_21, %c0_22, %c0_23] : memref<1x8x512xbf16, #tpu.memory_space<vmem>>, vector<1x8x256xbf16>
    %22 = vector.shape_cast %21 : vector<1x8x256xbf16> to vector<8x256xbf16>
    %23 = vector.shape_cast %20 : vector<8x256xbf16> to vector<1x8x256xbf16>
    tpu.vector_store %arg4[%c0_21, %c0_22, %c0_23], %23 {strides = array<i32>} : memref<1x8x512xbf16, #tpu.memory_space<vmem>>, vector<1x8x256xbf16>,
    %c1_24 = arith.constant 1 : index
    %c0_25 = arith.constant 0 : index
    %24 = vector.load %arg5[%c1_24, %c0_25] : memref<10x256xbf16, #tpu.memory_space<vmem>>, vector<8x256xbf16>
    %c2 = arith.constant 2 : index
    %c0_26 = arith.constant 0 : index
    %c0_27 = arith.constant 0 : index
    %25 = vector.load %arg2[%c2, %c0_26, %c0_27] : memref<4x256x256xbf16, #tpu.memory_space<vmem>>, vector<1x256x256xbf16>
    %26 = vector.shape_cast %25 : vector<1x256x256xbf16> to vector<256x256xbf16>
    %cst_28 = arith.constant dense<0.000000e+00> : vector<8x256xf32>
    %27 = tpu.matmul %24, %26, %cst_28 {dimension_numbers = #tpu.dot_dimension_numbers<[1], [0], [0], [1], [0, 0, 1, 1], [], []>} : vector<8x256xbf16>, vector<256x256xbf16>, vector<8x256xf32> -> vector<8x256xf32>
    %c2_29 = arith.constant 2 : index
    %c0_30 = arith.constant 0 : index
    %28 = vector.load %arg5[%c2_29, %c0_30] : memref<10x256xbf16, #tpu.memory_space<vmem>>, vector<8x256xbf16>
    %c3 = arith.constant 3 : index
    %c0_31 = arith.constant 0 : index
    %c0_32 = arith.constant 0 : index
    %29 = vector.load %arg2[%c3, %c0_31, %c0_32] : memref<4x256x256xbf16, #tpu.memory_space<vmem>>, vector<1x256x256xbf16>
    %30 = vector.shape_cast %29 : vector<1x256x256xbf16> to vector<256x256xbf16>
    %cst_33 = arith.constant dense<0.000000e+00> : vector<8x256xf32>
    %31 = tpu.matmul %28, %30, %cst_33 {dimension_numbers = #tpu.dot_dimension_numbers<[1], [0], [0], [1], [0, 0, 1, 1], [], []>} : vector<8x256xbf16>, vector<256x256xbf16>, vector<8x256xf32> -> vector<8x256xf32>
    %32 = arith.addf %27, %31 : vector<8x256xf32>
    %c0_34 = arith.constant 0 : index
    %c0_35 = arith.constant 0 : index
    %33 = vector.load %arg3[%c0_34, %c0_35] : memref<1x256xf32, #tpu.memory_space<vmem>>, vector<1x256xf32>
    %34 = vector.broadcast %33 : vector<1x256xf32> to vector<8x256xf32>
    %35 = arith.addf %32, %34 : vector<8x256xf32>
    %cst_36 = arith.constant 0.000000e+00 : f32
    %36 = vector.broadcast %cst_36 : f32 to vector<8x256xf32>
    %37 = arith.maximumf %35, %36 : vector<8x256xf32>
    %38 = arith.truncf %37 : vector<8x256xf32> to vector<8x256xbf16>
    %c0_37 = arith.constant 0 : index
    %c0_38 = arith.constant 0 : index
    %c256 = arith.constant 256 : index
    %39 = vector.load %arg4[%c0_37, %c0_38, %c256] : memref<1x8x512xbf16, #tpu.memory_space<vmem>>, vector<1x8x256xbf16>
    %40 = vector.shape_cast %39 : vector<1x8x256xbf16> to vector<8x256xbf16>
    %41 = vector.shape_cast %38 : vector<8x256xbf16> to vector<1x8x256xbf16>
    tpu.vector_store %arg4[%c0_37, %c0_38, %c256], %41 {strides = array<i32>} : memref<1x8x512xbf16, #tpu.memory_space<vmem>>, vector<1x8x256xbf16>,
    return
  }
  func.func @transform_0(%arg0: i32) -> (i32, i32, i32) {
    %c0_i32 = arith.constant 0 : i32
    %c0_i32_0 = arith.constant 0 : i32
    %c0_i32_1 = arith.constant 0 : i32
    return %arg0, %c0_i32, %c0_i32_0 : i32, i32, i32
  }
  func.func @transform_1(%arg0: i32) -> (i32, i32, i32) {
    %c0_i32 = arith.constant 0 : i32
    %c0_i32_0 = arith.constant 0 : i32
    %c0_i32_1 = arith.constant 0 : i32
    %c0_i32_2 = arith.constant 0 : i32
    return %c0_i32, %c0_i32_0, %c0_i32_1 : i32, i32, i32
  }
  func.func @transform_2(%arg0: i32) -> (i32, i32) {
    %c0_i32 = arith.constant 0 : i32
    %c0_i32_0 = arith.constant 0 : i32
    %c0_i32_1 = arith.constant 0 : i32
    return %c0_i32, %c0_i32_0 : i32, i32
  }
  func.func @transform_3(%arg0: i32) -> (i32, i32, i32) {
    %c0_i32 = arith.constant 0 : i32
    %c0_i32_0 = arith.constant 0 : i32
    %c0_i32_1 = arith.constant 0 : i32
    return %arg0, %c0_i32, %c0_i32_0 : i32, i32, i32
  }
}

module attributes {stable_mosaic.version = 11 : i64} {
  func.func @_stage_kernel(%arg0: i32, %arg1: memref<1x16x256xbf16, #tpu.memory_space<vmem>>, %arg2: memref<4x256x256xbf16, #tpu.memory_space<vmem>>, %arg3: memref<1x256xf32, #tpu.memory_space<vmem>>, %arg4: memref<1x16x512xbf16, #tpu.memory_space<vmem>>, %arg5: memref<18x256xbf16, #tpu.memory_space<vmem>>) attributes {dimension_semantics = [#tpu.dimension_semantics<parallel>], iteration_bounds = array<i64: 2>, scalar_prefetch = 0 : i64, scratch_operands = 1 : i64, tpu.core_type = #tpu.core_type<tc>, window_params = [{transform_indices = @transform_0, window_bounds = array<i64: 1, 16, 256>}, {pipeline_mode = #tpu.pipeline_mode<synchronous>, transform_indices = @transform_1, window_bounds = array<i64: 4, 256, 256>}, {pipeline_mode = #tpu.pipeline_mode<synchronous>, transform_indices = @transform_2, window_bounds = array<i64: 1, 256>}, {transform_indices = @transform_3, window_bounds = array<i64: 1, 16, 512>}]} {
    %cst = arith.constant 0.000000e+00 : bf16
    %0 = vector.broadcast %cst : bf16 to vector<1x256xbf16>
    %c0 = arith.constant 0 : index
    %c0_0 = arith.constant 0 : index
    %1 = vector.load %arg5[%c0, %c0_0] : memref<18x256xbf16, #tpu.memory_space<vmem>>, vector<1x256xbf16>
    tpu.vector_store %arg5[%c0, %c0_0], %0 {strides = array<i32>} : memref<18x256xbf16, #tpu.memory_space<vmem>>, vector<1x256xbf16>,
    %c17 = arith.constant 17 : index
    %c0_1 = arith.constant 0 : index
    %2 = vector.load %arg5[%c17, %c0_1] : memref<18x256xbf16, #tpu.memory_space<vmem>>, vector<1x256xbf16>
    tpu.vector_store %arg5[%c17, %c0_1], %0 {strides = array<i32>} : memref<18x256xbf16, #tpu.memory_space<vmem>>, vector<1x256xbf16>,
    %c0_2 = arith.constant 0 : index
    %c0_3 = arith.constant 0 : index
    %c0_4 = arith.constant 0 : index
    %3 = vector.load %arg1[%c0_2, %c0_3, %c0_4] : memref<1x16x256xbf16, #tpu.memory_space<vmem>>, vector<1x16x256xbf16>
    %4 = vector.shape_cast %3 : vector<1x16x256xbf16> to vector<16x256xbf16>
    %c1 = arith.constant 1 : index
    %c0_5 = arith.constant 0 : index
    %5 = vector.load %arg5[%c1, %c0_5] : memref<18x256xbf16, #tpu.memory_space<vmem>>, vector<16x256xbf16>
    tpu.vector_store %arg5[%c1, %c0_5], %4 {strides = array<i32>} : memref<18x256xbf16, #tpu.memory_space<vmem>>, vector<16x256xbf16>,
    %c0_6 = arith.constant 0 : index
    %c0_7 = arith.constant 0 : index
    %6 = vector.load %arg5[%c0_6, %c0_7] : memref<18x256xbf16, #tpu.memory_space<vmem>>, vector<16x256xbf16>
    %c0_8 = arith.constant 0 : index
    %c0_9 = arith.constant 0 : index
    %c0_10 = arith.constant 0 : index
    %7 = vector.load %arg2[%c0_8, %c0_9, %c0_10] : memref<4x256x256xbf16, #tpu.memory_space<vmem>>, vector<1x256x256xbf16>
    %8 = vector.shape_cast %7 : vector<1x256x256xbf16> to vector<256x256xbf16>
    %cst_11 = arith.constant dense<0.000000e+00> : vector<16x256xf32>
    %9 = tpu.matmul %6, %8, %cst_11 {dimension_numbers = #tpu.dot_dimension_numbers<[1], [0], [0], [1], [0, 0, 1, 1], [], []>} : vector<16x256xbf16>, vector<256x256xbf16>, vector<16x256xf32> -> vector<16x256xf32>
    %c1_12 = arith.constant 1 : index
    %c0_13 = arith.constant 0 : index
    %10 = vector.load %arg5[%c1_12, %c0_13] : memref<18x256xbf16, #tpu.memory_space<vmem>>, vector<16x256xbf16>
    %c1_14 = arith.constant 1 : index
    %c0_15 = arith.constant 0 : index
    %c0_16 = arith.constant 0 : index
    %11 = vector.load %arg2[%c1_14, %c0_15, %c0_16] : memref<4x256x256xbf16, #tpu.memory_space<vmem>>, vector<1x256x256xbf16>
    %12 = vector.shape_cast %11 : vector<1x256x256xbf16> to vector<256x256xbf16>
    %cst_17 = arith.constant dense<0.000000e+00> : vector<16x256xf32>
    %13 = tpu.matmul %10, %12, %cst_17 {dimension_numbers = #tpu.dot_dimension_numbers<[1], [0], [0], [1], [0, 0, 1, 1], [], []>} : vector<16x256xbf16>, vector<256x256xbf16>, vector<16x256xf32> -> vector<16x256xf32>
    %14 = arith.addf %9, %13 : vector<16x256xf32>
    %c0_18 = arith.constant 0 : index
    %c0_19 = arith.constant 0 : index
    %15 = vector.load %arg3[%c0_18, %c0_19] : memref<1x256xf32, #tpu.memory_space<vmem>>, vector<1x256xf32>
    %16 = vector.broadcast %15 : vector<1x256xf32> to vector<16x256xf32>
    %17 = arith.addf %14, %16 : vector<16x256xf32>
    %cst_20 = arith.constant 0.000000e+00 : f32
    %18 = vector.broadcast %cst_20 : f32 to vector<16x256xf32>
    %19 = arith.maximumf %17, %18 : vector<16x256xf32>
    %20 = arith.truncf %19 : vector<16x256xf32> to vector<16x256xbf16>
    %c0_21 = arith.constant 0 : index
    %c0_22 = arith.constant 0 : index
    %c0_23 = arith.constant 0 : index
    %21 = vector.load %arg4[%c0_21, %c0_22, %c0_23] : memref<1x16x512xbf16, #tpu.memory_space<vmem>>, vector<1x16x256xbf16>
    %22 = vector.shape_cast %21 : vector<1x16x256xbf16> to vector<16x256xbf16>
    %23 = vector.shape_cast %20 : vector<16x256xbf16> to vector<1x16x256xbf16>
    tpu.vector_store %arg4[%c0_21, %c0_22, %c0_23], %23 {strides = array<i32>} : memref<1x16x512xbf16, #tpu.memory_space<vmem>>, vector<1x16x256xbf16>,
    %c1_24 = arith.constant 1 : index
    %c0_25 = arith.constant 0 : index
    %24 = vector.load %arg5[%c1_24, %c0_25] : memref<18x256xbf16, #tpu.memory_space<vmem>>, vector<16x256xbf16>
    %c2 = arith.constant 2 : index
    %c0_26 = arith.constant 0 : index
    %c0_27 = arith.constant 0 : index
    %25 = vector.load %arg2[%c2, %c0_26, %c0_27] : memref<4x256x256xbf16, #tpu.memory_space<vmem>>, vector<1x256x256xbf16>
    %26 = vector.shape_cast %25 : vector<1x256x256xbf16> to vector<256x256xbf16>
    %cst_28 = arith.constant dense<0.000000e+00> : vector<16x256xf32>
    %27 = tpu.matmul %24, %26, %cst_28 {dimension_numbers = #tpu.dot_dimension_numbers<[1], [0], [0], [1], [0, 0, 1, 1], [], []>} : vector<16x256xbf16>, vector<256x256xbf16>, vector<16x256xf32> -> vector<16x256xf32>
    %c2_29 = arith.constant 2 : index
    %c0_30 = arith.constant 0 : index
    %28 = vector.load %arg5[%c2_29, %c0_30] : memref<18x256xbf16, #tpu.memory_space<vmem>>, vector<16x256xbf16>
    %c3 = arith.constant 3 : index
    %c0_31 = arith.constant 0 : index
    %c0_32 = arith.constant 0 : index
    %29 = vector.load %arg2[%c3, %c0_31, %c0_32] : memref<4x256x256xbf16, #tpu.memory_space<vmem>>, vector<1x256x256xbf16>
    %30 = vector.shape_cast %29 : vector<1x256x256xbf16> to vector<256x256xbf16>
    %cst_33 = arith.constant dense<0.000000e+00> : vector<16x256xf32>
    %31 = tpu.matmul %28, %30, %cst_33 {dimension_numbers = #tpu.dot_dimension_numbers<[1], [0], [0], [1], [0, 0, 1, 1], [], []>} : vector<16x256xbf16>, vector<256x256xbf16>, vector<16x256xf32> -> vector<16x256xf32>
    %32 = arith.addf %27, %31 : vector<16x256xf32>
    %c0_34 = arith.constant 0 : index
    %c0_35 = arith.constant 0 : index
    %33 = vector.load %arg3[%c0_34, %c0_35] : memref<1x256xf32, #tpu.memory_space<vmem>>, vector<1x256xf32>
    %34 = vector.broadcast %33 : vector<1x256xf32> to vector<16x256xf32>
    %35 = arith.addf %32, %34 : vector<16x256xf32>
    %cst_36 = arith.constant 0.000000e+00 : f32
    %36 = vector.broadcast %cst_36 : f32 to vector<16x256xf32>
    %37 = arith.maximumf %35, %36 : vector<16x256xf32>
    %38 = arith.truncf %37 : vector<16x256xf32> to vector<16x256xbf16>
    %c0_37 = arith.constant 0 : index
    %c0_38 = arith.constant 0 : index
    %c256 = arith.constant 256 : index
    %39 = vector.load %arg4[%c0_37, %c0_38, %c256] : memref<1x16x512xbf16, #tpu.memory_space<vmem>>, vector<1x16x256xbf16>
    %40 = vector.shape_cast %39 : vector<1x16x256xbf16> to vector<16x256xbf16>
    %41 = vector.shape_cast %38 : vector<16x256xbf16> to vector<1x16x256xbf16>
    tpu.vector_store %arg4[%c0_37, %c0_38, %c256], %41 {strides = array<i32>} : memref<1x16x512xbf16, #tpu.memory_space<vmem>>, vector<1x16x256xbf16>,
    return
  }
  func.func @transform_0(%arg0: i32) -> (i32, i32, i32) {
    %c0_i32 = arith.constant 0 : i32
    %c0_i32_0 = arith.constant 0 : i32
    %c0_i32_1 = arith.constant 0 : i32
    return %arg0, %c0_i32, %c0_i32_0 : i32, i32, i32
  }
  func.func @transform_1(%arg0: i32) -> (i32, i32, i32) {
    %c0_i32 = arith.constant 0 : i32
    %c0_i32_0 = arith.constant 0 : i32
    %c0_i32_1 = arith.constant 0 : i32
    %c0_i32_2 = arith.constant 0 : i32
    return %c0_i32, %c0_i32_0, %c0_i32_1 : i32, i32, i32
  }
  func.func @transform_2(%arg0: i32) -> (i32, i32) {
    %c0_i32 = arith.constant 0 : i32
    %c0_i32_0 = arith.constant 0 : i32
    %c0_i32_1 = arith.constant 0 : i32
    return %c0_i32, %c0_i32_0 : i32, i32
  }
  func.func @transform_3(%arg0: i32) -> (i32, i32, i32) {
    %c0_i32 = arith.constant 0 : i32
    %c0_i32_0 = arith.constant 0 : i32
    %c0_i32_1 = arith.constant 0 : i32
    return %arg0, %c0_i32, %c0_i32_0 : i32, i32, i32
  }
}

module attributes {stable_mosaic.version = 11 : i64} {
  func.func @_stage_kernel(%arg0: i32, %arg1: memref<1x32x256xbf16, #tpu.memory_space<vmem>>, %arg2: memref<4x256x256xbf16, #tpu.memory_space<vmem>>, %arg3: memref<1x256xf32, #tpu.memory_space<vmem>>, %arg4: memref<1x32x512xbf16, #tpu.memory_space<vmem>>, %arg5: memref<34x256xbf16, #tpu.memory_space<vmem>>) attributes {dimension_semantics = [#tpu.dimension_semantics<parallel>], iteration_bounds = array<i64: 2>, scalar_prefetch = 0 : i64, scratch_operands = 1 : i64, tpu.core_type = #tpu.core_type<tc>, window_params = [{transform_indices = @transform_0, window_bounds = array<i64: 1, 32, 256>}, {pipeline_mode = #tpu.pipeline_mode<synchronous>, transform_indices = @transform_1, window_bounds = array<i64: 4, 256, 256>}, {pipeline_mode = #tpu.pipeline_mode<synchronous>, transform_indices = @transform_2, window_bounds = array<i64: 1, 256>}, {transform_indices = @transform_3, window_bounds = array<i64: 1, 32, 512>}]} {
    %cst = arith.constant 0.000000e+00 : bf16
    %0 = vector.broadcast %cst : bf16 to vector<1x256xbf16>
    %c0 = arith.constant 0 : index
    %c0_0 = arith.constant 0 : index
    %1 = vector.load %arg5[%c0, %c0_0] : memref<34x256xbf16, #tpu.memory_space<vmem>>, vector<1x256xbf16>
    tpu.vector_store %arg5[%c0, %c0_0], %0 {strides = array<i32>} : memref<34x256xbf16, #tpu.memory_space<vmem>>, vector<1x256xbf16>,
    %c33 = arith.constant 33 : index
    %c0_1 = arith.constant 0 : index
    %2 = vector.load %arg5[%c33, %c0_1] : memref<34x256xbf16, #tpu.memory_space<vmem>>, vector<1x256xbf16>
    tpu.vector_store %arg5[%c33, %c0_1], %0 {strides = array<i32>} : memref<34x256xbf16, #tpu.memory_space<vmem>>, vector<1x256xbf16>,
    %c0_2 = arith.constant 0 : index
    %c0_3 = arith.constant 0 : index
    %c0_4 = arith.constant 0 : index
    %3 = vector.load %arg1[%c0_2, %c0_3, %c0_4] : memref<1x32x256xbf16, #tpu.memory_space<vmem>>, vector<1x32x256xbf16>
    %4 = vector.shape_cast %3 : vector<1x32x256xbf16> to vector<32x256xbf16>
    %c1 = arith.constant 1 : index
    %c0_5 = arith.constant 0 : index
    %5 = vector.load %arg5[%c1, %c0_5] : memref<34x256xbf16, #tpu.memory_space<vmem>>, vector<32x256xbf16>
    tpu.vector_store %arg5[%c1, %c0_5], %4 {strides = array<i32>} : memref<34x256xbf16, #tpu.memory_space<vmem>>, vector<32x256xbf16>,
    %c0_6 = arith.constant 0 : index
    %c0_7 = arith.constant 0 : index
    %6 = vector.load %arg5[%c0_6, %c0_7] : memref<34x256xbf16, #tpu.memory_space<vmem>>, vector<32x256xbf16>
    %c0_8 = arith.constant 0 : index
    %c0_9 = arith.constant 0 : index
    %c0_10 = arith.constant 0 : index
    %7 = vector.load %arg2[%c0_8, %c0_9, %c0_10] : memref<4x256x256xbf16, #tpu.memory_space<vmem>>, vector<1x256x256xbf16>
    %8 = vector.shape_cast %7 : vector<1x256x256xbf16> to vector<256x256xbf16>
    %cst_11 = arith.constant dense<0.000000e+00> : vector<32x256xf32>
    %9 = tpu.matmul %6, %8, %cst_11 {dimension_numbers = #tpu.dot_dimension_numbers<[1], [0], [0], [1], [0, 0, 1, 1], [], []>} : vector<32x256xbf16>, vector<256x256xbf16>, vector<32x256xf32> -> vector<32x256xf32>
    %c1_12 = arith.constant 1 : index
    %c0_13 = arith.constant 0 : index
    %10 = vector.load %arg5[%c1_12, %c0_13] : memref<34x256xbf16, #tpu.memory_space<vmem>>, vector<32x256xbf16>
    %c1_14 = arith.constant 1 : index
    %c0_15 = arith.constant 0 : index
    %c0_16 = arith.constant 0 : index
    %11 = vector.load %arg2[%c1_14, %c0_15, %c0_16] : memref<4x256x256xbf16, #tpu.memory_space<vmem>>, vector<1x256x256xbf16>
    %12 = vector.shape_cast %11 : vector<1x256x256xbf16> to vector<256x256xbf16>
    %cst_17 = arith.constant dense<0.000000e+00> : vector<32x256xf32>
    %13 = tpu.matmul %10, %12, %cst_17 {dimension_numbers = #tpu.dot_dimension_numbers<[1], [0], [0], [1], [0, 0, 1, 1], [], []>} : vector<32x256xbf16>, vector<256x256xbf16>, vector<32x256xf32> -> vector<32x256xf32>
    %14 = arith.addf %9, %13 : vector<32x256xf32>
    %c0_18 = arith.constant 0 : index
    %c0_19 = arith.constant 0 : index
    %15 = vector.load %arg3[%c0_18, %c0_19] : memref<1x256xf32, #tpu.memory_space<vmem>>, vector<1x256xf32>
    %16 = vector.broadcast %15 : vector<1x256xf32> to vector<32x256xf32>
    %17 = arith.addf %14, %16 : vector<32x256xf32>
    %cst_20 = arith.constant 0.000000e+00 : f32
    %18 = vector.broadcast %cst_20 : f32 to vector<32x256xf32>
    %19 = arith.maximumf %17, %18 : vector<32x256xf32>
    %20 = arith.truncf %19 : vector<32x256xf32> to vector<32x256xbf16>
    %c0_21 = arith.constant 0 : index
    %c0_22 = arith.constant 0 : index
    %c0_23 = arith.constant 0 : index
    %21 = vector.load %arg4[%c0_21, %c0_22, %c0_23] : memref<1x32x512xbf16, #tpu.memory_space<vmem>>, vector<1x32x256xbf16>
    %22 = vector.shape_cast %21 : vector<1x32x256xbf16> to vector<32x256xbf16>
    %23 = vector.shape_cast %20 : vector<32x256xbf16> to vector<1x32x256xbf16>
    tpu.vector_store %arg4[%c0_21, %c0_22, %c0_23], %23 {strides = array<i32>} : memref<1x32x512xbf16, #tpu.memory_space<vmem>>, vector<1x32x256xbf16>,
    %c1_24 = arith.constant 1 : index
    %c0_25 = arith.constant 0 : index
    %24 = vector.load %arg5[%c1_24, %c0_25] : memref<34x256xbf16, #tpu.memory_space<vmem>>, vector<32x256xbf16>
    %c2 = arith.constant 2 : index
    %c0_26 = arith.constant 0 : index
    %c0_27 = arith.constant 0 : index
    %25 = vector.load %arg2[%c2, %c0_26, %c0_27] : memref<4x256x256xbf16, #tpu.memory_space<vmem>>, vector<1x256x256xbf16>
    %26 = vector.shape_cast %25 : vector<1x256x256xbf16> to vector<256x256xbf16>
    %cst_28 = arith.constant dense<0.000000e+00> : vector<32x256xf32>
    %27 = tpu.matmul %24, %26, %cst_28 {dimension_numbers = #tpu.dot_dimension_numbers<[1], [0], [0], [1], [0, 0, 1, 1], [], []>} : vector<32x256xbf16>, vector<256x256xbf16>, vector<32x256xf32> -> vector<32x256xf32>
    %c2_29 = arith.constant 2 : index
    %c0_30 = arith.constant 0 : index
    %28 = vector.load %arg5[%c2_29, %c0_30] : memref<34x256xbf16, #tpu.memory_space<vmem>>, vector<32x256xbf16>
    %c3 = arith.constant 3 : index
    %c0_31 = arith.constant 0 : index
    %c0_32 = arith.constant 0 : index
    %29 = vector.load %arg2[%c3, %c0_31, %c0_32] : memref<4x256x256xbf16, #tpu.memory_space<vmem>>, vector<1x256x256xbf16>
    %30 = vector.shape_cast %29 : vector<1x256x256xbf16> to vector<256x256xbf16>
    %cst_33 = arith.constant dense<0.000000e+00> : vector<32x256xf32>
    %31 = tpu.matmul %28, %30, %cst_33 {dimension_numbers = #tpu.dot_dimension_numbers<[1], [0], [0], [1], [0, 0, 1, 1], [], []>} : vector<32x256xbf16>, vector<256x256xbf16>, vector<32x256xf32> -> vector<32x256xf32>
    %32 = arith.addf %27, %31 : vector<32x256xf32>
    %c0_34 = arith.constant 0 : index
    %c0_35 = arith.constant 0 : index
    %33 = vector.load %arg3[%c0_34, %c0_35] : memref<1x256xf32, #tpu.memory_space<vmem>>, vector<1x256xf32>
    %34 = vector.broadcast %33 : vector<1x256xf32> to vector<32x256xf32>
    %35 = arith.addf %32, %34 : vector<32x256xf32>
    %cst_36 = arith.constant 0.000000e+00 : f32
    %36 = vector.broadcast %cst_36 : f32 to vector<32x256xf32>
    %37 = arith.maximumf %35, %36 : vector<32x256xf32>
    %38 = arith.truncf %37 : vector<32x256xf32> to vector<32x256xbf16>
    %c0_37 = arith.constant 0 : index
    %c0_38 = arith.constant 0 : index
    %c256 = arith.constant 256 : index
    %39 = vector.load %arg4[%c0_37, %c0_38, %c256] : memref<1x32x512xbf16, #tpu.memory_space<vmem>>, vector<1x32x256xbf16>
    %40 = vector.shape_cast %39 : vector<1x32x256xbf16> to vector<32x256xbf16>
    %41 = vector.shape_cast %38 : vector<32x256xbf16> to vector<1x32x256xbf16>
    tpu.vector_store %arg4[%c0_37, %c0_38, %c256], %41 {strides = array<i32>} : memref<1x32x512xbf16, #tpu.memory_space<vmem>>, vector<1x32x256xbf16>,
    return
  }
  func.func @transform_0(%arg0: i32) -> (i32, i32, i32) {
    %c0_i32 = arith.constant 0 : i32
    %c0_i32_0 = arith.constant 0 : i32
    %c0_i32_1 = arith.constant 0 : i32
    return %arg0, %c0_i32, %c0_i32_0 : i32, i32, i32
  }
  func.func @transform_1(%arg0: i32) -> (i32, i32, i32) {
    %c0_i32 = arith.constant 0 : i32
    %c0_i32_0 = arith.constant 0 : i32
    %c0_i32_1 = arith.constant 0 : i32
    %c0_i32_2 = arith.constant 0 : i32
    return %c0_i32, %c0_i32_0, %c0_i32_1 : i32, i32, i32
  }
  func.func @transform_2(%arg0: i32) -> (i32, i32) {
    %c0_i32 = arith.constant 0 : i32
    %c0_i32_0 = arith.constant 0 : i32
    %c0_i32_1 = arith.constant 0 : i32
    return %c0_i32, %c0_i32_0 : i32, i32
  }
  func.func @transform_3(%arg0: i32) -> (i32, i32, i32) {
    %c0_i32 = arith.constant 0 : i32
    %c0_i32_0 = arith.constant 0 : i32
    %c0_i32_1 = arith.constant 0 : i32
    return %arg0, %c0_i32, %c0_i32_0 : i32, i32, i32
  }
}

module attributes {stable_mosaic.version = 11 : i64} {
  func.func @_stage_kernel(%arg0: i32, %arg1: memref<1x64x256xbf16, #tpu.memory_space<vmem>>, %arg2: memref<3x256x256xbf16, #tpu.memory_space<vmem>>, %arg3: memref<1x256xf32, #tpu.memory_space<vmem>>, %arg4: memref<2x256x64xbf16, #tpu.memory_space<vmem>>, %arg5: memref<1x2xf32, #tpu.memory_space<vmem>>, %arg6: memref<1x64x256xbf16, #tpu.memory_space<vmem>>, %arg7: memref<1x2x64x64xf32, #tpu.memory_space<vmem>>, %arg8: memref<66x256xbf16, #tpu.memory_space<vmem>>) attributes {dimension_semantics = [#tpu.dimension_semantics<parallel>], iteration_bounds = array<i64: 2>, scalar_prefetch = 0 : i64, scratch_operands = 1 : i64, tpu.core_type = #tpu.core_type<tc>, window_params = [{transform_indices = @transform_0, window_bounds = array<i64: 1, 64, 256>}, {pipeline_mode = #tpu.pipeline_mode<synchronous>, transform_indices = @transform_1, window_bounds = array<i64: 3, 256, 256>}, {pipeline_mode = #tpu.pipeline_mode<synchronous>, transform_indices = @transform_2, window_bounds = array<i64: 1, 256>}, {pipeline_mode = #tpu.pipeline_mode<synchronous>, transform_indices = @transform_3, window_bounds = array<i64: 2, 256, 64>}, {pipeline_mode = #tpu.pipeline_mode<synchronous>, transform_indices = @transform_4, window_bounds = array<i64: 1, 2>}, {transform_indices = @transform_5, window_bounds = array<i64: 1, 64, 256>}, {transform_indices = @transform_6, window_bounds = array<i64: 1, 2, 64, 64>}]} {
    %cst = arith.constant 0.000000e+00 : bf16
    %0 = vector.broadcast %cst : bf16 to vector<1x256xbf16>
    %c0 = arith.constant 0 : index
    %c0_0 = arith.constant 0 : index
    %1 = vector.load %arg8[%c0, %c0_0] : memref<66x256xbf16, #tpu.memory_space<vmem>>, vector<1x256xbf16>
    tpu.vector_store %arg8[%c0, %c0_0], %0 {strides = array<i32>} : memref<66x256xbf16, #tpu.memory_space<vmem>>, vector<1x256xbf16>,
    %c65 = arith.constant 65 : index
    %c0_1 = arith.constant 0 : index
    %2 = vector.load %arg8[%c65, %c0_1] : memref<66x256xbf16, #tpu.memory_space<vmem>>, vector<1x256xbf16>
    tpu.vector_store %arg8[%c65, %c0_1], %0 {strides = array<i32>} : memref<66x256xbf16, #tpu.memory_space<vmem>>, vector<1x256xbf16>,
    %c0_2 = arith.constant 0 : index
    %c0_3 = arith.constant 0 : index
    %c0_4 = arith.constant 0 : index
    %3 = vector.load %arg1[%c0_2, %c0_3, %c0_4] : memref<1x64x256xbf16, #tpu.memory_space<vmem>>, vector<1x64x256xbf16>
    %4 = vector.shape_cast %3 : vector<1x64x256xbf16> to vector<64x256xbf16>
    %c1 = arith.constant 1 : index
    %c0_5 = arith.constant 0 : index
    %5 = vector.load %arg8[%c1, %c0_5] : memref<66x256xbf16, #tpu.memory_space<vmem>>, vector<64x256xbf16>
    tpu.vector_store %arg8[%c1, %c0_5], %4 {strides = array<i32>} : memref<66x256xbf16, #tpu.memory_space<vmem>>, vector<64x256xbf16>,
    %c0_6 = arith.constant 0 : index
    %c0_7 = arith.constant 0 : index
    %6 = vector.load %arg8[%c0_6, %c0_7] : memref<66x256xbf16, #tpu.memory_space<vmem>>, vector<64x256xbf16>
    %c0_8 = arith.constant 0 : index
    %c0_9 = arith.constant 0 : index
    %c0_10 = arith.constant 0 : index
    %7 = vector.load %arg2[%c0_8, %c0_9, %c0_10] : memref<3x256x256xbf16, #tpu.memory_space<vmem>>, vector<1x256x256xbf16>
    %8 = vector.shape_cast %7 : vector<1x256x256xbf16> to vector<256x256xbf16>
    %cst_11 = arith.constant dense<0.000000e+00> : vector<64x256xf32>
    %9 = tpu.matmul %6, %8, %cst_11 {dimension_numbers = #tpu.dot_dimension_numbers<[1], [0], [0], [1], [0, 0, 1, 1], [], []>} : vector<64x256xbf16>, vector<256x256xbf16>, vector<64x256xf32> -> vector<64x256xf32>
    %c1_12 = arith.constant 1 : index
    %c0_13 = arith.constant 0 : index
    %10 = vector.load %arg8[%c1_12, %c0_13] : memref<66x256xbf16, #tpu.memory_space<vmem>>, vector<64x256xbf16>
    %c1_14 = arith.constant 1 : index
    %c0_15 = arith.constant 0 : index
    %c0_16 = arith.constant 0 : index
    %11 = vector.load %arg2[%c1_14, %c0_15, %c0_16] : memref<3x256x256xbf16, #tpu.memory_space<vmem>>, vector<1x256x256xbf16>
    %12 = vector.shape_cast %11 : vector<1x256x256xbf16> to vector<256x256xbf16>
    %cst_17 = arith.constant dense<0.000000e+00> : vector<64x256xf32>
    %13 = tpu.matmul %10, %12, %cst_17 {dimension_numbers = #tpu.dot_dimension_numbers<[1], [0], [0], [1], [0, 0, 1, 1], [], []>} : vector<64x256xbf16>, vector<256x256xbf16>, vector<64x256xf32> -> vector<64x256xf32>
    %14 = arith.addf %9, %13 : vector<64x256xf32>
    %c2 = arith.constant 2 : index
    %c0_18 = arith.constant 0 : index
    %15 = vector.load %arg8[%c2, %c0_18] : memref<66x256xbf16, #tpu.memory_space<vmem>>, vector<64x256xbf16>
    %c2_19 = arith.constant 2 : index
    %c0_20 = arith.constant 0 : index
    %c0_21 = arith.constant 0 : index
    %16 = vector.load %arg2[%c2_19, %c0_20, %c0_21] : memref<3x256x256xbf16, #tpu.memory_space<vmem>>, vector<1x256x256xbf16>
    %17 = vector.shape_cast %16 : vector<1x256x256xbf16> to vector<256x256xbf16>
    %cst_22 = arith.constant dense<0.000000e+00> : vector<64x256xf32>
    %18 = tpu.matmul %15, %17, %cst_22 {dimension_numbers = #tpu.dot_dimension_numbers<[1], [0], [0], [1], [0, 0, 1, 1], [], []>} : vector<64x256xbf16>, vector<256x256xbf16>, vector<64x256xf32> -> vector<64x256xf32>
    %19 = arith.addf %14, %18 : vector<64x256xf32>
    %c0_23 = arith.constant 0 : index
    %c0_24 = arith.constant 0 : index
    %20 = vector.load %arg3[%c0_23, %c0_24] : memref<1x256xf32, #tpu.memory_space<vmem>>, vector<1x256xf32>
    %21 = vector.broadcast %20 : vector<1x256xf32> to vector<64x256xf32>
    %22 = arith.addf %19, %21 : vector<64x256xf32>
    %cst_25 = arith.constant 0.000000e+00 : f32
    %23 = vector.broadcast %cst_25 : f32 to vector<64x256xf32>
    %24 = arith.maximumf %22, %23 : vector<64x256xf32>
    %25 = arith.truncf %24 : vector<64x256xf32> to vector<64x256xbf16>
    %c0_26 = arith.constant 0 : index
    %c0_27 = arith.constant 0 : index
    %c0_28 = arith.constant 0 : index
    %26 = vector.load %arg6[%c0_26, %c0_27, %c0_28] : memref<1x64x256xbf16, #tpu.memory_space<vmem>>, vector<1x64x256xbf16>
    %27 = vector.shape_cast %26 : vector<1x64x256xbf16> to vector<64x256xbf16>
    %28 = vector.shape_cast %25 : vector<64x256xbf16> to vector<1x64x256xbf16>
    tpu.vector_store %arg6[%c0_26, %c0_27, %c0_28], %28 {strides = array<i32>} : memref<1x64x256xbf16, #tpu.memory_space<vmem>>, vector<1x64x256xbf16>,
    %29 = arith.truncf %24 : vector<64x256xf32> to vector<64x256xbf16>
    %c0_29 = arith.constant 0 : index
    %c0_30 = arith.constant 0 : index
    %30 = vector.load %arg5[%c0_29, %c0_30] : memref<1x2xf32, #tpu.memory_space<vmem>>, vector<1x2xf32>
    %c0_31 = arith.constant 0 : index
    %c0_32 = arith.constant 0 : index
    %c0_33 = arith.constant 0 : index
    %31 = vector.load %arg4[%c0_31, %c0_32, %c0_33] : memref<2x256x64xbf16, #tpu.memory_space<vmem>>, vector<1x256x64xbf16>
    %32 = vector.shape_cast %31 : vector<1x256x64xbf16> to vector<256x64xbf16>
    %cst_34 = arith.constant dense<0.000000e+00> : vector<64x64xf32>
    %33 = tpu.matmul %29, %32, %cst_34 {dimension_numbers = #tpu.dot_dimension_numbers<[1], [0], [0], [1], [0, 0, 1, 1], [], []>} : vector<64x256xbf16>, vector<256x64xbf16>, vector<64x64xf32> -> vector<64x64xf32>
    %34 = vector.extract_strided_slice %30 {offsets = [0, 0], sizes = [1, 1], strides = [1, 1]} : vector<1x2xf32> to vector<1x1xf32>
    %35 = vector.broadcast %34 : vector<1x1xf32> to vector<64x64xf32>
    %36 = arith.addf %33, %35 : vector<64x64xf32>
    %c1_35 = arith.constant 1 : index
    %c0_36 = arith.constant 0 : index
    %c0_37 = arith.constant 0 : index
    %37 = vector.load %arg4[%c1_35, %c0_36, %c0_37] : memref<2x256x64xbf16, #tpu.memory_space<vmem>>, vector<1x256x64xbf16>
    %38 = vector.shape_cast %37 : vector<1x256x64xbf16> to vector<256x64xbf16>
    %cst_38 = arith.constant dense<0.000000e+00> : vector<64x64xf32>
    %39 = tpu.matmul %29, %38, %cst_38 {dimension_numbers = #tpu.dot_dimension_numbers<[1], [0], [0], [1], [0, 0, 1, 1], [], []>} : vector<64x256xbf16>, vector<256x64xbf16>, vector<64x64xf32> -> vector<64x64xf32>
    %40 = vector.extract_strided_slice %30 {offsets = [0, 1], sizes = [1, 1], strides = [1, 1]} : vector<1x2xf32> to vector<1x1xf32>
    %41 = vector.broadcast %40 : vector<1x1xf32> to vector<64x64xf32>
    %42 = arith.addf %39, %41 : vector<64x64xf32>
    %43 = arith.maximumf %36, %42 : vector<64x64xf32>
    %44 = arith.subf %36, %43 : vector<64x64xf32>
    %45 = math.exp %44 : vector<64x64xf32>
    %46 = arith.subf %42, %43 : vector<64x64xf32>
    %47 = math.exp %46 : vector<64x64xf32>
    %48 = arith.addf %45, %47 : vector<64x64xf32>
    %cst_39 = arith.constant 1.000000e+00 : f32
    %49 = vector.broadcast %cst_39 : f32 to vector<64x64xf32>
    %50 = arith.divf %49, %48 : vector<64x64xf32>
    %51 = arith.mulf %45, %50 : vector<64x64xf32>
    %c0_40 = arith.constant 0 : index
    %c0_41 = arith.constant 0 : index
    %c0_42 = arith.constant 0 : index
    %c0_43 = arith.constant 0 : index
    %52 = vector.load %arg7[%c0_40, %c0_41, %c0_42, %c0_43] : memref<1x2x64x64xf32, #tpu.memory_space<vmem>>, vector<1x1x64x64xf32>
    %53 = vector.shape_cast %52 : vector<1x1x64x64xf32> to vector<64x64xf32>
    %54 = vector.shape_cast %51 : vector<64x64xf32> to vector<1x1x64x64xf32>
    tpu.vector_store %arg7[%c0_40, %c0_41, %c0_42, %c0_43], %54 {strides = array<i32>} : memref<1x2x64x64xf32, #tpu.memory_space<vmem>>, vector<1x1x64x64xf32>,
    %55 = arith.mulf %47, %50 : vector<64x64xf32>
    %c0_44 = arith.constant 0 : index
    %c1_45 = arith.constant 1 : index
    %c0_46 = arith.constant 0 : index
    %c0_47 = arith.constant 0 : index
    %56 = vector.load %arg7[%c0_44, %c1_45, %c0_46, %c0_47] : memref<1x2x64x64xf32, #tpu.memory_space<vmem>>, vector<1x1x64x64xf32>
    %57 = vector.shape_cast %56 : vector<1x1x64x64xf32> to vector<64x64xf32>
    %58 = vector.shape_cast %55 : vector<64x64xf32> to vector<1x1x64x64xf32>
    tpu.vector_store %arg7[%c0_44, %c1_45, %c0_46, %c0_47], %58 {strides = array<i32>} : memref<1x2x64x64xf32, #tpu.memory_space<vmem>>, vector<1x1x64x64xf32>,
    return
  }
  func.func @transform_0(%arg0: i32) -> (i32, i32, i32) {
    %c0_i32 = arith.constant 0 : i32
    %c0_i32_0 = arith.constant 0 : i32
    %c0_i32_1 = arith.constant 0 : i32
    return %arg0, %c0_i32, %c0_i32_0 : i32, i32, i32
  }
  func.func @transform_1(%arg0: i32) -> (i32, i32, i32) {
    %c0_i32 = arith.constant 0 : i32
    %c0_i32_0 = arith.constant 0 : i32
    %c0_i32_1 = arith.constant 0 : i32
    %c0_i32_2 = arith.constant 0 : i32
    return %c0_i32, %c0_i32_0, %c0_i32_1 : i32, i32, i32
  }
  func.func @transform_2(%arg0: i32) -> (i32, i32) {
    %c0_i32 = arith.constant 0 : i32
    %c0_i32_0 = arith.constant 0 : i32
    %c0_i32_1 = arith.constant 0 : i32
    return %c0_i32, %c0_i32_0 : i32, i32
  }
  func.func @transform_3(%arg0: i32) -> (i32, i32, i32) {
    %c0_i32 = arith.constant 0 : i32
    %c0_i32_0 = arith.constant 0 : i32
    %c0_i32_1 = arith.constant 0 : i32
    %c0_i32_2 = arith.constant 0 : i32
    return %c0_i32, %c0_i32_0, %c0_i32_1 : i32, i32, i32
  }
  func.func @transform_4(%arg0: i32) -> (i32, i32) {
    %c0_i32 = arith.constant 0 : i32
    %c0_i32_0 = arith.constant 0 : i32
    %c0_i32_1 = arith.constant 0 : i32
    return %c0_i32, %c0_i32_0 : i32, i32
  }
  func.func @transform_5(%arg0: i32) -> (i32, i32, i32) {
    %c0_i32 = arith.constant 0 : i32
    %c0_i32_0 = arith.constant 0 : i32
    %c0_i32_1 = arith.constant 0 : i32
    return %arg0, %c0_i32, %c0_i32_0 : i32, i32, i32
  }
  func.func @transform_6(%arg0: i32) -> (i32, i32, i32, i32) {
    %c0_i32 = arith.constant 0 : i32
    %c0_i32_0 = arith.constant 0 : i32
    %c0_i32_1 = arith.constant 0 : i32
    %c0_i32_2 = arith.constant 0 : i32
    return %arg0, %c0_i32, %c0_i32_0, %c0_i32_1 : i32, i32, i32, i32
  }
}

</mosaic_0001>

<llo_original>
// kernel: _lambda_.5
$region0: #{_lambda_.5}
  #allocation0 [shape = 'u32[]', space=smem, size = 0x4, offset = 0x4, fixed_abs, tag = 'smem constant byte address 0x4 - core index']
  #allocation1 [shape = 'u32[72,128]{1,0:T(1,128)}', space=vmem, size = 0x9000, scoped, tag = 'internal scratch']
  #allocation2 [shape = 'bf16[10,256]{1,0:T(8,128)(2,1)}', space=vmem, size = 0x2000, scoped, tag = 'scratch operand']
  %s0 = inlined_call_operand.vmem [shape: bf16[2,8,256], index: 0, kind: input, shape index: {}]
  %s1 = inlined_call_operand.hbm [shape: bf16[3,256,256], index: 1, kind: input, shape index: {}]
  %s2 = inlined_call_operand.hbm [shape: f32[1,256], index: 2, kind: input, shape index: {}]
  %s3 = inlined_call_operand.vmem [shape: bf16[2,8,256], index: 3, kind: output, shape index: {}]
  %s4 = sld [smem:[#allocation0]]
  $region53: #{_lambda_.5} parent=0
    _
  %s6 = ssub.s32 1, %s4
  %s7 = scalar_select 0, %s6, %s4
  $region1: #{_lambda_.5} parent=0
    #allocation3 [shape = 'u8[393216]{0}', space=vmem, size = 0x60000, scoped, tag = 'input window, operand 1, single buffered']
    #allocation4 [shape = 's32[2]{0}', space=sflag, size = 0x8, scoped, tag = 'scoped memory for _lambda_.5']
    #allocation5 [shape = 'u8[1024]{0}', space=vmem, size = 0x400, scoped, tag = 'input window, operand 2, single buffered']
    #allocation6 [shape = 's32[1]{0}', space=sflag, size = 0x4, scoped, tag = 'scoped memory for _lambda_.5']
    %8 = vsyncpa [#allocation4], 0
    %9 = vsyncpa [#allocation6], 0
    loop: start=0, step=1, limit=4
    $region2: #{_lambda_.5} parent=1 // loop_pre_header
      _
    $region3: #{_lambda_.5} parent=1 // loop_header
      %s11 = sphi 0, %s15
      %p12 = scmp.ge.s32.totalorder %s11, 4
      %s21 = sphi 0, %s23
      %s24 = sphi 0, %s21
      %s25 = sphi 0, %s24
      %s41 = sphi 0, %s25
      %s45 = sphi 0, %s45
      %s47 = sphi 0, %s45
      %s48 = sphi 0, %s47
      %s62 = sphi 0, %s48
      %s66 = sphi 0, %s66
      %s68 = sphi 0, %s66
      %s69 = sphi 0, %s68
      %s83 = sphi 0, %s69
      %s89 = sphi 0, %s91
      %s92 = sphi 0, %s89
      %s93 = sphi 0, %s92
      %s109 = sphi 0, %s93
    $region4: #{_lambda_.5} parent=1 // loop_header_branch
      %14 = sbr.rel (%p12) target = $region8
    $region5: #{_lambda_.5} parent=1 // loop_body
      %s16 = ssub.s32 %s11, 1
      %s17 = ssub.s32 %s11, 2
      %s18 = sadd.s32 %s11, 1
      %s19 = ssub.s32 %s11, %s18
      %p20 = scmp.eq.s32.totalorder %s19, 0
      %s22 = sadd.s32 %s21, 1
      %s23 = scalar_select %p20, %s21, %s22
      %p26 = pneg %p20
      %p27 = scmp.eq.s32.totalorder %s11, 1
      %p28 = por %p26, %p27
      %p29 = scmp.ne.s32.totalorder %s21, %s24
      %p30 = scmp.eq.s32.totalorder %s11, 0
      %p31 = por %p29, %p30
      %p32 = scmp.ne.s32.totalorder %s21, %s24
      %p33 = scmp.eq.s32.totalorder %s16, 1
      %p34 = por %p32, %p33
      %p35 = scmp.ne.s32.totalorder %s24, %s25
      %p36 = scmp.eq.s32.totalorder %s16, 0
      %p37 = por %p35, %p36
      %p38 = scmp.ne.s32.totalorder %s24, %s25
      %p39 = scmp.eq.s32.totalorder %s17, 1
      %p40 = por %p38, %p39
      %p42 = scmp.ne.s32.totalorder %s25, %s41
      %p43 = scmp.eq.s32.totalorder %s17, 0
      %p44 = por %p42, %p43
      %s46 = sadd.s32 %s45, 1
      %p49 = scmp.eq.s32.totalorder %s11, 1
      %p50 = scmp.ne.s32.totalorder %s45, %s47
      %p51 = scmp.eq.s32.totalorder %s11, 0
      %p52 = por %p50, %p51
      %p53 = scmp.ne.s32.totalorder %s45, %s47
      %p54 = scmp.eq.s32.totalorder %s16, 1
      %p55 = por %p53, %p54
      %p56 = scmp.ne.s32.totalorder %s47, %s48
      %p57 = scmp.eq.s32.totalorder %s16, 0
      %p58 = por %p56, %p57
      %p59 = scmp.ne.s32.totalorder %s47, %s48
      %p60 = scmp.eq.s32.totalorder %s17, 1
      %p61 = por %p59, %p60
      %p63 = scmp.ne.s32.totalorder %s48, %s62
      %p64 = scmp.eq.s32.totalorder %s17, 0
      %p65 = por %p63, %p64
      %s67 = sadd.s32 %s66, 1
      %p70 = scmp.eq.s32.totalorder %s11, 1
      %p71 = scmp.ne.s32.totalorder %s66, %s68
      %p72 = scmp.eq.s32.totalorder %s11, 0
      %p73 = por %p71, %p72
      %p74 = scmp.ne.s32.totalorder %s66, %s68
      %p75 = scmp.eq.s32.totalorder %s16, 1
      %p76 = por %p74, %p75
      %p77 = scmp.ne.s32.totalorder %s68, %s69
      %p78 = scmp.eq.s32.totalorder %s16, 0
      %p79 = por %p77, %p78
      %p80 = scmp.ne.s32.totalorder %s68, %s69
      %p81 = scmp.eq.s32.totalorder %s17, 1
      %p82 = por %p80, %p81
      %p84 = scmp.ne.s32.totalorder %s69, %s83
      %p85 = scmp.eq.s32.totalorder %s17, 0
      %p86 = por %p84, %p85
      %s87 = ssub.s32 %s11, %s18
      %p88 = scmp.eq.s32.totalorder %s87, 0
      %s90 = sadd.s32 %s89, 1
      %s91 = scalar_select %p88, %s89, %s90
      %p94 = pneg %p88
      %p95 = scmp.eq.s32.totalorder %s11, 1
      %p96 = por %p94, %p95
      %p97 = scmp.ne.s32.totalorder %s89, %s92
      %p98 = scmp.eq.s32.totalorder %s11, 0
      %p99 = por %p97, %p98
      %p100 = scmp.ne.s32.totalorder %s89, %s92
      %p101 = scmp.eq.s32.totalorder %s16, 1
      %p102 = por %p100, %p101
      %p103 = scmp.ne.s32.totalorder %s92, %s93
      %p104 = scmp.eq.s32.totalorder %s16, 0
      %p105 = por %p103, %p104
      %p106 = scmp.ne.s32.totalorder %s92, %s93
      %p107 = scmp.eq.s32.totalorder %s17, 1
      %p108 = por %p106, %p107
      %p110 = scmp.ne.s32.totalorder %s93, %s109
      %p111 = scmp.eq.s32.totalorder %s17, 0
      %p112 = por %p110, %p111
      %p113 = scmp.le.s32.totalorder 1, %s11
      %p114 = scmp.lt.s32.totalorder %s11, 3
      %p115 = pnand %p113, %p114
      %p116 = pneg %p115
      // Predicated region
      $region9: #{_lambda_.5} parent=5 // pred_check
        _
      $region10: #{_lambda_.5} parent=5 // pred_check_branch
        %118 = sbr.rel (%p115) target = $region12
      $region11: #{_lambda_.5} parent=5 // pred_region
        %s119 = ssub.s32 %s11, 1
        // Predicated region
        $region13: #{_lambda_.5} parent=11 // pred_check
          %p120 = pneg %p58
        $region14: #{_lambda_.5} parent=11 // pred_check_branch
          %122 = sbr.rel (%p120) target = $region16
        $region15: #{_lambda_.5} parent=11 // pred_region
          %124 = vsyncadd [#allocation4], 0
          %s125 = sshll.u32 %s1, 4
          %s126 = int_to_ptr.hbm [resolvable:$true] %s125
          %s127 = sshll.u32 [#allocation3], 4
          %s128 = int_to_ptr.vmem [resolvable:$true] %s127
          %133 = dma.hbm_to_vmem [thread:$0]  %s126, 12288, %s128, [#allocation4], 128, 128, 8
        $region16: #{_lambda_.5} parent=11 // pred_fallthru
          _
        // Predicated region
        $region17: #{_lambda_.5} parent=11 // pred_check
          %p134 = pneg %p79
        $region18: #{_lambda_.5} parent=11 // pred_check_branch
          %136 = sbr.rel (%p134) target = $region20
        $region19: #{_lambda_.5} parent=11 // pred_region
          %138 = vsyncadd [#allocation6], 0
          %s140 = sshll.u32 %s2, 4
          %s141 = int_to_ptr.hbm [resolvable:$true] %s140
          %s142 = sshll.u32 [#allocation5], 4
          %s143 = int_to_ptr.vmem [resolvable:$true] %s142
          %145 = dma.hbm_to_vmem [thread:$0]  %s141, 32, %s143, [#allocation6]
        $region20: #{_lambda_.5} parent=11 // pred_fallthru
          _
      $region12: #{_lambda_.5} parent=5 // pred_fallthru
        _
      %p146 = scmp.lt.s32.totalorder %s11, 2
      // Predicated region
      $region21: #{_lambda_.5} parent=5 // pred_check
        %p147 = pneg %p146
      $region22: #{_lambda_.5} parent=5 // pred_check_branch
        %149 = sbr.rel (%p147) target = $region24
      $region23: #{_lambda_.5} parent=5 // pred_region
        // Predicated region
        $region25: #{_lambda_.5} parent=23 // pred_check
          %p150 = pneg %p31
        $region26: #{_lambda_.5} parent=23 // pred_check_branch
          %152 = sbr.rel (%p150) target = $region28
        $region27: #{_lambda_.5} parent=23 // pred_region
          %p153 = scmp.lt.s32.totalorder %s11, 1
          %s154 = scalar_select %p153, %s11, 1
          %s155 = smul.addr %s154, 2
          %s156 = smul.addr %s155, 4
          %s157 = scalar_lea.vmem %s0, %s156
        $region28: #{_lambda_.5} parent=23 // pred_fallthru
          _
      $region24: #{_lambda_.5} parent=5 // pred_fallthru
        _
      %p158 = scmp.le.s32.totalorder 1, %s11
      %p159 = scmp.lt.s32.totalorder %s11, 3
      %p160 = pnand %p158, %p159
      %p161 = pneg %p160
      // Predicated region
      $region29: #{_lambda_.5} parent=5 // pred_check
        _
      $region30: #{_lambda_.5} parent=5 // pred_check_branch
        %163 = sbr.rel (%p160) target = $region32
      $region31: #{_lambda_.5} parent=5 // pred_region
        %s164 = ssub.s32 %s11, 1
        // Predicated region
        $region33: #{_lambda_.5} parent=31 // pred_check
          %p165 = pneg %p58
        $region34: #{_lambda_.5} parent=31 // pred_check_branch
          %167 = sbr.rel (%p165) target = $region36
        $region35: #{_lambda_.5} parent=31 // pred_region
          %169 = dma.done [#allocation4], 12288
        $region36: #{_lambda_.5} parent=31 // pred_fallthru
          _
        // Predicated region
        $region37: #{_lambda_.5} parent=31 // pred_check
          %p170 = pneg %p79
        $region38: #{_lambda_.5} parent=31 // pred_check_branch
          %172 = sbr.rel (%p170) target = $region40
        $region39: #{_lambda_.5} parent=31 // pred_region
          %174 = dma.done [#allocation6], 32
        $region40: #{_lambda_.5} parent=31 // pred_fallthru
          _
        %p175 = scmp.lt.s32.totalorder %s16, 1
        %s176 = scalar_select %p175, %s16, 1
        %s177 = smul.addr %s176, 2
        %s178 = smul.addr %s177, 4
        %s179 = scalar_lea.vmem %s0, %s178
        %p180 = pneg %p37
        %p181 = pneg %p34
        %p182 = pneg %p58
        %p183 = pneg %p55
        %p184 = pneg %p79
        %p185 = pneg %p76
        %p186 = pneg %p105
        %p187 = pneg %p102
        %p188 = scmp.lt.s32.totalorder %s16, 1
        %s189 = scalar_select %p188, %s16, 1
        %s190 = smul.addr %s189, 2
        %s191 = smul.addr %s190, 4
        %s192 = scalar_lea.vmem %s3, %s191
        %p193 = scmp.lt.s32.totalorder %s16, 1
        %s194 = scalar_select %p193, %s16, 1
        %s195 = smul.addr %s194, 2
        %s196 = smul.addr %s195, 4
        %s197 = scalar_lea.vmem %s0, %s196
        %p198 = scmp.lt.s32.totalorder %s16, 1
        %s199 = scalar_select %p198, %s16, 1
        %s200 = smul.addr %s199, 2
        %s201 = smul.addr %s200, 4
        %s202 = scalar_lea.vmem %s3, %s201
        %vm204 = vcmask 1040384
        %vm205 = vsmask.f32 256
        %vm206 = vmand %vm204, %vm205
        %vm207 = vcmask 1044484
        %vm208 = vsmask.f32 4352
        %vm209 = vmand %vm207, %vm208
        %vm210 = vmor %vm209, %vm206
        %v211 = vld [vmem:[#allocation2] sm:$0x11]
        %v212 = vsel %vm210, 0, %v211
        %213 = vst [vmem:[#allocation2] sm:$0x11] %v212
        %vm214 = vsmask.f32 7938
        %vm215 = vmand %vm204, %vm214
        %vm216 = vsmask.f32 7954
        %vm217 = vmand %vm207, %vm216
        %vm218 = vmor %vm217, %vm215
        %v219 = vld [vmem:[#allocation2 + $0x8] sm:$0x11]
        %v220 = vsel %vm218, 0, %v219
        %221 = vst [vmem:[#allocation2 + $0x8] sm:$0x11] %v220
        %v222 = vld [vmem:[%s197] sm:$0xff]
        %v224 = vshrl.u32 %v222, 16
        %v226 = vrot.slane %v224, 7
        %v227 = vshll.u32 %v222, 16
        %v229 = vor.u32 %v226, %v227
        %v230 = vrot.slane %v226, 4
        %vm233 = vcmask 1043456
        %vm234 = vmand %vm233, %vm214
        %vm235 = vcmask 1047556
        %vm236 = vmand %vm235, %vm216
        %vm237 = vmor %vm236, %vm234
        %v238 = vld [vmem:[#allocation2] sm:$0xff]
        %v239 = vsel %vm237, %v229, %v238
        %240 = vst [vmem:[#allocation2] sm:$0xff] %v239
        %v241 = vld [vmem:[#allocation2 + $0x8] sm:$0x11]
        %v242 = vsel %vm210, %v230, %v241
        %243 = vst [vmem:[#allocation2 + $0x8] sm:$0x11] %v242
        %v244 = vld [vmem:[#allocation2] sm:$0xff]
        %v245 = vld [vmem:[#allocation3] sm:$0xff]
        %v246 = vld [vmem:[#allocation3 + $0x8] sm:$0xff]
        %v247 = vld [vmem:[#allocation3 + $0x10] sm:$0xff]
        %v248 = vld [vmem:[#allocation3 + $0x18] sm:$0xff]
        %v249 = vld [vmem:[#allocation3 + $0x20] sm:$0xff]
        %v250 = vld [vmem:[#allocation3 + $0x28] sm:$0xff]
        %v251 = vld [vmem:[#allocation3 + $0x30] sm:$0xff]
        %v252 = vld [vmem:[#allocation3 + $0x38] sm:$0xff]
        %v253 = vld [vmem:[#allocation3 + $0x40] sm:$0xff]
        %v254 = vld [vmem:[#allocation3 + $0x48] sm:$0xff]
        %v255 = vld [vmem:[#allocation3 + $0x50] sm:$0xff]
        %v256 = vld [vmem:[#allocation3 + $0x58] sm:$0xff]
        %v257 = vld [vmem:[#allocation3 + $0x60] sm:$0xff]
        %v258 = vld [vmem:[#allocation3 + $0x68] sm:$0xff]
        %v259 = vld [vmem:[#allocation3 + $0x70] sm:$0xff]
        %v260 = vld [vmem:[#allocation3 + $0x78] sm:$0xff]
        %v261 = vld [vmem:[#allocation3 + $0x80] sm:$0xff]
        %v262 = vld [vmem:[#allocation3 + $0x88] sm:$0xff]
        %v263 = vld [vmem:[#allocation3 + $0x90] sm:$0xff]
        %v264 = vld [vmem:[#allocation3 + $0x98] sm:$0xff]
        %v265 = vld [vmem:[#allocation3 + $0xa0] sm:$0xff]
        %v266 = vld [vmem:[#allocation3 + $0xa8] sm:$0xff]
        %v267 = vld [vmem:[#allocation3 + $0xb0] sm:$0xff]
        %v268 = vld [vmem:[#allocation3 + $0xb8] sm:$0xff]
        %v269 = vld [vmem:[#allocation3 + $0xc0] sm:$0xff]
        %v270 = vld [vmem:[#allocation3 + $0xc8] sm:$0xff]
        %v271 = vld [vmem:[#allocation3 + $0xd0] sm:$0xff]
        %v272 = vld [vmem:[#allocation3 + $0xd8] sm:$0xff]
        %v273 = vld [vmem:[#allocation3 + $0xe0] sm:$0xff]
        %v274 = vld [vmem:[#allocation3 + $0xe8] sm:$0xff]
        %v275 = vld [vmem:[#allocation3 + $0xf0] sm:$0xff]
        %v276 = vld [vmem:[#allocation3 + $0xf8] sm:$0xff]
        %v277 = vld [vmem:[#allocation2 + $0x8] sm:$0x11]
        %s278 = scalar_lea.vmem [#allocation3], 256
        %v279 = vld [vmem:[%s278] sm:$0xff]
        %v280 = vld [vmem:[%s278 + $0x8] sm:$0xff]
        %v281 = vld [vmem:[%s278 + $0x10] sm:$0xff]
        %v282 = vld [vmem:[%s278 + $0x18] sm:$0xff]
        %v283 = vld [vmem:[%s278 + $0x20] sm:$0xff]
        %v284 = vld [vmem:[%s278 + $0x28] sm:$0xff]
        %v285 = vld [vmem:[%s278 + $0x30] sm:$0xff]
        %v286 = vld [vmem:[%s278 + $0x38] sm:$0xff]
        %v287 = vld [vmem:[%s278 + $0x40] sm:$0xff]
        %v288 = vld [vmem:[%s278 + $0x48] sm:$0xff]
        %v289 = vld [vmem:[%s278 + $0x50] sm:$0xff]
        %v290 = vld [vmem:[%s278 + $0x58] sm:$0xff]
        %v291 = vld [vmem:[%s278 + $0x60] sm:$0xff]
        %v292 = vld [vmem:[%s278 + $0x68] sm:$0xff]
        %v293 = vld [vmem:[%s278 + $0x70] sm:$0xff]
        %v294 = vld [vmem:[%s278 + $0x78] sm:$0xff]
        %v295 = vld [vmem:[%s278 + $0x80] sm:$0xff]
        %v296 = vld [vmem:[%s278 + $0x88] sm:$0xff]
        %v297 = vld [vmem:[%s278 + $0x90] sm:$0xff]
        %v298 = vld [vmem:[%s278 + $0x98] sm:$0xff]
        %v299 = vld [vmem:[%s278 + $0xa0] sm:$0xff]
        %v300 = vld [vmem:[%s278 + $0xa8] sm:$0xff]
        %v301 = vld [vmem:[%s278 + $0xb0] sm:$0xff]
        %v302 = vld [vmem:[%s278 + $0xb8] sm:$0xff]
        %v303 = vld [vmem:[%s278 + $0xc0] sm:$0xff]
        %v304 = vld [vmem:[%s278 + $0xc8] sm:$0xff]
        %v305 = vld [vmem:[%s278 + $0xd0] sm:$0xff]
        %v306 = vld [vmem:[%s278 + $0xd8] sm:$0xff]
        %v307 = vld [vmem:[%s278 + $0xe0] sm:$0xff]
        %v308 = vld [vmem:[%s278 + $0xe8] sm:$0xff]
        %v309 = vld [vmem:[%s278 + $0xf0] sm:$0xff]
        %v310 = vld [vmem:[%s278 + $0xf8] sm:$0xff]
        %v313 = vunpack.c.l.b16 %v244
        %v314 = vunpack.c.h.b16 %v244
        %v315 = vunpack.c.l.b16 %v277
        %v316 = vunpack.c.h.b16 %v277
        %v317 = vpack.c.b16 %v315, %v313
        %v318 = vpack.c.b16 %v316, %v314
        %v320 = vshrl.u32 %v317, 16
        %v322 = vshll.u32 %v317, 16
        %v324 = vrot.slane %v322, 1
        %v325 = vor.u32 %v320, %v324
        %v327 = vshrl.u32 %v318, 16
        %v329 = vshll.u32 %v318, 16
        %v331 = vrot.slane %v329, 1
        %v332 = vor.u32 %v327, %v331
        %v367 = vunpack.c.l.b16 %v279
        %v368 = vunpack.c.h.b16 %v279
        %v369 = vunpack.c.l.b16 %v280
        %v370 = vunpack.c.h.b16 %v280
        %v371 = vunpack.c.l.b16 %v281
        %v372 = vunpack.c.h.b16 %v281
        %v373 = vunpack.c.l.b16 %v282
        %v374 = vunpack.c.h.b16 %v282
        %v375 = vunpack.c.l.b16 %v283
        %v376 = vunpack.c.h.b16 %v283
        %v377 = vunpack.c.l.b16 %v284
        %v378 = vunpack.c.h.b16 %v284
        %v379 = vunpack.c.l.b16 %v285
        %v380 = vunpack.c.h.b16 %v285
        %v381 = vunpack.c.l.b16 %v286
        %v382 = vunpack.c.h.b16 %v286
        %v383 = vunpack.c.l.b16 %v287
        %v384 = vunpack.c.h.b16 %v287
        %v385 = vunpack.c.l.b16 %v288
        %v386 = vunpack.c.h.b16 %v288
        %v387 = vunpack.c.l.b16 %v289
        %v388 = vunpack.c.h.b16 %v289
        %v389 = vunpack.c.l.b16 %v290
        %v390 = vunpack.c.h.b16 %v290
        %v391 = vunpack.c.l.b16 %v291
        %v392 = vunpack.c.h.b16 %v291
        %v393 = vunpack.c.l.b16 %v292
        %v394 = vunpack.c.h.b16 %v292
        %v395 = vunpack.c.l.b16 %v293
        %v396 = vunpack.c.h.b16 %v293
        %v397 = vunpack.c.l.b16 %v294
        %v398 = vunpack.c.h.b16 %v294
        %v399 = vunpack.c.l.b16 %v295
        %v400 = vunpack.c.h.b16 %v295
        %v401 = vunpack.c.l.b16 %v296
        %v402 = vunpack.c.h.b16 %v296
        %v403 = vunpack.c.l.b16 %v297
        %v404 = vunpack.c.h.b16 %v297
        %v405 = vunpack.c.l.b16 %v298
        %v406 = vunpack.c.h.b16 %v298
        %v407 = vunpack.c.l.b16 %v299
        %v408 = vunpack.c.h.b16 %v299
        %v409 = vunpack.c.l.b16 %v300
        %v410 = vunpack.c.h.b16 %v300
        %v411 = vunpack.c.l.b16 %v301
        %v412 = vunpack.c.h.b16 %v301
        %v413 = vunpack.c.l.b16 %v302
        %v414 = vunpack.c.h.b16 %v302
        %v415 = vunpack.c.l.b16 %v303
        %v416 = vunpack.c.h.b16 %v303
        %v417 = vunpack.c.l.b16 %v304
        %v418 = vunpack.c.h.b16 %v304
        %v419 = vunpack.c.l.b16 %v305
        %v420 = vunpack.c.h.b16 %v305
        %v421 = vunpack.c.l.b16 %v306
        %v422 = vunpack.c.h.b16 %v306
        %v423 = vunpack.c.l.b16 %v307
        %v424 = vunpack.c.h.b16 %v307
        %v425 = vunpack.c.l.b16 %v308
        %v426 = vunpack.c.h.b16 %v308
        %v427 = vunpack.c.l.b16 %v309
        %v428 = vunpack.c.h.b16 %v309
        %v429 = vunpack.c.l.b16 %v310
        %v430 = vunpack.c.h.b16 %v310
        %v431 = vpack.c.b16 %v369, %v367
        %v432 = vpack.c.b16 %v370, %v368
        %v433 = vpack.c.b16 %v373, %v371
        %v434 = vpack.c.b16 %v374, %v372
        %v435 = vpack.c.b16 %v377, %v375
        %v436 = vpack.c.b16 %v378, %v376
        %v437 = vpack.c.b16 %v381, %v379
        %v438 = vpack.c.b16 %v382, %v380
        %v439 = vpack.c.b16 %v385, %v383
        %v440 = vpack.c.b16 %v386, %v384
        %v441 = vpack.c.b16 %v389, %v387
        %v442 = vpack.c.b16 %v390, %v388
        %v443 = vpack.c.b16 %v393, %v391
        %v444 = vpack.c.b16 %v394, %v392
        %v445 = vpack.c.b16 %v397, %v395
        %v446 = vpack.c.b16 %v398, %v396
        %v447 = vpack.c.b16 %v401, %v399
        %v448 = vpack.c.b16 %v402, %v400
        %v449 = vpack.c.b16 %v405, %v403
        %v450 = vpack.c.b16 %v406, %v404
        %v451 = vpack.c.b16 %v409, %v407
        %v452 = vpack.c.b16 %v410, %v408
        %v453 = vpack.c.b16 %v413, %v411
        %v454 = vpack.c.b16 %v414, %v412
        %v455 = vpack.c.b16 %v417, %v415
        %v456 = vpack.c.b16 %v418, %v416
        %v457 = vpack.c.b16 %v421, %v419
        %v458 = vpack.c.b16 %v422, %v420
        %v459 = vpack.c.b16 %v425, %v423
        %v460 = vpack.c.b16 %v426, %v424
        %v461 = vpack.c.b16 %v429, %v427
        %v462 = vpack.c.b16 %v430, %v428
        %495 = vmatpush.bf16.msra.mxu0 %v445
        %496 = vmatpush.bf16.msra.mxu0 %v443
        %497 = vmatpush.bf16.msra.mxu0 %v441
        %498 = vmatpush.bf16.msra.mxu0 %v439
        %499 = vmatpush.bf16.msra.mxu0 %v437
        %500 = vmatpush.bf16.msra.mxu0 %v435
        %501 = vmatpush.bf16.msra.mxu0 %v433
        %502 = vmatpush.bf16.msra.mxu0 %v431
        %503 = vmatmul.bf16.gmra.mxu0 %v325
        %v504 = vpop.f32.mrf.mxu0
        %v505 = vadd.f32 0.0, %v504
        %v506 = vpop.f32.mrf.mxu0
        %507 = vdwg.mxu0
        %508 = vmatpush.bf16.msra.mxu0 %v461
        %509 = vmatpush.bf16.msra.mxu0 %v459
        %510 = vmatpush.bf16.msra.mxu0 %v457
        %511 = vmatpush.bf16.msra.mxu0 %v455
        %512 = vmatpush.bf16.msra.mxu0 %v453
        %513 = vmatpush.bf16.msra.mxu0 %v451
        %514 = vmatpush.bf16.msra.mxu0 %v449
        %515 = vmatpush.bf16.msra.mxu0 %v447
        %516 = vmatmul.bf16.gmra.mxu0 %v332
        %v517 = vpop.f32.mrf.mxu0
        %v518 = vadd.f32 %v505, %v517
        %v519 = vpop.f32.mrf.mxu0
        %520 = vdwg.mxu0
        %521 = vmatpush.bf16.msra.mxu0 %v446
        %522 = vmatpush.bf16.msra.mxu0 %v444
        %523 = vmatpush.bf16.msra.mxu0 %v442
        %524 = vmatpush.bf16.msra.mxu0 %v440
        %525 = vmatpush.bf16.msra.mxu0 %v438
        %526 = vmatpush.bf16.msra.mxu0 %v436
        %527 = vmatpush.bf16.msra.mxu0 %v434
        %528 = vmatpush.bf16.msra.mxu0 %v432
        %529 = vmatmul.bf16.gmra.mxu0 %v325
        %v530 = vpop.f32.mrf.mxu0
        %v531 = vadd.f32 0.0, %v530
        %v532 = vpop.f32.mrf.mxu0
        %533 = vdwg.mxu0
        %534 = vmatpush.bf16.msra.mxu0 %v462
        %535 = vmatpush.bf16.msra.mxu0 %v460
        %536 = vmatpush.bf16.msra.mxu0 %v458
        %537 = vmatpush.bf16.msra.mxu0 %v456
        %538 = vmatpush.bf16.msra.mxu0 %v454
        %539 = vmatpush.bf16.msra.mxu0 %v452
        %540 = vmatpush.bf16.msra.mxu0 %v450
        %541 = vmatpush.bf16.msra.mxu0 %v448
        %542 = vmatmul.bf16.gmra.mxu0 %v332
        %v543 = vpop.f32.mrf.mxu0
        %v544 = vadd.f32 %v531, %v543
        %v545 = vpop.f32.mrf.mxu0
        %546 = vdwg.mxu0
        %v547 = vpack.c.b16 %v313, %v313
        %v548 = vpack.c.b16 %v314, %v314
        %v583 = vunpack.c.l.b16 %v245
        %v584 = vunpack.c.h.b16 %v245
        %v585 = vunpack.c.l.b16 %v246
        %v586 = vunpack.c.h.b16 %v246
        %v587 = vunpack.c.l.b16 %v247
        %v588 = vunpack.c.h.b16 %v247
        %v589 = vunpack.c.l.b16 %v248
        %v590 = vunpack.c.h.b16 %v248
        %v591 = vunpack.c.l.b16 %v249
        %v592 = vunpack.c.h.b16 %v249
        %v593 = vunpack.c.l.b16 %v250
        %v594 = vunpack.c.h.b16 %v250
        %v595 = vunpack.c.l.b16 %v251
        %v596 = vunpack.c.h.b16 %v251
        %v597 = vunpack.c.l.b16 %v252
        %v598 = vunpack.c.h.b16 %v252
        %v599 = vunpack.c.l.b16 %v253
        %v600 = vunpack.c.h.b16 %v253
        %v601 = vunpack.c.l.b16 %v254
        %v602 = vunpack.c.h.b16 %v254
        %v603 = vunpack.c.l.b16 %v255
        %v604 = vunpack.c.h.b16 %v255
        %v605 = vunpack.c.l.b16 %v256
        %v606 = vunpack.c.h.b16 %v256
        %v607 = vunpack.c.l.b16 %v257
        %v608 = vunpack.c.h.b16 %v257
        %v609 = vunpack.c.l.b16 %v258
        %v610 = vunpack.c.h.b16 %v258
        %v611 = vunpack.c.l.b16 %v259
        %v612 = vunpack.c.h.b16 %v259
        %v613 = vunpack.c.l.b16 %v260
        %v614 = vunpack.c.h.b16 %v260
        %v615 = vunpack.c.l.b16 %v261
        %v616 = vunpack.c.h.b16 %v261
        %v617 = vunpack.c.l.b16 %v262
        %v618 = vunpack.c.h.b16 %v262
        %v619 = vunpack.c.l.b16 %v263
        %v620 = vunpack.c.h.b16 %v263
        %v621 = vunpack.c.l.b16 %v264
        %v622 = vunpack.c.h.b16 %v264
        %v623 = vunpack.c.l.b16 %v265
        %v624 = vunpack.c.h.b16 %v265
        %v625 = vunpack.c.l.b16 %v266
        %v626 = vunpack.c.h.b16 %v266
        %v627 = vunpack.c.l.b16 %v267
        %v628 = vunpack.c.h.b16 %v267
        %v629 = vunpack.c.l.b16 %v268
        %v630 = vunpack.c.h.b16 %v268
        %v631 = vunpack.c.l.b16 %v269
        %v632 = vunpack.c.h.b16 %v269
        %v633 = vunpack.c.l.b16 %v270
        %v634 = vunpack.c.h.b16 %v270
        %v635 = vunpack.c.l.b16 %v271
        %v636 = vunpack.c.h.b16 %v271
        %v637 = vunpack.c.l.b16 %v272
        %v638 = vunpack.c.h.b16 %v272
        %v639 = vunpack.c.l.b16 %v273
        %v640 = vunpack.c.h.b16 %v273
        %v641 = vunpack.c.l.b16 %v274
        %v642 = vunpack.c.h.b16 %v274
        %v643 = vunpack.c.l.b16 %v275
        %v644 = vunpack.c.h.b16 %v275
        %v645 = vunpack.c.l.b16 %v276
        %v646 = vunpack.c.h.b16 %v276
        %v647 = vpack.c.b16 %v585, %v583
        %v648 = vpack.c.b16 %v586, %v584
        %v649 = vpack.c.b16 %v589, %v587
        %v650 = vpack.c.b16 %v590, %v588
        %v651 = vpack.c.b16 %v593, %v591
        %v652 = vpack.c.b16 %v594, %v592
        %v653 = vpack.c.b16 %v597, %v595
        %v654 = vpack.c.b16 %v598, %v596
        %v655 = vpack.c.b16 %v601, %v599
        %v656 = vpack.c.b16 %v602, %v600
        %v657 = vpack.c.b16 %v605, %v603
        %v658 = vpack.c.b16 %v606, %v604
        %v659 = vpack.c.b16 %v609, %v607
        %v660 = vpack.c.b16 %v610, %v608
        %v661 = vpack.c.b16 %v613, %v611
        %v662 = vpack.c.b16 %v614, %v612
        %v663 = vpack.c.b16 %v617, %v615
        %v664 = vpack.c.b16 %v618, %v616
        %v665 = vpack.c.b16 %v621, %v619
        %v666 = vpack.c.b16 %v622, %v620
        %v667 = vpack.c.b16 %v625, %v623
        %v668 = vpack.c.b16 %v626, %v624
        %v669 = vpack.c.b16 %v629, %v627
        %v670 = vpack.c.b16 %v630, %v628
        %v671 = vpack.c.b16 %v633, %v631
        %v672 = vpack.c.b16 %v634, %v632
        %v673 = vpack.c.b16 %v637, %v635
        %v674 = vpack.c.b16 %v638, %v636
        %v675 = vpack.c.b16 %v641, %v639
        %v676 = vpack.c.b16 %v642, %v640
        %v677 = vpack.c.b16 %v645, %v643
        %v678 = vpack.c.b16 %v646, %v644
        %711 = vmatpush.bf16.msra.mxu0 %v661
        %712 = vmatpush.bf16.msra.mxu0 %v659
        %713 = vmatpush.bf16.msra.mxu0 %v657
        %714 = vmatpush.bf16.msra.mxu0 %v655
        %715 = vmatpush.bf16.msra.mxu0 %v653
        %716 = vmatpush.bf16.msra.mxu0 %v651
        %717 = vmatpush.bf16.msra.mxu0 %v649
        %718 = vmatpush.bf16.msra.mxu0 %v647
        %719 = vmatmul.bf16.gmra.mxu0 %v547
        %v720 = vpop.f32.mrf.mxu0
        %v721 = vadd.f32 %v518, %v720
        %v722 = vpop.f32.mrf.mxu0
        %723 = vdwg.mxu0
        %724 = vmatpush.bf16.msra.mxu0 %v677
        %725 = vmatpush.bf16.msra.mxu0 %v675
        %726 = vmatpush.bf16.msra.mxu0 %v673
        %727 = vmatpush.bf16.msra.mxu0 %v671
        %728 = vmatpush.bf16.msra.mxu0 %v669
        %729 = vmatpush.bf16.msra.mxu0 %v667
        %730 = vmatpush.bf16.msra.mxu0 %v665
        %731 = vmatpush.bf16.msra.mxu0 %v663
        %732 = vmatmul.bf16.gmra.mxu0 %v548
        %v733 = vpop.f32.mrf.mxu0
        %v734 = vadd.f32 %v721, %v733
        %v735 = vpop.f32.mrf.mxu0
        %736 = vdwg.mxu0
        %737 = vmatpush.bf16.msra.mxu0 %v662
        %738 = vmatpush.bf16.msra.mxu0 %v660
        %739 = vmatpush.bf16.msra.mxu0 %v658
        %740 = vmatpush.bf16.msra.mxu0 %v656
        %741 = vmatpush.bf16.msra.mxu0 %v654
        %742 = vmatpush.bf16.msra.mxu0 %v652
        %743 = vmatpush.bf16.msra.mxu0 %v650
        %744 = vmatpush.bf16.msra.mxu0 %v648
        %745 = vmatmul.bf16.gmra.mxu0 %v547
        %v746 = vpop.f32.mrf.mxu0
        %v747 = vadd.f32 %v544, %v746
        %v748 = vpop.f32.mrf.mxu0
        %749 = vdwg.mxu0
        %750 = vmatpush.bf16.msra.mxu0 %v678
        %751 = vmatpush.bf16.msra.mxu0 %v676
        %752 = vmatpush.bf16.msra.mxu0 %v674
        %753 = vmatpush.bf16.msra.mxu0 %v672
        %754 = vmatpush.bf16.msra.mxu0 %v670
        %755 = vmatpush.bf16.msra.mxu0 %v668
        %756 = vmatpush.bf16.msra.mxu0 %v666
        %757 = vmatpush.bf16.msra.mxu0 %v664
        %758 = vmatmul.bf16.gmra.mxu0 %v548
        %v759 = vpop.f32.mrf.mxu0
        %v760 = vadd.f32 %v747, %v759
        %v761 = vpop.f32.mrf.mxu0
        %762 = vdwg.mxu0
        %v763 = vld [vmem:[#allocation2] sm:$0xee]
        %s764 = scalar_lea.vmem [#allocation3], 512
        %v765 = vld [vmem:[%s764] sm:$0xff]
        %v766 = vld [vmem:[%s764 + $0x8] sm:$0xff]
        %v767 = vld [vmem:[%s764 + $0x10] sm:$0xff]
        %v768 = vld [vmem:[%s764 + $0x18] sm:$0xff]
        %v769 = vld [vmem:[%s764 + $0x20] sm:$0xff]
        %v770 = vld [vmem:[%s764 + $0x28] sm:$0xff]
        %v771 = vld [vmem:[%s764 + $0x30] sm:$0xff]
        %v772 = vld [vmem:[%s764 + $0x38] sm:$0xff]
        %v773 = vld [vmem:[%s764 + $0x40] sm:$0xff]
        %v774 = vld [vmem:[%s764 + $0x48] sm:$0xff]
        %v775 = vld [vmem:[%s764 + $0x50] sm:$0xff]
        %v776 = vld [vmem:[%s764 + $0x58] sm:$0xff]
        %v777 = vld [vmem:[%s764 + $0x60] sm:$0xff]
        %v778 = vld [vmem:[%s764 + $0x68] sm:$0xff]
        %v779 = vld [vmem:[%s764 + $0x70] sm:$0xff]
        %v780 = vld [vmem:[%s764 + $0x78] sm:$0xff]
        %v781 = vld [vmem:[%s764 + $0x80] sm:$0xff]
        %v782 = vld [vmem:[%s764 + $0x88] sm:$0xff]
        %v783 = vld [vmem:[%s764 + $0x90] sm:$0xff]
        %v784 = vld [vmem:[%s764 + $0x98] sm:$0xff]
        %v785 = vld [vmem:[%s764 + $0xa0] sm:$0xff]
        %v786 = vld [vmem:[%s764 + $0xa8] sm:$0xff]
        %v787 = vld [vmem:[%s764 + $0xb0] sm:$0xff]
        %v788 = vld [vmem:[%s764 + $0xb8] sm:$0xff]
        %v789 = vld [vmem:[%s764 + $0xc0] sm:$0xff]
        %v790 = vld [vmem:[%s764 + $0xc8] sm:$0xff]
        %v791 = vld [vmem:[%s764 + $0xd0] sm:$0xff]
        %v792 = vld [vmem:[%s764 + $0xd8] sm:$0xff]
        %v793 = vld [vmem:[%s764 + $0xe0] sm:$0xff]
        %v794 = vld [vmem:[%s764 + $0xe8] sm:$0xff]
        %v795 = vld [vmem:[%s764 + $0xf0] sm:$0xff]
        %v796 = vld [vmem:[%s764 + $0xf8] sm:$0xff]
        %v798 = vunpack.c.l.b16 %v763
        %v799 = vunpack.c.h.b16 %v763
        %v800 = vpack.c.b16 %v315, %v798
        %v801 = vpack.c.b16 %v316, %v799
        %v802 = vrot.slane %v800, 1
        %v803 = vrot.slane %v801, 1
        %v838 = vunpack.c.l.b16 %v765
        %v839 = vunpack.c.h.b16 %v765
        %v840 = vunpack.c.l.b16 %v766
        %v841 = vunpack.c.h.b16 %v766
        %v842 = vunpack.c.l.b16 %v767
        %v843 = vunpack.c.h.b16 %v767
        %v844 = vunpack.c.l.b16 %v768
        %v845 = vunpack.c.h.b16 %v768
        %v846 = vunpack.c.l.b16 %v769
        %v847 = vunpack.c.h.b16 %v769
        %v848 = vunpack.c.l.b16 %v770
        %v849 = vunpack.c.h.b16 %v770
        %v850 = vunpack.c.l.b16 %v771
        %v851 = vunpack.c.h.b16 %v771
        %v852 = vunpack.c.l.b16 %v772
        %v853 = vunpack.c.h.b16 %v772
        %v854 = vunpack.c.l.b16 %v773
        %v855 = vunpack.c.h.b16 %v773
        %v856 = vunpack.c.l.b16 %v774
        %v857 = vunpack.c.h.b16 %v774
        %v858 = vunpack.c.l.b16 %v775
        %v859 = vunpack.c.h.b16 %v775
        %v860 = vunpack.c.l.b16 %v776
        %v861 = vunpack.c.h.b16 %v776
        %v862 = vunpack.c.l.b16 %v777
        %v863 = vunpack.c.h.b16 %v777
        %v864 = vunpack.c.l.b16 %v778
        %v865 = vunpack.c.h.b16 %v778
        %v866 = vunpack.c.l.b16 %v779
        %v867 = vunpack.c.h.b16 %v779
        %v868 = vunpack.c.l.b16 %v780
        %v869 = vunpack.c.h.b16 %v780
        %v870 = vunpack.c.l.b16 %v781
        %v871 = vunpack.c.h.b16 %v781
        %v872 = vunpack.c.l.b16 %v782
        %v873 = vunpack.c.h.b16 %v782
        %v874 = vunpack.c.l.b16 %v783
        %v875 = vunpack.c.h.b16 %v783
        %v876 = vunpack.c.l.b16 %v784
        %v877 = vunpack.c.h.b16 %v784
        %v878 = vunpack.c.l.b16 %v785
        %v879 = vunpack.c.h.b16 %v785
        %v880 = vunpack.c.l.b16 %v786
        %v881 = vunpack.c.h.b16 %v786
        %v882 = vunpack.c.l.b16 %v787
        %v883 = vunpack.c.h.b16 %v787
        %v884 = vunpack.c.l.b16 %v788
        %v885 = vunpack.c.h.b16 %v788
        %v886 = vunpack.c.l.b16 %v789
        %v887 = vunpack.c.h.b16 %v789
        %v888 = vunpack.c.l.b16 %v790
        %v889 = vunpack.c.h.b16 %v790
        %v890 = vunpack.c.l.b16 %v791
        %v891 = vunpack.c.h.b16 %v791
        %v892 = vunpack.c.l.b16 %v792
        %v893 = vunpack.c.h.b16 %v792
        %v894 = vunpack.c.l.b16 %v793
        %v895 = vunpack.c.h.b16 %v793
        %v896 = vunpack.c.l.b16 %v794
        %v897 = vunpack.c.h.b16 %v794
        %v898 = vunpack.c.l.b16 %v795
        %v899 = vunpack.c.h.b16 %v795
        %v900 = vunpack.c.l.b16 %v796
        %v901 = vunpack.c.h.b16 %v796
        %v902 = vpack.c.b16 %v840, %v838
        %v903 = vpack.c.b16 %v841, %v839
        %v904 = vpack.c.b16 %v844, %v842
        %v905 = vpack.c.b16 %v845, %v843
        %v906 = vpack.c.b16 %v848, %v846
        %v907 = vpack.c.b16 %v849, %v847
        %v908 = vpack.c.b16 %v852, %v850
        %v909 = vpack.c.b16 %v853, %v851
        %v910 = vpack.c.b16 %v856, %v854
        %v911 = vpack.c.b16 %v857, %v855
        %v912 = vpack.c.b16 %v860, %v858
        %v913 = vpack.c.b16 %v861, %v859
        %v914 = vpack.c.b16 %v864, %v862
        %v915 = vpack.c.b16 %v865, %v863
        %v916 = vpack.c.b16 %v868, %v866
        %v917 = vpack.c.b16 %v869, %v867
        %v918 = vpack.c.b16 %v872, %v870
        %v919 = vpack.c.b16 %v873, %v871
        %v920 = vpack.c.b16 %v876, %v874
        %v921 = vpack.c.b16 %v877, %v875
        %v922 = vpack.c.b16 %v880, %v878
        %v923 = vpack.c.b16 %v881, %v879
        %v924 = vpack.c.b16 %v884, %v882
        %v925 = vpack.c.b16 %v885, %v883
        %v926 = vpack.c.b16 %v888, %v886
        %v927 = vpack.c.b16 %v889, %v887
        %v928 = vpack.c.b16 %v892, %v890
        %v929 = vpack.c.b16 %v893, %v891
        %v930 = vpack.c.b16 %v896, %v894
        %v931 = vpack.c.b16 %v897, %v895
        %v932 = vpack.c.b16 %v900, %v898
        %v933 = vpack.c.b16 %v901, %v899
        %966 = vmatpush.bf16.msra.mxu0 %v916
        %967 = vmatpush.bf16.msra.mxu0 %v914
        %968 = vmatpush.bf16.msra.mxu0 %v912
        %969 = vmatpush.bf16.msra.mxu0 %v910
        %970 = vmatpush.bf16.msra.mxu0 %v908
        %971 = vmatpush.bf16.msra.mxu0 %v906
        %972 = vmatpush.bf16.msra.mxu0 %v904
        %973 = vmatpush.bf16.msra.mxu0 %v902
        %974 = vmatmul.bf16.gmra.mxu0 %v802
        %v975 = vpop.f32.mrf.mxu0
        %v976 = vadd.f32 0.0, %v975
        %v977 = vpop.f32.mrf.mxu0
        %978 = vdwg.mxu0
        %979 = vmatpush.bf16.msra.mxu0 %v932
        %980 = vmatpush.bf16.msra.mxu0 %v930
        %981 = vmatpush.bf16.msra.mxu0 %v928
        %982 = vmatpush.bf16.msra.mxu0 %v926
        %983 = vmatpush.bf16.msra.mxu0 %v924
        %984 = vmatpush.bf16.msra.mxu0 %v922
        %985 = vmatpush.bf16.msra.mxu0 %v920
        %986 = vmatpush.bf16.msra.mxu0 %v918
        %987 = vmatmul.bf16.gmra.mxu0 %v803
        %v988 = vpop.f32.mrf.mxu0
        %v989 = vadd.f32 %v976, %v988
        %v990 = vpop.f32.mrf.mxu0
        %991 = vdwg.mxu0
        %992 = vmatpush.bf16.msra.mxu0 %v917
        %993 = vmatpush.bf16.msra.mxu0 %v915
        %994 = vmatpush.bf16.msra.mxu0 %v913
        %995 = vmatpush.bf16.msra.mxu0 %v911
        %996 = vmatpush.bf16.msra.mxu0 %v909
        %997 = vmatpush.bf16.msra.mxu0 %v907
        %998 = vmatpush.bf16.msra.mxu0 %v905
        %999 = vmatpush.bf16.msra.mxu0 %v903
        %1000 = vmatmul.bf16.gmra.mxu0 %v802
        %v1001 = vpop.f32.mrf.mxu0
        %v1002 = vadd.f32 0.0, %v1001
        %v1003 = vpop.f32.mrf.mxu0
        %1004 = vdwg.mxu0
        %1005 = vmatpush.bf16.msra.mxu0 %v933
        %1006 = vmatpush.bf16.msra.mxu0 %v931
        %1007 = vmatpush.bf16.msra.mxu0 %v929
        %1008 = vmatpush.bf16.msra.mxu0 %v927
        %1009 = vmatpush.bf16.msra.mxu0 %v925
        %1010 = vmatpush.bf16.msra.mxu0 %v923
        %1011 = vmatpush.bf16.msra.mxu0 %v921
        %1012 = vmatpush.bf16.msra.mxu0 %v919
        %1013 = vmatmul.bf16.gmra.mxu0 %v803
        %v1014 = vpop.f32.mrf.mxu0
        %v1015 = vadd.f32 %v1002, %v1014
        %v1016 = vpop.f32.mrf.mxu0
        %1017 = vdwg.mxu0
        %v1018 = vadd.f32 %v734, %v989
        %v1019 = vadd.f32 %v760, %v1015
        %v1020 = vld [vmem:[#allocation5] sm:$0x3]
        %v1022 = vperm.slane %v1020, 0
        %v1023 = vperm.slane %v1020, 1
        %v1026 = vadd.f32 %v1018, %v1022
        %v1027 = vadd.f32 %v1019, %v1023
        %v1028 = vpack.c.bf16 %v1027, %v1026
        %1029 = vst [vmem:[%s202] sm:$0xff] %v1028
        %p1030 = scmp.lt.s32.totalorder %s16, 1
        %s1031 = scalar_select %p1030, %s16, 1
        %s1032 = smul.addr %s1031, 2
        %s1033 = smul.addr %s1032, 4
        %s1034 = scalar_lea.vmem %s3, %s1033
        // Predicated region
        $region41: #{_lambda_.5} parent=31 // pred_check
          %p1035 = pneg %p102
        $region42: #{_lambda_.5} parent=31 // pred_check_branch
          %1037 = sbr.rel (%p1035) target = $region44
        $region43: #{_lambda_.5} parent=31 // pred_region
          _
        $region44: #{_lambda_.5} parent=31 // pred_fallthru
          _
      $region32: #{_lambda_.5} parent=5 // pred_fallthru
        _
      %p1038 = scmp.le.s32.totalorder 2, %s11
      // Predicated region
      $region45: #{_lambda_.5} parent=5 // pred_check
        %p1039 = pneg %p1038
      $region46: #{_lambda_.5} parent=5 // pred_check_branch
        %1041 = sbr.rel (%p1039) target = $region48
      $region47: #{_lambda_.5} parent=5 // pred_region
        %s1042 = ssub.s32 %s11, 2
        // Predicated region
        $region49: #{_lambda_.5} parent=47 // pred_check
          %p1043 = pneg %p108
        $region50: #{_lambda_.5} parent=47 // pred_check_branch
          %1045 = sbr.rel (%p1043) target = $region52
        $region51: #{_lambda_.5} parent=47 // pred_region
          %p1046 = scmp.lt.s32.totalorder %s17, 1
          %s1047 = scalar_select %p1046, %s17, 1
          %s1048 = smul.addr %s1047, 2
          %s1049 = smul.addr %s1048, 4
          %s1050 = scalar_lea.vmem %s3, %s1049
        $region52: #{_lambda_.5} parent=47 // pred_fallthru
          _
      $region48: #{_lambda_.5} parent=5 // pred_fallthru
        _
    $region6: #{_lambda_.5} parent=1 // loop_footer
      %s15 = sadd.s32 1, %s11
    $region7: #{_lambda_.5} parent=1 // loop_footer_branch
      %10 = sbr.rel target = $region3
    $region8: #{_lambda_.5} parent=1 // loop_exit
      _
    %1051 = vsyncpa [#allocation4], 1
    %s1052 = scalar_lea.sflag [#allocation4], 1
    %1053 = vsyncpa %s1052, 1
    %1054 = vsyncpa [#allocation6], 1

// kernel: _lambda_.6
$region0: #{_lambda_.6}
  #allocation0 [shape = 'u32[]', space=smem, size = 0x4, offset = 0x4, fixed_abs, tag = 'smem constant byte address 0x4 - core index']
  #allocation1 [shape = 'u32[72,128]{1,0:T(1,128)}', space=vmem, size = 0x9000, scoped, tag = 'internal scratch']
  #allocation2 [shape = 'bf16[10,256]{1,0:T(8,128)(2,1)}', space=vmem, size = 0x2000, scoped, tag = 'scratch operand']
  %s0 = inlined_call_operand.vmem [shape: bf16[2,8,256], index: 0, kind: input, shape index: {}]
  %s1 = inlined_call_operand.hbm [shape: bf16[4,256,256], index: 1, kind: input, shape index: {}]
  %s2 = inlined_call_operand.hbm [shape: f32[1,256], index: 2, kind: input, shape index: {}]
  %s3 = inlined_call_operand.vmem [shape: bf16[2,8,512], index: 3, kind: output, shape index: {}]
  %s4 = sld [smem:[#allocation0]]
  $region53: #{_lambda_.6} parent=0
    _
  %s6 = ssub.s32 1, %s4
  %s7 = scalar_select 0, %s6, %s4
  $region1: #{_lambda_.6} parent=0
    #allocation3 [shape = 'u8[524288]{0}', space=vmem, size = 0x80000, scoped, tag = 'input window, operand 1, single buffered']
    #allocation4 [shape = 's32[2]{0}', space=sflag, size = 0x8, scoped, tag = 'scoped memory for _lambda_.6']
    #allocation5 [shape = 'u8[1024]{0}', space=vmem, size = 0x400, scoped, tag = 'input window, operand 2, single buffered']
    #allocation6 [shape = 's32[1]{0}', space=sflag, size = 0x4, scoped, tag = 'scoped memory for _lambda_.6']
    %8 = vsyncpa [#allocation4], 0
    %9 = vsyncpa [#allocation6], 0
    loop: start=0, step=1, limit=4
    $region2: #{_lambda_.6} parent=1 // loop_pre_header
      _
    $region3: #{_lambda_.6} parent=1 // loop_header
      %s11 = sphi 0, %s15
      %p12 = scmp.ge.s32.totalorder %s11, 4
      %s21 = sphi 0, %s23
      %s24 = sphi 0, %s21
      %s25 = sphi 0, %s24
      %s41 = sphi 0, %s25
      %s45 = sphi 0, %s45
      %s47 = sphi 0, %s45
      %s48 = sphi 0, %s47
      %s62 = sphi 0, %s48
      %s66 = sphi 0, %s66
      %s68 = sphi 0, %s66
      %s69 = sphi 0, %s68
      %s83 = sphi 0, %s69
      %s89 = sphi 0, %s91
      %s92 = sphi 0, %s89
      %s93 = sphi 0, %s92
      %s109 = sphi 0, %s93
    $region4: #{_lambda_.6} parent=1 // loop_header_branch
      %14 = sbr.rel (%p12) target = $region8
    $region5: #{_lambda_.6} parent=1 // loop_body
      %s16 = ssub.s32 %s11, 1
      %s17 = ssub.s32 %s11, 2
      %s18 = sadd.s32 %s11, 1
      %s19 = ssub.s32 %s11, %s18
      %p20 = scmp.eq.s32.totalorder %s19, 0
      %s22 = sadd.s32 %s21, 1
      %s23 = scalar_select %p20, %s21, %s22
      %p26 = pneg %p20
      %p27 = scmp.eq.s32.totalorder %s11, 1
      %p28 = por %p26, %p27
      %p29 = scmp.ne.s32.totalorder %s21, %s24
      %p30 = scmp.eq.s32.totalorder %s11, 0
      %p31 = por %p29, %p30
      %p32 = scmp.ne.s32.totalorder %s21, %s24
      %p33 = scmp.eq.s32.totalorder %s16, 1
      %p34 = por %p32, %p33
      %p35 = scmp.ne.s32.totalorder %s24, %s25
      %p36 = scmp.eq.s32.totalorder %s16, 0
      %p37 = por %p35, %p36
      %p38 = scmp.ne.s32.totalorder %s24, %s25
      %p39 = scmp.eq.s32.totalorder %s17, 1
      %p40 = por %p38, %p39
      %p42 = scmp.ne.s32.totalorder %s25, %s41
      %p43 = scmp.eq.s32.totalorder %s17, 0
      %p44 = por %p42, %p43
      %s46 = sadd.s32 %s45, 1
      %p49 = scmp.eq.s32.totalorder %s11, 1
      %p50 = scmp.ne.s32.totalorder %s45, %s47
      %p51 = scmp.eq.s32.totalorder %s11, 0
      %p52 = por %p50, %p51
      %p53 = scmp.ne.s32.totalorder %s45, %s47
      %p54 = scmp.eq.s32.totalorder %s16, 1
      %p55 = por %p53, %p54
      %p56 = scmp.ne.s32.totalorder %s47, %s48
      %p57 = scmp.eq.s32.totalorder %s16, 0
      %p58 = por %p56, %p57
      %p59 = scmp.ne.s32.totalorder %s47, %s48
      %p60 = scmp.eq.s32.totalorder %s17, 1
      %p61 = por %p59, %p60
      %p63 = scmp.ne.s32.totalorder %s48, %s62
      %p64 = scmp.eq.s32.totalorder %s17, 0
      %p65 = por %p63, %p64
      %s67 = sadd.s32 %s66, 1
      %p70 = scmp.eq.s32.totalorder %s11, 1
      %p71 = scmp.ne.s32.totalorder %s66, %s68
      %p72 = scmp.eq.s32.totalorder %s11, 0
      %p73 = por %p71, %p72
      %p74 = scmp.ne.s32.totalorder %s66, %s68
      %p75 = scmp.eq.s32.totalorder %s16, 1
      %p76 = por %p74, %p75
      %p77 = scmp.ne.s32.totalorder %s68, %s69
      %p78 = scmp.eq.s32.totalorder %s16, 0
      %p79 = por %p77, %p78
      %p80 = scmp.ne.s32.totalorder %s68, %s69
      %p81 = scmp.eq.s32.totalorder %s17, 1
      %p82 = por %p80, %p81
      %p84 = scmp.ne.s32.totalorder %s69, %s83
      %p85 = scmp.eq.s32.totalorder %s17, 0
      %p86 = por %p84, %p85
      %s87 = ssub.s32 %s11, %s18
      %p88 = scmp.eq.s32.totalorder %s87, 0
      %s90 = sadd.s32 %s89, 1
      %s91 = scalar_select %p88, %s89, %s90
      %p94 = pneg %p88
      %p95 = scmp.eq.s32.totalorder %s11, 1
      %p96 = por %p94, %p95
      %p97 = scmp.ne.s32.totalorder %s89, %s92
      %p98 = scmp.eq.s32.totalorder %s11, 0
      %p99 = por %p97, %p98
      %p100 = scmp.ne.s32.totalorder %s89, %s92
      %p101 = scmp.eq.s32.totalorder %s16, 1
      %p102 = por %p100, %p101
      %p103 = scmp.ne.s32.totalorder %s92, %s93
      %p104 = scmp.eq.s32.totalorder %s16, 0
      %p105 = por %p103, %p104
      %p106 = scmp.ne.s32.totalorder %s92, %s93
      %p107 = scmp.eq.s32.totalorder %s17, 1
      %p108 = por %p106, %p107
      %p110 = scmp.ne.s32.totalorder %s93, %s109
      %p111 = scmp.eq.s32.totalorder %s17, 0
      %p112 = por %p110, %p111
      %p113 = scmp.le.s32.totalorder 1, %s11
      %p114 = scmp.lt.s32.totalorder %s11, 3
      %p115 = pnand %p113, %p114
      %p116 = pneg %p115
      // Predicated region
      $region9: #{_lambda_.6} parent=5 // pred_check
        _
      $region10: #{_lambda_.6} parent=5 // pred_check_branch
        %118 = sbr.rel (%p115) target = $region12
      $region11: #{_lambda_.6} parent=5 // pred_region
        %s119 = ssub.s32 %s11, 1
        // Predicated region
        $region13: #{_lambda_.6} parent=11 // pred_check
          %p120 = pneg %p58
        $region14: #{_lambda_.6} parent=11 // pred_check_branch
          %122 = sbr.rel (%p120) target = $region16
        $region15: #{_lambda_.6} parent=11 // pred_region
          %124 = vsyncadd [#allocation4], 0
          %s125 = sshll.u32 %s1, 4
          %s126 = int_to_ptr.hbm [resolvable:$true] %s125
          %s127 = sshll.u32 [#allocation3], 4
          %s128 = int_to_ptr.vmem [resolvable:$true] %s127
          %133 = dma.hbm_to_vmem [thread:$0]  %s126, 16384, %s128, [#allocation4], 128, 128, 8
        $region16: #{_lambda_.6} parent=11 // pred_fallthru
          _
        // Predicated region
        $region17: #{_lambda_.6} parent=11 // pred_check
          %p134 = pneg %p79
        $region18: #{_lambda_.6} parent=11 // pred_check_branch
          %136 = sbr.rel (%p134) target = $region20
        $region19: #{_lambda_.6} parent=11 // pred_region
          %138 = vsyncadd [#allocation6], 0
          %s140 = sshll.u32 %s2, 4
          %s141 = int_to_ptr.hbm [resolvable:$true] %s140
          %s142 = sshll.u32 [#allocation5], 4
          %s143 = int_to_ptr.vmem [resolvable:$true] %s142
          %145 = dma.hbm_to_vmem [thread:$0]  %s141, 32, %s143, [#allocation6]
        $region20: #{_lambda_.6} parent=11 // pred_fallthru
          _
      $region12: #{_lambda_.6} parent=5 // pred_fallthru
        _
      %p146 = scmp.lt.s32.totalorder %s11, 2
      // Predicated region
      $region21: #{_lambda_.6} parent=5 // pred_check
        %p147 = pneg %p146
      $region22: #{_lambda_.6} parent=5 // pred_check_branch
        %149 = sbr.rel (%p147) target = $region24
      $region23: #{_lambda_.6} parent=5 // pred_region
        // Predicated region
        $region25: #{_lambda_.6} parent=23 // pred_check
          %p150 = pneg %p31
        $region26: #{_lambda_.6} parent=23 // pred_check_branch
          %152 = sbr.rel (%p150) target = $region28
        $region27: #{_lambda_.6} parent=23 // pred_region
          %p153 = scmp.lt.s32.totalorder %s11, 1
          %s154 = scalar_select %p153, %s11, 1
          %s155 = smul.addr %s154, 2
          %s156 = smul.addr %s155, 4
          %s157 = scalar_lea.vmem %s0, %s156
        $region28: #{_lambda_.6} parent=23 // pred_fallthru
          _
      $region24: #{_lambda_.6} parent=5 // pred_fallthru
        _
      %p158 = scmp.le.s32.totalorder 1, %s11
      %p159 = scmp.lt.s32.totalorder %s11, 3
      %p160 = pnand %p158, %p159
      %p161 = pneg %p160
      // Predicated region
      $region29: #{_lambda_.6} parent=5 // pred_check
        _
      $region30: #{_lambda_.6} parent=5 // pred_check_branch
        %163 = sbr.rel (%p160) target = $region32
      $region31: #{_lambda_.6} parent=5 // pred_region
        %s164 = ssub.s32 %s11, 1
        // Predicated region
        $region33: #{_lambda_.6} parent=31 // pred_check
          %p165 = pneg %p58
        $region34: #{_lambda_.6} parent=31 // pred_check_branch
          %167 = sbr.rel (%p165) target = $region36
        $region35: #{_lambda_.6} parent=31 // pred_region
          %169 = dma.done [#allocation4], 16384
        $region36: #{_lambda_.6} parent=31 // pred_fallthru
          _
        // Predicated region
        $region37: #{_lambda_.6} parent=31 // pred_check
          %p170 = pneg %p79
        $region38: #{_lambda_.6} parent=31 // pred_check_branch
          %172 = sbr.rel (%p170) target = $region40
        $region39: #{_lambda_.6} parent=31 // pred_region
          %174 = dma.done [#allocation6], 32
        $region40: #{_lambda_.6} parent=31 // pred_fallthru
          _
        %p175 = scmp.lt.s32.totalorder %s16, 1
        %s176 = scalar_select %p175, %s16, 1
        %s177 = smul.addr %s176, 2
        %s178 = smul.addr %s177, 4
        %s179 = scalar_lea.vmem %s0, %s178
        %p180 = pneg %p37
        %p181 = pneg %p34
        %p182 = pneg %p58
        %p183 = pneg %p55
        %p184 = pneg %p79
        %p185 = pneg %p76
        %p186 = pneg %p105
        %p187 = pneg %p102
        %p188 = scmp.lt.s32.totalorder %s16, 1
        %s189 = scalar_select %p188, %s16, 1
        %s190 = smul.addr %s189, 4
        %s191 = smul.addr %s190, 4
        %s192 = scalar_lea.vmem %s3, %s191
        %p193 = scmp.lt.s32.totalorder %s16, 1
        %s194 = scalar_select %p193, %s16, 1
        %s195 = smul.addr %s194, 2
        %s196 = smul.addr %s195, 4
        %s197 = scalar_lea.vmem %s0, %s196
        %p198 = scmp.lt.s32.totalorder %s16, 1
        %s199 = scalar_select %p198, %s16, 1
        %s200 = smul.addr %s199, 4
        %s201 = smul.addr %s200, 4
        %s202 = scalar_lea.vmem %s3, %s201
        %vm204 = vcmask 1040384
        %vm205 = vsmask.f32 256
        %vm206 = vmand %vm204, %vm205
        %vm207 = vcmask 1044484
        %vm208 = vsmask.f32 4352
        %vm209 = vmand %vm207, %vm208
        %vm210 = vmor %vm209, %vm206
        %v211 = vld [vmem:[#allocation2] sm:$0x11]
        %v212 = vsel %vm210, 0, %v211
        %213 = vst [vmem:[#allocation2] sm:$0x11] %v212
        %vm214 = vsmask.f32 7938
        %vm215 = vmand %vm204, %vm214
        %vm216 = vsmask.f32 7954
        %vm217 = vmand %vm207, %vm216
        %vm218 = vmor %vm217, %vm215
        %v219 = vld [vmem:[#allocation2 + $0x8] sm:$0x11]
        %v220 = vsel %vm218, 0, %v219
        %221 = vst [vmem:[#allocation2 + $0x8] sm:$0x11] %v220
        %v222 = vld [vmem:[%s197] sm:$0xff]
        %v224 = vshrl.u32 %v222, 16
        %v226 = vrot.slane %v224, 7
        %v227 = vshll.u32 %v222, 16
        %v229 = vor.u32 %v226, %v227
        %v230 = vrot.slane %v226, 4
        %vm233 = vcmask 1043456
        %vm234 = vmand %vm233, %vm214
        %vm235 = vcmask 1047556
        %vm236 = vmand %vm235, %vm216
        %vm237 = vmor %vm236, %vm234
        %v238 = vld [vmem:[#allocation2] sm:$0xff]
        %v239 = vsel %vm237, %v229, %v238
        %240 = vst [vmem:[#allocation2] sm:$0xff] %v239
        %v241 = vld [vmem:[#allocation2 + $0x8] sm:$0x11]
        %v242 = vsel %vm210, %v230, %v241
        %243 = vst [vmem:[#allocation2 + $0x8] sm:$0x11] %v242
        %v244 = vld [vmem:[#allocation2] sm:$0xff]
        %v245 = vld [vmem:[#allocation3] sm:$0xff]
        %v246 = vld [vmem:[#allocation3 + $0x8] sm:$0xff]
        %v247 = vld [vmem:[#allocation3 + $0x10] sm:$0xff]
        %v248 = vld [vmem:[#allocation3 + $0x18] sm:$0xff]
        %v249 = vld [vmem:[#allocation3 + $0x20] sm:$0xff]
        %v250 = vld [vmem:[#allocation3 + $0x28] sm:$0xff]
        %v251 = vld [vmem:[#allocation3 + $0x30] sm:$0xff]
        %v252 = vld [vmem:[#allocation3 + $0x38] sm:$0xff]
        %v253 = vld [vmem:[#allocation3 + $0x40] sm:$0xff]
        %v254 = vld [vmem:[#allocation3 + $0x48] sm:$0xff]
        %v255 = vld [vmem:[#allocation3 + $0x50] sm:$0xff]
        %v256 = vld [vmem:[#allocation3 + $0x58] sm:$0xff]
        %v257 = vld [vmem:[#allocation3 + $0x60] sm:$0xff]
        %v258 = vld [vmem:[#allocation3 + $0x68] sm:$0xff]
        %v259 = vld [vmem:[#allocation3 + $0x70] sm:$0xff]
        %v260 = vld [vmem:[#allocation3 + $0x78] sm:$0xff]
        %v261 = vld [vmem:[#allocation3 + $0x80] sm:$0xff]
        %v262 = vld [vmem:[#allocation3 + $0x88] sm:$0xff]
        %v263 = vld [vmem:[#allocation3 + $0x90] sm:$0xff]
        %v264 = vld [vmem:[#allocation3 + $0x98] sm:$0xff]
        %v265 = vld [vmem:[#allocation3 + $0xa0] sm:$0xff]
        %v266 = vld [vmem:[#allocation3 + $0xa8] sm:$0xff]
        %v267 = vld [vmem:[#allocation3 + $0xb0] sm:$0xff]
        %v268 = vld [vmem:[#allocation3 + $0xb8] sm:$0xff]
        %v269 = vld [vmem:[#allocation3 + $0xc0] sm:$0xff]
        %v270 = vld [vmem:[#allocation3 + $0xc8] sm:$0xff]
        %v271 = vld [vmem:[#allocation3 + $0xd0] sm:$0xff]
        %v272 = vld [vmem:[#allocation3 + $0xd8] sm:$0xff]
        %v273 = vld [vmem:[#allocation3 + $0xe0] sm:$0xff]
        %v274 = vld [vmem:[#allocation3 + $0xe8] sm:$0xff]
        %v275 = vld [vmem:[#allocation3 + $0xf0] sm:$0xff]
        %v276 = vld [vmem:[#allocation3 + $0xf8] sm:$0xff]
        %v277 = vld [vmem:[#allocation2 + $0x8] sm:$0x11]
        %s278 = scalar_lea.vmem [#allocation3], 256
        %v279 = vld [vmem:[%s278] sm:$0xff]
        %v280 = vld [vmem:[%s278 + $0x8] sm:$0xff]
        %v281 = vld [vmem:[%s278 + $0x10] sm:$0xff]
        %v282 = vld [vmem:[%s278 + $0x18] sm:$0xff]
        %v283 = vld [vmem:[%s278 + $0x20] sm:$0xff]
        %v284 = vld [vmem:[%s278 + $0x28] sm:$0xff]
        %v285 = vld [vmem:[%s278 + $0x30] sm:$0xff]
        %v286 = vld [vmem:[%s278 + $0x38] sm:$0xff]
        %v287 = vld [vmem:[%s278 + $0x40] sm:$0xff]
        %v288 = vld [vmem:[%s278 + $0x48] sm:$0xff]
        %v289 = vld [vmem:[%s278 + $0x50] sm:$0xff]
        %v290 = vld [vmem:[%s278 + $0x58] sm:$0xff]
        %v291 = vld [vmem:[%s278 + $0x60] sm:$0xff]
        %v292 = vld [vmem:[%s278 + $0x68] sm:$0xff]
        %v293 = vld [vmem:[%s278 + $0x70] sm:$0xff]
        %v294 = vld [vmem:[%s278 + $0x78] sm:$0xff]
        %v295 = vld [vmem:[%s278 + $0x80] sm:$0xff]
        %v296 = vld [vmem:[%s278 + $0x88] sm:$0xff]
        %v297 = vld [vmem:[%s278 + $0x90] sm:$0xff]
        %v298 = vld [vmem:[%s278 + $0x98] sm:$0xff]
        %v299 = vld [vmem:[%s278 + $0xa0] sm:$0xff]
        %v300 = vld [vmem:[%s278 + $0xa8] sm:$0xff]
        %v301 = vld [vmem:[%s278 + $0xb0] sm:$0xff]
        %v302 = vld [vmem:[%s278 + $0xb8] sm:$0xff]
        %v303 = vld [vmem:[%s278 + $0xc0] sm:$0xff]
        %v304 = vld [vmem:[%s278 + $0xc8] sm:$0xff]
        %v305 = vld [vmem:[%s278 + $0xd0] sm:$0xff]
        %v306 = vld [vmem:[%s278 + $0xd8] sm:$0xff]
        %v307 = vld [vmem:[%s278 + $0xe0] sm:$0xff]
        %v308 = vld [vmem:[%s278 + $0xe8] sm:$0xff]
        %v309 = vld [vmem:[%s278 + $0xf0] sm:$0xff]
        %v310 = vld [vmem:[%s278 + $0xf8] sm:$0xff]
        %v313 = vunpack.c.l.b16 %v244
        %v314 = vunpack.c.h.b16 %v244
        %v315 = vunpack.c.l.b16 %v277
        %v316 = vunpack.c.h.b16 %v277
        %v317 = vpack.c.b16 %v315, %v313
        %v318 = vpack.c.b16 %v316, %v314
        %v320 = vshrl.u32 %v317, 16
        %v322 = vshll.u32 %v317, 16
        %v324 = vrot.slane %v322, 1
        %v325 = vor.u32 %v320, %v324
        %v327 = vshrl.u32 %v318, 16
        %v329 = vshll.u32 %v318, 16
        %v331 = vrot.slane %v329, 1
        %v332 = vor.u32 %v327, %v331
        %v367 = vunpack.c.l.b16 %v279
        %v368 = vunpack.c.h.b16 %v279
        %v369 = vunpack.c.l.b16 %v280
        %v370 = vunpack.c.h.b16 %v280
        %v371 = vunpack.c.l.b16 %v281
        %v372 = vunpack.c.h.b16 %v281
        %v373 = vunpack.c.l.b16 %v282
        %v374 = vunpack.c.h.b16 %v282
        %v375 = vunpack.c.l.b16 %v283
        %v376 = vunpack.c.h.b16 %v283
        %v377 = vunpack.c.l.b16 %v284
        %v378 = vunpack.c.h.b16 %v284
        %v379 = vunpack.c.l.b16 %v285
        %v380 = vunpack.c.h.b16 %v285
        %v381 = vunpack.c.l.b16 %v286
        %v382 = vunpack.c.h.b16 %v286
        %v383 = vunpack.c.l.b16 %v287
        %v384 = vunpack.c.h.b16 %v287
        %v385 = vunpack.c.l.b16 %v288
        %v386 = vunpack.c.h.b16 %v288
        %v387 = vunpack.c.l.b16 %v289
        %v388 = vunpack.c.h.b16 %v289
        %v389 = vunpack.c.l.b16 %v290
        %v390 = vunpack.c.h.b16 %v290
        %v391 = vunpack.c.l.b16 %v291
        %v392 = vunpack.c.h.b16 %v291
        %v393 = vunpack.c.l.b16 %v292
        %v394 = vunpack.c.h.b16 %v292
        %v395 = vunpack.c.l.b16 %v293
        %v396 = vunpack.c.h.b16 %v293
        %v397 = vunpack.c.l.b16 %v294
        %v398 = vunpack.c.h.b16 %v294
        %v399 = vunpack.c.l.b16 %v295
        %v400 = vunpack.c.h.b16 %v295
        %v401 = vunpack.c.l.b16 %v296
        %v402 = vunpack.c.h.b16 %v296
        %v403 = vunpack.c.l.b16 %v297
        %v404 = vunpack.c.h.b16 %v297
        %v405 = vunpack.c.l.b16 %v298
        %v406 = vunpack.c.h.b16 %v298
        %v407 = vunpack.c.l.b16 %v299
        %v408 = vunpack.c.h.b16 %v299
        %v409 = vunpack.c.l.b16 %v300
        %v410 = vunpack.c.h.b16 %v300
        %v411 = vunpack.c.l.b16 %v301
        %v412 = vunpack.c.h.b16 %v301
        %v413 = vunpack.c.l.b16 %v302
        %v414 = vunpack.c.h.b16 %v302
        %v415 = vunpack.c.l.b16 %v303
        %v416 = vunpack.c.h.b16 %v303
        %v417 = vunpack.c.l.b16 %v304
        %v418 = vunpack.c.h.b16 %v304
        %v419 = vunpack.c.l.b16 %v305
        %v420 = vunpack.c.h.b16 %v305
        %v421 = vunpack.c.l.b16 %v306
        %v422 = vunpack.c.h.b16 %v306
        %v423 = vunpack.c.l.b16 %v307
        %v424 = vunpack.c.h.b16 %v307
        %v425 = vunpack.c.l.b16 %v308
        %v426 = vunpack.c.h.b16 %v308
        %v427 = vunpack.c.l.b16 %v309
        %v428 = vunpack.c.h.b16 %v309
        %v429 = vunpack.c.l.b16 %v310
        %v430 = vunpack.c.h.b16 %v310
        %v431 = vpack.c.b16 %v369, %v367
        %v432 = vpack.c.b16 %v370, %v368
        %v433 = vpack.c.b16 %v373, %v371
        %v434 = vpack.c.b16 %v374, %v372
        %v435 = vpack.c.b16 %v377, %v375
        %v436 = vpack.c.b16 %v378, %v376
        %v437 = vpack.c.b16 %v381, %v379
        %v438 = vpack.c.b16 %v382, %v380
        %v439 = vpack.c.b16 %v385, %v383
        %v440 = vpack.c.b16 %v386, %v384
        %v441 = vpack.c.b16 %v389, %v387
        %v442 = vpack.c.b16 %v390, %v388
        %v443 = vpack.c.b16 %v393, %v391
        %v444 = vpack.c.b16 %v394, %v392
        %v445 = vpack.c.b16 %v397, %v395
        %v446 = vpack.c.b16 %v398, %v396
        %v447 = vpack.c.b16 %v401, %v399
        %v448 = vpack.c.b16 %v402, %v400
        %v449 = vpack.c.b16 %v405, %v403
        %v450 = vpack.c.b16 %v406, %v404
        %v451 = vpack.c.b16 %v409, %v407
        %v452 = vpack.c.b16 %v410, %v408
        %v453 = vpack.c.b16 %v413, %v411
        %v454 = vpack.c.b16 %v414, %v412
        %v455 = vpack.c.b16 %v417, %v415
        %v456 = vpack.c.b16 %v418, %v416
        %v457 = vpack.c.b16 %v421, %v419
        %v458 = vpack.c.b16 %v422, %v420
        %v459 = vpack.c.b16 %v425, %v423
        %v460 = vpack.c.b16 %v426, %v424
        %v461 = vpack.c.b16 %v429, %v427
        %v462 = vpack.c.b16 %v430, %v428
        %495 = vmatpush.bf16.msra.mxu0 %v445
        %496 = vmatpush.bf16.msra.mxu0 %v443
        %497 = vmatpush.bf16.msra.mxu0 %v441
        %498 = vmatpush.bf16.msra.mxu0 %v439
        %499 = vmatpush.bf16.msra.mxu0 %v437
        %500 = vmatpush.bf16.msra.mxu0 %v435
        %501 = vmatpush.bf16.msra.mxu0 %v433
        %502 = vmatpush.bf16.msra.mxu0 %v431
        %503 = vmatmul.bf16.gmra.mxu0 %v325
        %v504 = vpop.f32.mrf.mxu0
        %v505 = vadd.f32 0.0, %v504
        %v506 = vpop.f32.mrf.mxu0
        %507 = vdwg.mxu0
        %508 = vmatpush.bf16.msra.mxu0 %v461
        %509 = vmatpush.bf16.msra.mxu0 %v459
        %510 = vmatpush.bf16.msra.mxu0 %v457
        %511 = vmatpush.bf16.msra.mxu0 %v455
        %512 = vmatpush.bf16.msra.mxu0 %v453
        %513 = vmatpush.bf16.msra.mxu0 %v451
        %514 = vmatpush.bf16.msra.mxu0 %v449
        %515 = vmatpush.bf16.msra.mxu0 %v447
        %516 = vmatmul.bf16.gmra.mxu0 %v332
        %v517 = vpop.f32.mrf.mxu0
        %v518 = vadd.f32 %v505, %v517
        %v519 = vpop.f32.mrf.mxu0
        %520 = vdwg.mxu0
        %521 = vmatpush.bf16.msra.mxu0 %v446
        %522 = vmatpush.bf16.msra.mxu0 %v444
        %523 = vmatpush.bf16.msra.mxu0 %v442
        %524 = vmatpush.bf16.msra.mxu0 %v440
        %525 = vmatpush.bf16.msra.mxu0 %v438
        %526 = vmatpush.bf16.msra.mxu0 %v436
        %527 = vmatpush.bf16.msra.mxu0 %v434
        %528 = vmatpush.bf16.msra.mxu0 %v432
        %529 = vmatmul.bf16.gmra.mxu0 %v325
        %v530 = vpop.f32.mrf.mxu0
        %v531 = vadd.f32 0.0, %v530
        %v532 = vpop.f32.mrf.mxu0
        %533 = vdwg.mxu0
        %534 = vmatpush.bf16.msra.mxu0 %v462
        %535 = vmatpush.bf16.msra.mxu0 %v460
        %536 = vmatpush.bf16.msra.mxu0 %v458
        %537 = vmatpush.bf16.msra.mxu0 %v456
        %538 = vmatpush.bf16.msra.mxu0 %v454
        %539 = vmatpush.bf16.msra.mxu0 %v452
        %540 = vmatpush.bf16.msra.mxu0 %v450
        %541 = vmatpush.bf16.msra.mxu0 %v448
        %542 = vmatmul.bf16.gmra.mxu0 %v332
        %v543 = vpop.f32.mrf.mxu0
        %v544 = vadd.f32 %v531, %v543
        %v545 = vpop.f32.mrf.mxu0
        %546 = vdwg.mxu0
        %v547 = vpack.c.b16 %v313, %v313
        %v548 = vpack.c.b16 %v314, %v314
        %v583 = vunpack.c.l.b16 %v245
        %v584 = vunpack.c.h.b16 %v245
        %v585 = vunpack.c.l.b16 %v246
        %v586 = vunpack.c.h.b16 %v246
        %v587 = vunpack.c.l.b16 %v247
        %v588 = vunpack.c.h.b16 %v247
        %v589 = vunpack.c.l.b16 %v248
        %v590 = vunpack.c.h.b16 %v248
        %v591 = vunpack.c.l.b16 %v249
        %v592 = vunpack.c.h.b16 %v249
        %v593 = vunpack.c.l.b16 %v250
        %v594 = vunpack.c.h.b16 %v250
        %v595 = vunpack.c.l.b16 %v251
        %v596 = vunpack.c.h.b16 %v251
        %v597 = vunpack.c.l.b16 %v252
        %v598 = vunpack.c.h.b16 %v252
        %v599 = vunpack.c.l.b16 %v253
        %v600 = vunpack.c.h.b16 %v253
        %v601 = vunpack.c.l.b16 %v254
        %v602 = vunpack.c.h.b16 %v254
        %v603 = vunpack.c.l.b16 %v255
        %v604 = vunpack.c.h.b16 %v255
        %v605 = vunpack.c.l.b16 %v256
        %v606 = vunpack.c.h.b16 %v256
        %v607 = vunpack.c.l.b16 %v257
        %v608 = vunpack.c.h.b16 %v257
        %v609 = vunpack.c.l.b16 %v258
        %v610 = vunpack.c.h.b16 %v258
        %v611 = vunpack.c.l.b16 %v259
        %v612 = vunpack.c.h.b16 %v259
        %v613 = vunpack.c.l.b16 %v260
        %v614 = vunpack.c.h.b16 %v260
        %v615 = vunpack.c.l.b16 %v261
        %v616 = vunpack.c.h.b16 %v261
        %v617 = vunpack.c.l.b16 %v262
        %v618 = vunpack.c.h.b16 %v262
        %v619 = vunpack.c.l.b16 %v263
        %v620 = vunpack.c.h.b16 %v263
        %v621 = vunpack.c.l.b16 %v264
        %v622 = vunpack.c.h.b16 %v264
        %v623 = vunpack.c.l.b16 %v265
        %v624 = vunpack.c.h.b16 %v265
        %v625 = vunpack.c.l.b16 %v266
        %v626 = vunpack.c.h.b16 %v266
        %v627 = vunpack.c.l.b16 %v267
        %v628 = vunpack.c.h.b16 %v267
        %v629 = vunpack.c.l.b16 %v268
        %v630 = vunpack.c.h.b16 %v268
        %v631 = vunpack.c.l.b16 %v269
        %v632 = vunpack.c.h.b16 %v269
        %v633 = vunpack.c.l.b16 %v270
        %v634 = vunpack.c.h.b16 %v270
        %v635 = vunpack.c.l.b16 %v271
        %v636 = vunpack.c.h.b16 %v271
        %v637 = vunpack.c.l.b16 %v272
        %v638 = vunpack.c.h.b16 %v272
        %v639 = vunpack.c.l.b16 %v273
        %v640 = vunpack.c.h.b16 %v273
        %v641 = vunpack.c.l.b16 %v274
        %v642 = vunpack.c.h.b16 %v274
        %v643 = vunpack.c.l.b16 %v275
        %v644 = vunpack.c.h.b16 %v275
        %v645 = vunpack.c.l.b16 %v276
        %v646 = vunpack.c.h.b16 %v276
        %v647 = vpack.c.b16 %v585, %v583
        %v648 = vpack.c.b16 %v586, %v584
        %v649 = vpack.c.b16 %v589, %v587
        %v650 = vpack.c.b16 %v590, %v588
        %v651 = vpack.c.b16 %v593, %v591
        %v652 = vpack.c.b16 %v594, %v592
        %v653 = vpack.c.b16 %v597, %v595
        %v654 = vpack.c.b16 %v598, %v596
        %v655 = vpack.c.b16 %v601, %v599
        %v656 = vpack.c.b16 %v602, %v600
        %v657 = vpack.c.b16 %v605, %v603
        %v658 = vpack.c.b16 %v606, %v604
        %v659 = vpack.c.b16 %v609, %v607
        %v660 = vpack.c.b16 %v610, %v608
        %v661 = vpack.c.b16 %v613, %v611
        %v662 = vpack.c.b16 %v614, %v612
        %v663 = vpack.c.b16 %v617, %v615
        %v664 = vpack.c.b16 %v618, %v616
        %v665 = vpack.c.b16 %v621, %v619
        %v666 = vpack.c.b16 %v622, %v620
        %v667 = vpack.c.b16 %v625, %v623
        %v668 = vpack.c.b16 %v626, %v624
        %v669 = vpack.c.b16 %v629, %v627
        %v670 = vpack.c.b16 %v630, %v628
        %v671 = vpack.c.b16 %v633, %v631
        %v672 = vpack.c.b16 %v634, %v632
        %v673 = vpack.c.b16 %v637, %v635
        %v674 = vpack.c.b16 %v638, %v636
        %v675 = vpack.c.b16 %v641, %v639
        %v676 = vpack.c.b16 %v642, %v640
        %v677 = vpack.c.b16 %v645, %v643
        %v678 = vpack.c.b16 %v646, %v644
        %711 = vmatpush.bf16.msra.mxu0 %v661
        %712 = vmatpush.bf16.msra.mxu0 %v659
        %713 = vmatpush.bf16.msra.mxu0 %v657
        %714 = vmatpush.bf16.msra.mxu0 %v655
        %715 = vmatpush.bf16.msra.mxu0 %v653
        %716 = vmatpush.bf16.msra.mxu0 %v651
        %717 = vmatpush.bf16.msra.mxu0 %v649
        %718 = vmatpush.bf16.msra.mxu0 %v647
        %719 = vmatmul.bf16.gmra.mxu0 %v547
        %v720 = vpop.f32.mrf.mxu0
        %v721 = vadd.f32 %v518, %v720
        %v722 = vpop.f32.mrf.mxu0
        %723 = vdwg.mxu0
        %724 = vmatpush.bf16.msra.mxu0 %v677
        %725 = vmatpush.bf16.msra.mxu0 %v675
        %726 = vmatpush.bf16.msra.mxu0 %v673
        %727 = vmatpush.bf16.msra.mxu0 %v671
        %728 = vmatpush.bf16.msra.mxu0 %v669
        %729 = vmatpush.bf16.msra.mxu0 %v667
        %730 = vmatpush.bf16.msra.mxu0 %v665
        %731 = vmatpush.bf16.msra.mxu0 %v663
        %732 = vmatmul.bf16.gmra.mxu0 %v548
        %v733 = vpop.f32.mrf.mxu0
        %v734 = vadd.f32 %v721, %v733
        %v735 = vpop.f32.mrf.mxu0
        %736 = vdwg.mxu0
        %737 = vmatpush.bf16.msra.mxu0 %v662
        %738 = vmatpush.bf16.msra.mxu0 %v660
        %739 = vmatpush.bf16.msra.mxu0 %v658
        %740 = vmatpush.bf16.msra.mxu0 %v656
        %741 = vmatpush.bf16.msra.mxu0 %v654
        %742 = vmatpush.bf16.msra.mxu0 %v652
        %743 = vmatpush.bf16.msra.mxu0 %v650
        %744 = vmatpush.bf16.msra.mxu0 %v648
        %745 = vmatmul.bf16.gmra.mxu0 %v547
        %v746 = vpop.f32.mrf.mxu0
        %v747 = vadd.f32 %v544, %v746
        %v748 = vpop.f32.mrf.mxu0
        %749 = vdwg.mxu0
        %750 = vmatpush.bf16.msra.mxu0 %v678
        %751 = vmatpush.bf16.msra.mxu0 %v676
        %752 = vmatpush.bf16.msra.mxu0 %v674
        %753 = vmatpush.bf16.msra.mxu0 %v672
        %754 = vmatpush.bf16.msra.mxu0 %v670
        %755 = vmatpush.bf16.msra.mxu0 %v668
        %756 = vmatpush.bf16.msra.mxu0 %v666
        %757 = vmatpush.bf16.msra.mxu0 %v664
        %758 = vmatmul.bf16.gmra.mxu0 %v548
        %v759 = vpop.f32.mrf.mxu0
        %v760 = vadd.f32 %v747, %v759
        %v761 = vpop.f32.mrf.mxu0
        %762 = vdwg.mxu0
        %v763 = vld [vmem:[#allocation5] sm:$0x3]
        %v765 = vperm.slane %v763, 0
        %v766 = vperm.slane %v763, 1
        %v769 = vadd.f32 %v734, %v765
        %v770 = vadd.f32 %v760, %v766
        %v771 = vmax.f32 %v769, 0.0
        %v772 = vmax.f32 %v770, 0.0
        %v773 = vpack.c.bf16 %v772, %v771
        %774 = vst [vmem:[%s202] sm:$0xff] %v773
        %v775 = vld [vmem:[#allocation2] sm:$0xff]
        %v776 = vld [vmem:[#allocation2 + $0x8] sm:$0x11]
        %s777 = scalar_lea.vmem [#allocation3], 512
        %v778 = vld [vmem:[%s777] sm:$0xff]
        %v779 = vld [vmem:[%s777 + $0x8] sm:$0xff]
        %v780 = vld [vmem:[%s777 + $0x10] sm:$0xff]
        %v781 = vld [vmem:[%s777 + $0x18] sm:$0xff]
        %v782 = vld [vmem:[%s777 + $0x20] sm:$0xff]
        %v783 = vld [vmem:[%s777 + $0x28] sm:$0xff]
        %v784 = vld [vmem:[%s777 + $0x30] sm:$0xff]
        %v785 = vld [vmem:[%s777 + $0x38] sm:$0xff]
        %v786 = vld [vmem:[%s777 + $0x40] sm:$0xff]
        %v787 = vld [vmem:[%s777 + $0x48] sm:$0xff]
        %v788 = vld [vmem:[%s777 + $0x50] sm:$0xff]
        %v789 = vld [vmem:[%s777 + $0x58] sm:$0xff]
        %v790 = vld [vmem:[%s777 + $0x60] sm:$0xff]
        %v791 = vld [vmem:[%s777 + $0x68] sm:$0xff]
        %v792 = vld [vmem:[%s777 + $0x70] sm:$0xff]
        %v793 = vld [vmem:[%s777 + $0x78] sm:$0xff]
        %v794 = vld [vmem:[%s777 + $0x80] sm:$0xff]
        %v795 = vld [vmem:[%s777 + $0x88] sm:$0xff]
        %v796 = vld [vmem:[%s777 + $0x90] sm:$0xff]
        %v797 = vld [vmem:[%s777 + $0x98] sm:$0xff]
        %v798 = vld [vmem:[%s777 + $0xa0] sm:$0xff]
        %v799 = vld [vmem:[%s777 + $0xa8] sm:$0xff]
        %v800 = vld [vmem:[%s777 + $0xb0] sm:$0xff]
        %v801 = vld [vmem:[%s777 + $0xb8] sm:$0xff]
        %v802 = vld [vmem:[%s777 + $0xc0] sm:$0xff]
        %v803 = vld [vmem:[%s777 + $0xc8] sm:$0xff]
        %v804 = vld [vmem:[%s777 + $0xd0] sm:$0xff]
        %v805 = vld [vmem:[%s777 + $0xd8] sm:$0xff]
        %v806 = vld [vmem:[%s777 + $0xe0] sm:$0xff]
        %v807 = vld [vmem:[%s777 + $0xe8] sm:$0xff]
        %v808 = vld [vmem:[%s777 + $0xf0] sm:$0xff]
        %v809 = vld [vmem:[%s777 + $0xf8] sm:$0xff]
        %v810 = vld [vmem:[#allocation2] sm:$0xee]
        %s811 = scalar_lea.vmem [#allocation3], 768
        %v812 = vld [vmem:[%s811] sm:$0xff]
        %v813 = vld [vmem:[%s811 + $0x8] sm:$0xff]
        %v814 = vld [vmem:[%s811 + $0x10] sm:$0xff]
        %v815 = vld [vmem:[%s811 + $0x18] sm:$0xff]
        %v816 = vld [vmem:[%s811 + $0x20] sm:$0xff]
        %v817 = vld [vmem:[%s811 + $0x28] sm:$0xff]
        %v818 = vld [vmem:[%s811 + $0x30] sm:$0xff]
        %v819 = vld [vmem:[%s811 + $0x38] sm:$0xff]
        %v820 = vld [vmem:[%s811 + $0x40] sm:$0xff]
        %v821 = vld [vmem:[%s811 + $0x48] sm:$0xff]
        %v822 = vld [vmem:[%s811 + $0x50] sm:$0xff]
        %v823 = vld [vmem:[%s811 + $0x58] sm:$0xff]
        %v824 = vld [vmem:[%s811 + $0x60] sm:$0xff]
        %v825 = vld [vmem:[%s811 + $0x68] sm:$0xff]
        %v826 = vld [vmem:[%s811 + $0x70] sm:$0xff]
        %v827 = vld [vmem:[%s811 + $0x78] sm:$0xff]
        %v828 = vld [vmem:[%s811 + $0x80] sm:$0xff]
        %v829 = vld [vmem:[%s811 + $0x88] sm:$0xff]
        %v830 = vld [vmem:[%s811 + $0x90] sm:$0xff]
        %v831 = vld [vmem:[%s811 + $0x98] sm:$0xff]
        %v832 = vld [vmem:[%s811 + $0xa0] sm:$0xff]
        %v833 = vld [vmem:[%s811 + $0xa8] sm:$0xff]
        %v834 = vld [vmem:[%s811 + $0xb0] sm:$0xff]
        %v835 = vld [vmem:[%s811 + $0xb8] sm:$0xff]
        %v836 = vld [vmem:[%s811 + $0xc0] sm:$0xff]
        %v837 = vld [vmem:[%s811 + $0xc8] sm:$0xff]
        %v838 = vld [vmem:[%s811 + $0xd0] sm:$0xff]
        %v839 = vld [vmem:[%s811 + $0xd8] sm:$0xff]
        %v840 = vld [vmem:[%s811 + $0xe0] sm:$0xff]
        %v841 = vld [vmem:[%s811 + $0xe8] sm:$0xff]
        %v842 = vld [vmem:[%s811 + $0xf0] sm:$0xff]
        %v843 = vld [vmem:[%s811 + $0xf8] sm:$0xff]
        %v846 = vunpack.c.l.b16 %v810
        %v847 = vunpack.c.h.b16 %v810
        %v848 = vunpack.c.l.b16 %v776
        %v849 = vunpack.c.h.b16 %v776
        %v850 = vpack.c.b16 %v848, %v846
        %v851 = vpack.c.b16 %v849, %v847
        %v852 = vrot.slane %v850, 1
        %v853 = vrot.slane %v851, 1
        %v888 = vunpack.c.l.b16 %v812
        %v889 = vunpack.c.h.b16 %v812
        %v890 = vunpack.c.l.b16 %v813
        %v891 = vunpack.c.h.b16 %v813
        %v892 = vunpack.c.l.b16 %v814
        %v893 = vunpack.c.h.b16 %v814
        %v894 = vunpack.c.l.b16 %v815
        %v895 = vunpack.c.h.b16 %v815
        %v896 = vunpack.c.l.b16 %v816
        %v897 = vunpack.c.h.b16 %v816
        %v898 = vunpack.c.l.b16 %v817
        %v899 = vunpack.c.h.b16 %v817
        %v900 = vunpack.c.l.b16 %v818
        %v901 = vunpack.c.h.b16 %v818
        %v902 = vunpack.c.l.b16 %v819
        %v903 = vunpack.c.h.b16 %v819
        %v904 = vunpack.c.l.b16 %v820
        %v905 = vunpack.c.h.b16 %v820
        %v906 = vunpack.c.l.b16 %v821
        %v907 = vunpack.c.h.b16 %v821
        %v908 = vunpack.c.l.b16 %v822
        %v909 = vunpack.c.h.b16 %v822
        %v910 = vunpack.c.l.b16 %v823
        %v911 = vunpack.c.h.b16 %v823
        %v912 = vunpack.c.l.b16 %v824
        %v913 = vunpack.c.h.b16 %v824
        %v914 = vunpack.c.l.b16 %v825
        %v915 = vunpack.c.h.b16 %v825
        %v916 = vunpack.c.l.b16 %v826
        %v917 = vunpack.c.h.b16 %v826
        %v918 = vunpack.c.l.b16 %v827
        %v919 = vunpack.c.h.b16 %v827
        %v920 = vunpack.c.l.b16 %v828
        %v921 = vunpack.c.h.b16 %v828
        %v922 = vunpack.c.l.b16 %v829
        %v923 = vunpack.c.h.b16 %v829
        %v924 = vunpack.c.l.b16 %v830
        %v925 = vunpack.c.h.b16 %v830
        %v926 = vunpack.c.l.b16 %v831
        %v927 = vunpack.c.h.b16 %v831
        %v928 = vunpack.c.l.b16 %v832
        %v929 = vunpack.c.h.b16 %v832
        %v930 = vunpack.c.l.b16 %v833
        %v931 = vunpack.c.h.b16 %v833
        %v932 = vunpack.c.l.b16 %v834
        %v933 = vunpack.c.h.b16 %v834
        %v934 = vunpack.c.l.b16 %v835
        %v935 = vunpack.c.h.b16 %v835
        %v936 = vunpack.c.l.b16 %v836
        %v937 = vunpack.c.h.b16 %v836
        %v938 = vunpack.c.l.b16 %v837
        %v939 = vunpack.c.h.b16 %v837
        %v940 = vunpack.c.l.b16 %v838
        %v941 = vunpack.c.h.b16 %v838
        %v942 = vunpack.c.l.b16 %v839
        %v943 = vunpack.c.h.b16 %v839
        %v944 = vunpack.c.l.b16 %v840
        %v945 = vunpack.c.h.b16 %v840
        %v946 = vunpack.c.l.b16 %v841
        %v947 = vunpack.c.h.b16 %v841
        %v948 = vunpack.c.l.b16 %v842
        %v949 = vunpack.c.h.b16 %v842
        %v950 = vunpack.c.l.b16 %v843
        %v951 = vunpack.c.h.b16 %v843
        %v952 = vpack.c.b16 %v890, %v888
        %v953 = vpack.c.b16 %v891, %v889
        %v954 = vpack.c.b16 %v894, %v892
        %v955 = vpack.c.b16 %v895, %v893
        %v956 = vpack.c.b16 %v898, %v896
        %v957 = vpack.c.b16 %v899, %v897
        %v958 = vpack.c.b16 %v902, %v900
        %v959 = vpack.c.b16 %v903, %v901
        %v960 = vpack.c.b16 %v906, %v904
        %v961 = vpack.c.b16 %v907, %v905
        %v962 = vpack.c.b16 %v910, %v908
        %v963 = vpack.c.b16 %v911, %v909
        %v964 = vpack.c.b16 %v914, %v912
        %v965 = vpack.c.b16 %v915, %v913
        %v966 = vpack.c.b16 %v918, %v916
        %v967 = vpack.c.b16 %v919, %v917
        %v968 = vpack.c.b16 %v922, %v920
        %v969 = vpack.c.b16 %v923, %v921
        %v970 = vpack.c.b16 %v926, %v924
        %v971 = vpack.c.b16 %v927, %v925
        %v972 = vpack.c.b16 %v930, %v928
        %v973 = vpack.c.b16 %v931, %v929
        %v974 = vpack.c.b16 %v934, %v932
        %v975 = vpack.c.b16 %v935, %v933
        %v976 = vpack.c.b16 %v938, %v936
        %v977 = vpack.c.b16 %v939, %v937
        %v978 = vpack.c.b16 %v942, %v940
        %v979 = vpack.c.b16 %v943, %v941
        %v980 = vpack.c.b16 %v946, %v944
        %v981 = vpack.c.b16 %v947, %v945
        %v982 = vpack.c.b16 %v950, %v948
        %v983 = vpack.c.b16 %v951, %v949
        %1016 = vmatpush.bf16.msra.mxu0 %v966
        %1017 = vmatpush.bf16.msra.mxu0 %v964
        %1018 = vmatpush.bf16.msra.mxu0 %v962
        %1019 = vmatpush.bf16.msra.mxu0 %v960
        %1020 = vmatpush.bf16.msra.mxu0 %v958
        %1021 = vmatpush.bf16.msra.mxu0 %v956
        %1022 = vmatpush.bf16.msra.mxu0 %v954
        %1023 = vmatpush.bf16.msra.mxu0 %v952
        %1024 = vmatmul.bf16.gmra.mxu0 %v852
        %v1025 = vpop.f32.mrf.mxu0
        %v1026 = vadd.f32 0.0, %v1025
        %v1027 = vpop.f32.mrf.mxu0
        %1028 = vdwg.mxu0
        %1029 = vmatpush.bf16.msra.mxu0 %v982
        %1030 = vmatpush.bf16.msra.mxu0 %v980
        %1031 = vmatpush.bf16.msra.mxu0 %v978
        %1032 = vmatpush.bf16.msra.mxu0 %v976
        %1033 = vmatpush.bf16.msra.mxu0 %v974
        %1034 = vmatpush.bf16.msra.mxu0 %v972
        %1035 = vmatpush.bf16.msra.mxu0 %v970
        %1036 = vmatpush.bf16.msra.mxu0 %v968
        %1037 = vmatmul.bf16.gmra.mxu0 %v853
        %v1038 = vpop.f32.mrf.mxu0
        %v1039 = vadd.f32 %v1026, %v1038
        %v1040 = vpop.f32.mrf.mxu0
        %1041 = vdwg.mxu0
        %1042 = vmatpush.bf16.msra.mxu0 %v967
        %1043 = vmatpush.bf16.msra.mxu0 %v965
        %1044 = vmatpush.bf16.msra.mxu0 %v963
        %1045 = vmatpush.bf16.msra.mxu0 %v961
        %1046 = vmatpush.bf16.msra.mxu0 %v959
        %1047 = vmatpush.bf16.msra.mxu0 %v957
        %1048 = vmatpush.bf16.msra.mxu0 %v955
        %1049 = vmatpush.bf16.msra.mxu0 %v953
        %1050 = vmatmul.bf16.gmra.mxu0 %v852
        %v1051 = vpop.f32.mrf.mxu0
        %v1052 = vadd.f32 0.0, %v1051
        %v1053 = vpop.f32.mrf.mxu0
        %1054 = vdwg.mxu0
        %1055 = vmatpush.bf16.msra.mxu0 %v983
        %1056 = vmatpush.bf16.msra.mxu0 %v981
        %1057 = vmatpush.bf16.msra.mxu0 %v979
        %1058 = vmatpush.bf16.msra.mxu0 %v977
        %1059 = vmatpush.bf16.msra.mxu0 %v975
        %1060 = vmatpush.bf16.msra.mxu0 %v973
        %1061 = vmatpush.bf16.msra.mxu0 %v971
        %1062 = vmatpush.bf16.msra.mxu0 %v969
        %1063 = vmatmul.bf16.gmra.mxu0 %v853
        %v1064 = vpop.f32.mrf.mxu0
        %v1065 = vadd.f32 %v1052, %v1064
        %v1066 = vpop.f32.mrf.mxu0
        %1067 = vdwg.mxu0
        %v1069 = vunpack.c.l.b16 %v775
        %v1070 = vunpack.c.h.b16 %v775
        %v1071 = vpack.c.b16 %v848, %v1069
        %v1072 = vpack.c.b16 %v849, %v1070
        %v1074 = vshrl.u32 %v1071, 16
        %v1076 = vshll.u32 %v1071, 16
        %v1078 = vrot.slane %v1076, 1
        %v1079 = vor.u32 %v1074, %v1078
        %v1081 = vshrl.u32 %v1072, 16
        %v1083 = vshll.u32 %v1072, 16
        %v1085 = vrot.slane %v1083, 1
        %v1086 = vor.u32 %v1081, %v1085
        %v1121 = vunpack.c.l.b16 %v778
        %v1122 = vunpack.c.h.b16 %v778
        %v1123 = vunpack.c.l.b16 %v779
        %v1124 = vunpack.c.h.b16 %v779
        %v1125 = vunpack.c.l.b16 %v780
        %v1126 = vunpack.c.h.b16 %v780
        %v1127 = vunpack.c.l.b16 %v781
        %v1128 = vunpack.c.h.b16 %v781
        %v1129 = vunpack.c.l.b16 %v782
        %v1130 = vunpack.c.h.b16 %v782
        %v1131 = vunpack.c.l.b16 %v783
        %v1132 = vunpack.c.h.b16 %v783
        %v1133 = vunpack.c.l.b16 %v784
        %v1134 = vunpack.c.h.b16 %v784
        %v1135 = vunpack.c.l.b16 %v785
        %v1136 = vunpack.c.h.b16 %v785
        %v1137 = vunpack.c.l.b16 %v786
        %v1138 = vunpack.c.h.b16 %v786
        %v1139 = vunpack.c.l.b16 %v787
        %v1140 = vunpack.c.h.b16 %v787
        %v1141 = vunpack.c.l.b16 %v788
        %v1142 = vunpack.c.h.b16 %v788
        %v1143 = vunpack.c.l.b16 %v789
        %v1144 = vunpack.c.h.b16 %v789
        %v1145 = vunpack.c.l.b16 %v790
        %v1146 = vunpack.c.h.b16 %v790
        %v1147 = vunpack.c.l.b16 %v791
        %v1148 = vunpack.c.h.b16 %v791
        %v1149 = vunpack.c.l.b16 %v792
        %v1150 = vunpack.c.h.b16 %v792
        %v1151 = vunpack.c.l.b16 %v793
        %v1152 = vunpack.c.h.b16 %v793
        %v1153 = vunpack.c.l.b16 %v794
        %v1154 = vunpack.c.h.b16 %v794
        %v1155 = vunpack.c.l.b16 %v795
        %v1156 = vunpack.c.h.b16 %v795
        %v1157 = vunpack.c.l.b16 %v796
        %v1158 = vunpack.c.h.b16 %v796
        %v1159 = vunpack.c.l.b16 %v797
        %v1160 = vunpack.c.h.b16 %v797
        %v1161 = vunpack.c.l.b16 %v798
        %v1162 = vunpack.c.h.b16 %v798
        %v1163 = vunpack.c.l.b16 %v799
        %v1164 = vunpack.c.h.b16 %v799
        %v1165 = vunpack.c.l.b16 %v800
        %v1166 = vunpack.c.h.b16 %v800
        %v1167 = vunpack.c.l.b16 %v801
        %v1168 = vunpack.c.h.b16 %v801
        %v1169 = vunpack.c.l.b16 %v802
        %v1170 = vunpack.c.h.b16 %v802
        %v1171 = vunpack.c.l.b16 %v803
        %v1172 = vunpack.c.h.b16 %v803
        %v1173 = vunpack.c.l.b16 %v804
        %v1174 = vunpack.c.h.b16 %v804
        %v1175 = vunpack.c.l.b16 %v805
        %v1176 = vunpack.c.h.b16 %v805
        %v1177 = vunpack.c.l.b16 %v806
        %v1178 = vunpack.c.h.b16 %v806
        %v1179 = vunpack.c.l.b16 %v807
        %v1180 = vunpack.c.h.b16 %v807
        %v1181 = vunpack.c.l.b16 %v808
        %v1182 = vunpack.c.h.b16 %v808
        %v1183 = vunpack.c.l.b16 %v809
        %v1184 = vunpack.c.h.b16 %v809
        %v1185 = vpack.c.b16 %v1123, %v1121
        %v1186 = vpack.c.b16 %v1124, %v1122
        %v1187 = vpack.c.b16 %v1127, %v1125
        %v1188 = vpack.c.b16 %v1128, %v1126
        %v1189 = vpack.c.b16 %v1131, %v1129
        %v1190 = vpack.c.b16 %v1132, %v1130
        %v1191 = vpack.c.b16 %v1135, %v1133
        %v1192 = vpack.c.b16 %v1136, %v1134
        %v1193 = vpack.c.b16 %v1139, %v1137
        %v1194 = vpack.c.b16 %v1140, %v1138
        %v1195 = vpack.c.b16 %v1143, %v1141
        %v1196 = vpack.c.b16 %v1144, %v1142
        %v1197 = vpack.c.b16 %v1147, %v1145
        %v1198 = vpack.c.b16 %v1148, %v1146
        %v1199 = vpack.c.b16 %v1151, %v1149
        %v1200 = vpack.c.b16 %v1152, %v1150
        %v1201 = vpack.c.b16 %v1155, %v1153
        %v1202 = vpack.c.b16 %v1156, %v1154
        %v1203 = vpack.c.b16 %v1159, %v1157
        %v1204 = vpack.c.b16 %v1160, %v1158
        %v1205 = vpack.c.b16 %v1163, %v1161
        %v1206 = vpack.c.b16 %v1164, %v1162
        %v1207 = vpack.c.b16 %v1167, %v1165
        %v1208 = vpack.c.b16 %v1168, %v1166
        %v1209 = vpack.c.b16 %v1171, %v1169
        %v1210 = vpack.c.b16 %v1172, %v1170
        %v1211 = vpack.c.b16 %v1175, %v1173
        %v1212 = vpack.c.b16 %v1176, %v1174
        %v1213 = vpack.c.b16 %v1179, %v1177
        %v1214 = vpack.c.b16 %v1180, %v1178
        %v1215 = vpack.c.b16 %v1183, %v1181
        %v1216 = vpack.c.b16 %v1184, %v1182
        %1249 = vmatpush.bf16.msra.mxu0 %v1199
        %1250 = vmatpush.bf16.msra.mxu0 %v1197
        %1251 = vmatpush.bf16.msra.mxu0 %v1195
        %1252 = vmatpush.bf16.msra.mxu0 %v1193
        %1253 = vmatpush.bf16.msra.mxu0 %v1191
        %1254 = vmatpush.bf16.msra.mxu0 %v1189
        %1255 = vmatpush.bf16.msra.mxu0 %v1187
        %1256 = vmatpush.bf16.msra.mxu0 %v1185
        %1257 = vmatmul.bf16.gmra.mxu0 %v1079
        %v1258 = vpop.f32.mrf.mxu0
        %v1259 = vadd.f32 %v1039, %v1258
        %v1260 = vpop.f32.mrf.mxu0
        %1261 = vdwg.mxu0
        %1262 = vmatpush.bf16.msra.mxu0 %v1215
        %1263 = vmatpush.bf16.msra.mxu0 %v1213
        %1264 = vmatpush.bf16.msra.mxu0 %v1211
        %1265 = vmatpush.bf16.msra.mxu0 %v1209
        %1266 = vmatpush.bf16.msra.mxu0 %v1207
        %1267 = vmatpush.bf16.msra.mxu0 %v1205
        %1268 = vmatpush.bf16.msra.mxu0 %v1203
        %1269 = vmatpush.bf16.msra.mxu0 %v1201
        %1270 = vmatmul.bf16.gmra.mxu0 %v1086
        %v1271 = vpop.f32.mrf.mxu0
        %v1272 = vadd.f32 %v1259, %v1271
        %v1273 = vpop.f32.mrf.mxu0
        %1274 = vdwg.mxu0
        %1275 = vmatpush.bf16.msra.mxu0 %v1200
        %1276 = vmatpush.bf16.msra.mxu0 %v1198
        %1277 = vmatpush.bf16.msra.mxu0 %v1196
        %1278 = vmatpush.bf16.msra.mxu0 %v1194
        %1279 = vmatpush.bf16.msra.mxu0 %v1192
        %1280 = vmatpush.bf16.msra.mxu0 %v1190
        %1281 = vmatpush.bf16.msra.mxu0 %v1188
        %1282 = vmatpush.bf16.msra.mxu0 %v1186
        %1283 = vmatmul.bf16.gmra.mxu0 %v1079
        %v1284 = vpop.f32.mrf.mxu0
        %v1285 = vadd.f32 %v1065, %v1284
        %v1286 = vpop.f32.mrf.mxu0
        %1287 = vdwg.mxu0
        %1288 = vmatpush.bf16.msra.mxu0 %v1216
        %1289 = vmatpush.bf16.msra.mxu0 %v1214
        %1290 = vmatpush.bf16.msra.mxu0 %v1212
        %1291 = vmatpush.bf16.msra.mxu0 %v1210
        %1292 = vmatpush.bf16.msra.mxu0 %v1208
        %1293 = vmatpush.bf16.msra.mxu0 %v1206
        %1294 = vmatpush.bf16.msra.mxu0 %v1204
        %1295 = vmatpush.bf16.msra.mxu0 %v1202
        %1296 = vmatmul.bf16.gmra.mxu0 %v1086
        %v1297 = vpop.f32.mrf.mxu0
        %v1298 = vadd.f32 %v1285, %v1297
        %v1299 = vpop.f32.mrf.mxu0
        %1300 = vdwg.mxu0
        %v1301 = vld [vmem:[#allocation5] sm:$0x3]
        %v1303 = vperm.slane %v1301, 0
        %v1304 = vperm.slane %v1301, 1
        %v1307 = vadd.f32 %v1272, %v1303
        %v1308 = vadd.f32 %v1298, %v1304
        %v1309 = vmax.f32 %v1307, 0.0
        %v1310 = vmax.f32 %v1308, 0.0
        %v1311 = vpack.c.bf16 %v1310, %v1309
        %1312 = vst [vmem:[%s202 + $0x8] sm:$0xff] %v1311
        %p1313 = scmp.lt.s32.totalorder %s16, 1
        %s1314 = scalar_select %p1313, %s16, 1
        %s1315 = smul.addr %s1314, 4
        %s1316 = smul.addr %s1315, 4
        %s1317 = scalar_lea.vmem %s3, %s1316
        // Predicated region
        $region41: #{_lambda_.6} parent=31 // pred_check
          %p1318 = pneg %p102
        $region42: #{_lambda_.6} parent=31 // pred_check_branch
          %1320 = sbr.rel (%p1318) target = $region44
        $region43: #{_lambda_.6} parent=31 // pred_region
          _
        $region44: #{_lambda_.6} parent=31 // pred_fallthru
          _
      $region32: #{_lambda_.6} parent=5 // pred_fallthru
        _
      %p1321 = scmp.le.s32.totalorder 2, %s11
      // Predicated region
      $region45: #{_lambda_.6} parent=5 // pred_check
        %p1322 = pneg %p1321
      $region46: #{_lambda_.6} parent=5 // pred_check_branch
        %1324 = sbr.rel (%p1322) target = $region48
      $region47: #{_lambda_.6} parent=5 // pred_region
        %s1325 = ssub.s32 %s11, 2
        // Predicated region
        $region49: #{_lambda_.6} parent=47 // pred_check
          %p1326 = pneg %p108
        $region50: #{_lambda_.6} parent=47 // pred_check_branch
          %1328 = sbr.rel (%p1326) target = $region52
        $region51: #{_lambda_.6} parent=47 // pred_region
          %p1329 = scmp.lt.s32.totalorder %s17, 1
          %s1330 = scalar_select %p1329, %s17, 1
          %s1331 = smul.addr %s1330, 4
          %s1332 = smul.addr %s1331, 4
          %s1333 = scalar_lea.vmem %s3, %s1332
        $region52: #{_lambda_.6} parent=47 // pred_fallthru
          _
      $region48: #{_lambda_.6} parent=5 // pred_fallthru
        _
    $region6: #{_lambda_.6} parent=1 // loop_footer
      %s15 = sadd.s32 1, %s11
    $region7: #{_lambda_.6} parent=1 // loop_footer_branch
      %10 = sbr.rel target = $region3
    $region8: #{_lambda_.6} parent=1 // loop_exit
      _
    %1334 = vsyncpa [#allocation4], 1
    %s1335 = scalar_lea.sflag [#allocation4], 1
    %1336 = vsyncpa %s1335, 1
    %1337 = vsyncpa [#allocation6], 1

// kernel: _lambda_.7
$region0: #{_lambda_.7}
  #allocation0 [shape = 'u32[]', space=smem, size = 0x4, offset = 0x4, fixed_abs, tag = 'smem constant byte address 0x4 - core index']
  #allocation1 [shape = 'u32[72,128]{1,0:T(1,128)}', space=vmem, size = 0x9000, scoped, tag = 'internal scratch']
  #allocation2 [shape = 'bf16[18,256]{1,0:T(8,128)(2,1)}', space=vmem, size = 0x3000, scoped, tag = 'scratch operand']
  %s0 = inlined_call_operand.vmem [shape: bf16[2,16,256], index: 0, kind: input, shape index: {}]
  %s1 = inlined_call_operand.hbm [shape: bf16[4,256,256], index: 1, kind: input, shape index: {}]
  %s2 = inlined_call_operand.hbm [shape: f32[1,256], index: 2, kind: input, shape index: {}]
  %s3 = inlined_call_operand.vmem [shape: bf16[2,16,512], index: 3, kind: output, shape index: {}]
  %s4 = sld [smem:[#allocation0]]
  $region53: #{_lambda_.7} parent=0
    _
  %s6 = ssub.s32 1, %s4
  %s7 = scalar_select 0, %s6, %s4
  $region1: #{_lambda_.7} parent=0
    #allocation3 [shape = 'u8[524288]{0}', space=vmem, size = 0x80000, scoped, tag = 'input window, operand 1, single buffered']
    #allocation4 [shape = 's32[2]{0}', space=sflag, size = 0x8, scoped, tag = 'scoped memory for _lambda_.7']
    #allocation5 [shape = 'u8[1024]{0}', space=vmem, size = 0x400, scoped, tag = 'input window, operand 2, single buffered']
    #allocation6 [shape = 's32[1]{0}', space=sflag, size = 0x4, scoped, tag = 'scoped memory for _lambda_.7']
    %8 = vsyncpa [#allocation4], 0
    %9 = vsyncpa [#allocation6], 0
    loop: start=0, step=1, limit=4
    $region2: #{_lambda_.7} parent=1 // loop_pre_header
      _
    $region3: #{_lambda_.7} parent=1 // loop_header
      %s11 = sphi 0, %s15
      %p12 = scmp.ge.s32.totalorder %s11, 4
      %s21 = sphi 0, %s23
      %s24 = sphi 0, %s21
      %s25 = sphi 0, %s24
      %s41 = sphi 0, %s25
      %s45 = sphi 0, %s45
      %s47 = sphi 0, %s45
      %s48 = sphi 0, %s47
      %s62 = sphi 0, %s48
      %s66 = sphi 0, %s66
      %s68 = sphi 0, %s66
      %s69 = sphi 0, %s68
      %s83 = sphi 0, %s69
      %s89 = sphi 0, %s91
      %s92 = sphi 0, %s89
      %s93 = sphi 0, %s92
      %s109 = sphi 0, %s93
    $region4: #{_lambda_.7} parent=1 // loop_header_branch
      %14 = sbr.rel (%p12) target = $region8
    $region5: #{_lambda_.7} parent=1 // loop_body
      %s16 = ssub.s32 %s11, 1
      %s17 = ssub.s32 %s11, 2
      %s18 = sadd.s32 %s11, 1
      %s19 = ssub.s32 %s11, %s18
      %p20 = scmp.eq.s32.totalorder %s19, 0
      %s22 = sadd.s32 %s21, 1
      %s23 = scalar_select %p20, %s21, %s22
      %p26 = pneg %p20
      %p27 = scmp.eq.s32.totalorder %s11, 1
      %p28 = por %p26, %p27
      %p29 = scmp.ne.s32.totalorder %s21, %s24
      %p30 = scmp.eq.s32.totalorder %s11, 0
      %p31 = por %p29, %p30
      %p32 = scmp.ne.s32.totalorder %s21, %s24
      %p33 = scmp.eq.s32.totalorder %s16, 1
      %p34 = por %p32, %p33
      %p35 = scmp.ne.s32.totalorder %s24, %s25
      %p36 = scmp.eq.s32.totalorder %s16, 0
      %p37 = por %p35, %p36
      %p38 = scmp.ne.s32.totalorder %s24, %s25
      %p39 = scmp.eq.s32.totalorder %s17, 1
      %p40 = por %p38, %p39
      %p42 = scmp.ne.s32.totalorder %s25, %s41
      %p43 = scmp.eq.s32.totalorder %s17, 0
      %p44 = por %p42, %p43
      %s46 = sadd.s32 %s45, 1
      %p49 = scmp.eq.s32.totalorder %s11, 1
      %p50 = scmp.ne.s32.totalorder %s45, %s47
      %p51 = scmp.eq.s32.totalorder %s11, 0
      %p52 = por %p50, %p51
      %p53 = scmp.ne.s32.totalorder %s45, %s47
      %p54 = scmp.eq.s32.totalorder %s16, 1
      %p55 = por %p53, %p54
      %p56 = scmp.ne.s32.totalorder %s47, %s48
      %p57 = scmp.eq.s32.totalorder %s16, 0
      %p58 = por %p56, %p57
      %p59 = scmp.ne.s32.totalorder %s47, %s48
      %p60 = scmp.eq.s32.totalorder %s17, 1
      %p61 = por %p59, %p60
      %p63 = scmp.ne.s32.totalorder %s48, %s62
      %p64 = scmp.eq.s32.totalorder %s17, 0
      %p65 = por %p63, %p64
      %s67 = sadd.s32 %s66, 1
      %p70 = scmp.eq.s32.totalorder %s11, 1
      %p71 = scmp.ne.s32.totalorder %s66, %s68
      %p72 = scmp.eq.s32.totalorder %s11, 0
      %p73 = por %p71, %p72
      %p74 = scmp.ne.s32.totalorder %s66, %s68
      %p75 = scmp.eq.s32.totalorder %s16, 1
      %p76 = por %p74, %p75
      %p77 = scmp.ne.s32.totalorder %s68, %s69
      %p78 = scmp.eq.s32.totalorder %s16, 0
      %p79 = por %p77, %p78
      %p80 = scmp.ne.s32.totalorder %s68, %s69
      %p81 = scmp.eq.s32.totalorder %s17, 1
      %p82 = por %p80, %p81
      %p84 = scmp.ne.s32.totalorder %s69, %s83
      %p85 = scmp.eq.s32.totalorder %s17, 0
      %p86 = por %p84, %p85
      %s87 = ssub.s32 %s11, %s18
      %p88 = scmp.eq.s32.totalorder %s87, 0
      %s90 = sadd.s32 %s89, 1
      %s91 = scalar_select %p88, %s89, %s90
      %p94 = pneg %p88
      %p95 = scmp.eq.s32.totalorder %s11, 1
      %p96 = por %p94, %p95
      %p97 = scmp.ne.s32.totalorder %s89, %s92
      %p98 = scmp.eq.s32.totalorder %s11, 0
      %p99 = por %p97, %p98
      %p100 = scmp.ne.s32.totalorder %s89, %s92
      %p101 = scmp.eq.s32.totalorder %s16, 1
      %p102 = por %p100, %p101
      %p103 = scmp.ne.s32.totalorder %s92, %s93
      %p104 = scmp.eq.s32.totalorder %s16, 0
      %p105 = por %p103, %p104
      %p106 = scmp.ne.s32.totalorder %s92, %s93
      %p107 = scmp.eq.s32.totalorder %s17, 1
      %p108 = por %p106, %p107
      %p110 = scmp.ne.s32.totalorder %s93, %s109
      %p111 = scmp.eq.s32.totalorder %s17, 0
      %p112 = por %p110, %p111
      %p113 = scmp.le.s32.totalorder 1, %s11
      %p114 = scmp.lt.s32.totalorder %s11, 3
      %p115 = pnand %p113, %p114
      %p116 = pneg %p115
      // Predicated region
      $region9: #{_lambda_.7} parent=5 // pred_check
        _
      $region10: #{_lambda_.7} parent=5 // pred_check_branch
        %118 = sbr.rel (%p115) target = $region12
      $region11: #{_lambda_.7} parent=5 // pred_region
        %s119 = ssub.s32 %s11, 1
        // Predicated region
        $region13: #{_lambda_.7} parent=11 // pred_check
          %p120 = pneg %p58
        $region14: #{_lambda_.7} parent=11 // pred_check_branch
          %122 = sbr.rel (%p120) target = $region16
        $region15: #{_lambda_.7} parent=11 // pred_region
          %124 = vsyncadd [#allocation4], 0
          %s125 = sshll.u32 %s1, 4
          %s126 = int_to_ptr.hbm [resolvable:$true] %s125
          %s127 = sshll.u32 [#allocation3], 4
          %s128 = int_to_ptr.vmem [resolvable:$true] %s127
          %133 = dma.hbm_to_vmem [thread:$0]  %s126, 16384, %s128, [#allocation4], 128, 128, 8
        $region16: #{_lambda_.7} parent=11 // pred_fallthru
          _
        // Predicated region
        $region17: #{_lambda_.7} parent=11 // pred_check
          %p134 = pneg %p79
        $region18: #{_lambda_.7} parent=11 // pred_check_branch
          %136 = sbr.rel (%p134) target = $region20
        $region19: #{_lambda_.7} parent=11 // pred_region
          %138 = vsyncadd [#allocation6], 0
          %s140 = sshll.u32 %s2, 4
          %s141 = int_to_ptr.hbm [resolvable:$true] %s140
          %s142 = sshll.u32 [#allocation5], 4
          %s143 = int_to_ptr.vmem [resolvable:$true] %s142
          %145 = dma.hbm_to_vmem [thread:$0]  %s141, 32, %s143, [#allocation6]
        $region20: #{_lambda_.7} parent=11 // pred_fallthru
          _
      $region12: #{_lambda_.7} parent=5 // pred_fallthru
        _
      %p146 = scmp.lt.s32.totalorder %s11, 2
      // Predicated region
      $region21: #{_lambda_.7} parent=5 // pred_check
        %p147 = pneg %p146
      $region22: #{_lambda_.7} parent=5 // pred_check_branch
        %149 = sbr.rel (%p147) target = $region24
      $region23: #{_lambda_.7} parent=5 // pred_region
        // Predicated region
        $region25: #{_lambda_.7} parent=23 // pred_check
          %p150 = pneg %p31
        $region26: #{_lambda_.7} parent=23 // pred_check_branch
          %152 = sbr.rel (%p150) target = $region28
        $region27: #{_lambda_.7} parent=23 // pred_region
          %p153 = scmp.lt.s32.totalorder %s11, 1
          %s154 = scalar_select %p153, %s11, 1
          %s155 = smul.addr %s154, 4
          %s156 = smul.addr %s155, 4
          %s157 = scalar_lea.vmem %s0, %s156
        $region28: #{_lambda_.7} parent=23 // pred_fallthru
          _
      $region24: #{_lambda_.7} parent=5 // pred_fallthru
        _
      %p158 = scmp.le.s32.totalorder 1, %s11
      %p159 = scmp.lt.s32.totalorder %s11, 3
      %p160 = pnand %p158, %p159
      %p161 = pneg %p160
      // Predicated region
      $region29: #{_lambda_.7} parent=5 // pred_check
        _
      $region30: #{_lambda_.7} parent=5 // pred_check_branch
        %163 = sbr.rel (%p160) target = $region32
      $region31: #{_lambda_.7} parent=5 // pred_region
        %s164 = ssub.s32 %s11, 1
        // Predicated region
        $region33: #{_lambda_.7} parent=31 // pred_check
          %p165 = pneg %p58
        $region34: #{_lambda_.7} parent=31 // pred_check_branch
          %167 = sbr.rel (%p165) target = $region36
        $region35: #{_lambda_.7} parent=31 // pred_region
          %169 = dma.done [#allocation4], 16384
        $region36: #{_lambda_.7} parent=31 // pred_fallthru
          _
        // Predicated region
        $region37: #{_lambda_.7} parent=31 // pred_check
          %p170 = pneg %p79
        $region38: #{_lambda_.7} parent=31 // pred_check_branch
          %172 = sbr.rel (%p170) target = $region40
        $region39: #{_lambda_.7} parent=31 // pred_region
          %174 = dma.done [#allocation6], 32
        $region40: #{_lambda_.7} parent=31 // pred_fallthru
          _
        %p175 = scmp.lt.s32.totalorder %s16, 1
        %s176 = scalar_select %p175, %s16, 1
        %s177 = smul.addr %s176, 4
        %s178 = smul.addr %s177, 4
        %s179 = scalar_lea.vmem %s0, %s178
        %p180 = pneg %p37
        %p181 = pneg %p34
        %p182 = pneg %p58
        %p183 = pneg %p55
        %p184 = pneg %p79
        %p185 = pneg %p76
        %p186 = pneg %p105
        %p187 = pneg %p102
        %p188 = scmp.lt.s32.totalorder %s16, 1
        %s189 = scalar_select %p188, %s16, 1
        %s190 = smul.addr %s189, 8
        %s191 = smul.addr %s190, 4
        %s192 = scalar_lea.vmem %s3, %s191
        %p193 = scmp.lt.s32.totalorder %s16, 1
        %s194 = scalar_select %p193, %s16, 1
        %s195 = smul.addr %s194, 4
        %s196 = smul.addr %s195, 4
        %s197 = scalar_lea.vmem %s0, %s196
        %p198 = scmp.lt.s32.totalorder %s16, 1
        %s199 = scalar_select %p198, %s16, 1
        %s200 = smul.addr %s199, 8
        %s201 = smul.addr %s200, 4
        %s202 = scalar_lea.vmem %s3, %s201
        %vm204 = vcmask 1040384
        %vm205 = vsmask.f32 256
        %vm206 = vmand %vm204, %vm205
        %vm207 = vcmask 1044484
        %vm208 = vsmask.f32 4352
        %vm209 = vmand %vm207, %vm208
        %vm210 = vmor %vm209, %vm206
        %v211 = vld [vmem:[#allocation2] sm:$0x11]
        %v212 = vsel %vm210, 0, %v211
        %213 = vst [vmem:[#allocation2] sm:$0x11] %v212
        %vm214 = vsmask.f32 7938
        %vm215 = vmand %vm204, %vm214
        %vm216 = vsmask.f32 7954
        %vm217 = vmand %vm207, %vm216
        %vm218 = vmor %vm217, %vm215
        %v219 = vld [vmem:[#allocation2 + $0x10] sm:$0x11]
        %v220 = vsel %vm218, 0, %v219
        %221 = vst [vmem:[#allocation2 + $0x10] sm:$0x11] %v220
        %v222 = vld [vmem:[%s197] sm:$0xff]
        %v223 = vld [vmem:[%s197 + $0x8] sm:$0xff]
        %vm224 = vsmask.f32 4368
        %vm225 = vmor %vm205, %vm224
        %v227 = vshrl.u32 %v222, 16
        %v229 = vrot.slane %v227, 7
        %v230 = vshll.u32 %v222, 16
        %v232 = vor.u32 %v229, %v230
        %v233 = vrot.slane %v229, 4
        %v235 = vshrl.u32 %v223, 16
        %v237 = vrot.slane %v235, 7
        %v238 = vshll.u32 %v223, 16
        %v240 = vor.u32 %v237, %v238
        %v241 = vsel %vm225, %v233, %v240
        %v242 = vrot.slane %v237, 4
        %vm246 = vcmask 1043456
        %vm247 = vmand %vm246, %vm214
        %vm248 = vcmask 1047556
        %vm249 = vmand %vm248, %vm216
        %vm250 = vmor %vm249, %vm247
        %v251 = vld [vmem:[#allocation2] sm:$0xff]
        %v252 = vsel %vm250, %v232, %v251
        %253 = vst [vmem:[#allocation2] sm:$0xff] %v252
        %254 = vst [vmem:[#allocation2 + $0x8] sm:$0xff] %v241
        %v255 = vld [vmem:[#allocation2 + $0x10] sm:$0x11]
        %v256 = vsel %vm210, %v242, %v255
        %257 = vst [vmem:[#allocation2 + $0x10] sm:$0x11] %v256
        %v258 = vld [vmem:[#allocation2] sm:$0xff]
        %v259 = vld [vmem:[#allocation2 + $0x8] sm:$0xff]
        %v260 = vld [vmem:[#allocation3] sm:$0xff]
        %v261 = vld [vmem:[#allocation3 + $0x8] sm:$0xff]
        %v262 = vld [vmem:[#allocation3 + $0x10] sm:$0xff]
        %v263 = vld [vmem:[#allocation3 + $0x18] sm:$0xff]
        %v264 = vld [vmem:[#allocation3 + $0x20] sm:$0xff]
        %v265 = vld [vmem:[#allocation3 + $0x28] sm:$0xff]
        %v266 = vld [vmem:[#allocation3 + $0x30] sm:$0xff]
        %v267 = vld [vmem:[#allocation3 + $0x38] sm:$0xff]
        %v268 = vld [vmem:[#allocation3 + $0x40] sm:$0xff]
        %v269 = vld [vmem:[#allocation3 + $0x48] sm:$0xff]
        %v270 = vld [vmem:[#allocation3 + $0x50] sm:$0xff]
        %v271 = vld [vmem:[#allocation3 + $0x58] sm:$0xff]
        %v272 = vld [vmem:[#allocation3 + $0x60] sm:$0xff]
        %v273 = vld [vmem:[#allocation3 + $0x68] sm:$0xff]
        %v274 = vld [vmem:[#allocation3 + $0x70] sm:$0xff]
        %v275 = vld [vmem:[#allocation3 + $0x78] sm:$0xff]
        %v276 = vld [vmem:[#allocation3 + $0x80] sm:$0xff]
        %v277 = vld [vmem:[#allocation3 + $0x88] sm:$0xff]
        %v278 = vld [vmem:[#allocation3 + $0x90] sm:$0xff]
        %v279 = vld [vmem:[#allocation3 + $0x98] sm:$0xff]
        %v280 = vld [vmem:[#allocation3 + $0xa0] sm:$0xff]
        %v281 = vld [vmem:[#allocation3 + $0xa8] sm:$0xff]
        %v282 = vld [vmem:[#allocation3 + $0xb0] sm:$0xff]
        %v283 = vld [vmem:[#allocation3 + $0xb8] sm:$0xff]
        %v284 = vld [vmem:[#allocation3 + $0xc0] sm:$0xff]
        %v285 = vld [vmem:[#allocation3 + $0xc8] sm:$0xff]
        %v286 = vld [vmem:[#allocation3 + $0xd0] sm:$0xff]
        %v287 = vld [vmem:[#allocation3 + $0xd8] sm:$0xff]
        %v288 = vld [vmem:[#allocation3 + $0xe0] sm:$0xff]
        %v289 = vld [vmem:[#allocation3 + $0xe8] sm:$0xff]
        %v290 = vld [vmem:[#allocation3 + $0xf0] sm:$0xff]
        %v291 = vld [vmem:[#allocation3 + $0xf8] sm:$0xff]
        %v292 = vld [vmem:[#allocation2 + $0x10] sm:$0x11]
        %s293 = scalar_lea.vmem [#allocation3], 256
        %v294 = vld [vmem:[%s293] sm:$0xff]
        %v295 = vld [vmem:[%s293 + $0x8] sm:$0xff]
        %v296 = vld [vmem:[%s293 + $0x10] sm:$0xff]
        %v297 = vld [vmem:[%s293 + $0x18] sm:$0xff]
        %v298 = vld [vmem:[%s293 + $0x20] sm:$0xff]
        %v299 = vld [vmem:[%s293 + $0x28] sm:$0xff]
        %v300 = vld [vmem:[%s293 + $0x30] sm:$0xff]
        %v301 = vld [vmem:[%s293 + $0x38] sm:$0xff]
        %v302 = vld [vmem:[%s293 + $0x40] sm:$0xff]
        %v303 = vld [vmem:[%s293 + $0x48] sm:$0xff]
        %v304 = vld [vmem:[%s293 + $0x50] sm:$0xff]
        %v305 = vld [vmem:[%s293 + $0x58] sm:$0xff]
        %v306 = vld [vmem:[%s293 + $0x60] sm:$0xff]
        %v307 = vld [vmem:[%s293 + $0x68] sm:$0xff]
        %v308 = vld [vmem:[%s293 + $0x70] sm:$0xff]
        %v309 = vld [vmem:[%s293 + $0x78] sm:$0xff]
        %v310 = vld [vmem:[%s293 + $0x80] sm:$0xff]
        %v311 = vld [vmem:[%s293 + $0x88] sm:$0xff]
        %v312 = vld [vmem:[%s293 + $0x90] sm:$0xff]
        %v313 = vld [vmem:[%s293 + $0x98] sm:$0xff]
        %v314 = vld [vmem:[%s293 + $0xa0] sm:$0xff]
        %v315 = vld [vmem:[%s293 + $0xa8] sm:$0xff]
        %v316 = vld [vmem:[%s293 + $0xb0] sm:$0xff]
        %v317 = vld [vmem:[%s293 + $0xb8] sm:$0xff]
        %v318 = vld [vmem:[%s293 + $0xc0] sm:$0xff]
        %v319 = vld [vmem:[%s293 + $0xc8] sm:$0xff]
        %v320 = vld [vmem:[%s293 + $0xd0] sm:$0xff]
        %v321 = vld [vmem:[%s293 + $0xd8] sm:$0xff]
        %v322 = vld [vmem:[%s293 + $0xe0] sm:$0xff]
        %v323 = vld [vmem:[%s293 + $0xe8] sm:$0xff]
        %v324 = vld [vmem:[%s293 + $0xf0] sm:$0xff]
        %v325 = vld [vmem:[%s293 + $0xf8] sm:$0xff]
        %v329 = vunpack.c.l.b16 %v258
        %v330 = vunpack.c.h.b16 %v258
        %v331 = vunpack.c.l.b16 %v259
        %v332 = vunpack.c.h.b16 %v259
        %v333 = vunpack.c.l.b16 %v292
        %v334 = vunpack.c.h.b16 %v292
        %v335 = vpack.c.b16 %v331, %v329
        %v336 = vpack.c.b16 %v332, %v330
        %v337 = vpack.c.b16 %v333, %v333
        %v338 = vpack.c.b16 %v334, %v334
        %vm339 = vsmask.f32 7424
        %v341 = vshrl.u32 %v335, 16
        %v343 = vshll.u32 %v335, 16
        %v345 = vrot.slane %v343, 1
        %v346 = vor.u32 %v341, %v345
        %v348 = vshll.u32 %v337, 16
        %v350 = vrot.slane %v348, 1
        %v351 = vsel %vm339, %v346, %v350
        %v353 = vshrl.u32 %v336, 16
        %v355 = vshll.u32 %v336, 16
        %v357 = vrot.slane %v355, 1
        %v358 = vor.u32 %v353, %v357
        %v360 = vshll.u32 %v338, 16
        %v362 = vrot.slane %v360, 1
        %v363 = vsel %vm339, %v358, %v362
        %v398 = vunpack.c.l.b16 %v294
        %v399 = vunpack.c.h.b16 %v294
        %v400 = vunpack.c.l.b16 %v295
        %v401 = vunpack.c.h.b16 %v295
        %v402 = vunpack.c.l.b16 %v296
        %v403 = vunpack.c.h.b16 %v296
        %v404 = vunpack.c.l.b16 %v297
        %v405 = vunpack.c.h.b16 %v297
        %v406 = vunpack.c.l.b16 %v298
        %v407 = vunpack.c.h.b16 %v298
        %v408 = vunpack.c.l.b16 %v299
        %v409 = vunpack.c.h.b16 %v299
        %v410 = vunpack.c.l.b16 %v300
        %v411 = vunpack.c.h.b16 %v300
        %v412 = vunpack.c.l.b16 %v301
        %v413 = vunpack.c.h.b16 %v301
        %v414 = vunpack.c.l.b16 %v302
        %v415 = vunpack.c.h.b16 %v302
        %v416 = vunpack.c.l.b16 %v303
        %v417 = vunpack.c.h.b16 %v303
        %v418 = vunpack.c.l.b16 %v304
        %v419 = vunpack.c.h.b16 %v304
        %v420 = vunpack.c.l.b16 %v305
        %v421 = vunpack.c.h.b16 %v305
        %v422 = vunpack.c.l.b16 %v306
        %v423 = vunpack.c.h.b16 %v306
        %v424 = vunpack.c.l.b16 %v307
        %v425 = vunpack.c.h.b16 %v307
        %v426 = vunpack.c.l.b16 %v308
        %v427 = vunpack.c.h.b16 %v308
        %v428 = vunpack.c.l.b16 %v309
        %v429 = vunpack.c.h.b16 %v309
        %v430 = vunpack.c.l.b16 %v310
        %v431 = vunpack.c.h.b16 %v310
        %v432 = vunpack.c.l.b16 %v311
        %v433 = vunpack.c.h.b16 %v311
        %v434 = vunpack.c.l.b16 %v312
        %v435 = vunpack.c.h.b16 %v312
        %v436 = vunpack.c.l.b16 %v313
        %v437 = vunpack.c.h.b16 %v313
        %v438 = vunpack.c.l.b16 %v314
        %v439 = vunpack.c.h.b16 %v314
        %v440 = vunpack.c.l.b16 %v315
        %v441 = vunpack.c.h.b16 %v315
        %v442 = vunpack.c.l.b16 %v316
        %v443 = vunpack.c.h.b16 %v316
        %v444 = vunpack.c.l.b16 %v317
        %v445 = vunpack.c.h.b16 %v317
        %v446 = vunpack.c.l.b16 %v318
        %v447 = vunpack.c.h.b16 %v318
        %v448 = vunpack.c.l.b16 %v319
        %v449 = vunpack.c.h.b16 %v319
        %v450 = vunpack.c.l.b16 %v320
        %v451 = vunpack.c.h.b16 %v320
        %v452 = vunpack.c.l.b16 %v321
        %v453 = vunpack.c.h.b16 %v321
        %v454 = vunpack.c.l.b16 %v322
        %v455 = vunpack.c.h.b16 %v322
        %v456 = vunpack.c.l.b16 %v323
        %v457 = vunpack.c.h.b16 %v323
        %v458 = vunpack.c.l.b16 %v324
        %v459 = vunpack.c.h.b16 %v324
        %v460 = vunpack.c.l.b16 %v325
        %v461 = vunpack.c.h.b16 %v325
        %v462 = vpack.c.b16 %v400, %v398
        %v463 = vpack.c.b16 %v401, %v399
        %v464 = vpack.c.b16 %v404, %v402
        %v465 = vpack.c.b16 %v405, %v403
        %v466 = vpack.c.b16 %v408, %v406
        %v467 = vpack.c.b16 %v409, %v407
        %v468 = vpack.c.b16 %v412, %v410
        %v469 = vpack.c.b16 %v413, %v411
        %v470 = vpack.c.b16 %v416, %v414
        %v471 = vpack.c.b16 %v417, %v415
        %v472 = vpack.c.b16 %v420, %v418
        %v473 = vpack.c.b16 %v421, %v419
        %v474 = vpack.c.b16 %v424, %v422
        %v475 = vpack.c.b16 %v425, %v423
        %v476 = vpack.c.b16 %v428, %v426
        %v477 = vpack.c.b16 %v429, %v427
        %v478 = vpack.c.b16 %v432, %v430
        %v479 = vpack.c.b16 %v433, %v431
        %v480 = vpack.c.b16 %v436, %v434
        %v481 = vpack.c.b16 %v437, %v435
        %v482 = vpack.c.b16 %v440, %v438
        %v483 = vpack.c.b16 %v441, %v439
        %v484 = vpack.c.b16 %v444, %v442
        %v485 = vpack.c.b16 %v445, %v443
        %v486 = vpack.c.b16 %v448, %v446
        %v487 = vpack.c.b16 %v449, %v447
        %v488 = vpack.c.b16 %v452, %v450
        %v489 = vpack.c.b16 %v453, %v451
        %v490 = vpack.c.b16 %v456, %v454
        %v491 = vpack.c.b16 %v457, %v455
        %v492 = vpack.c.b16 %v460, %v458
        %v493 = vpack.c.b16 %v461, %v459
        %526 = vmatpush.bf16.msra.mxu0 %v476
        %527 = vmatpush.bf16.msra.mxu0 %v474
        %528 = vmatpush.bf16.msra.mxu0 %v472
        %529 = vmatpush.bf16.msra.mxu0 %v470
        %530 = vmatpush.bf16.msra.mxu0 %v468
        %531 = vmatpush.bf16.msra.mxu0 %v466
        %532 = vmatpush.bf16.msra.mxu0 %v464
        %533 = vmatpush.bf16.msra.mxu0 %v462
        %534 = vmatmul.bf16.gmra.mxu0 %v351
        %v535 = vpop.f32.mrf.mxu0
        %v536 = vadd.f32 0.0, %v535
        %v537 = vpop.f32.mrf.mxu0
        %v538 = vadd.f32 0.0, %v537
        %539 = vdwg.mxu0
        %540 = vmatpush.bf16.msra.mxu0 %v492
        %541 = vmatpush.bf16.msra.mxu0 %v490
        %542 = vmatpush.bf16.msra.mxu0 %v488
        %543 = vmatpush.bf16.msra.mxu0 %v486
        %544 = vmatpush.bf16.msra.mxu0 %v484
        %545 = vmatpush.bf16.msra.mxu0 %v482
        %546 = vmatpush.bf16.msra.mxu0 %v480
        %547 = vmatpush.bf16.msra.mxu0 %v478
        %548 = vmatmul.bf16.gmra.mxu0 %v363
        %v549 = vpop.f32.mrf.mxu0
        %v550 = vadd.f32 %v536, %v549
        %v551 = vpop.f32.mrf.mxu0
        %v552 = vadd.f32 %v538, %v551
        %553 = vdwg.mxu0
        %554 = vmatpush.bf16.msra.mxu0 %v477
        %555 = vmatpush.bf16.msra.mxu0 %v475
        %556 = vmatpush.bf16.msra.mxu0 %v473
        %557 = vmatpush.bf16.msra.mxu0 %v471
        %558 = vmatpush.bf16.msra.mxu0 %v469
        %559 = vmatpush.bf16.msra.mxu0 %v467
        %560 = vmatpush.bf16.msra.mxu0 %v465
        %561 = vmatpush.bf16.msra.mxu0 %v463
        %562 = vmatmul.bf16.gmra.mxu0 %v351
        %v563 = vpop.f32.mrf.mxu0
        %v564 = vadd.f32 0.0, %v563
        %v565 = vpop.f32.mrf.mxu0
        %v566 = vadd.f32 0.0, %v565
        %567 = vdwg.mxu0
        %568 = vmatpush.bf16.msra.mxu0 %v493
        %569 = vmatpush.bf16.msra.mxu0 %v491
        %570 = vmatpush.bf16.msra.mxu0 %v489
        %571 = vmatpush.bf16.msra.mxu0 %v487
        %572 = vmatpush.bf16.msra.mxu0 %v485
        %573 = vmatpush.bf16.msra.mxu0 %v483
        %574 = vmatpush.bf16.msra.mxu0 %v481
        %575 = vmatpush.bf16.msra.mxu0 %v479
        %576 = vmatmul.bf16.gmra.mxu0 %v363
        %v577 = vpop.f32.mrf.mxu0
        %v578 = vadd.f32 %v564, %v577
        %v579 = vpop.f32.mrf.mxu0
        %v580 = vadd.f32 %v566, %v579
        %581 = vdwg.mxu0
        %v616 = vunpack.c.l.b16 %v260
        %v617 = vunpack.c.h.b16 %v260
        %v618 = vunpack.c.l.b16 %v261
        %v619 = vunpack.c.h.b16 %v261
        %v620 = vunpack.c.l.b16 %v262
        %v621 = vunpack.c.h.b16 %v262
        %v622 = vunpack.c.l.b16 %v263
        %v623 = vunpack.c.h.b16 %v263
        %v624 = vunpack.c.l.b16 %v264
        %v625 = vunpack.c.h.b16 %v264
        %v626 = vunpack.c.l.b16 %v265
        %v627 = vunpack.c.h.b16 %v265
        %v628 = vunpack.c.l.b16 %v266
        %v629 = vunpack.c.h.b16 %v266
        %v630 = vunpack.c.l.b16 %v267
        %v631 = vunpack.c.h.b16 %v267
        %v632 = vunpack.c.l.b16 %v268
        %v633 = vunpack.c.h.b16 %v268
        %v634 = vunpack.c.l.b16 %v269
        %v635 = vunpack.c.h.b16 %v269
        %v636 = vunpack.c.l.b16 %v270
        %v637 = vunpack.c.h.b16 %v270
        %v638 = vunpack.c.l.b16 %v271
        %v639 = vunpack.c.h.b16 %v271
        %v640 = vunpack.c.l.b16 %v272
        %v641 = vunpack.c.h.b16 %v272
        %v642 = vunpack.c.l.b16 %v273
        %v643 = vunpack.c.h.b16 %v273
        %v644 = vunpack.c.l.b16 %v274
        %v645 = vunpack.c.h.b16 %v274
        %v646 = vunpack.c.l.b16 %v275
        %v647 = vunpack.c.h.b16 %v275
        %v648 = vunpack.c.l.b16 %v276
        %v649 = vunpack.c.h.b16 %v276
        %v650 = vunpack.c.l.b16 %v277
        %v651 = vunpack.c.h.b16 %v277
        %v652 = vunpack.c.l.b16 %v278
        %v653 = vunpack.c.h.b16 %v278
        %v654 = vunpack.c.l.b16 %v279
        %v655 = vunpack.c.h.b16 %v279
        %v656 = vunpack.c.l.b16 %v280
        %v657 = vunpack.c.h.b16 %v280
        %v658 = vunpack.c.l.b16 %v281
        %v659 = vunpack.c.h.b16 %v281
        %v660 = vunpack.c.l.b16 %v282
        %v661 = vunpack.c.h.b16 %v282
        %v662 = vunpack.c.l.b16 %v283
        %v663 = vunpack.c.h.b16 %v283
        %v664 = vunpack.c.l.b16 %v284
        %v665 = vunpack.c.h.b16 %v284
        %v666 = vunpack.c.l.b16 %v285
        %v667 = vunpack.c.h.b16 %v285
        %v668 = vunpack.c.l.b16 %v286
        %v669 = vunpack.c.h.b16 %v286
        %v670 = vunpack.c.l.b16 %v287
        %v671 = vunpack.c.h.b16 %v287
        %v672 = vunpack.c.l.b16 %v288
        %v673 = vunpack.c.h.b16 %v288
        %v674 = vunpack.c.l.b16 %v289
        %v675 = vunpack.c.h.b16 %v289
        %v676 = vunpack.c.l.b16 %v290
        %v677 = vunpack.c.h.b16 %v290
        %v678 = vunpack.c.l.b16 %v291
        %v679 = vunpack.c.h.b16 %v291
        %v680 = vpack.c.b16 %v618, %v616
        %v681 = vpack.c.b16 %v619, %v617
        %v682 = vpack.c.b16 %v622, %v620
        %v683 = vpack.c.b16 %v623, %v621
        %v684 = vpack.c.b16 %v626, %v624
        %v685 = vpack.c.b16 %v627, %v625
        %v686 = vpack.c.b16 %v630, %v628
        %v687 = vpack.c.b16 %v631, %v629
        %v688 = vpack.c.b16 %v634, %v632
        %v689 = vpack.c.b16 %v635, %v633
        %v690 = vpack.c.b16 %v638, %v636
        %v691 = vpack.c.b16 %v639, %v637
        %v692 = vpack.c.b16 %v642, %v640
        %v693 = vpack.c.b16 %v643, %v641
        %v694 = vpack.c.b16 %v646, %v644
        %v695 = vpack.c.b16 %v647, %v645
        %v696 = vpack.c.b16 %v650, %v648
        %v697 = vpack.c.b16 %v651, %v649
        %v698 = vpack.c.b16 %v654, %v652
        %v699 = vpack.c.b16 %v655, %v653
        %v700 = vpack.c.b16 %v658, %v656
        %v701 = vpack.c.b16 %v659, %v657
        %v702 = vpack.c.b16 %v662, %v660
        %v703 = vpack.c.b16 %v663, %v661
        %v704 = vpack.c.b16 %v666, %v664
        %v705 = vpack.c.b16 %v667, %v665
        %v706 = vpack.c.b16 %v670, %v668
        %v707 = vpack.c.b16 %v671, %v669
        %v708 = vpack.c.b16 %v674, %v672
        %v709 = vpack.c.b16 %v675, %v673
        %v710 = vpack.c.b16 %v678, %v676
        %v711 = vpack.c.b16 %v679, %v677
        %744 = vmatpush.bf16.msra.mxu0 %v694
        %745 = vmatpush.bf16.msra.mxu0 %v692
        %746 = vmatpush.bf16.msra.mxu0 %v690
        %747 = vmatpush.bf16.msra.mxu0 %v688
        %748 = vmatpush.bf16.msra.mxu0 %v686
        %749 = vmatpush.bf16.msra.mxu0 %v684
        %750 = vmatpush.bf16.msra.mxu0 %v682
        %751 = vmatpush.bf16.msra.mxu0 %v680
        %752 = vmatmul.bf16.gmra.mxu0 %v335
        %v753 = vpop.f32.mrf.mxu0
        %v754 = vadd.f32 %v550, %v753
        %v755 = vpop.f32.mrf.mxu0
        %v756 = vadd.f32 %v552, %v755
        %757 = vdwg.mxu0
        %758 = vmatpush.bf16.msra.mxu0 %v710
        %759 = vmatpush.bf16.msra.mxu0 %v708
        %760 = vmatpush.bf16.msra.mxu0 %v706
        %761 = vmatpush.bf16.msra.mxu0 %v704
        %762 = vmatpush.bf16.msra.mxu0 %v702
        %763 = vmatpush.bf16.msra.mxu0 %v700
        %764 = vmatpush.bf16.msra.mxu0 %v698
        %765 = vmatpush.bf16.msra.mxu0 %v696
        %766 = vmatmul.bf16.gmra.mxu0 %v336
        %v767 = vpop.f32.mrf.mxu0
        %v768 = vadd.f32 %v754, %v767
        %v769 = vpop.f32.mrf.mxu0
        %v770 = vadd.f32 %v756, %v769
        %771 = vdwg.mxu0
        %772 = vmatpush.bf16.msra.mxu0 %v695
        %773 = vmatpush.bf16.msra.mxu0 %v693
        %774 = vmatpush.bf16.msra.mxu0 %v691
        %775 = vmatpush.bf16.msra.mxu0 %v689
        %776 = vmatpush.bf16.msra.mxu0 %v687
        %777 = vmatpush.bf16.msra.mxu0 %v685
        %778 = vmatpush.bf16.msra.mxu0 %v683
        %779 = vmatpush.bf16.msra.mxu0 %v681
        %780 = vmatmul.bf16.gmra.mxu0 %v335
        %v781 = vpop.f32.mrf.mxu0
        %v782 = vadd.f32 %v578, %v781
        %v783 = vpop.f32.mrf.mxu0
        %v784 = vadd.f32 %v580, %v783
        %785 = vdwg.mxu0
        %786 = vmatpush.bf16.msra.mxu0 %v711
        %787 = vmatpush.bf16.msra.mxu0 %v709
        %788 = vmatpush.bf16.msra.mxu0 %v707
        %789 = vmatpush.bf16.msra.mxu0 %v705
        %790 = vmatpush.bf16.msra.mxu0 %v703
        %791 = vmatpush.bf16.msra.mxu0 %v701
        %792 = vmatpush.bf16.msra.mxu0 %v699
        %793 = vmatpush.bf16.msra.mxu0 %v697
        %794 = vmatmul.bf16.gmra.mxu0 %v336
        %v795 = vpop.f32.mrf.mxu0
        %v796 = vadd.f32 %v782, %v795
        %v797 = vpop.f32.mrf.mxu0
        %v798 = vadd.f32 %v784, %v797
        %799 = vdwg.mxu0
        %v800 = vld [vmem:[#allocation5] sm:$0x3]
        %v802 = vperm.slane %v800, 0
        %v803 = vperm.slane %v800, 1
        %v806 = vadd.f32 %v768, %v802
        %v807 = vadd.f32 %v796, %v803
        %v808 = vadd.f32 %v770, %v802
        %v809 = vadd.f32 %v798, %v803
        %v810 = vmax.f32 %v806, 0.0
        %v811 = vmax.f32 %v807, 0.0
        %v812 = vmax.f32 %v808, 0.0
        %v813 = vmax.f32 %v809, 0.0
        %v814 = vpack.c.bf16 %v811, %v810
        %v815 = vpack.c.bf16 %v813, %v812
        %816 = vst [vmem:[%s202] sm:$0xff] %v814
        %817 = vst [vmem:[%s202 + $0x10] sm:$0xff] %v815
        %v818 = vld [vmem:[#allocation2] sm:$0xff]
        %v819 = vld [vmem:[#allocation2 + $0x8] sm:$0xff]
        %v820 = vld [vmem:[#allocation2 + $0x10] sm:$0x11]
        %s821 = scalar_lea.vmem [#allocation3], 512
        %v822 = vld [vmem:[%s821] sm:$0xff]
        %v823 = vld [vmem:[%s821 + $0x8] sm:$0xff]
        %v824 = vld [vmem:[%s821 + $0x10] sm:$0xff]
        %v825 = vld [vmem:[%s821 + $0x18] sm:$0xff]
        %v826 = vld [vmem:[%s821 + $0x20] sm:$0xff]
        %v827 = vld [vmem:[%s821 + $0x28] sm:$0xff]
        %v828 = vld [vmem:[%s821 + $0x30] sm:$0xff]
        %v829 = vld [vmem:[%s821 + $0x38] sm:$0xff]
        %v830 = vld [vmem:[%s821 + $0x40] sm:$0xff]
        %v831 = vld [vmem:[%s821 + $0x48] sm:$0xff]
        %v832 = vld [vmem:[%s821 + $0x50] sm:$0xff]
        %v833 = vld [vmem:[%s821 + $0x58] sm:$0xff]
        %v834 = vld [vmem:[%s821 + $0x60] sm:$0xff]
        %v835 = vld [vmem:[%s821 + $0x68] sm:$0xff]
        %v836 = vld [vmem:[%s821 + $0x70] sm:$0xff]
        %v837 = vld [vmem:[%s821 + $0x78] sm:$0xff]
        %v838 = vld [vmem:[%s821 + $0x80] sm:$0xff]
        %v839 = vld [vmem:[%s821 + $0x88] sm:$0xff]
        %v840 = vld [vmem:[%s821 + $0x90] sm:$0xff]
        %v841 = vld [vmem:[%s821 + $0x98] sm:$0xff]
        %v842 = vld [vmem:[%s821 + $0xa0] sm:$0xff]
        %v843 = vld [vmem:[%s821 + $0xa8] sm:$0xff]
        %v844 = vld [vmem:[%s821 + $0xb0] sm:$0xff]
        %v845 = vld [vmem:[%s821 + $0xb8] sm:$0xff]
        %v846 = vld [vmem:[%s821 + $0xc0] sm:$0xff]
        %v847 = vld [vmem:[%s821 + $0xc8] sm:$0xff]
        %v848 = vld [vmem:[%s821 + $0xd0] sm:$0xff]
        %v849 = vld [vmem:[%s821 + $0xd8] sm:$0xff]
        %v850 = vld [vmem:[%s821 + $0xe0] sm:$0xff]
        %v851 = vld [vmem:[%s821 + $0xe8] sm:$0xff]
        %v852 = vld [vmem:[%s821 + $0xf0] sm:$0xff]
        %v853 = vld [vmem:[%s821 + $0xf8] sm:$0xff]
        %v854 = vld [vmem:[#allocation2] sm:$0xee]
        %s855 = scalar_lea.vmem [#allocation3], 768
        %v856 = vld [vmem:[%s855] sm:$0xff]
        %v857 = vld [vmem:[%s855 + $0x8] sm:$0xff]
        %v858 = vld [vmem:[%s855 + $0x10] sm:$0xff]
        %v859 = vld [vmem:[%s855 + $0x18] sm:$0xff]
        %v860 = vld [vmem:[%s855 + $0x20] sm:$0xff]
        %v861 = vld [vmem:[%s855 + $0x28] sm:$0xff]
        %v862 = vld [vmem:[%s855 + $0x30] sm:$0xff]
        %v863 = vld [vmem:[%s855 + $0x38] sm:$0xff]
        %v864 = vld [vmem:[%s855 + $0x40] sm:$0xff]
        %v865 = vld [vmem:[%s855 + $0x48] sm:$0xff]
        %v866 = vld [vmem:[%s855 + $0x50] sm:$0xff]
        %v867 = vld [vmem:[%s855 + $0x58] sm:$0xff]
        %v868 = vld [vmem:[%s855 + $0x60] sm:$0xff]
        %v869 = vld [vmem:[%s855 + $0x68] sm:$0xff]
        %v870 = vld [vmem:[%s855 + $0x70] sm:$0xff]
        %v871 = vld [vmem:[%s855 + $0x78] sm:$0xff]
        %v872 = vld [vmem:[%s855 + $0x80] sm:$0xff]
        %v873 = vld [vmem:[%s855 + $0x88] sm:$0xff]
        %v874 = vld [vmem:[%s855 + $0x90] sm:$0xff]
        %v875 = vld [vmem:[%s855 + $0x98] sm:$0xff]
        %v876 = vld [vmem:[%s855 + $0xa0] sm:$0xff]
        %v877 = vld [vmem:[%s855 + $0xa8] sm:$0xff]
        %v878 = vld [vmem:[%s855 + $0xb0] sm:$0xff]
        %v879 = vld [vmem:[%s855 + $0xb8] sm:$0xff]
        %v880 = vld [vmem:[%s855 + $0xc0] sm:$0xff]
        %v881 = vld [vmem:[%s855 + $0xc8] sm:$0xff]
        %v882 = vld [vmem:[%s855 + $0xd0] sm:$0xff]
        %v883 = vld [vmem:[%s855 + $0xd8] sm:$0xff]
        %v884 = vld [vmem:[%s855 + $0xe0] sm:$0xff]
        %v885 = vld [vmem:[%s855 + $0xe8] sm:$0xff]
        %v886 = vld [vmem:[%s855 + $0xf0] sm:$0xff]
        %v887 = vld [vmem:[%s855 + $0xf8] sm:$0xff]
        %v891 = vunpack.c.l.b16 %v854
        %v892 = vunpack.c.h.b16 %v854
        %v893 = vunpack.c.l.b16 %v819
        %v894 = vunpack.c.h.b16 %v819
        %v895 = vunpack.c.l.b16 %v820
        %v896 = vunpack.c.h.b16 %v820
        %v897 = vpack.c.b16 %v893, %v891
        %v898 = vpack.c.b16 %v894, %v892
        %v899 = vpack.c.b16 %v895, %v895
        %v900 = vpack.c.b16 %v896, %v896
        %vm901 = vcmask 1046528
        %v902 = vrot.slane %v897, 1
        %v903 = vrot.slane %v899, 1
        %v904 = vsel %vm901, %v902, %v903
        %v905 = vrot.slane %v898, 1
        %v906 = vrot.slane %v900, 1
        %v907 = vsel %vm901, %v905, %v906
        %v942 = vunpack.c.l.b16 %v856
        %v943 = vunpack.c.h.b16 %v856
        %v944 = vunpack.c.l.b16 %v857
        %v945 = vunpack.c.h.b16 %v857
        %v946 = vunpack.c.l.b16 %v858
        %v947 = vunpack.c.h.b16 %v858
        %v948 = vunpack.c.l.b16 %v859
        %v949 = vunpack.c.h.b16 %v859
        %v950 = vunpack.c.l.b16 %v860
        %v951 = vunpack.c.h.b16 %v860
        %v952 = vunpack.c.l.b16 %v861
        %v953 = vunpack.c.h.b16 %v861
        %v954 = vunpack.c.l.b16 %v862
        %v955 = vunpack.c.h.b16 %v862
        %v956 = vunpack.c.l.b16 %v863
        %v957 = vunpack.c.h.b16 %v863
        %v958 = vunpack.c.l.b16 %v864
        %v959 = vunpack.c.h.b16 %v864
        %v960 = vunpack.c.l.b16 %v865
        %v961 = vunpack.c.h.b16 %v865
        %v962 = vunpack.c.l.b16 %v866
        %v963 = vunpack.c.h.b16 %v866
        %v964 = vunpack.c.l.b16 %v867
        %v965 = vunpack.c.h.b16 %v867
        %v966 = vunpack.c.l.b16 %v868
        %v967 = vunpack.c.h.b16 %v868
        %v968 = vunpack.c.l.b16 %v869
        %v969 = vunpack.c.h.b16 %v869
        %v970 = vunpack.c.l.b16 %v870
        %v971 = vunpack.c.h.b16 %v870
        %v972 = vunpack.c.l.b16 %v871
        %v973 = vunpack.c.h.b16 %v871
        %v974 = vunpack.c.l.b16 %v872
        %v975 = vunpack.c.h.b16 %v872
        %v976 = vunpack.c.l.b16 %v873
        %v977 = vunpack.c.h.b16 %v873
        %v978 = vunpack.c.l.b16 %v874
        %v979 = vunpack.c.h.b16 %v874
        %v980 = vunpack.c.l.b16 %v875
        %v981 = vunpack.c.h.b16 %v875
        %v982 = vunpack.c.l.b16 %v876
        %v983 = vunpack.c.h.b16 %v876
        %v984 = vunpack.c.l.b16 %v877
        %v985 = vunpack.c.h.b16 %v877
        %v986 = vunpack.c.l.b16 %v878
        %v987 = vunpack.c.h.b16 %v878
        %v988 = vunpack.c.l.b16 %v879
        %v989 = vunpack.c.h.b16 %v879
        %v990 = vunpack.c.l.b16 %v880
        %v991 = vunpack.c.h.b16 %v880
        %v992 = vunpack.c.l.b16 %v881
        %v993 = vunpack.c.h.b16 %v881
        %v994 = vunpack.c.l.b16 %v882
        %v995 = vunpack.c.h.b16 %v882
        %v996 = vunpack.c.l.b16 %v883
        %v997 = vunpack.c.h.b16 %v883
        %v998 = vunpack.c.l.b16 %v884
        %v999 = vunpack.c.h.b16 %v884
        %v1000 = vunpack.c.l.b16 %v885
        %v1001 = vunpack.c.h.b16 %v885
        %v1002 = vunpack.c.l.b16 %v886
        %v1003 = vunpack.c.h.b16 %v886
        %v1004 = vunpack.c.l.b16 %v887
        %v1005 = vunpack.c.h.b16 %v887
        %v1006 = vpack.c.b16 %v944, %v942
        %v1007 = vpack.c.b16 %v945, %v943
        %v1008 = vpack.c.b16 %v948, %v946
        %v1009 = vpack.c.b16 %v949, %v947
        %v1010 = vpack.c.b16 %v952, %v950
        %v1011 = vpack.c.b16 %v953, %v951
        %v1012 = vpack.c.b16 %v956, %v954
        %v1013 = vpack.c.b16 %v957, %v955
        %v1014 = vpack.c.b16 %v960, %v958
        %v1015 = vpack.c.b16 %v961, %v959
        %v1016 = vpack.c.b16 %v964, %v962
        %v1017 = vpack.c.b16 %v965, %v963
        %v1018 = vpack.c.b16 %v968, %v966
        %v1019 = vpack.c.b16 %v969, %v967
        %v1020 = vpack.c.b16 %v972, %v970
        %v1021 = vpack.c.b16 %v973, %v971
        %v1022 = vpack.c.b16 %v976, %v974
        %v1023 = vpack.c.b16 %v977, %v975
        %v1024 = vpack.c.b16 %v980, %v978
        %v1025 = vpack.c.b16 %v981, %v979
        %v1026 = vpack.c.b16 %v984, %v982
        %v1027 = vpack.c.b16 %v985, %v983
        %v1028 = vpack.c.b16 %v988, %v986
        %v1029 = vpack.c.b16 %v989, %v987
        %v1030 = vpack.c.b16 %v992, %v990
        %v1031 = vpack.c.b16 %v993, %v991
        %v1032 = vpack.c.b16 %v996, %v994
        %v1033 = vpack.c.b16 %v997, %v995
        %v1034 = vpack.c.b16 %v1000, %v998
        %v1035 = vpack.c.b16 %v1001, %v999
        %v1036 = vpack.c.b16 %v1004, %v1002
        %v1037 = vpack.c.b16 %v1005, %v1003
        %1070 = vmatpush.bf16.msra.mxu0 %v1020
        %1071 = vmatpush.bf16.msra.mxu0 %v1018
        %1072 = vmatpush.bf16.msra.mxu0 %v1016
        %1073 = vmatpush.bf16.msra.mxu0 %v1014
        %1074 = vmatpush.bf16.msra.mxu0 %v1012
        %1075 = vmatpush.bf16.msra.mxu0 %v1010
        %1076 = vmatpush.bf16.msra.mxu0 %v1008
        %1077 = vmatpush.bf16.msra.mxu0 %v1006
        %1078 = vmatmul.bf16.gmra.mxu0 %v904
        %v1079 = vpop.f32.mrf.mxu0
        %v1080 = vadd.f32 0.0, %v1079
        %v1081 = vpop.f32.mrf.mxu0
        %v1082 = vadd.f32 0.0, %v1081
        %1083 = vdwg.mxu0
        %1084 = vmatpush.bf16.msra.mxu0 %v1036
        %1085 = vmatpush.bf16.msra.mxu0 %v1034
        %1086 = vmatpush.bf16.msra.mxu0 %v1032
        %1087 = vmatpush.bf16.msra.mxu0 %v1030
        %1088 = vmatpush.bf16.msra.mxu0 %v1028
        %1089 = vmatpush.bf16.msra.mxu0 %v1026
        %1090 = vmatpush.bf16.msra.mxu0 %v1024
        %1091 = vmatpush.bf16.msra.mxu0 %v1022
        %1092 = vmatmul.bf16.gmra.mxu0 %v907
        %v1093 = vpop.f32.mrf.mxu0
        %v1094 = vadd.f32 %v1080, %v1093
        %v1095 = vpop.f32.mrf.mxu0
        %v1096 = vadd.f32 %v1082, %v1095
        %1097 = vdwg.mxu0
        %1098 = vmatpush.bf16.msra.mxu0 %v1021
        %1099 = vmatpush.bf16.msra.mxu0 %v1019
        %1100 = vmatpush.bf16.msra.mxu0 %v1017
        %1101 = vmatpush.bf16.msra.mxu0 %v1015
        %1102 = vmatpush.bf16.msra.mxu0 %v1013
        %1103 = vmatpush.bf16.msra.mxu0 %v1011
        %1104 = vmatpush.bf16.msra.mxu0 %v1009
        %1105 = vmatpush.bf16.msra.mxu0 %v1007
        %1106 = vmatmul.bf16.gmra.mxu0 %v904
        %v1107 = vpop.f32.mrf.mxu0
        %v1108 = vadd.f32 0.0, %v1107
        %v1109 = vpop.f32.mrf.mxu0
        %v1110 = vadd.f32 0.0, %v1109
        %1111 = vdwg.mxu0
        %1112 = vmatpush.bf16.msra.mxu0 %v1037
        %1113 = vmatpush.bf16.msra.mxu0 %v1035
        %1114 = vmatpush.bf16.msra.mxu0 %v1033
        %1115 = vmatpush.bf16.msra.mxu0 %v1031
        %1116 = vmatpush.bf16.msra.mxu0 %v1029
        %1117 = vmatpush.bf16.msra.mxu0 %v1027
        %1118 = vmatpush.bf16.msra.mxu0 %v1025
        %1119 = vmatpush.bf16.msra.mxu0 %v1023
        %1120 = vmatmul.bf16.gmra.mxu0 %v907
        %v1121 = vpop.f32.mrf.mxu0
        %v1122 = vadd.f32 %v1108, %v1121
        %v1123 = vpop.f32.mrf.mxu0
        %v1124 = vadd.f32 %v1110, %v1123
        %1125 = vdwg.mxu0
        %v1127 = vunpack.c.l.b16 %v818
        %v1128 = vunpack.c.h.b16 %v818
        %v1129 = vpack.c.b16 %v893, %v1127
        %v1130 = vpack.c.b16 %v894, %v1128
        %v1132 = vshrl.u32 %v1129, 16
        %v1134 = vshll.u32 %v1129, 16
        %v1136 = vrot.slane %v1134, 1
        %v1137 = vor.u32 %v1132, %v1136
        %v1139 = vshll.u32 %v899, 16
        %v1141 = vrot.slane %v1139, 1
        %v1142 = vsel %vm339, %v1137, %v1141
        %v1144 = vshrl.u32 %v1130, 16
        %v1146 = vshll.u32 %v1130, 16
        %v1148 = vrot.slane %v1146, 1
        %v1149 = vor.u32 %v1144, %v1148
        %v1151 = vshll.u32 %v900, 16
        %v1153 = vrot.slane %v1151, 1
        %v1154 = vsel %vm339, %v1149, %v1153
        %v1189 = vunpack.c.l.b16 %v822
        %v1190 = vunpack.c.h.b16 %v822
        %v1191 = vunpack.c.l.b16 %v823
        %v1192 = vunpack.c.h.b16 %v823
        %v1193 = vunpack.c.l.b16 %v824
        %v1194 = vunpack.c.h.b16 %v824
        %v1195 = vunpack.c.l.b16 %v825
        %v1196 = vunpack.c.h.b16 %v825
        %v1197 = vunpack.c.l.b16 %v826
        %v1198 = vunpack.c.h.b16 %v826
        %v1199 = vunpack.c.l.b16 %v827
        %v1200 = vunpack.c.h.b16 %v827
        %v1201 = vunpack.c.l.b16 %v828
        %v1202 = vunpack.c.h.b16 %v828
        %v1203 = vunpack.c.l.b16 %v829
        %v1204 = vunpack.c.h.b16 %v829
        %v1205 = vunpack.c.l.b16 %v830
        %v1206 = vunpack.c.h.b16 %v830
        %v1207 = vunpack.c.l.b16 %v831
        %v1208 = vunpack.c.h.b16 %v831
        %v1209 = vunpack.c.l.b16 %v832
        %v1210 = vunpack.c.h.b16 %v832
        %v1211 = vunpack.c.l.b16 %v833
        %v1212 = vunpack.c.h.b16 %v833
        %v1213 = vunpack.c.l.b16 %v834
        %v1214 = vunpack.c.h.b16 %v834
        %v1215 = vunpack.c.l.b16 %v835
        %v1216 = vunpack.c.h.b16 %v835
        %v1217 = vunpack.c.l.b16 %v836
        %v1218 = vunpack.c.h.b16 %v836
        %v1219 = vunpack.c.l.b16 %v837
        %v1220 = vunpack.c.h.b16 %v837
        %v1221 = vunpack.c.l.b16 %v838
        %v1222 = vunpack.c.h.b16 %v838
        %v1223 = vunpack.c.l.b16 %v839
        %v1224 = vunpack.c.h.b16 %v839
        %v1225 = vunpack.c.l.b16 %v840
        %v1226 = vunpack.c.h.b16 %v840
        %v1227 = vunpack.c.l.b16 %v841
        %v1228 = vunpack.c.h.b16 %v841
        %v1229 = vunpack.c.l.b16 %v842
        %v1230 = vunpack.c.h.b16 %v842
        %v1231 = vunpack.c.l.b16 %v843
        %v1232 = vunpack.c.h.b16 %v843
        %v1233 = vunpack.c.l.b16 %v844
        %v1234 = vunpack.c.h.b16 %v844
        %v1235 = vunpack.c.l.b16 %v845
        %v1236 = vunpack.c.h.b16 %v845
        %v1237 = vunpack.c.l.b16 %v846
        %v1238 = vunpack.c.h.b16 %v846
        %v1239 = vunpack.c.l.b16 %v847
        %v1240 = vunpack.c.h.b16 %v847
        %v1241 = vunpack.c.l.b16 %v848
        %v1242 = vunpack.c.h.b16 %v848
        %v1243 = vunpack.c.l.b16 %v849
        %v1244 = vunpack.c.h.b16 %v849
        %v1245 = vunpack.c.l.b16 %v850
        %v1246 = vunpack.c.h.b16 %v850
        %v1247 = vunpack.c.l.b16 %v851
        %v1248 = vunpack.c.h.b16 %v851
        %v1249 = vunpack.c.l.b16 %v852
        %v1250 = vunpack.c.h.b16 %v852
        %v1251 = vunpack.c.l.b16 %v853
        %v1252 = vunpack.c.h.b16 %v853
        %v1253 = vpack.c.b16 %v1191, %v1189
        %v1254 = vpack.c.b16 %v1192, %v1190
        %v1255 = vpack.c.b16 %v1195, %v1193
        %v1256 = vpack.c.b16 %v1196, %v1194
        %v1257 = vpack.c.b16 %v1199, %v1197
        %v1258 = vpack.c.b16 %v1200, %v1198
        %v1259 = vpack.c.b16 %v1203, %v1201
        %v1260 = vpack.c.b16 %v1204, %v1202
        %v1261 = vpack.c.b16 %v1207, %v1205
        %v1262 = vpack.c.b16 %v1208, %v1206
        %v1263 = vpack.c.b16 %v1211, %v1209
        %v1264 = vpack.c.b16 %v1212, %v1210
        %v1265 = vpack.c.b16 %v1215, %v1213
        %v1266 = vpack.c.b16 %v1216, %v1214
        %v1267 = vpack.c.b16 %v1219, %v1217
        %v1268 = vpack.c.b16 %v1220, %v1218
        %v1269 = vpack.c.b16 %v1223, %v1221
        %v1270 = vpack.c.b16 %v1224, %v1222
        %v1271 = vpack.c.b16 %v1227, %v1225
        %v1272 = vpack.c.b16 %v1228, %v1226
        %v1273 = vpack.c.b16 %v1231, %v1229
        %v1274 = vpack.c.b16 %v1232, %v1230
        %v1275 = vpack.c.b16 %v1235, %v1233
        %v1276 = vpack.c.b16 %v1236, %v1234
        %v1277 = vpack.c.b16 %v1239, %v1237
        %v1278 = vpack.c.b16 %v1240, %v1238
        %v1279 = vpack.c.b16 %v1243, %v1241
        %v1280 = vpack.c.b16 %v1244, %v1242
        %v1281 = vpack.c.b16 %v1247, %v1245
        %v1282 = vpack.c.b16 %v1248, %v1246
        %v1283 = vpack.c.b16 %v1251, %v1249
        %v1284 = vpack.c.b16 %v1252, %v1250
        %1317 = vmatpush.bf16.msra.mxu0 %v1267
        %1318 = vmatpush.bf16.msra.mxu0 %v1265
        %1319 = vmatpush.bf16.msra.mxu0 %v1263
        %1320 = vmatpush.bf16.msra.mxu0 %v1261
        %1321 = vmatpush.bf16.msra.mxu0 %v1259
        %1322 = vmatpush.bf16.msra.mxu0 %v1257
        %1323 = vmatpush.bf16.msra.mxu0 %v1255
        %1324 = vmatpush.bf16.msra.mxu0 %v1253
        %1325 = vmatmul.bf16.gmra.mxu0 %v1142
        %v1326 = vpop.f32.mrf.mxu0
        %v1327 = vadd.f32 %v1094, %v1326
        %v1328 = vpop.f32.mrf.mxu0
        %v1329 = vadd.f32 %v1096, %v1328
        %1330 = vdwg.mxu0
        %1331 = vmatpush.bf16.msra.mxu0 %v1283
        %1332 = vmatpush.bf16.msra.mxu0 %v1281
        %1333 = vmatpush.bf16.msra.mxu0 %v1279
        %1334 = vmatpush.bf16.msra.mxu0 %v1277
        %1335 = vmatpush.bf16.msra.mxu0 %v1275
        %1336 = vmatpush.bf16.msra.mxu0 %v1273
        %1337 = vmatpush.bf16.msra.mxu0 %v1271
        %1338 = vmatpush.bf16.msra.mxu0 %v1269
        %1339 = vmatmul.bf16.gmra.mxu0 %v1154
        %v1340 = vpop.f32.mrf.mxu0
        %v1341 = vadd.f32 %v1327, %v1340
        %v1342 = vpop.f32.mrf.mxu0
        %v1343 = vadd.f32 %v1329, %v1342
        %1344 = vdwg.mxu0
        %1345 = vmatpush.bf16.msra.mxu0 %v1268
        %1346 = vmatpush.bf16.msra.mxu0 %v1266
        %1347 = vmatpush.bf16.msra.mxu0 %v1264
        %1348 = vmatpush.bf16.msra.mxu0 %v1262
        %1349 = vmatpush.bf16.msra.mxu0 %v1260
        %1350 = vmatpush.bf16.msra.mxu0 %v1258
        %1351 = vmatpush.bf16.msra.mxu0 %v1256
        %1352 = vmatpush.bf16.msra.mxu0 %v1254
        %1353 = vmatmul.bf16.gmra.mxu0 %v1142
        %v1354 = vpop.f32.mrf.mxu0
        %v1355 = vadd.f32 %v1122, %v1354
        %v1356 = vpop.f32.mrf.mxu0
        %v1357 = vadd.f32 %v1124, %v1356
        %1358 = vdwg.mxu0
        %1359 = vmatpush.bf16.msra.mxu0 %v1284
        %1360 = vmatpush.bf16.msra.mxu0 %v1282
        %1361 = vmatpush.bf16.msra.mxu0 %v1280
        %1362 = vmatpush.bf16.msra.mxu0 %v1278
        %1363 = vmatpush.bf16.msra.mxu0 %v1276
        %1364 = vmatpush.bf16.msra.mxu0 %v1274
        %1365 = vmatpush.bf16.msra.mxu0 %v1272
        %1366 = vmatpush.bf16.msra.mxu0 %v1270
        %1367 = vmatmul.bf16.gmra.mxu0 %v1154
        %v1368 = vpop.f32.mrf.mxu0
        %v1369 = vadd.f32 %v1355, %v1368
        %v1370 = vpop.f32.mrf.mxu0
        %v1371 = vadd.f32 %v1357, %v1370
        %1372 = vdwg.mxu0
        %v1373 = vld [vmem:[#allocation5] sm:$0x3]
        %v1375 = vperm.slane %v1373, 0
        %v1376 = vperm.slane %v1373, 1
        %v1379 = vadd.f32 %v1341, %v1375
        %v1380 = vadd.f32 %v1369, %v1376
        %v1381 = vadd.f32 %v1343, %v1375
        %v1382 = vadd.f32 %v1371, %v1376
        %v1383 = vmax.f32 %v1379, 0.0
        %v1384 = vmax.f32 %v1380, 0.0
        %v1385 = vmax.f32 %v1381, 0.0
        %v1386 = vmax.f32 %v1382, 0.0
        %v1387 = vpack.c.bf16 %v1384, %v1383
        %v1388 = vpack.c.bf16 %v1386, %v1385
        %1389 = vst [vmem:[%s202 + $0x8] sm:$0xff] %v1387
        %1390 = vst [vmem:[%s202 + $0x18] sm:$0xff] %v1388
        %p1391 = scmp.lt.s32.totalorder %s16, 1
        %s1392 = scalar_select %p1391, %s16, 1
        %s1393 = smul.addr %s1392, 8
        %s1394 = smul.addr %s1393, 4
        %s1395 = scalar_lea.vmem %s3, %s1394
        // Predicated region
        $region41: #{_lambda_.7} parent=31 // pred_check
          %p1396 = pneg %p102
        $region42: #{_lambda_.7} parent=31 // pred_check_branch
          %1398 = sbr.rel (%p1396) target = $region44
        $region43: #{_lambda_.7} parent=31 // pred_region
          _
        $region44: #{_lambda_.7} parent=31 // pred_fallthru
          _
      $region32: #{_lambda_.7} parent=5 // pred_fallthru
        _
      %p1399 = scmp.le.s32.totalorder 2, %s11
      // Predicated region
      $region45: #{_lambda_.7} parent=5 // pred_check
        %p1400 = pneg %p1399
      $region46: #{_lambda_.7} parent=5 // pred_check_branch
        %1402 = sbr.rel (%p1400) target = $region48
      $region47: #{_lambda_.7} parent=5 // pred_region
        %s1403 = ssub.s32 %s11, 2
        // Predicated region
        $region49: #{_lambda_.7} parent=47 // pred_check
          %p1404 = pneg %p108
        $region50: #{_lambda_.7} parent=47 // pred_check_branch
          %1406 = sbr.rel (%p1404) target = $region52
        $region51: #{_lambda_.7} parent=47 // pred_region
          %p1407 = scmp.lt.s32.totalorder %s17, 1
          %s1408 = scalar_select %p1407, %s17, 1
          %s1409 = smul.addr %s1408, 8
          %s1410 = smul.addr %s1409, 4
          %s1411 = scalar_lea.vmem %s3, %s1410
        $region52: #{_lambda_.7} parent=47 // pred_fallthru
          _
      $region48: #{_lambda_.7} parent=5 // pred_fallthru
        _
    $region6: #{_lambda_.7} parent=1 // loop_footer
      %s15 = sadd.s32 1, %s11
    $region7: #{_lambda_.7} parent=1 // loop_footer_branch
      %10 = sbr.rel target = $region3
    $region8: #{_lambda_.7} parent=1 // loop_exit
      _
    %1412 = vsyncpa [#allocation4], 1
    %s1413 = scalar_lea.sflag [#allocation4], 1
    %1414 = vsyncpa %s1413, 1
    %1415 = vsyncpa [#allocation6], 1

// kernel: _lambda_.8
$region0: #{_lambda_.8}
  #allocation0 [shape = 'u32[]', space=smem, size = 0x4, offset = 0x4, fixed_abs, tag = 'smem constant byte address 0x4 - core index']
  #allocation1 [shape = 'u32[72,128]{1,0:T(1,128)}', space=vmem, size = 0x9000, scoped, tag = 'internal scratch']
  #allocation2 [shape = 'bf16[34,256]{1,0:T(8,128)(2,1)}', space=vmem, size = 0x5000, scoped, tag = 'scratch operand']
  %s0 = inlined_call_operand.vmem [shape: bf16[2,32,256], index: 0, kind: input, shape index: {}]
  %s1 = inlined_call_operand.hbm [shape: bf16[4,256,256], index: 1, kind: input, shape index: {}]
  %s2 = inlined_call_operand.hbm [shape: f32[1,256], index: 2, kind: input, shape index: {}]
  %s3 = inlined_call_operand.vmem [shape: bf16[2,32,512], index: 3, kind: output, shape index: {}]
  %s4 = sld [smem:[#allocation0]]
  $region53: #{_lambda_.8} parent=0
    _
  %s6 = ssub.s32 1, %s4
  %s7 = scalar_select 0, %s6, %s4
  $region1: #{_lambda_.8} parent=0
    #allocation3 [shape = 'u8[524288]{0}', space=vmem, size = 0x80000, scoped, tag = 'input window, operand 1, single buffered']
    #allocation4 [shape = 's32[2]{0}', space=sflag, size = 0x8, scoped, tag = 'scoped memory for _lambda_.8']
    #allocation5 [shape = 'u8[1024]{0}', space=vmem, size = 0x400, scoped, tag = 'input window, operand 2, single buffered']
    #allocation6 [shape = 's32[1]{0}', space=sflag, size = 0x4, scoped, tag = 'scoped memory for _lambda_.8']
    %8 = vsyncpa [#allocation4], 0
    %9 = vsyncpa [#allocation6], 0
    loop: start=0, step=1, limit=4
    $region2: #{_lambda_.8} parent=1 // loop_pre_header
      _
    $region3: #{_lambda_.8} parent=1 // loop_header
      %s11 = sphi 0, %s15
      %p12 = scmp.ge.s32.totalorder %s11, 4
      %s21 = sphi 0, %s23
      %s24 = sphi 0, %s21
      %s25 = sphi 0, %s24
      %s41 = sphi 0, %s25
      %s45 = sphi 0, %s45
      %s47 = sphi 0, %s45
      %s48 = sphi 0, %s47
      %s62 = sphi 0, %s48
      %s66 = sphi 0, %s66
      %s68 = sphi 0, %s66
      %s69 = sphi 0, %s68
      %s83 = sphi 0, %s69
      %s89 = sphi 0, %s91
      %s92 = sphi 0, %s89
      %s93 = sphi 0, %s92
      %s109 = sphi 0, %s93
    $region4: #{_lambda_.8} parent=1 // loop_header_branch
      %14 = sbr.rel (%p12) target = $region8
    $region5: #{_lambda_.8} parent=1 // loop_body
      %s16 = ssub.s32 %s11, 1
      %s17 = ssub.s32 %s11, 2
      %s18 = sadd.s32 %s11, 1
      %s19 = ssub.s32 %s11, %s18
      %p20 = scmp.eq.s32.totalorder %s19, 0
      %s22 = sadd.s32 %s21, 1
      %s23 = scalar_select %p20, %s21, %s22
      %p26 = pneg %p20
      %p27 = scmp.eq.s32.totalorder %s11, 1
      %p28 = por %p26, %p27
      %p29 = scmp.ne.s32.totalorder %s21, %s24
      %p30 = scmp.eq.s32.totalorder %s11, 0
      %p31 = por %p29, %p30
      %p32 = scmp.ne.s32.totalorder %s21, %s24
      %p33 = scmp.eq.s32.totalorder %s16, 1
      %p34 = por %p32, %p33
      %p35 = scmp.ne.s32.totalorder %s24, %s25
      %p36 = scmp.eq.s32.totalorder %s16, 0
      %p37 = por %p35, %p36
      %p38 = scmp.ne.s32.totalorder %s24, %s25
      %p39 = scmp.eq.s32.totalorder %s17, 1
      %p40 = por %p38, %p39
      %p42 = scmp.ne.s32.totalorder %s25, %s41
      %p43 = scmp.eq.s32.totalorder %s17, 0
      %p44 = por %p42, %p43
      %s46 = sadd.s32 %s45, 1
      %p49 = scmp.eq.s32.totalorder %s11, 1
      %p50 = scmp.ne.s32.totalorder %s45, %s47
      %p51 = scmp.eq.s32.totalorder %s11, 0
      %p52 = por %p50, %p51
      %p53 = scmp.ne.s32.totalorder %s45, %s47
      %p54 = scmp.eq.s32.totalorder %s16, 1
      %p55 = por %p53, %p54
      %p56 = scmp.ne.s32.totalorder %s47, %s48
      %p57 = scmp.eq.s32.totalorder %s16, 0
      %p58 = por %p56, %p57
      %p59 = scmp.ne.s32.totalorder %s47, %s48
      %p60 = scmp.eq.s32.totalorder %s17, 1
      %p61 = por %p59, %p60
      %p63 = scmp.ne.s32.totalorder %s48, %s62
      %p64 = scmp.eq.s32.totalorder %s17, 0
      %p65 = por %p63, %p64
      %s67 = sadd.s32 %s66, 1
      %p70 = scmp.eq.s32.totalorder %s11, 1
      %p71 = scmp.ne.s32.totalorder %s66, %s68
      %p72 = scmp.eq.s32.totalorder %s11, 0
      %p73 = por %p71, %p72
      %p74 = scmp.ne.s32.totalorder %s66, %s68
      %p75 = scmp.eq.s32.totalorder %s16, 1
      %p76 = por %p74, %p75
      %p77 = scmp.ne.s32.totalorder %s68, %s69
      %p78 = scmp.eq.s32.totalorder %s16, 0
      %p79 = por %p77, %p78
      %p80 = scmp.ne.s32.totalorder %s68, %s69
      %p81 = scmp.eq.s32.totalorder %s17, 1
      %p82 = por %p80, %p81
      %p84 = scmp.ne.s32.totalorder %s69, %s83
      %p85 = scmp.eq.s32.totalorder %s17, 0
      %p86 = por %p84, %p85
      %s87 = ssub.s32 %s11, %s18
      %p88 = scmp.eq.s32.totalorder %s87, 0
      %s90 = sadd.s32 %s89, 1
      %s91 = scalar_select %p88, %s89, %s90
      %p94 = pneg %p88
      %p95 = scmp.eq.s32.totalorder %s11, 1
      %p96 = por %p94, %p95
      %p97 = scmp.ne.s32.totalorder %s89, %s92
      %p98 = scmp.eq.s32.totalorder %s11, 0
      %p99 = por %p97, %p98
      %p100 = scmp.ne.s32.totalorder %s89, %s92
      %p101 = scmp.eq.s32.totalorder %s16, 1
      %p102 = por %p100, %p101
      %p103 = scmp.ne.s32.totalorder %s92, %s93
      %p104 = scmp.eq.s32.totalorder %s16, 0
      %p105 = por %p103, %p104
      %p106 = scmp.ne.s32.totalorder %s92, %s93
      %p107 = scmp.eq.s32.totalorder %s17, 1
      %p108 = por %p106, %p107
      %p110 = scmp.ne.s32.totalorder %s93, %s109
      %p111 = scmp.eq.s32.totalorder %s17, 0
      %p112 = por %p110, %p111
      %p113 = scmp.le.s32.totalorder 1, %s11
      %p114 = scmp.lt.s32.totalorder %s11, 3
      %p115 = pnand %p113, %p114
      %p116 = pneg %p115
      // Predicated region
      $region9: #{_lambda_.8} parent=5 // pred_check
        _
      $region10: #{_lambda_.8} parent=5 // pred_check_branch
        %118 = sbr.rel (%p115) target = $region12
      $region11: #{_lambda_.8} parent=5 // pred_region
        %s119 = ssub.s32 %s11, 1
        // Predicated region
        $region13: #{_lambda_.8} parent=11 // pred_check
          %p120 = pneg %p58
        $region14: #{_lambda_.8} parent=11 // pred_check_branch
          %122 = sbr.rel (%p120) target = $region16
        $region15: #{_lambda_.8} parent=11 // pred_region
          %124 = vsyncadd [#allocation4], 0
          %s125 = sshll.u32 %s1, 4
          %s126 = int_to_ptr.hbm [resolvable:$true] %s125
          %s127 = sshll.u32 [#allocation3], 4
          %s128 = int_to_ptr.vmem [resolvable:$true] %s127
          %133 = dma.hbm_to_vmem [thread:$0]  %s126, 16384, %s128, [#allocation4], 128, 128, 8
        $region16: #{_lambda_.8} parent=11 // pred_fallthru
          _
        // Predicated region
        $region17: #{_lambda_.8} parent=11 // pred_check
          %p134 = pneg %p79
        $region18: #{_lambda_.8} parent=11 // pred_check_branch
          %136 = sbr.rel (%p134) target = $region20
        $region19: #{_lambda_.8} parent=11 // pred_region
          %138 = vsyncadd [#allocation6], 0
          %s140 = sshll.u32 %s2, 4
          %s141 = int_to_ptr.hbm [resolvable:$true] %s140
          %s142 = sshll.u32 [#allocation5], 4
          %s143 = int_to_ptr.vmem [resolvable:$true] %s142
          %145 = dma.hbm_to_vmem [thread:$0]  %s141, 32, %s143, [#allocation6]
        $region20: #{_lambda_.8} parent=11 // pred_fallthru
          _
      $region12: #{_lambda_.8} parent=5 // pred_fallthru
        _
      %p146 = scmp.lt.s32.totalorder %s11, 2
      // Predicated region
      $region21: #{_lambda_.8} parent=5 // pred_check
        %p147 = pneg %p146
      $region22: #{_lambda_.8} parent=5 // pred_check_branch
        %149 = sbr.rel (%p147) target = $region24
      $region23: #{_lambda_.8} parent=5 // pred_region
        // Predicated region
        $region25: #{_lambda_.8} parent=23 // pred_check
          %p150 = pneg %p31
        $region26: #{_lambda_.8} parent=23 // pred_check_branch
          %152 = sbr.rel (%p150) target = $region28
        $region27: #{_lambda_.8} parent=23 // pred_region
          %p153 = scmp.lt.s32.totalorder %s11, 1
          %s154 = scalar_select %p153, %s11, 1
          %s155 = smul.addr %s154, 8
          %s156 = smul.addr %s155, 4
          %s157 = scalar_lea.vmem %s0, %s156
        $region28: #{_lambda_.8} parent=23 // pred_fallthru
          _
      $region24: #{_lambda_.8} parent=5 // pred_fallthru
        _
      %p158 = scmp.le.s32.totalorder 1, %s11
      %p159 = scmp.lt.s32.totalorder %s11, 3
      %p160 = pnand %p158, %p159
      %p161 = pneg %p160
      // Predicated region
      $region29: #{_lambda_.8} parent=5 // pred_check
        _
      $region30: #{_lambda_.8} parent=5 // pred_check_branch
        %163 = sbr.rel (%p160) target = $region32
      $region31: #{_lambda_.8} parent=5 // pred_region
        %s164 = ssub.s32 %s11, 1
        // Predicated region
        $region33: #{_lambda_.8} parent=31 // pred_check
          %p165 = pneg %p58
        $region34: #{_lambda_.8} parent=31 // pred_check_branch
          %167 = sbr.rel (%p165) target = $region36
        $region35: #{_lambda_.8} parent=31 // pred_region
          %169 = dma.done [#allocation4], 16384
        $region36: #{_lambda_.8} parent=31 // pred_fallthru
          _
        // Predicated region
        $region37: #{_lambda_.8} parent=31 // pred_check
          %p170 = pneg %p79
        $region38: #{_lambda_.8} parent=31 // pred_check_branch
          %172 = sbr.rel (%p170) target = $region40
        $region39: #{_lambda_.8} parent=31 // pred_region
          %174 = dma.done [#allocation6], 32
        $region40: #{_lambda_.8} parent=31 // pred_fallthru
          _
        %p175 = scmp.lt.s32.totalorder %s16, 1
        %s176 = scalar_select %p175, %s16, 1
        %s177 = smul.addr %s176, 8
        %s178 = smul.addr %s177, 4
        %s179 = scalar_lea.vmem %s0, %s178
        %p180 = pneg %p37
        %p181 = pneg %p34
        %p182 = pneg %p58
        %p183 = pneg %p55
        %p184 = pneg %p79
        %p185 = pneg %p76
        %p186 = pneg %p105
        %p187 = pneg %p102
        %p188 = scmp.lt.s32.totalorder %s16, 1
        %s189 = scalar_select %p188, %s16, 1
        %s190 = smul.addr %s189, 16
        %s191 = smul.addr %s190, 4
        %s192 = scalar_lea.vmem %s3, %s191
        %p193 = scmp.lt.s32.totalorder %s16, 1
        %s194 = scalar_select %p193, %s16, 1
        %s195 = smul.addr %s194, 8
        %s196 = smul.addr %s195, 4
        %s197 = scalar_lea.vmem %s0, %s196
        %p198 = scmp.lt.s32.totalorder %s16, 1
        %s199 = scalar_select %p198, %s16, 1
        %s200 = smul.addr %s199, 16
        %s201 = smul.addr %s200, 4
        %s202 = scalar_lea.vmem %s3, %s201
        %vm204 = vcmask 1040384
        %vm205 = vsmask.f32 256
        %vm206 = vmand %vm204, %vm205
        %vm207 = vcmask 1044484
        %vm208 = vsmask.f32 4352
        %vm209 = vmand %vm207, %vm208
        %vm210 = vmor %vm209, %vm206
        %v211 = vld [vmem:[#allocation2] sm:$0x11]
        %v212 = vsel %vm210, 0, %v211
        %213 = vst [vmem:[#allocation2] sm:$0x11] %v212
        %vm214 = vsmask.f32 7938
        %vm215 = vmand %vm204, %vm214
        %vm216 = vsmask.f32 7954
        %vm217 = vmand %vm207, %vm216
        %vm218 = vmor %vm217, %vm215
        %v219 = vld [vmem:[#allocation2 + $0x20] sm:$0x11]
        %v220 = vsel %vm218, 0, %v219
        %221 = vst [vmem:[#allocation2 + $0x20] sm:$0x11] %v220
        %v222 = vld [vmem:[%s197] sm:$0xff]
        %v223 = vld [vmem:[%s197 + $0x8] sm:$0xff]
        %v224 = vld [vmem:[%s197 + $0x10] sm:$0xff]
        %v225 = vld [vmem:[%s197 + $0x18] sm:$0xff]
        %vm226 = vsmask.f32 4368
        %vm227 = vmor %vm205, %vm226
        %v229 = vshrl.u32 %v222, 16
        %v231 = vrot.slane %v229, 7
        %v232 = vshll.u32 %v222, 16
        %v234 = vor.u32 %v231, %v232
        %v235 = vrot.slane %v231, 4
        %v237 = vshrl.u32 %v223, 16
        %v239 = vrot.slane %v237, 7
        %v240 = vshll.u32 %v223, 16
        %v242 = vor.u32 %v239, %v240
        %v243 = vsel %vm227, %v235, %v242
        %v244 = vrot.slane %v239, 4
        %v246 = vshrl.u32 %v224, 16
        %v248 = vrot.slane %v246, 7
        %v249 = vshll.u32 %v224, 16
        %v251 = vor.u32 %v248, %v249
        %v252 = vsel %vm227, %v244, %v251
        %v253 = vrot.slane %v248, 4
        %v255 = vshrl.u32 %v225, 16
        %v257 = vrot.slane %v255, 7
        %v258 = vshll.u32 %v225, 16
        %v260 = vor.u32 %v257, %v258
        %v261 = vsel %vm227, %v253, %v260
        %v262 = vrot.slane %v257, 4
        %vm268 = vcmask 1043456
        %vm269 = vmand %vm268, %vm214
        %vm270 = vcmask 1047556
        %vm271 = vmand %vm270, %vm216
        %vm272 = vmor %vm271, %vm269
        %v273 = vld [vmem:[#allocation2] sm:$0xff]
        %v274 = vsel %vm272, %v234, %v273
        %275 = vst [vmem:[#allocation2] sm:$0xff] %v274
        %276 = vst [vmem:[#allocation2 + $0x8] sm:$0xff] %v243
        %277 = vst [vmem:[#allocation2 + $0x10] sm:$0xff] %v252
        %278 = vst [vmem:[#allocation2 + $0x18] sm:$0xff] %v261
        %v279 = vld [vmem:[#allocation2 + $0x20] sm:$0x11]
        %v280 = vsel %vm210, %v262, %v279
        %281 = vst [vmem:[#allocation2 + $0x20] sm:$0x11] %v280
        %v282 = vld [vmem:[#allocation2] sm:$0xff]
        %v283 = vld [vmem:[#allocation2 + $0x8] sm:$0xff]
        %v284 = vld [vmem:[#allocation2 + $0x10] sm:$0xff]
        %v285 = vld [vmem:[#allocation2 + $0x18] sm:$0xff]
        %v286 = vld [vmem:[#allocation3] sm:$0xff]
        %v287 = vld [vmem:[#allocation3 + $0x8] sm:$0xff]
        %v288 = vld [vmem:[#allocation3 + $0x10] sm:$0xff]
        %v289 = vld [vmem:[#allocation3 + $0x18] sm:$0xff]
        %v290 = vld [vmem:[#allocation3 + $0x20] sm:$0xff]
        %v291 = vld [vmem:[#allocation3 + $0x28] sm:$0xff]
        %v292 = vld [vmem:[#allocation3 + $0x30] sm:$0xff]
        %v293 = vld [vmem:[#allocation3 + $0x38] sm:$0xff]
        %v294 = vld [vmem:[#allocation3 + $0x40] sm:$0xff]
        %v295 = vld [vmem:[#allocation3 + $0x48] sm:$0xff]
        %v296 = vld [vmem:[#allocation3 + $0x50] sm:$0xff]
        %v297 = vld [vmem:[#allocation3 + $0x58] sm:$0xff]
        %v298 = vld [vmem:[#allocation3 + $0x60] sm:$0xff]
        %v299 = vld [vmem:[#allocation3 + $0x68] sm:$0xff]
        %v300 = vld [vmem:[#allocation3 + $0x70] sm:$0xff]
        %v301 = vld [vmem:[#allocation3 + $0x78] sm:$0xff]
        %v302 = vld [vmem:[#allocation3 + $0x80] sm:$0xff]
        %v303 = vld [vmem:[#allocation3 + $0x88] sm:$0xff]
        %v304 = vld [vmem:[#allocation3 + $0x90] sm:$0xff]
        %v305 = vld [vmem:[#allocation3 + $0x98] sm:$0xff]
        %v306 = vld [vmem:[#allocation3 + $0xa0] sm:$0xff]
        %v307 = vld [vmem:[#allocation3 + $0xa8] sm:$0xff]
        %v308 = vld [vmem:[#allocation3 + $0xb0] sm:$0xff]
        %v309 = vld [vmem:[#allocation3 + $0xb8] sm:$0xff]
        %v310 = vld [vmem:[#allocation3 + $0xc0] sm:$0xff]
        %v311 = vld [vmem:[#allocation3 + $0xc8] sm:$0xff]
        %v312 = vld [vmem:[#allocation3 + $0xd0] sm:$0xff]
        %v313 = vld [vmem:[#allocation3 + $0xd8] sm:$0xff]
        %v314 = vld [vmem:[#allocation3 + $0xe0] sm:$0xff]
        %v315 = vld [vmem:[#allocation3 + $0xe8] sm:$0xff]
        %v316 = vld [vmem:[#allocation3 + $0xf0] sm:$0xff]
        %v317 = vld [vmem:[#allocation3 + $0xf8] sm:$0xff]
        %v318 = vld [vmem:[#allocation2 + $0x20] sm:$0x11]
        %s319 = scalar_lea.vmem [#allocation3], 256
        %v320 = vld [vmem:[%s319] sm:$0xff]
        %v321 = vld [vmem:[%s319 + $0x8] sm:$0xff]
        %v322 = vld [vmem:[%s319 + $0x10] sm:$0xff]
        %v323 = vld [vmem:[%s319 + $0x18] sm:$0xff]
        %v324 = vld [vmem:[%s319 + $0x20] sm:$0xff]
        %v325 = vld [vmem:[%s319 + $0x28] sm:$0xff]
        %v326 = vld [vmem:[%s319 + $0x30] sm:$0xff]
        %v327 = vld [vmem:[%s319 + $0x38] sm:$0xff]
        %v328 = vld [vmem:[%s319 + $0x40] sm:$0xff]
        %v329 = vld [vmem:[%s319 + $0x48] sm:$0xff]
        %v330 = vld [vmem:[%s319 + $0x50] sm:$0xff]
        %v331 = vld [vmem:[%s319 + $0x58] sm:$0xff]
        %v332 = vld [vmem:[%s319 + $0x60] sm:$0xff]
        %v333 = vld [vmem:[%s319 + $0x68] sm:$0xff]
        %v334 = vld [vmem:[%s319 + $0x70] sm:$0xff]
        %v335 = vld [vmem:[%s319 + $0x78] sm:$0xff]
        %v336 = vld [vmem:[%s319 + $0x80] sm:$0xff]
        %v337 = vld [vmem:[%s319 + $0x88] sm:$0xff]
        %v338 = vld [vmem:[%s319 + $0x90] sm:$0xff]
        %v339 = vld [vmem:[%s319 + $0x98] sm:$0xff]
        %v340 = vld [vmem:[%s319 + $0xa0] sm:$0xff]
        %v341 = vld [vmem:[%s319 + $0xa8] sm:$0xff]
        %v342 = vld [vmem:[%s319 + $0xb0] sm:$0xff]
        %v343 = vld [vmem:[%s319 + $0xb8] sm:$0xff]
        %v344 = vld [vmem:[%s319 + $0xc0] sm:$0xff]
        %v345 = vld [vmem:[%s319 + $0xc8] sm:$0xff]
        %v346 = vld [vmem:[%s319 + $0xd0] sm:$0xff]
        %v347 = vld [vmem:[%s319 + $0xd8] sm:$0xff]
        %v348 = vld [vmem:[%s319 + $0xe0] sm:$0xff]
        %v349 = vld [vmem:[%s319 + $0xe8] sm:$0xff]
        %v350 = vld [vmem:[%s319 + $0xf0] sm:$0xff]
        %v351 = vld [vmem:[%s319 + $0xf8] sm:$0xff]
        %v357 = vunpack.c.l.b16 %v282
        %v358 = vunpack.c.h.b16 %v282
        %v359 = vunpack.c.l.b16 %v283
        %v360 = vunpack.c.h.b16 %v283
        %v361 = vunpack.c.l.b16 %v284
        %v362 = vunpack.c.h.b16 %v284
        %v363 = vunpack.c.l.b16 %v285
        %v364 = vunpack.c.h.b16 %v285
        %v365 = vunpack.c.l.b16 %v318
        %v366 = vunpack.c.h.b16 %v318
        %v367 = vpack.c.b16 %v359, %v357
        %v368 = vpack.c.b16 %v360, %v358
        %v369 = vpack.c.b16 %v363, %v361
        %v370 = vpack.c.b16 %v364, %v362
        %v371 = vpack.c.b16 %v365, %v365
        %v372 = vpack.c.b16 %v366, %v366
        %vm373 = vsmask.f32 7424
        %v375 = vshrl.u32 %v367, 16
        %v377 = vshll.u32 %v367, 16
        %v379 = vrot.slane %v377, 1
        %v380 = vor.u32 %v375, %v379
        %v382 = vshll.u32 %v369, 16
        %v384 = vrot.slane %v382, 1
        %v385 = vsel %vm373, %v380, %v384
        %v387 = vshrl.u32 %v368, 16
        %v389 = vshll.u32 %v368, 16
        %v391 = vrot.slane %v389, 1
        %v392 = vor.u32 %v387, %v391
        %v394 = vshll.u32 %v370, 16
        %v396 = vrot.slane %v394, 1
        %v397 = vsel %vm373, %v392, %v396
        %v398 = vshrl.u32 %v369, 16
        %v400 = vor.u32 %v398, %v384
        %v402 = vshll.u32 %v371, 16
        %v404 = vrot.slane %v402, 1
        %v405 = vsel %vm373, %v400, %v404
        %v406 = vshrl.u32 %v370, 16
        %v408 = vor.u32 %v406, %v396
        %v410 = vshll.u32 %v372, 16
        %v412 = vrot.slane %v410, 1
        %v413 = vsel %vm373, %v408, %v412
        %v450 = vunpack.c.l.b16 %v320
        %v451 = vunpack.c.h.b16 %v320
        %v452 = vunpack.c.l.b16 %v321
        %v453 = vunpack.c.h.b16 %v321
        %v454 = vunpack.c.l.b16 %v322
        %v455 = vunpack.c.h.b16 %v322
        %v456 = vunpack.c.l.b16 %v323
        %v457 = vunpack.c.h.b16 %v323
        %v458 = vunpack.c.l.b16 %v324
        %v459 = vunpack.c.h.b16 %v324
        %v460 = vunpack.c.l.b16 %v325
        %v461 = vunpack.c.h.b16 %v325
        %v462 = vunpack.c.l.b16 %v326
        %v463 = vunpack.c.h.b16 %v326
        %v464 = vunpack.c.l.b16 %v327
        %v465 = vunpack.c.h.b16 %v327
        %v466 = vunpack.c.l.b16 %v328
        %v467 = vunpack.c.h.b16 %v328
        %v468 = vunpack.c.l.b16 %v329
        %v469 = vunpack.c.h.b16 %v329
        %v470 = vunpack.c.l.b16 %v330
        %v471 = vunpack.c.h.b16 %v330
        %v472 = vunpack.c.l.b16 %v331
        %v473 = vunpack.c.h.b16 %v331
        %v474 = vunpack.c.l.b16 %v332
        %v475 = vunpack.c.h.b16 %v332
        %v476 = vunpack.c.l.b16 %v333
        %v477 = vunpack.c.h.b16 %v333
        %v478 = vunpack.c.l.b16 %v334
        %v479 = vunpack.c.h.b16 %v334
        %v480 = vunpack.c.l.b16 %v335
        %v481 = vunpack.c.h.b16 %v335
        %v482 = vunpack.c.l.b16 %v336
        %v483 = vunpack.c.h.b16 %v336
        %v484 = vunpack.c.l.b16 %v337
        %v485 = vunpack.c.h.b16 %v337
        %v486 = vunpack.c.l.b16 %v338
        %v487 = vunpack.c.h.b16 %v338
        %v488 = vunpack.c.l.b16 %v339
        %v489 = vunpack.c.h.b16 %v339
        %v490 = vunpack.c.l.b16 %v340
        %v491 = vunpack.c.h.b16 %v340
        %v492 = vunpack.c.l.b16 %v341
        %v493 = vunpack.c.h.b16 %v341
        %v494 = vunpack.c.l.b16 %v342
        %v495 = vunpack.c.h.b16 %v342
        %v496 = vunpack.c.l.b16 %v343
        %v497 = vunpack.c.h.b16 %v343
        %v498 = vunpack.c.l.b16 %v344
        %v499 = vunpack.c.h.b16 %v344
        %v500 = vunpack.c.l.b16 %v345
        %v501 = vunpack.c.h.b16 %v345
        %v502 = vunpack.c.l.b16 %v346
        %v503 = vunpack.c.h.b16 %v346
        %v504 = vunpack.c.l.b16 %v347
        %v505 = vunpack.c.h.b16 %v347
        %v506 = vunpack.c.l.b16 %v348
        %v507 = vunpack.c.h.b16 %v348
        %v508 = vunpack.c.l.b16 %v349
        %v509 = vunpack.c.h.b16 %v349
        %v510 = vunpack.c.l.b16 %v350
        %v511 = vunpack.c.h.b16 %v350
        %v512 = vunpack.c.l.b16 %v351
        %v513 = vunpack.c.h.b16 %v351
        %v514 = vpack.c.b16 %v452, %v450
        %v515 = vpack.c.b16 %v453, %v451
        %v516 = vpack.c.b16 %v456, %v454
        %v517 = vpack.c.b16 %v457, %v455
        %v518 = vpack.c.b16 %v460, %v458
        %v519 = vpack.c.b16 %v461, %v459
        %v520 = vpack.c.b16 %v464, %v462
        %v521 = vpack.c.b16 %v465, %v463
        %v522 = vpack.c.b16 %v468, %v466
        %v523 = vpack.c.b16 %v469, %v467
        %v524 = vpack.c.b16 %v472, %v470
        %v525 = vpack.c.b16 %v473, %v471
        %v526 = vpack.c.b16 %v476, %v474
        %v527 = vpack.c.b16 %v477, %v475
        %v528 = vpack.c.b16 %v480, %v478
        %v529 = vpack.c.b16 %v481, %v479
        %v530 = vpack.c.b16 %v484, %v482
        %v531 = vpack.c.b16 %v485, %v483
        %v532 = vpack.c.b16 %v488, %v486
        %v533 = vpack.c.b16 %v489, %v487
        %v534 = vpack.c.b16 %v492, %v490
        %v535 = vpack.c.b16 %v493, %v491
        %v536 = vpack.c.b16 %v496, %v494
        %v537 = vpack.c.b16 %v497, %v495
        %v538 = vpack.c.b16 %v500, %v498
        %v539 = vpack.c.b16 %v501, %v499
        %v540 = vpack.c.b16 %v504, %v502
        %v541 = vpack.c.b16 %v505, %v503
        %v542 = vpack.c.b16 %v508, %v506
        %v543 = vpack.c.b16 %v509, %v507
        %v544 = vpack.c.b16 %v512, %v510
        %v545 = vpack.c.b16 %v513, %v511
        %578 = vmatpush.bf16.msra.mxu0 %v528
        %579 = vmatpush.bf16.msra.mxu0 %v526
        %580 = vmatpush.bf16.msra.mxu0 %v524
        %581 = vmatpush.bf16.msra.mxu0 %v522
        %582 = vmatpush.bf16.msra.mxu0 %v520
        %583 = vmatpush.bf16.msra.mxu0 %v518
        %584 = vmatpush.bf16.msra.mxu0 %v516
        %585 = vmatpush.bf16.msra.mxu0 %v514
        %586 = vmatmul.bf16.gmra.mxu0 %v385
        %v587 = vpop.f32.mrf.mxu0
        %v588 = vadd.f32 0.0, %v587
        %v589 = vpop.f32.mrf.mxu0
        %v590 = vadd.f32 0.0, %v589
        %591 = vmatmul.bf16.gmra.mxu0 %v405
        %v592 = vpop.f32.mrf.mxu0
        %v593 = vadd.f32 0.0, %v592
        %v594 = vpop.f32.mrf.mxu0
        %v595 = vadd.f32 0.0, %v594
        %596 = vdwg.mxu0
        %597 = vmatpush.bf16.msra.mxu0 %v544
        %598 = vmatpush.bf16.msra.mxu0 %v542
        %599 = vmatpush.bf16.msra.mxu0 %v540
        %600 = vmatpush.bf16.msra.mxu0 %v538
        %601 = vmatpush.bf16.msra.mxu0 %v536
        %602 = vmatpush.bf16.msra.mxu0 %v534
        %603 = vmatpush.bf16.msra.mxu0 %v532
        %604 = vmatpush.bf16.msra.mxu0 %v530
        %605 = vmatmul.bf16.gmra.mxu0 %v397
        %v606 = vpop.f32.mrf.mxu0
        %v607 = vadd.f32 %v588, %v606
        %v608 = vpop.f32.mrf.mxu0
        %v609 = vadd.f32 %v590, %v608
        %610 = vmatmul.bf16.gmra.mxu0 %v413
        %v611 = vpop.f32.mrf.mxu0
        %v612 = vadd.f32 %v593, %v611
        %v613 = vpop.f32.mrf.mxu0
        %v614 = vadd.f32 %v595, %v613
        %615 = vdwg.mxu0
        %616 = vmatpush.bf16.msra.mxu0 %v529
        %617 = vmatpush.bf16.msra.mxu0 %v527
        %618 = vmatpush.bf16.msra.mxu0 %v525
        %619 = vmatpush.bf16.msra.mxu0 %v523
        %620 = vmatpush.bf16.msra.mxu0 %v521
        %621 = vmatpush.bf16.msra.mxu0 %v519
        %622 = vmatpush.bf16.msra.mxu0 %v517
        %623 = vmatpush.bf16.msra.mxu0 %v515
        %624 = vmatmul.bf16.gmra.mxu0 %v385
        %v625 = vpop.f32.mrf.mxu0
        %v626 = vadd.f32 0.0, %v625
        %v627 = vpop.f32.mrf.mxu0
        %v628 = vadd.f32 0.0, %v627
        %629 = vmatmul.bf16.gmra.mxu0 %v405
        %v630 = vpop.f32.mrf.mxu0
        %v631 = vadd.f32 0.0, %v630
        %v632 = vpop.f32.mrf.mxu0
        %v633 = vadd.f32 0.0, %v632
        %634 = vdwg.mxu0
        %635 = vmatpush.bf16.msra.mxu0 %v545
        %636 = vmatpush.bf16.msra.mxu0 %v543
        %637 = vmatpush.bf16.msra.mxu0 %v541
        %638 = vmatpush.bf16.msra.mxu0 %v539
        %639 = vmatpush.bf16.msra.mxu0 %v537
        %640 = vmatpush.bf16.msra.mxu0 %v535
        %641 = vmatpush.bf16.msra.mxu0 %v533
        %642 = vmatpush.bf16.msra.mxu0 %v531
        %643 = vmatmul.bf16.gmra.mxu0 %v397
        %v644 = vpop.f32.mrf.mxu0
        %v645 = vadd.f32 %v626, %v644
        %v646 = vpop.f32.mrf.mxu0
        %v647 = vadd.f32 %v628, %v646
        %648 = vmatmul.bf16.gmra.mxu0 %v413
        %v649 = vpop.f32.mrf.mxu0
        %v650 = vadd.f32 %v631, %v649
        %v651 = vpop.f32.mrf.mxu0
        %v652 = vadd.f32 %v633, %v651
        %653 = vdwg.mxu0
        %v690 = vunpack.c.l.b16 %v286
        %v691 = vunpack.c.h.b16 %v286
        %v692 = vunpack.c.l.b16 %v287
        %v693 = vunpack.c.h.b16 %v287
        %v694 = vunpack.c.l.b16 %v288
        %v695 = vunpack.c.h.b16 %v288
        %v696 = vunpack.c.l.b16 %v289
        %v697 = vunpack.c.h.b16 %v289
        %v698 = vunpack.c.l.b16 %v290
        %v699 = vunpack.c.h.b16 %v290
        %v700 = vunpack.c.l.b16 %v291
        %v701 = vunpack.c.h.b16 %v291
        %v702 = vunpack.c.l.b16 %v292
        %v703 = vunpack.c.h.b16 %v292
        %v704 = vunpack.c.l.b16 %v293
        %v705 = vunpack.c.h.b16 %v293
        %v706 = vunpack.c.l.b16 %v294
        %v707 = vunpack.c.h.b16 %v294
        %v708 = vunpack.c.l.b16 %v295
        %v709 = vunpack.c.h.b16 %v295
        %v710 = vunpack.c.l.b16 %v296
        %v711 = vunpack.c.h.b16 %v296
        %v712 = vunpack.c.l.b16 %v297
        %v713 = vunpack.c.h.b16 %v297
        %v714 = vunpack.c.l.b16 %v298
        %v715 = vunpack.c.h.b16 %v298
        %v716 = vunpack.c.l.b16 %v299
        %v717 = vunpack.c.h.b16 %v299
        %v718 = vunpack.c.l.b16 %v300
        %v719 = vunpack.c.h.b16 %v300
        %v720 = vunpack.c.l.b16 %v301
        %v721 = vunpack.c.h.b16 %v301
        %v722 = vunpack.c.l.b16 %v302
        %v723 = vunpack.c.h.b16 %v302
        %v724 = vunpack.c.l.b16 %v303
        %v725 = vunpack.c.h.b16 %v303
        %v726 = vunpack.c.l.b16 %v304
        %v727 = vunpack.c.h.b16 %v304
        %v728 = vunpack.c.l.b16 %v305
        %v729 = vunpack.c.h.b16 %v305
        %v730 = vunpack.c.l.b16 %v306
        %v731 = vunpack.c.h.b16 %v306
        %v732 = vunpack.c.l.b16 %v307
        %v733 = vunpack.c.h.b16 %v307
        %v734 = vunpack.c.l.b16 %v308
        %v735 = vunpack.c.h.b16 %v308
        %v736 = vunpack.c.l.b16 %v309
        %v737 = vunpack.c.h.b16 %v309
        %v738 = vunpack.c.l.b16 %v310
        %v739 = vunpack.c.h.b16 %v310
        %v740 = vunpack.c.l.b16 %v311
        %v741 = vunpack.c.h.b16 %v311
        %v742 = vunpack.c.l.b16 %v312
        %v743 = vunpack.c.h.b16 %v312
        %v744 = vunpack.c.l.b16 %v313
        %v745 = vunpack.c.h.b16 %v313
        %v746 = vunpack.c.l.b16 %v314
        %v747 = vunpack.c.h.b16 %v314
        %v748 = vunpack.c.l.b16 %v315
        %v749 = vunpack.c.h.b16 %v315
        %v750 = vunpack.c.l.b16 %v316
        %v751 = vunpack.c.h.b16 %v316
        %v752 = vunpack.c.l.b16 %v317
        %v753 = vunpack.c.h.b16 %v317
        %v754 = vpack.c.b16 %v692, %v690
        %v755 = vpack.c.b16 %v693, %v691
        %v756 = vpack.c.b16 %v696, %v694
        %v757 = vpack.c.b16 %v697, %v695
        %v758 = vpack.c.b16 %v700, %v698
        %v759 = vpack.c.b16 %v701, %v699
        %v760 = vpack.c.b16 %v704, %v702
        %v761 = vpack.c.b16 %v705, %v703
        %v762 = vpack.c.b16 %v708, %v706
        %v763 = vpack.c.b16 %v709, %v707
        %v764 = vpack.c.b16 %v712, %v710
        %v765 = vpack.c.b16 %v713, %v711
        %v766 = vpack.c.b16 %v716, %v714
        %v767 = vpack.c.b16 %v717, %v715
        %v768 = vpack.c.b16 %v720, %v718
        %v769 = vpack.c.b16 %v721, %v719
        %v770 = vpack.c.b16 %v724, %v722
        %v771 = vpack.c.b16 %v725, %v723
        %v772 = vpack.c.b16 %v728, %v726
        %v773 = vpack.c.b16 %v729, %v727
        %v774 = vpack.c.b16 %v732, %v730
        %v775 = vpack.c.b16 %v733, %v731
        %v776 = vpack.c.b16 %v736, %v734
        %v777 = vpack.c.b16 %v737, %v735
        %v778 = vpack.c.b16 %v740, %v738
        %v779 = vpack.c.b16 %v741, %v739
        %v780 = vpack.c.b16 %v744, %v742
        %v781 = vpack.c.b16 %v745, %v743
        %v782 = vpack.c.b16 %v748, %v746
        %v783 = vpack.c.b16 %v749, %v747
        %v784 = vpack.c.b16 %v752, %v750
        %v785 = vpack.c.b16 %v753, %v751
        %818 = vmatpush.bf16.msra.mxu0 %v768
        %819 = vmatpush.bf16.msra.mxu0 %v766
        %820 = vmatpush.bf16.msra.mxu0 %v764
        %821 = vmatpush.bf16.msra.mxu0 %v762
        %822 = vmatpush.bf16.msra.mxu0 %v760
        %823 = vmatpush.bf16.msra.mxu0 %v758
        %824 = vmatpush.bf16.msra.mxu0 %v756
        %825 = vmatpush.bf16.msra.mxu0 %v754
        %826 = vmatmul.bf16.gmra.mxu0 %v367
        %v827 = vpop.f32.mrf.mxu0
        %v828 = vadd.f32 %v607, %v827
        %v829 = vpop.f32.mrf.mxu0
        %v830 = vadd.f32 %v609, %v829
        %831 = vmatmul.bf16.gmra.mxu0 %v369
        %v832 = vpop.f32.mrf.mxu0
        %v833 = vadd.f32 %v612, %v832
        %v834 = vpop.f32.mrf.mxu0
        %v835 = vadd.f32 %v614, %v834
        %836 = vdwg.mxu0
        %837 = vmatpush.bf16.msra.mxu0 %v784
        %838 = vmatpush.bf16.msra.mxu0 %v782
        %839 = vmatpush.bf16.msra.mxu0 %v780
        %840 = vmatpush.bf16.msra.mxu0 %v778
        %841 = vmatpush.bf16.msra.mxu0 %v776
        %842 = vmatpush.bf16.msra.mxu0 %v774
        %843 = vmatpush.bf16.msra.mxu0 %v772
        %844 = vmatpush.bf16.msra.mxu0 %v770
        %845 = vmatmul.bf16.gmra.mxu0 %v368
        %v846 = vpop.f32.mrf.mxu0
        %v847 = vadd.f32 %v828, %v846
        %v848 = vpop.f32.mrf.mxu0
        %v849 = vadd.f32 %v830, %v848
        %850 = vmatmul.bf16.gmra.mxu0 %v370
        %v851 = vpop.f32.mrf.mxu0
        %v852 = vadd.f32 %v833, %v851
        %v853 = vpop.f32.mrf.mxu0
        %v854 = vadd.f32 %v835, %v853
        %855 = vdwg.mxu0
        %856 = vmatpush.bf16.msra.mxu0 %v769
        %857 = vmatpush.bf16.msra.mxu0 %v767
        %858 = vmatpush.bf16.msra.mxu0 %v765
        %859 = vmatpush.bf16.msra.mxu0 %v763
        %860 = vmatpush.bf16.msra.mxu0 %v761
        %861 = vmatpush.bf16.msra.mxu0 %v759
        %862 = vmatpush.bf16.msra.mxu0 %v757
        %863 = vmatpush.bf16.msra.mxu0 %v755
        %864 = vmatmul.bf16.gmra.mxu0 %v367
        %v865 = vpop.f32.mrf.mxu0
        %v866 = vadd.f32 %v645, %v865
        %v867 = vpop.f32.mrf.mxu0
        %v868 = vadd.f32 %v647, %v867
        %869 = vmatmul.bf16.gmra.mxu0 %v369
        %v870 = vpop.f32.mrf.mxu0
        %v871 = vadd.f32 %v650, %v870
        %v872 = vpop.f32.mrf.mxu0
        %v873 = vadd.f32 %v652, %v872
        %874 = vdwg.mxu0
        %875 = vmatpush.bf16.msra.mxu0 %v785
        %876 = vmatpush.bf16.msra.mxu0 %v783
        %877 = vmatpush.bf16.msra.mxu0 %v781
        %878 = vmatpush.bf16.msra.mxu0 %v779
        %879 = vmatpush.bf16.msra.mxu0 %v777
        %880 = vmatpush.bf16.msra.mxu0 %v775
        %881 = vmatpush.bf16.msra.mxu0 %v773
        %882 = vmatpush.bf16.msra.mxu0 %v771
        %883 = vmatmul.bf16.gmra.mxu0 %v368
        %v884 = vpop.f32.mrf.mxu0
        %v885 = vadd.f32 %v866, %v884
        %v886 = vpop.f32.mrf.mxu0
        %v887 = vadd.f32 %v868, %v886
        %888 = vmatmul.bf16.gmra.mxu0 %v370
        %v889 = vpop.f32.mrf.mxu0
        %v890 = vadd.f32 %v871, %v889
        %v891 = vpop.f32.mrf.mxu0
        %v892 = vadd.f32 %v873, %v891
        %893 = vdwg.mxu0
        %v894 = vld [vmem:[#allocation5] sm:$0x3]
        %v896 = vperm.slane %v894, 0
        %v897 = vperm.slane %v894, 1
        %v900 = vadd.f32 %v847, %v896
        %v901 = vadd.f32 %v885, %v897
        %v902 = vadd.f32 %v849, %v896
        %v903 = vadd.f32 %v887, %v897
        %v904 = vadd.f32 %v852, %v896
        %v905 = vadd.f32 %v890, %v897
        %v906 = vadd.f32 %v854, %v896
        %v907 = vadd.f32 %v892, %v897
        %v908 = vmax.f32 %v900, 0.0
        %v909 = vmax.f32 %v901, 0.0
        %v910 = vmax.f32 %v902, 0.0
        %v911 = vmax.f32 %v903, 0.0
        %v912 = vmax.f32 %v904, 0.0
        %v913 = vmax.f32 %v905, 0.0
        %v914 = vmax.f32 %v906, 0.0
        %v915 = vmax.f32 %v907, 0.0
        %v916 = vpack.c.bf16 %v909, %v908
        %v917 = vpack.c.bf16 %v911, %v910
        %v918 = vpack.c.bf16 %v913, %v912
        %v919 = vpack.c.bf16 %v915, %v914
        %920 = vst [vmem:[%s202] sm:$0xff] %v916
        %921 = vst [vmem:[%s202 + $0x10] sm:$0xff] %v917
        %922 = vst [vmem:[%s202 + $0x20] sm:$0xff] %v918
        %923 = vst [vmem:[%s202 + $0x30] sm:$0xff] %v919
        %v924 = vld [vmem:[#allocation2] sm:$0xff]
        %v925 = vld [vmem:[#allocation2 + $0x8] sm:$0xff]
        %v926 = vld [vmem:[#allocation2 + $0x10] sm:$0xff]
        %v927 = vld [vmem:[#allocation2 + $0x18] sm:$0xff]
        %v928 = vld [vmem:[#allocation2 + $0x20] sm:$0x11]
        %s929 = scalar_lea.vmem [#allocation3], 512
        %v930 = vld [vmem:[%s929] sm:$0xff]
        %v931 = vld [vmem:[%s929 + $0x8] sm:$0xff]
        %v932 = vld [vmem:[%s929 + $0x10] sm:$0xff]
        %v933 = vld [vmem:[%s929 + $0x18] sm:$0xff]
        %v934 = vld [vmem:[%s929 + $0x20] sm:$0xff]
        %v935 = vld [vmem:[%s929 + $0x28] sm:$0xff]
        %v936 = vld [vmem:[%s929 + $0x30] sm:$0xff]
        %v937 = vld [vmem:[%s929 + $0x38] sm:$0xff]
        %v938 = vld [vmem:[%s929 + $0x40] sm:$0xff]
        %v939 = vld [vmem:[%s929 + $0x48] sm:$0xff]
        %v940 = vld [vmem:[%s929 + $0x50] sm:$0xff]
        %v941 = vld [vmem:[%s929 + $0x58] sm:$0xff]
        %v942 = vld [vmem:[%s929 + $0x60] sm:$0xff]
        %v943 = vld [vmem:[%s929 + $0x68] sm:$0xff]
        %v944 = vld [vmem:[%s929 + $0x70] sm:$0xff]
        %v945 = vld [vmem:[%s929 + $0x78] sm:$0xff]
        %v946 = vld [vmem:[%s929 + $0x80] sm:$0xff]
        %v947 = vld [vmem:[%s929 + $0x88] sm:$0xff]
        %v948 = vld [vmem:[%s929 + $0x90] sm:$0xff]
        %v949 = vld [vmem:[%s929 + $0x98] sm:$0xff]
        %v950 = vld [vmem:[%s929 + $0xa0] sm:$0xff]
        %v951 = vld [vmem:[%s929 + $0xa8] sm:$0xff]
        %v952 = vld [vmem:[%s929 + $0xb0] sm:$0xff]
        %v953 = vld [vmem:[%s929 + $0xb8] sm:$0xff]
        %v954 = vld [vmem:[%s929 + $0xc0] sm:$0xff]
        %v955 = vld [vmem:[%s929 + $0xc8] sm:$0xff]
        %v956 = vld [vmem:[%s929 + $0xd0] sm:$0xff]
        %v957 = vld [vmem:[%s929 + $0xd8] sm:$0xff]
        %v958 = vld [vmem:[%s929 + $0xe0] sm:$0xff]
        %v959 = vld [vmem:[%s929 + $0xe8] sm:$0xff]
        %v960 = vld [vmem:[%s929 + $0xf0] sm:$0xff]
        %v961 = vld [vmem:[%s929 + $0xf8] sm:$0xff]
        %v962 = vld [vmem:[#allocation2] sm:$0xee]
        %s963 = scalar_lea.vmem [#allocation3], 768
        %v964 = vld [vmem:[%s963] sm:$0xff]
        %v965 = vld [vmem:[%s963 + $0x8] sm:$0xff]
        %v966 = vld [vmem:[%s963 + $0x10] sm:$0xff]
        %v967 = vld [vmem:[%s963 + $0x18] sm:$0xff]
        %v968 = vld [vmem:[%s963 + $0x20] sm:$0xff]
        %v969 = vld [vmem:[%s963 + $0x28] sm:$0xff]
        %v970 = vld [vmem:[%s963 + $0x30] sm:$0xff]
        %v971 = vld [vmem:[%s963 + $0x38] sm:$0xff]
        %v972 = vld [vmem:[%s963 + $0x40] sm:$0xff]
        %v973 = vld [vmem:[%s963 + $0x48] sm:$0xff]
        %v974 = vld [vmem:[%s963 + $0x50] sm:$0xff]
        %v975 = vld [vmem:[%s963 + $0x58] sm:$0xff]
        %v976 = vld [vmem:[%s963 + $0x60] sm:$0xff]
        %v977 = vld [vmem:[%s963 + $0x68] sm:$0xff]
        %v978 = vld [vmem:[%s963 + $0x70] sm:$0xff]
        %v979 = vld [vmem:[%s963 + $0x78] sm:$0xff]
        %v980 = vld [vmem:[%s963 + $0x80] sm:$0xff]
        %v981 = vld [vmem:[%s963 + $0x88] sm:$0xff]
        %v982 = vld [vmem:[%s963 + $0x90] sm:$0xff]
        %v983 = vld [vmem:[%s963 + $0x98] sm:$0xff]
        %v984 = vld [vmem:[%s963 + $0xa0] sm:$0xff]
        %v985 = vld [vmem:[%s963 + $0xa8] sm:$0xff]
        %v986 = vld [vmem:[%s963 + $0xb0] sm:$0xff]
        %v987 = vld [vmem:[%s963 + $0xb8] sm:$0xff]
        %v988 = vld [vmem:[%s963 + $0xc0] sm:$0xff]
        %v989 = vld [vmem:[%s963 + $0xc8] sm:$0xff]
        %v990 = vld [vmem:[%s963 + $0xd0] sm:$0xff]
        %v991 = vld [vmem:[%s963 + $0xd8] sm:$0xff]
        %v992 = vld [vmem:[%s963 + $0xe0] sm:$0xff]
        %v993 = vld [vmem:[%s963 + $0xe8] sm:$0xff]
        %v994 = vld [vmem:[%s963 + $0xf0] sm:$0xff]
        %v995 = vld [vmem:[%s963 + $0xf8] sm:$0xff]
        %v1001 = vunpack.c.l.b16 %v962
        %v1002 = vunpack.c.h.b16 %v962
        %v1003 = vunpack.c.l.b16 %v925
        %v1004 = vunpack.c.h.b16 %v925
        %v1005 = vunpack.c.l.b16 %v926
        %v1006 = vunpack.c.h.b16 %v926
        %v1007 = vunpack.c.l.b16 %v927
        %v1008 = vunpack.c.h.b16 %v927
        %v1009 = vunpack.c.l.b16 %v928
        %v1010 = vunpack.c.h.b16 %v928
        %v1011 = vpack.c.b16 %v1003, %v1001
        %v1012 = vpack.c.b16 %v1004, %v1002
        %v1013 = vpack.c.b16 %v1007, %v1005
        %v1014 = vpack.c.b16 %v1008, %v1006
        %v1015 = vpack.c.b16 %v1009, %v1009
        %v1016 = vpack.c.b16 %v1010, %v1010
        %vm1017 = vcmask 1046528
        %v1018 = vrot.slane %v1011, 1
        %v1019 = vrot.slane %v1013, 1
        %v1020 = vsel %vm1017, %v1018, %v1019
        %v1021 = vrot.slane %v1012, 1
        %v1022 = vrot.slane %v1014, 1
        %v1023 = vsel %vm1017, %v1021, %v1022
        %v1024 = vrot.slane %v1015, 1
        %v1025 = vsel %vm1017, %v1019, %v1024
        %v1026 = vrot.slane %v1016, 1
        %v1027 = vsel %vm1017, %v1022, %v1026
        %v1064 = vunpack.c.l.b16 %v964
        %v1065 = vunpack.c.h.b16 %v964
        %v1066 = vunpack.c.l.b16 %v965
        %v1067 = vunpack.c.h.b16 %v965
        %v1068 = vunpack.c.l.b16 %v966
        %v1069 = vunpack.c.h.b16 %v966
        %v1070 = vunpack.c.l.b16 %v967
        %v1071 = vunpack.c.h.b16 %v967
        %v1072 = vunpack.c.l.b16 %v968
        %v1073 = vunpack.c.h.b16 %v968
        %v1074 = vunpack.c.l.b16 %v969
        %v1075 = vunpack.c.h.b16 %v969
        %v1076 = vunpack.c.l.b16 %v970
        %v1077 = vunpack.c.h.b16 %v970
        %v1078 = vunpack.c.l.b16 %v971
        %v1079 = vunpack.c.h.b16 %v971
        %v1080 = vunpack.c.l.b16 %v972
        %v1081 = vunpack.c.h.b16 %v972
        %v1082 = vunpack.c.l.b16 %v973
        %v1083 = vunpack.c.h.b16 %v973
        %v1084 = vunpack.c.l.b16 %v974
        %v1085 = vunpack.c.h.b16 %v974
        %v1086 = vunpack.c.l.b16 %v975
        %v1087 = vunpack.c.h.b16 %v975
        %v1088 = vunpack.c.l.b16 %v976
        %v1089 = vunpack.c.h.b16 %v976
        %v1090 = vunpack.c.l.b16 %v977
        %v1091 = vunpack.c.h.b16 %v977
        %v1092 = vunpack.c.l.b16 %v978
        %v1093 = vunpack.c.h.b16 %v978
        %v1094 = vunpack.c.l.b16 %v979
        %v1095 = vunpack.c.h.b16 %v979
        %v1096 = vunpack.c.l.b16 %v980
        %v1097 = vunpack.c.h.b16 %v980
        %v1098 = vunpack.c.l.b16 %v981
        %v1099 = vunpack.c.h.b16 %v981
        %v1100 = vunpack.c.l.b16 %v982
        %v1101 = vunpack.c.h.b16 %v982
        %v1102 = vunpack.c.l.b16 %v983
        %v1103 = vunpack.c.h.b16 %v983
        %v1104 = vunpack.c.l.b16 %v984
        %v1105 = vunpack.c.h.b16 %v984
        %v1106 = vunpack.c.l.b16 %v985
        %v1107 = vunpack.c.h.b16 %v985
        %v1108 = vunpack.c.l.b16 %v986
        %v1109 = vunpack.c.h.b16 %v986
        %v1110 = vunpack.c.l.b16 %v987
        %v1111 = vunpack.c.h.b16 %v987
        %v1112 = vunpack.c.l.b16 %v988
        %v1113 = vunpack.c.h.b16 %v988
        %v1114 = vunpack.c.l.b16 %v989
        %v1115 = vunpack.c.h.b16 %v989
        %v1116 = vunpack.c.l.b16 %v990
        %v1117 = vunpack.c.h.b16 %v990
        %v1118 = vunpack.c.l.b16 %v991
        %v1119 = vunpack.c.h.b16 %v991
        %v1120 = vunpack.c.l.b16 %v992
        %v1121 = vunpack.c.h.b16 %v992
        %v1122 = vunpack.c.l.b16 %v993
        %v1123 = vunpack.c.h.b16 %v993
        %v1124 = vunpack.c.l.b16 %v994
        %v1125 = vunpack.c.h.b16 %v994
        %v1126 = vunpack.c.l.b16 %v995
        %v1127 = vunpack.c.h.b16 %v995
        %v1128 = vpack.c.b16 %v1066, %v1064
        %v1129 = vpack.c.b16 %v1067, %v1065
        %v1130 = vpack.c.b16 %v1070, %v1068
        %v1131 = vpack.c.b16 %v1071, %v1069
        %v1132 = vpack.c.b16 %v1074, %v1072
        %v1133 = vpack.c.b16 %v1075, %v1073
        %v1134 = vpack.c.b16 %v1078, %v1076
        %v1135 = vpack.c.b16 %v1079, %v1077
        %v1136 = vpack.c.b16 %v1082, %v1080
        %v1137 = vpack.c.b16 %v1083, %v1081
        %v1138 = vpack.c.b16 %v1086, %v1084
        %v1139 = vpack.c.b16 %v1087, %v1085
        %v1140 = vpack.c.b16 %v1090, %v1088
        %v1141 = vpack.c.b16 %v1091, %v1089
        %v1142 = vpack.c.b16 %v1094, %v1092
        %v1143 = vpack.c.b16 %v1095, %v1093
        %v1144 = vpack.c.b16 %v1098, %v1096
        %v1145 = vpack.c.b16 %v1099, %v1097
        %v1146 = vpack.c.b16 %v1102, %v1100
        %v1147 = vpack.c.b16 %v1103, %v1101
        %v1148 = vpack.c.b16 %v1106, %v1104
        %v1149 = vpack.c.b16 %v1107, %v1105
        %v1150 = vpack.c.b16 %v1110, %v1108
        %v1151 = vpack.c.b16 %v1111, %v1109
        %v1152 = vpack.c.b16 %v1114, %v1112
        %v1153 = vpack.c.b16 %v1115, %v1113
        %v1154 = vpack.c.b16 %v1118, %v1116
        %v1155 = vpack.c.b16 %v1119, %v1117
        %v1156 = vpack.c.b16 %v1122, %v1120
        %v1157 = vpack.c.b16 %v1123, %v1121
        %v1158 = vpack.c.b16 %v1126, %v1124
        %v1159 = vpack.c.b16 %v1127, %v1125
        %1192 = vmatpush.bf16.msra.mxu0 %v1142
        %1193 = vmatpush.bf16.msra.mxu0 %v1140
        %1194 = vmatpush.bf16.msra.mxu0 %v1138
        %1195 = vmatpush.bf16.msra.mxu0 %v1136
        %1196 = vmatpush.bf16.msra.mxu0 %v1134
        %1197 = vmatpush.bf16.msra.mxu0 %v1132
        %1198 = vmatpush.bf16.msra.mxu0 %v1130
        %1199 = vmatpush.bf16.msra.mxu0 %v1128
        %1200 = vmatmul.bf16.gmra.mxu0 %v1020
        %v1201 = vpop.f32.mrf.mxu0
        %v1202 = vadd.f32 0.0, %v1201
        %v1203 = vpop.f32.mrf.mxu0
        %v1204 = vadd.f32 0.0, %v1203
        %1205 = vmatmul.bf16.gmra.mxu0 %v1025
        %v1206 = vpop.f32.mrf.mxu0
        %v1207 = vadd.f32 0.0, %v1206
        %v1208 = vpop.f32.mrf.mxu0
        %v1209 = vadd.f32 0.0, %v1208
        %1210 = vdwg.mxu0
        %1211 = vmatpush.bf16.msra.mxu0 %v1158
        %1212 = vmatpush.bf16.msra.mxu0 %v1156
        %1213 = vmatpush.bf16.msra.mxu0 %v1154
        %1214 = vmatpush.bf16.msra.mxu0 %v1152
        %1215 = vmatpush.bf16.msra.mxu0 %v1150
        %1216 = vmatpush.bf16.msra.mxu0 %v1148
        %1217 = vmatpush.bf16.msra.mxu0 %v1146
        %1218 = vmatpush.bf16.msra.mxu0 %v1144
        %1219 = vmatmul.bf16.gmra.mxu0 %v1023
        %v1220 = vpop.f32.mrf.mxu0
        %v1221 = vadd.f32 %v1202, %v1220
        %v1222 = vpop.f32.mrf.mxu0
        %v1223 = vadd.f32 %v1204, %v1222
        %1224 = vmatmul.bf16.gmra.mxu0 %v1027
        %v1225 = vpop.f32.mrf.mxu0
        %v1226 = vadd.f32 %v1207, %v1225
        %v1227 = vpop.f32.mrf.mxu0
        %v1228 = vadd.f32 %v1209, %v1227
        %1229 = vdwg.mxu0
        %1230 = vmatpush.bf16.msra.mxu0 %v1143
        %1231 = vmatpush.bf16.msra.mxu0 %v1141
        %1232 = vmatpush.bf16.msra.mxu0 %v1139
        %1233 = vmatpush.bf16.msra.mxu0 %v1137
        %1234 = vmatpush.bf16.msra.mxu0 %v1135
        %1235 = vmatpush.bf16.msra.mxu0 %v1133
        %1236 = vmatpush.bf16.msra.mxu0 %v1131
        %1237 = vmatpush.bf16.msra.mxu0 %v1129
        %1238 = vmatmul.bf16.gmra.mxu0 %v1020
        %v1239 = vpop.f32.mrf.mxu0
        %v1240 = vadd.f32 0.0, %v1239
        %v1241 = vpop.f32.mrf.mxu0
        %v1242 = vadd.f32 0.0, %v1241
        %1243 = vmatmul.bf16.gmra.mxu0 %v1025
        %v1244 = vpop.f32.mrf.mxu0
        %v1245 = vadd.f32 0.0, %v1244
        %v1246 = vpop.f32.mrf.mxu0
        %v1247 = vadd.f32 0.0, %v1246
        %1248 = vdwg.mxu0
        %1249 = vmatpush.bf16.msra.mxu0 %v1159
        %1250 = vmatpush.bf16.msra.mxu0 %v1157
        %1251 = vmatpush.bf16.msra.mxu0 %v1155
        %1252 = vmatpush.bf16.msra.mxu0 %v1153
        %1253 = vmatpush.bf16.msra.mxu0 %v1151
        %1254 = vmatpush.bf16.msra.mxu0 %v1149
        %1255 = vmatpush.bf16.msra.mxu0 %v1147
        %1256 = vmatpush.bf16.msra.mxu0 %v1145
        %1257 = vmatmul.bf16.gmra.mxu0 %v1023
        %v1258 = vpop.f32.mrf.mxu0
        %v1259 = vadd.f32 %v1240, %v1258
        %v1260 = vpop.f32.mrf.mxu0
        %v1261 = vadd.f32 %v1242, %v1260
        %1262 = vmatmul.bf16.gmra.mxu0 %v1027
        %v1263 = vpop.f32.mrf.mxu0
        %v1264 = vadd.f32 %v1245, %v1263
        %v1265 = vpop.f32.mrf.mxu0
        %v1266 = vadd.f32 %v1247, %v1265
        %1267 = vdwg.mxu0
        %v1269 = vunpack.c.l.b16 %v924
        %v1270 = vunpack.c.h.b16 %v924
        %v1271 = vpack.c.b16 %v1003, %v1269
        %v1272 = vpack.c.b16 %v1004, %v1270
        %v1274 = vshrl.u32 %v1271, 16
        %v1276 = vshll.u32 %v1271, 16
        %v1278 = vrot.slane %v1276, 1
        %v1279 = vor.u32 %v1274, %v1278
        %v1281 = vshll.u32 %v1013, 16
        %v1283 = vrot.slane %v1281, 1
        %v1284 = vsel %vm373, %v1279, %v1283
        %v1286 = vshrl.u32 %v1272, 16
        %v1288 = vshll.u32 %v1272, 16
        %v1290 = vrot.slane %v1288, 1
        %v1291 = vor.u32 %v1286, %v1290
        %v1293 = vshll.u32 %v1014, 16
        %v1295 = vrot.slane %v1293, 1
        %v1296 = vsel %vm373, %v1291, %v1295
        %v1297 = vshrl.u32 %v1013, 16
        %v1299 = vor.u32 %v1297, %v1283
        %v1301 = vshll.u32 %v1015, 16
        %v1303 = vrot.slane %v1301, 1
        %v1304 = vsel %vm373, %v1299, %v1303
        %v1305 = vshrl.u32 %v1014, 16
        %v1307 = vor.u32 %v1305, %v1295
        %v1309 = vshll.u32 %v1016, 16
        %v1311 = vrot.slane %v1309, 1
        %v1312 = vsel %vm373, %v1307, %v1311
        %v1349 = vunpack.c.l.b16 %v930
        %v1350 = vunpack.c.h.b16 %v930
        %v1351 = vunpack.c.l.b16 %v931
        %v1352 = vunpack.c.h.b16 %v931
        %v1353 = vunpack.c.l.b16 %v932
        %v1354 = vunpack.c.h.b16 %v932
        %v1355 = vunpack.c.l.b16 %v933
        %v1356 = vunpack.c.h.b16 %v933
        %v1357 = vunpack.c.l.b16 %v934
        %v1358 = vunpack.c.h.b16 %v934
        %v1359 = vunpack.c.l.b16 %v935
        %v1360 = vunpack.c.h.b16 %v935
        %v1361 = vunpack.c.l.b16 %v936
        %v1362 = vunpack.c.h.b16 %v936
        %v1363 = vunpack.c.l.b16 %v937
        %v1364 = vunpack.c.h.b16 %v937
        %v1365 = vunpack.c.l.b16 %v938
        %v1366 = vunpack.c.h.b16 %v938
        %v1367 = vunpack.c.l.b16 %v939
        %v1368 = vunpack.c.h.b16 %v939
        %v1369 = vunpack.c.l.b16 %v940
        %v1370 = vunpack.c.h.b16 %v940
        %v1371 = vunpack.c.l.b16 %v941
        %v1372 = vunpack.c.h.b16 %v941
        %v1373 = vunpack.c.l.b16 %v942
        %v1374 = vunpack.c.h.b16 %v942
        %v1375 = vunpack.c.l.b16 %v943
        %v1376 = vunpack.c.h.b16 %v943
        %v1377 = vunpack.c.l.b16 %v944
        %v1378 = vunpack.c.h.b16 %v944
        %v1379 = vunpack.c.l.b16 %v945
        %v1380 = vunpack.c.h.b16 %v945
        %v1381 = vunpack.c.l.b16 %v946
        %v1382 = vunpack.c.h.b16 %v946
        %v1383 = vunpack.c.l.b16 %v947
        %v1384 = vunpack.c.h.b16 %v947
        %v1385 = vunpack.c.l.b16 %v948
        %v1386 = vunpack.c.h.b16 %v948
        %v1387 = vunpack.c.l.b16 %v949
        %v1388 = vunpack.c.h.b16 %v949
        %v1389 = vunpack.c.l.b16 %v950
        %v1390 = vunpack.c.h.b16 %v950
        %v1391 = vunpack.c.l.b16 %v951
        %v1392 = vunpack.c.h.b16 %v951
        %v1393 = vunpack.c.l.b16 %v952
        %v1394 = vunpack.c.h.b16 %v952
        %v1395 = vunpack.c.l.b16 %v953
        %v1396 = vunpack.c.h.b16 %v953
        %v1397 = vunpack.c.l.b16 %v954
        %v1398 = vunpack.c.h.b16 %v954
        %v1399 = vunpack.c.l.b16 %v955
        %v1400 = vunpack.c.h.b16 %v955
        %v1401 = vunpack.c.l.b16 %v956
        %v1402 = vunpack.c.h.b16 %v956
        %v1403 = vunpack.c.l.b16 %v957
        %v1404 = vunpack.c.h.b16 %v957
        %v1405 = vunpack.c.l.b16 %v958
        %v1406 = vunpack.c.h.b16 %v958
        %v1407 = vunpack.c.l.b16 %v959
        %v1408 = vunpack.c.h.b16 %v959
        %v1409 = vunpack.c.l.b16 %v960
        %v1410 = vunpack.c.h.b16 %v960
        %v1411 = vunpack.c.l.b16 %v961
        %v1412 = vunpack.c.h.b16 %v961
        %v1413 = vpack.c.b16 %v1351, %v1349
        %v1414 = vpack.c.b16 %v1352, %v1350
        %v1415 = vpack.c.b16 %v1355, %v1353
        %v1416 = vpack.c.b16 %v1356, %v1354
        %v1417 = vpack.c.b16 %v1359, %v1357
        %v1418 = vpack.c.b16 %v1360, %v1358
        %v1419 = vpack.c.b16 %v1363, %v1361
        %v1420 = vpack.c.b16 %v1364, %v1362
        %v1421 = vpack.c.b16 %v1367, %v1365
        %v1422 = vpack.c.b16 %v1368, %v1366
        %v1423 = vpack.c.b16 %v1371, %v1369
        %v1424 = vpack.c.b16 %v1372, %v1370
        %v1425 = vpack.c.b16 %v1375, %v1373
        %v1426 = vpack.c.b16 %v1376, %v1374
        %v1427 = vpack.c.b16 %v1379, %v1377
        %v1428 = vpack.c.b16 %v1380, %v1378
        %v1429 = vpack.c.b16 %v1383, %v1381
        %v1430 = vpack.c.b16 %v1384, %v1382
        %v1431 = vpack.c.b16 %v1387, %v1385
        %v1432 = vpack.c.b16 %v1388, %v1386
        %v1433 = vpack.c.b16 %v1391, %v1389
        %v1434 = vpack.c.b16 %v1392, %v1390
        %v1435 = vpack.c.b16 %v1395, %v1393
        %v1436 = vpack.c.b16 %v1396, %v1394
        %v1437 = vpack.c.b16 %v1399, %v1397
        %v1438 = vpack.c.b16 %v1400, %v1398
        %v1439 = vpack.c.b16 %v1403, %v1401
        %v1440 = vpack.c.b16 %v1404, %v1402
        %v1441 = vpack.c.b16 %v1407, %v1405
        %v1442 = vpack.c.b16 %v1408, %v1406
        %v1443 = vpack.c.b16 %v1411, %v1409
        %v1444 = vpack.c.b16 %v1412, %v1410
        %1477 = vmatpush.bf16.msra.mxu0 %v1427
        %1478 = vmatpush.bf16.msra.mxu0 %v1425
        %1479 = vmatpush.bf16.msra.mxu0 %v1423
        %1480 = vmatpush.bf16.msra.mxu0 %v1421
        %1481 = vmatpush.bf16.msra.mxu0 %v1419
        %1482 = vmatpush.bf16.msra.mxu0 %v1417
        %1483 = vmatpush.bf16.msra.mxu0 %v1415
        %1484 = vmatpush.bf16.msra.mxu0 %v1413
        %1485 = vmatmul.bf16.gmra.mxu0 %v1284
        %v1486 = vpop.f32.mrf.mxu0
        %v1487 = vadd.f32 %v1221, %v1486
        %v1488 = vpop.f32.mrf.mxu0
        %v1489 = vadd.f32 %v1223, %v1488
        %1490 = vmatmul.bf16.gmra.mxu0 %v1304
        %v1491 = vpop.f32.mrf.mxu0
        %v1492 = vadd.f32 %v1226, %v1491
        %v1493 = vpop.f32.mrf.mxu0
        %v1494 = vadd.f32 %v1228, %v1493
        %1495 = vdwg.mxu0
        %1496 = vmatpush.bf16.msra.mxu0 %v1443
        %1497 = vmatpush.bf16.msra.mxu0 %v1441
        %1498 = vmatpush.bf16.msra.mxu0 %v1439
        %1499 = vmatpush.bf16.msra.mxu0 %v1437
        %1500 = vmatpush.bf16.msra.mxu0 %v1435
        %1501 = vmatpush.bf16.msra.mxu0 %v1433
        %1502 = vmatpush.bf16.msra.mxu0 %v1431
        %1503 = vmatpush.bf16.msra.mxu0 %v1429
        %1504 = vmatmul.bf16.gmra.mxu0 %v1296
        %v1505 = vpop.f32.mrf.mxu0
        %v1506 = vadd.f32 %v1487, %v1505
        %v1507 = vpop.f32.mrf.mxu0
        %v1508 = vadd.f32 %v1489, %v1507
        %1509 = vmatmul.bf16.gmra.mxu0 %v1312
        %v1510 = vpop.f32.mrf.mxu0
        %v1511 = vadd.f32 %v1492, %v1510
        %v1512 = vpop.f32.mrf.mxu0
        %v1513 = vadd.f32 %v1494, %v1512
        %1514 = vdwg.mxu0
        %1515 = vmatpush.bf16.msra.mxu0 %v1428
        %1516 = vmatpush.bf16.msra.mxu0 %v1426
        %1517 = vmatpush.bf16.msra.mxu0 %v1424
        %1518 = vmatpush.bf16.msra.mxu0 %v1422
        %1519 = vmatpush.bf16.msra.mxu0 %v1420
        %1520 = vmatpush.bf16.msra.mxu0 %v1418
        %1521 = vmatpush.bf16.msra.mxu0 %v1416
        %1522 = vmatpush.bf16.msra.mxu0 %v1414
        %1523 = vmatmul.bf16.gmra.mxu0 %v1284
        %v1524 = vpop.f32.mrf.mxu0
        %v1525 = vadd.f32 %v1259, %v1524
        %v1526 = vpop.f32.mrf.mxu0
        %v1527 = vadd.f32 %v1261, %v1526
        %1528 = vmatmul.bf16.gmra.mxu0 %v1304
        %v1529 = vpop.f32.mrf.mxu0
        %v1530 = vadd.f32 %v1264, %v1529
        %v1531 = vpop.f32.mrf.mxu0
        %v1532 = vadd.f32 %v1266, %v1531
        %1533 = vdwg.mxu0
        %1534 = vmatpush.bf16.msra.mxu0 %v1444
        %1535 = vmatpush.bf16.msra.mxu0 %v1442
        %1536 = vmatpush.bf16.msra.mxu0 %v1440
        %1537 = vmatpush.bf16.msra.mxu0 %v1438
        %1538 = vmatpush.bf16.msra.mxu0 %v1436
        %1539 = vmatpush.bf16.msra.mxu0 %v1434
        %1540 = vmatpush.bf16.msra.mxu0 %v1432
        %1541 = vmatpush.bf16.msra.mxu0 %v1430
        %1542 = vmatmul.bf16.gmra.mxu0 %v1296
        %v1543 = vpop.f32.mrf.mxu0
        %v1544 = vadd.f32 %v1525, %v1543
        %v1545 = vpop.f32.mrf.mxu0
        %v1546 = vadd.f32 %v1527, %v1545
        %1547 = vmatmul.bf16.gmra.mxu0 %v1312
        %v1548 = vpop.f32.mrf.mxu0
        %v1549 = vadd.f32 %v1530, %v1548
        %v1550 = vpop.f32.mrf.mxu0
        %v1551 = vadd.f32 %v1532, %v1550
        %1552 = vdwg.mxu0
        %v1553 = vld [vmem:[#allocation5] sm:$0x3]
        %v1555 = vperm.slane %v1553, 0
        %v1556 = vperm.slane %v1553, 1
        %v1559 = vadd.f32 %v1506, %v1555
        %v1560 = vadd.f32 %v1544, %v1556
        %v1561 = vadd.f32 %v1508, %v1555
        %v1562 = vadd.f32 %v1546, %v1556
        %v1563 = vadd.f32 %v1511, %v1555
        %v1564 = vadd.f32 %v1549, %v1556
        %v1565 = vadd.f32 %v1513, %v1555
        %v1566 = vadd.f32 %v1551, %v1556
        %v1567 = vmax.f32 %v1559, 0.0
        %v1568 = vmax.f32 %v1560, 0.0
        %v1569 = vmax.f32 %v1561, 0.0
        %v1570 = vmax.f32 %v1562, 0.0
        %v1571 = vmax.f32 %v1563, 0.0
        %v1572 = vmax.f32 %v1564, 0.0
        %v1573 = vmax.f32 %v1565, 0.0
        %v1574 = vmax.f32 %v1566, 0.0
        %v1575 = vpack.c.bf16 %v1568, %v1567
        %v1576 = vpack.c.bf16 %v1570, %v1569
        %v1577 = vpack.c.bf16 %v1572, %v1571
        %v1578 = vpack.c.bf16 %v1574, %v1573
        %1579 = vst [vmem:[%s202 + $0x8] sm:$0xff] %v1575
        %1580 = vst [vmem:[%s202 + $0x18] sm:$0xff] %v1576
        %1581 = vst [vmem:[%s202 + $0x28] sm:$0xff] %v1577
        %1582 = vst [vmem:[%s202 + $0x38] sm:$0xff] %v1578
        %p1583 = scmp.lt.s32.totalorder %s16, 1
        %s1584 = scalar_select %p1583, %s16, 1
        %s1585 = smul.addr %s1584, 16
        %s1586 = smul.addr %s1585, 4
        %s1587 = scalar_lea.vmem %s3, %s1586
        // Predicated region
        $region41: #{_lambda_.8} parent=31 // pred_check
          %p1588 = pneg %p102
        $region42: #{_lambda_.8} parent=31 // pred_check_branch
          %1590 = sbr.rel (%p1588) target = $region44
        $region43: #{_lambda_.8} parent=31 // pred_region
          _
        $region44: #{_lambda_.8} parent=31 // pred_fallthru
          _
      $region32: #{_lambda_.8} parent=5 // pred_fallthru
        _
      %p1591 = scmp.le.s32.totalorder 2, %s11
      // Predicated region
      $region45: #{_lambda_.8} parent=5 // pred_check
        %p1592 = pneg %p1591
      $region46: #{_lambda_.8} parent=5 // pred_check_branch
        %1594 = sbr.rel (%p1592) target = $region48
      $region47: #{_lambda_.8} parent=5 // pred_region
        %s1595 = ssub.s32 %s11, 2
        // Predicated region
        $region49: #{_lambda_.8} parent=47 // pred_check
          %p1596 = pneg %p108
        $region50: #{_lambda_.8} parent=47 // pred_check_branch
          %1598 = sbr.rel (%p1596) target = $region52
        $region51: #{_lambda_.8} parent=47 // pred_region
          %p1599 = scmp.lt.s32.totalorder %s17, 1
          %s1600 = scalar_select %p1599, %s17, 1
          %s1601 = smul.addr %s1600, 16
          %s1602 = smul.addr %s1601, 4
          %s1603 = scalar_lea.vmem %s3, %s1602
        $region52: #{_lambda_.8} parent=47 // pred_fallthru
          _
      $region48: #{_lambda_.8} parent=5 // pred_fallthru
        _
    $region6: #{_lambda_.8} parent=1 // loop_footer
      %s15 = sadd.s32 1, %s11
    $region7: #{_lambda_.8} parent=1 // loop_footer_branch
      %10 = sbr.rel target = $region3
    $region8: #{_lambda_.8} parent=1 // loop_exit
      _
    %1604 = vsyncpa [#allocation4], 1
    %s1605 = scalar_lea.sflag [#allocation4], 1
    %1606 = vsyncpa %s1605, 1
    %1607 = vsyncpa [#allocation6], 1

// kernel: _lambda_.9
$region0: #{_lambda_.9}
  #allocation0 [shape = 'u32[]', space=smem, size = 0x4, offset = 0x4, fixed_abs, tag = 'smem constant byte address 0x4 - core index']
  #allocation1 [shape = 'u32[72,128]{1,0:T(1,128)}', space=vmem, size = 0x9000, scoped, tag = 'internal scratch']
  #allocation2 [shape = 'bf16[66,256]{1,0:T(8,128)(2,1)}', space=vmem, size = 0x9000, scoped, tag = 'scratch operand']
  %s0 = inlined_call_operand.vmem [shape: bf16[2,64,256], index: 0, kind: input, shape index: {}]
  %s1 = inlined_call_operand.hbm [shape: bf16[3,256,256], index: 1, kind: input, shape index: {}]
  %s2 = inlined_call_operand.hbm [shape: f32[1,256], index: 2, kind: input, shape index: {}]
  %s3 = inlined_call_operand.hbm [shape: bf16[2,256,64], index: 3, kind: input, shape index: {}]
  %s4 = inlined_call_operand.hbm [shape: f32[1,2], index: 4, kind: input, shape index: {}]
  %s5 = inlined_call_operand.vmem [shape: bf16[2,64,256], index: 5, kind: output, shape index: {0}]
  %s6 = inlined_call_operand.hbm [shape: f32[2,2,64,64], index: 6, kind: output, shape index: {1}]
  %7 = xla_tuple %s5, %s6
  %s8 = sld [smem:[#allocation0]]
  $region77: #{_lambda_.9} parent=0
    _
  %s10 = ssub.s32 1, %s8
  %s11 = scalar_select 0, %s10, %s8
  $region1: #{_lambda_.9} parent=0
    #allocation3 [shape = 'u8[393216]{0}', space=vmem, size = 0x60000, scoped, tag = 'input window, operand 1, single buffered']
    #allocation4 [shape = 's32[2]{0}', space=sflag, size = 0x8, scoped, tag = 'scoped memory for _lambda_.9']
    #allocation5 [shape = 's32[2]{0}', space=sflag, size = 0x8, scoped, tag = 'scoped memory for _lambda_.9']
    #allocation6 [shape = 'u8[1024]{0}', space=vmem, size = 0x400, scoped, tag = 'input window, operand 2, single buffered']
    #allocation7 [shape = 's32[1]{0}', space=sflag, size = 0x4, scoped, tag = 'scoped memory for _lambda_.9']
    #allocation8 [shape = 'u8[131072]{0}', space=vmem, size = 0x20000, scoped, tag = 'input window, operand 3, single buffered']
    #allocation9 [shape = 'u8[512]{0}', space=vmem, size = 0x400, scoped, tag = 'input window, operand 4, single buffered']
    #allocation10 [shape = 's32[1]{0}', space=sflag, size = 0x4, scoped, tag = 'scoped memory for _lambda_.9']
    #allocation11 [shape = 'u8[131072]{0}', space=vmem, size = 0x20000, scoped, tag = 'output window, operand 1']
    %12 = vsyncpa [#allocation4], 0
    %13 = vsyncpa [#allocation7], 0
    %14 = vsyncpa [#allocation10], 0
    %15 = vsyncpa [#allocation5], 0
    %s16 = scalar_lea.sflag [#allocation5], 1
    %17 = vsyncpa %s16, 0
    loop: start=0, step=1, limit=4
    $region2: #{_lambda_.9} parent=1 // loop_pre_header
      _
    $region3: #{_lambda_.9} parent=1 // loop_header
      %s19 = sphi 0, %s23
      %p20 = scmp.ge.s32.totalorder %s19, 4
      %s29 = sphi 0, %s31
      %s32 = sphi 0, %s29
      %s33 = sphi 0, %s32
      %s49 = sphi 0, %s33
      %s53 = sphi 0, %s53
      %s55 = sphi 0, %s53
      %s56 = sphi 0, %s55
      %s70 = sphi 0, %s56
      %s74 = sphi 0, %s74
      %s76 = sphi 0, %s74
      %s77 = sphi 0, %s76
      %s91 = sphi 0, %s77
      %s95 = sphi 0, %s95
      %s97 = sphi 0, %s95
      %s98 = sphi 0, %s97
      %s112 = sphi 0, %s98
      %s116 = sphi 0, %s116
      %s118 = sphi 0, %s116
      %s119 = sphi 0, %s118
      %s133 = sphi 0, %s119
      %s139 = sphi 0, %s141
      %s142 = sphi 0, %s139
      %s143 = sphi 0, %s142
      %s159 = sphi 0, %s143
      %s165 = sphi 0, %s167
      %s168 = sphi 0, %s165
      %s169 = sphi 0, %s168
      %s185 = sphi 0, %s169
    $region4: #{_lambda_.9} parent=1 // loop_header_branch
      %22 = sbr.rel (%p20) target = $region8
    $region5: #{_lambda_.9} parent=1 // loop_body
      %s24 = ssub.s32 %s19, 1
      %s25 = ssub.s32 %s19, 2
      %s26 = sadd.s32 %s19, 1
      %s27 = ssub.s32 %s19, %s26
      %p28 = scmp.eq.s32.totalorder %s27, 0
      %s30 = sadd.s32 %s29, 1
      %s31 = scalar_select %p28, %s29, %s30
      %p34 = pneg %p28
      %p35 = scmp.eq.s32.totalorder %s19, 1
      %p36 = por %p34, %p35
      %p37 = scmp.ne.s32.totalorder %s29, %s32
      %p38 = scmp.eq.s32.totalorder %s19, 0
      %p39 = por %p37, %p38
      %p40 = scmp.ne.s32.totalorder %s29, %s32
      %p41 = scmp.eq.s32.totalorder %s24, 1
      %p42 = por %p40, %p41
      %p43 = scmp.ne.s32.totalorder %s32, %s33
      %p44 = scmp.eq.s32.totalorder %s24, 0
      %p45 = por %p43, %p44
      %p46 = scmp.ne.s32.totalorder %s32, %s33
      %p47 = scmp.eq.s32.totalorder %s25, 1
      %p48 = por %p46, %p47
      %p50 = scmp.ne.s32.totalorder %s33, %s49
      %p51 = scmp.eq.s32.totalorder %s25, 0
      %p52 = por %p50, %p51
      %s54 = sadd.s32 %s53, 1
      %p57 = scmp.eq.s32.totalorder %s19, 1
      %p58 = scmp.ne.s32.totalorder %s53, %s55
      %p59 = scmp.eq.s32.totalorder %s19, 0
      %p60 = por %p58, %p59
      %p61 = scmp.ne.s32.totalorder %s53, %s55
      %p62 = scmp.eq.s32.totalorder %s24, 1
      %p63 = por %p61, %p62
      %p64 = scmp.ne.s32.totalorder %s55, %s56
      %p65 = scmp.eq.s32.totalorder %s24, 0
      %p66 = por %p64, %p65
      %p67 = scmp.ne.s32.totalorder %s55, %s56
      %p68 = scmp.eq.s32.totalorder %s25, 1
      %p69 = por %p67, %p68
      %p71 = scmp.ne.s32.totalorder %s56, %s70
      %p72 = scmp.eq.s32.totalorder %s25, 0
      %p73 = por %p71, %p72
      %s75 = sadd.s32 %s74, 1
      %p78 = scmp.eq.s32.totalorder %s19, 1
      %p79 = scmp.ne.s32.totalorder %s74, %s76
      %p80 = scmp.eq.s32.totalorder %s19, 0
      %p81 = por %p79, %p80
      %p82 = scmp.ne.s32.totalorder %s74, %s76
      %p83 = scmp.eq.s32.totalorder %s24, 1
      %p84 = por %p82, %p83
      %p85 = scmp.ne.s32.totalorder %s76, %s77
      %p86 = scmp.eq.s32.totalorder %s24, 0
      %p87 = por %p85, %p86
      %p88 = scmp.ne.s32.totalorder %s76, %s77
      %p89 = scmp.eq.s32.totalorder %s25, 1
      %p90 = por %p88, %p89
      %p92 = scmp.ne.s32.totalorder %s77, %s91
      %p93 = scmp.eq.s32.totalorder %s25, 0
      %p94 = por %p92, %p93
      %s96 = sadd.s32 %s95, 1
      %p99 = scmp.eq.s32.totalorder %s19, 1
      %p100 = scmp.ne.s32.totalorder %s95, %s97
      %p101 = scmp.eq.s32.totalorder %s19, 0
      %p102 = por %p100, %p101
      %p103 = scmp.ne.s32.totalorder %s95, %s97
      %p104 = scmp.eq.s32.totalorder %s24, 1
      %p105 = por %p103, %p104
      %p106 = scmp.ne.s32.totalorder %s97, %s98
      %p107 = scmp.eq.s32.totalorder %s24, 0
      %p108 = por %p106, %p107
      %p109 = scmp.ne.s32.totalorder %s97, %s98
      %p110 = scmp.eq.s32.totalorder %s25, 1
      %p111 = por %p109, %p110
      %p113 = scmp.ne.s32.totalorder %s98, %s112
      %p114 = scmp.eq.s32.totalorder %s25, 0
      %p115 = por %p113, %p114
      %s117 = sadd.s32 %s116, 1
      %p120 = scmp.eq.s32.totalorder %s19, 1
      %p121 = scmp.ne.s32.totalorder %s116, %s118
      %p122 = scmp.eq.s32.totalorder %s19, 0
      %p123 = por %p121, %p122
      %p124 = scmp.ne.s32.totalorder %s116, %s118
      %p125 = scmp.eq.s32.totalorder %s24, 1
      %p126 = por %p124, %p125
      %p127 = scmp.ne.s32.totalorder %s118, %s119
      %p128 = scmp.eq.s32.totalorder %s24, 0
      %p129 = por %p127, %p128
      %p130 = scmp.ne.s32.totalorder %s118, %s119
      %p131 = scmp.eq.s32.totalorder %s25, 1
      %p132 = por %p130, %p131
      %p134 = scmp.ne.s32.totalorder %s119, %s133
      %p135 = scmp.eq.s32.totalorder %s25, 0
      %p136 = por %p134, %p135
      %s137 = ssub.s32 %s19, %s26
      %p138 = scmp.eq.s32.totalorder %s137, 0
      %s140 = sadd.s32 %s139, 1
      %s141 = scalar_select %p138, %s139, %s140
      %p144 = pneg %p138
      %p145 = scmp.eq.s32.totalorder %s19, 1
      %p146 = por %p144, %p145
      %p147 = scmp.ne.s32.totalorder %s139, %s142
      %p148 = scmp.eq.s32.totalorder %s19, 0
      %p149 = por %p147, %p148
      %p150 = scmp.ne.s32.totalorder %s139, %s142
      %p151 = scmp.eq.s32.totalorder %s24, 1
      %p152 = por %p150, %p151
      %p153 = scmp.ne.s32.totalorder %s142, %s143
      %p154 = scmp.eq.s32.totalorder %s24, 0
      %p155 = por %p153, %p154
      %p156 = scmp.ne.s32.totalorder %s142, %s143
      %p157 = scmp.eq.s32.totalorder %s25, 1
      %p158 = por %p156, %p157
      %p160 = scmp.ne.s32.totalorder %s143, %s159
      %p161 = scmp.eq.s32.totalorder %s25, 0
      %p162 = por %p160, %p161
      %s163 = ssub.s32 %s19, %s26
      %p164 = scmp.eq.s32.totalorder %s163, 0
      %s166 = sadd.s32 %s165, 1
      %s167 = scalar_select %p164, %s165, %s166
      %p170 = pneg %p164
      %p171 = scmp.eq.s32.totalorder %s19, 1
      %p172 = por %p170, %p171
      %p173 = scmp.ne.s32.totalorder %s165, %s168
      %p174 = scmp.eq.s32.totalorder %s19, 0
      %p175 = por %p173, %p174
      %p176 = scmp.ne.s32.totalorder %s165, %s168
      %p177 = scmp.eq.s32.totalorder %s24, 1
      %p178 = por %p176, %p177
      %p179 = scmp.ne.s32.totalorder %s168, %s169
      %p180 = scmp.eq.s32.totalorder %s24, 0
      %p181 = por %p179, %p180
      %p182 = scmp.ne.s32.totalorder %s168, %s169
      %p183 = scmp.eq.s32.totalorder %s25, 1
      %p184 = por %p182, %p183
      %p186 = scmp.ne.s32.totalorder %s169, %s185
      %p187 = scmp.eq.s32.totalorder %s25, 0
      %p188 = por %p186, %p187
      %p189 = scmp.le.s32.totalorder 1, %s19
      %p190 = scmp.lt.s32.totalorder %s19, 3
      %p191 = pnand %p189, %p190
      %p192 = pneg %p191
      // Predicated region
      $region9: #{_lambda_.9} parent=5 // pred_check
        _
      $region10: #{_lambda_.9} parent=5 // pred_check_branch
        %194 = sbr.rel (%p191) target = $region12
      $region11: #{_lambda_.9} parent=5 // pred_region
        %s195 = ssub.s32 %s19, 1
        // Predicated region
        $region13: #{_lambda_.9} parent=11 // pred_check
          %p196 = pneg %p66
        $region14: #{_lambda_.9} parent=11 // pred_check_branch
          %198 = sbr.rel (%p196) target = $region16
        $region15: #{_lambda_.9} parent=11 // pred_region
          %200 = vsyncadd [#allocation4], 0
          %s201 = sshll.u32 %s1, 4
          %s202 = int_to_ptr.hbm [resolvable:$true] %s201
          %s203 = sshll.u32 [#allocation3], 4
          %s204 = int_to_ptr.vmem [resolvable:$true] %s203
          %209 = dma.hbm_to_vmem [thread:$0]  %s202, 12288, %s204, [#allocation4], 128, 128, 8
        $region16: #{_lambda_.9} parent=11 // pred_fallthru
          _
        // Predicated region
        $region17: #{_lambda_.9} parent=11 // pred_check
          %p210 = pneg %p87
        $region18: #{_lambda_.9} parent=11 // pred_check_branch
          %212 = sbr.rel (%p210) target = $region20
        $region19: #{_lambda_.9} parent=11 // pred_region
          %214 = vsyncadd [#allocation7], 0
          %s216 = sshll.u32 %s2, 4
          %s217 = int_to_ptr.hbm [resolvable:$true] %s216
          %s218 = sshll.u32 [#allocation6], 4
          %s219 = int_to_ptr.vmem [resolvable:$true] %s218
          %221 = dma.hbm_to_vmem [thread:$0]  %s217, 32, %s219, [#allocation7]
        $region20: #{_lambda_.9} parent=11 // pred_fallthru
          _
        // Predicated region
        $region21: #{_lambda_.9} parent=11 // pred_check
          %p222 = pneg %p108
        $region22: #{_lambda_.9} parent=11 // pred_check_branch
          %224 = sbr.rel (%p222) target = $region24
        $region23: #{_lambda_.9} parent=11 // pred_region
          %226 = vsyncadd [#allocation7], 0
          %s227 = sshll.u32 %s3, 4
          %s228 = int_to_ptr.hbm [resolvable:$true] %s227
          %s229 = sshll.u32 [#allocation8], 4
          %s230 = int_to_ptr.vmem [resolvable:$true] %s229
          %235 = dma.hbm_to_vmem [thread:$0]  %s228, 4096, %s230, [#allocation7], 64, 64, 4
        $region24: #{_lambda_.9} parent=11 // pred_fallthru
          _
        // Predicated region
        $region25: #{_lambda_.9} parent=11 // pred_check
          %p236 = pneg %p129
        $region26: #{_lambda_.9} parent=11 // pred_check_branch
          %238 = sbr.rel (%p236) target = $region28
        $region27: #{_lambda_.9} parent=11 // pred_region
          %240 = vsyncadd [#allocation10], 0
          %s242 = sshll.u32 %s4, 4
          %s243 = int_to_ptr.hbm [resolvable:$true] %s242
          %s244 = sshll.u32 [#allocation9], 4
          %s245 = int_to_ptr.vmem [resolvable:$true] %s244
          %247 = dma.hbm_to_vmem [thread:$0]  %s243, 16, %s245, [#allocation10]
        $region28: #{_lambda_.9} parent=11 // pred_fallthru
          _
      $region12: #{_lambda_.9} parent=5 // pred_fallthru
        _
      %p248 = scmp.lt.s32.totalorder %s19, 2
      // Predicated region
      $region29: #{_lambda_.9} parent=5 // pred_check
        %p249 = pneg %p248
      $region30: #{_lambda_.9} parent=5 // pred_check_branch
        %251 = sbr.rel (%p249) target = $region32
      $region31: #{_lambda_.9} parent=5 // pred_region
        // Predicated region
        $region33: #{_lambda_.9} parent=31 // pred_check
          %p252 = pneg %p39
        $region34: #{_lambda_.9} parent=31 // pred_check_branch
          %254 = sbr.rel (%p252) target = $region36
        $region35: #{_lambda_.9} parent=31 // pred_region
          %p255 = scmp.lt.s32.totalorder %s19, 1
          %s256 = scalar_select %p255, %s19, 1
          %s257 = smul.addr %s256, 16
          %s258 = smul.addr %s257, 4
          %s259 = scalar_lea.vmem %s0, %s258
        $region36: #{_lambda_.9} parent=31 // pred_fallthru
          _
      $region32: #{_lambda_.9} parent=5 // pred_fallthru
        _
      %p260 = scmp.le.s32.totalorder 1, %s19
      %p261 = scmp.lt.s32.totalorder %s19, 3
      %p262 = pnand %p260, %p261
      %p263 = pneg %p262
      // Predicated region
      $region37: #{_lambda_.9} parent=5 // pred_check
        _
      $region38: #{_lambda_.9} parent=5 // pred_check_branch
        %265 = sbr.rel (%p262) target = $region40
      $region39: #{_lambda_.9} parent=5 // pred_region
        %s266 = ssub.s32 %s19, 1
        // Predicated region
        $region41: #{_lambda_.9} parent=39 // pred_check
          %p267 = pneg %p66
        $region42: #{_lambda_.9} parent=39 // pred_check_branch
          %269 = sbr.rel (%p267) target = $region44
        $region43: #{_lambda_.9} parent=39 // pred_region
          %271 = dma.done [#allocation4], 12288
        $region44: #{_lambda_.9} parent=39 // pred_fallthru
          _
        // Predicated region
        $region45: #{_lambda_.9} parent=39 // pred_check
          %p272 = pneg %p87
        $region46: #{_lambda_.9} parent=39 // pred_check_branch
          %274 = sbr.rel (%p272) target = $region48
        $region47: #{_lambda_.9} parent=39 // pred_region
          %276 = dma.done [#allocation7], 32
        $region48: #{_lambda_.9} parent=39 // pred_fallthru
          _
        // Predicated region
        $region49: #{_lambda_.9} parent=39 // pred_check
          %p277 = pneg %p108
        $region50: #{_lambda_.9} parent=39 // pred_check_branch
          %279 = sbr.rel (%p277) target = $region52
        $region51: #{_lambda_.9} parent=39 // pred_region
          %281 = dma.done [#allocation7], 4096
        $region52: #{_lambda_.9} parent=39 // pred_fallthru
          _
        // Predicated region
        $region53: #{_lambda_.9} parent=39 // pred_check
          %p282 = pneg %p129
        $region54: #{_lambda_.9} parent=39 // pred_check_branch
          %284 = sbr.rel (%p282) target = $region56
        $region55: #{_lambda_.9} parent=39 // pred_region
          %286 = dma.done [#allocation10], 16
        $region56: #{_lambda_.9} parent=39 // pred_fallthru
          _
        %p287 = scmp.lt.s32.totalorder %s24, 1
        %s288 = scalar_select %p287, %s24, 1
        %s289 = smul.addr %s288, 16
        %s290 = smul.addr %s289, 4
        %s291 = scalar_lea.vmem %s0, %s290
        %p292 = pneg %p45
        %p293 = pneg %p42
        %p294 = pneg %p66
        %p295 = pneg %p63
        %p296 = pneg %p87
        %p297 = pneg %p84
        %p298 = pneg %p108
        %p299 = pneg %p105
        %p300 = pneg %p129
        %p301 = pneg %p126
        %p302 = pneg %p155
        %p303 = pneg %p152
        %p304 = scmp.lt.s32.totalorder %s24, 1
        %s305 = scalar_select %p304, %s24, 1
        %s306 = smul.addr %s305, 16
        %s307 = smul.addr %s306, 4
        %s308 = scalar_lea.vmem %s5, %s307
        %p309 = pneg %p181
        %p310 = pneg %p178
        %s311 = sand.u32 %s168, 1
        %s312 = scalar_lea.sflag [#allocation5], %s311
        %s313 = sand.u32 %s168, 1
        %s314 = smul.addr %s313, 128
        %s315 = scalar_lea.vmem [#allocation11], %s314
        %p316 = scmp.lt.s32.totalorder %s24, 1
        %s317 = scalar_select %p316, %s24, 1
        %s318 = smul.addr %s317, 16
        %s319 = smul.addr %s318, 4
        %s320 = scalar_lea.vmem %s0, %s319
        %p321 = scmp.lt.s32.totalorder %s24, 1
        %s322 = scalar_select %p321, %s24, 1
        %s323 = smul.addr %s322, 16
        %s324 = smul.addr %s323, 4
        %s325 = scalar_lea.vmem %s5, %s324
        %vm327 = vcmask 1040384
        %vm328 = vsmask.f32 256
        %vm329 = vmand %vm327, %vm328
        %vm330 = vcmask 1044484
        %vm331 = vsmask.f32 4352
        %vm332 = vmand %vm330, %vm331
        %vm333 = vmor %vm332, %vm329
        %v334 = vld [vmem:[#allocation2] sm:$0x11]
        %v335 = vsel %vm333, 0, %v334
        %336 = vst [vmem:[#allocation2] sm:$0x11] %v335
        %vm337 = vsmask.f32 7938
        %vm338 = vmand %vm327, %vm337
        %vm339 = vsmask.f32 7954
        %vm340 = vmand %vm330, %vm339
        %vm341 = vmor %vm340, %vm338
        %v342 = vld [vmem:[#allocation2 + $0x40] sm:$0x11]
        %v343 = vsel %vm341, 0, %v342
        %344 = vst [vmem:[#allocation2 + $0x40] sm:$0x11] %v343
        %v345 = vld [vmem:[%s320] sm:$0xff]
        %v346 = vld [vmem:[%s320 + $0x8] sm:$0xff]
        %v347 = vld [vmem:[%s320 + $0x10] sm:$0xff]
        %v348 = vld [vmem:[%s320 + $0x18] sm:$0xff]
        %v349 = vld [vmem:[%s320 + $0x20] sm:$0xff]
        %v350 = vld [vmem:[%s320 + $0x28] sm:$0xff]
        %v351 = vld [vmem:[%s320 + $0x30] sm:$0xff]
        %v352 = vld [vmem:[%s320 + $0x38] sm:$0xff]
        %vm353 = vsmask.f32 4368
        %vm354 = vmor %vm328, %vm353
        %v356 = vshrl.u32 %v345, 16
        %v358 = vrot.slane %v356, 7
        %v359 = vshll.u32 %v345, 16
        %v361 = vor.u32 %v358, %v359
        %v362 = vrot.slane %v358, 4
        %v364 = vshrl.u32 %v346, 16
        %v366 = vrot.slane %v364, 7
        %v367 = vshll.u32 %v346, 16
        %v369 = vor.u32 %v366, %v367
        %v370 = vsel %vm354, %v362, %v369
        %v371 = vrot.slane %v366, 4
        %v373 = vshrl.u32 %v347, 16
        %v375 = vrot.slane %v373, 7
        %v376 = vshll.u32 %v347, 16
        %v378 = vor.u32 %v375, %v376
        %v379 = vsel %vm354, %v371, %v378
        %v380 = vrot.slane %v375, 4
        %v382 = vshrl.u32 %v348, 16
        %v384 = vrot.slane %v382, 7
        %v385 = vshll.u32 %v348, 16
        %v387 = vor.u32 %v384, %v385
        %v388 = vsel %vm354, %v380, %v387
        %v389 = vrot.slane %v384, 4
        %v391 = vshrl.u32 %v349, 16
        %v393 = vrot.slane %v391, 7
        %v394 = vshll.u32 %v349, 16
        %v396 = vor.u32 %v393, %v394
        %v397 = vsel %vm354, %v389, %v396
        %v398 = vrot.slane %v393, 4
        %v400 = vshrl.u32 %v350, 16
        %v402 = vrot.slane %v400, 7
        %v403 = vshll.u32 %v350, 16
        %v405 = vor.u32 %v402, %v403
        %v406 = vsel %vm354, %v398, %v405
        %v407 = vrot.slane %v402, 4
        %v409 = vshrl.u32 %v351, 16
        %v411 = vrot.slane %v409, 7
        %v412 = vshll.u32 %v351, 16
        %v414 = vor.u32 %v411, %v412
        %v415 = vsel %vm354, %v407, %v414
        %v416 = vrot.slane %v411, 4
        %v418 = vshrl.u32 %v352, 16
        %v420 = vrot.slane %v418, 7
        %v421 = vshll.u32 %v352, 16
        %v423 = vor.u32 %v420, %v421
        %v424 = vsel %vm354, %v416, %v423
        %v425 = vrot.slane %v420, 4
        %vm435 = vcmask 1043456
        %vm436 = vmand %vm435, %vm337
        %vm437 = vcmask 1047556
        %vm438 = vmand %vm437, %vm339
        %vm439 = vmor %vm438, %vm436
        %v440 = vld [vmem:[#allocation2] sm:$0xff]
        %v441 = vsel %vm439, %v361, %v440
        %442 = vst [vmem:[#allocation2] sm:$0xff] %v441
        %443 = vst [vmem:[#allocation2 + $0x8] sm:$0xff] %v370
        %444 = vst [vmem:[#allocation2 + $0x10] sm:$0xff] %v379
        %445 = vst [vmem:[#allocation2 + $0x18] sm:$0xff] %v388
        %446 = vst [vmem:[#allocation2 + $0x20] sm:$0xff] %v397
        %447 = vst [vmem:[#allocation2 + $0x28] sm:$0xff] %v406
        %448 = vst [vmem:[#allocation2 + $0x30] sm:$0xff] %v415
        %449 = vst [vmem:[#allocation2 + $0x38] sm:$0xff] %v424
        %v450 = vld [vmem:[#allocation2 + $0x40] sm:$0x11]
        %v451 = vsel %vm333, %v425, %v450
        %452 = vst [vmem:[#allocation2 + $0x40] sm:$0x11] %v451
        %v453 = vld [vmem:[#allocation2] sm:$0xff]
        %v454 = vld [vmem:[#allocation2 + $0x8] sm:$0xff]
        %v455 = vld [vmem:[#allocation2 + $0x10] sm:$0xff]
        %v456 = vld [vmem:[#allocation2 + $0x18] sm:$0xff]
        %v457 = vld [vmem:[#allocation2 + $0x20] sm:$0xff]
        %v458 = vld [vmem:[#allocation2 + $0x28] sm:$0xff]
        %v459 = vld [vmem:[#allocation2 + $0x30] sm:$0xff]
        %v460 = vld [vmem:[#allocation2 + $0x38] sm:$0xff]
        %v461 = vld [vmem:[#allocation3] sm:$0xff]
        %v462 = vld [vmem:[#allocation3 + $0x8] sm:$0xff]
        %v463 = vld [vmem:[#allocation3 + $0x10] sm:$0xff]
        %v464 = vld [vmem:[#allocation3 + $0x18] sm:$0xff]
        %v465 = vld [vmem:[#allocation3 + $0x20] sm:$0xff]
        %v466 = vld [vmem:[#allocation3 + $0x28] sm:$0xff]
        %v467 = vld [vmem:[#allocation3 + $0x30] sm:$0xff]
        %v468 = vld [vmem:[#allocation3 + $0x38] sm:$0xff]
        %v469 = vld [vmem:[#allocation3 + $0x40] sm:$0xff]
        %v470 = vld [vmem:[#allocation3 + $0x48] sm:$0xff]
        %v471 = vld [vmem:[#allocation3 + $0x50] sm:$0xff]
        %v472 = vld [vmem:[#allocation3 + $0x58] sm:$0xff]
        %v473 = vld [vmem:[#allocation3 + $0x60] sm:$0xff]
        %v474 = vld [vmem:[#allocation3 + $0x68] sm:$0xff]
        %v475 = vld [vmem:[#allocation3 + $0x70] sm:$0xff]
        %v476 = vld [vmem:[#allocation3 + $0x78] sm:$0xff]
        %v477 = vld [vmem:[#allocation3 + $0x80] sm:$0xff]
        %v478 = vld [vmem:[#allocation3 + $0x88] sm:$0xff]
        %v479 = vld [vmem:[#allocation3 + $0x90] sm:$0xff]
        %v480 = vld [vmem:[#allocation3 + $0x98] sm:$0xff]
        %v481 = vld [vmem:[#allocation3 + $0xa0] sm:$0xff]
        %v482 = vld [vmem:[#allocation3 + $0xa8] sm:$0xff]
        %v483 = vld [vmem:[#allocation3 + $0xb0] sm:$0xff]
        %v484 = vld [vmem:[#allocation3 + $0xb8] sm:$0xff]
        %v485 = vld [vmem:[#allocation3 + $0xc0] sm:$0xff]
        %v486 = vld [vmem:[#allocation3 + $0xc8] sm:$0xff]
        %v487 = vld [vmem:[#allocation3 + $0xd0] sm:$0xff]
        %v488 = vld [vmem:[#allocation3 + $0xd8] sm:$0xff]
        %v489 = vld [vmem:[#allocation3 + $0xe0] sm:$0xff]
        %v490 = vld [vmem:[#allocation3 + $0xe8] sm:$0xff]
        %v491 = vld [vmem:[#allocation3 + $0xf0] sm:$0xff]
        %v492 = vld [vmem:[#allocation3 + $0xf8] sm:$0xff]
        %v493 = vld [vmem:[#allocation2 + $0x40] sm:$0x11]
        %s494 = scalar_lea.vmem [#allocation3], 256
        %v495 = vld [vmem:[%s494] sm:$0xff]
        %v496 = vld [vmem:[%s494 + $0x8] sm:$0xff]
        %v497 = vld [vmem:[%s494 + $0x10] sm:$0xff]
        %v498 = vld [vmem:[%s494 + $0x18] sm:$0xff]
        %v499 = vld [vmem:[%s494 + $0x20] sm:$0xff]
        %v500 = vld [vmem:[%s494 + $0x28] sm:$0xff]
        %v501 = vld [vmem:[%s494 + $0x30] sm:$0xff]
        %v502 = vld [vmem:[%s494 + $0x38] sm:$0xff]
        %v503 = vld [vmem:[%s494 + $0x40] sm:$0xff]
        %v504 = vld [vmem:[%s494 + $0x48] sm:$0xff]
        %v505 = vld [vmem:[%s494 + $0x50] sm:$0xff]
        %v506 = vld [vmem:[%s494 + $0x58] sm:$0xff]
        %v507 = vld [vmem:[%s494 + $0x60] sm:$0xff]
        %v508 = vld [vmem:[%s494 + $0x68] sm:$0xff]
        %v509 = vld [vmem:[%s494 + $0x70] sm:$0xff]
        %v510 = vld [vmem:[%s494 + $0x78] sm:$0xff]
        %v511 = vld [vmem:[%s494 + $0x80] sm:$0xff]
        %v512 = vld [vmem:[%s494 + $0x88] sm:$0xff]
        %v513 = vld [vmem:[%s494 + $0x90] sm:$0xff]
        %v514 = vld [vmem:[%s494 + $0x98] sm:$0xff]
        %v515 = vld [vmem:[%s494 + $0xa0] sm:$0xff]
        %v516 = vld [vmem:[%s494 + $0xa8] sm:$0xff]
        %v517 = vld [vmem:[%s494 + $0xb0] sm:$0xff]
        %v518 = vld [vmem:[%s494 + $0xb8] sm:$0xff]
        %v519 = vld [vmem:[%s494 + $0xc0] sm:$0xff]
        %v520 = vld [vmem:[%s494 + $0xc8] sm:$0xff]
        %v521 = vld [vmem:[%s494 + $0xd0] sm:$0xff]
        %v522 = vld [vmem:[%s494 + $0xd8] sm:$0xff]
        %v523 = vld [vmem:[%s494 + $0xe0] sm:$0xff]
        %v524 = vld [vmem:[%s494 + $0xe8] sm:$0xff]
        %v525 = vld [vmem:[%s494 + $0xf0] sm:$0xff]
        %v526 = vld [vmem:[%s494 + $0xf8] sm:$0xff]
        %v536 = vunpack.c.l.b16 %v453
        %v537 = vunpack.c.h.b16 %v453
        %v538 = vunpack.c.l.b16 %v454
        %v539 = vunpack.c.h.b16 %v454
        %v540 = vunpack.c.l.b16 %v455
        %v541 = vunpack.c.h.b16 %v455
        %v542 = vunpack.c.l.b16 %v456
        %v543 = vunpack.c.h.b16 %v456
        %v544 = vunpack.c.l.b16 %v457
        %v545 = vunpack.c.h.b16 %v457
        %v546 = vunpack.c.l.b16 %v458
        %v547 = vunpack.c.h.b16 %v458
        %v548 = vunpack.c.l.b16 %v459
        %v549 = vunpack.c.h.b16 %v459
        %v550 = vunpack.c.l.b16 %v460
        %v551 = vunpack.c.h.b16 %v460
        %v552 = vunpack.c.l.b16 %v493
        %v553 = vunpack.c.h.b16 %v493
        %v554 = vpack.c.b16 %v538, %v536
        %v555 = vpack.c.b16 %v539, %v537
        %v556 = vpack.c.b16 %v542, %v540
        %v557 = vpack.c.b16 %v543, %v541
        %v558 = vpack.c.b16 %v546, %v544
        %v559 = vpack.c.b16 %v547, %v545
        %v560 = vpack.c.b16 %v550, %v548
        %v561 = vpack.c.b16 %v551, %v549
        %v562 = vpack.c.b16 %v552, %v552
        %v563 = vpack.c.b16 %v553, %v553
        %vm564 = vsmask.f32 7424
        %v566 = vshrl.u32 %v554, 16
        %v568 = vshll.u32 %v554, 16
        %v570 = vrot.slane %v568, 1
        %v571 = vor.u32 %v566, %v570
        %v573 = vshll.u32 %v556, 16
        %v575 = vrot.slane %v573, 1
        %v576 = vsel %vm564, %v571, %v575
        %v578 = vshrl.u32 %v555, 16
        %v580 = vshll.u32 %v555, 16
        %v582 = vrot.slane %v580, 1
        %v583 = vor.u32 %v578, %v582
        %v585 = vshll.u32 %v557, 16
        %v587 = vrot.slane %v585, 1
        %v588 = vsel %vm564, %v583, %v587
        %v589 = vshrl.u32 %v556, 16
        %v591 = vor.u32 %v589, %v575
        %v593 = vshll.u32 %v558, 16
        %v595 = vrot.slane %v593, 1
        %v596 = vsel %vm564, %v591, %v595
        %v597 = vshrl.u32 %v557, 16
        %v599 = vor.u32 %v597, %v587
        %v601 = vshll.u32 %v559, 16
        %v603 = vrot.slane %v601, 1
        %v604 = vsel %vm564, %v599, %v603
        %v605 = vshrl.u32 %v558, 16
        %v607 = vor.u32 %v605, %v595
        %v609 = vshll.u32 %v560, 16
        %v611 = vrot.slane %v609, 1
        %v612 = vsel %vm564, %v607, %v611
        %v613 = vshrl.u32 %v559, 16
        %v615 = vor.u32 %v613, %v603
        %v617 = vshll.u32 %v561, 16
        %v619 = vrot.slane %v617, 1
        %v620 = vsel %vm564, %v615, %v619
        %v621 = vshrl.u32 %v560, 16
        %v623 = vor.u32 %v621, %v611
        %v625 = vshll.u32 %v562, 16
        %v627 = vrot.slane %v625, 1
        %v628 = vsel %vm564, %v623, %v627
        %v629 = vshrl.u32 %v561, 16
        %v631 = vor.u32 %v629, %v619
        %v633 = vshll.u32 %v563, 16
        %v635 = vrot.slane %v633, 1
        %v636 = vsel %vm564, %v631, %v635
        %v677 = vunpack.c.l.b16 %v495
        %v678 = vunpack.c.h.b16 %v495
        %v679 = vunpack.c.l.b16 %v496
        %v680 = vunpack.c.h.b16 %v496
        %v681 = vunpack.c.l.b16 %v497
        %v682 = vunpack.c.h.b16 %v497
        %v683 = vunpack.c.l.b16 %v498
        %v684 = vunpack.c.h.b16 %v498
        %v685 = vunpack.c.l.b16 %v499
        %v686 = vunpack.c.h.b16 %v499
        %v687 = vunpack.c.l.b16 %v500
        %v688 = vunpack.c.h.b16 %v500
        %v689 = vunpack.c.l.b16 %v501
        %v690 = vunpack.c.h.b16 %v501
        %v691 = vunpack.c.l.b16 %v502
        %v692 = vunpack.c.h.b16 %v502
        %v693 = vunpack.c.l.b16 %v503
        %v694 = vunpack.c.h.b16 %v503
        %v695 = vunpack.c.l.b16 %v504
        %v696 = vunpack.c.h.b16 %v504
        %v697 = vunpack.c.l.b16 %v505
        %v698 = vunpack.c.h.b16 %v505
        %v699 = vunpack.c.l.b16 %v506
        %v700 = vunpack.c.h.b16 %v506
        %v701 = vunpack.c.l.b16 %v507
        %v702 = vunpack.c.h.b16 %v507
        %v703 = vunpack.c.l.b16 %v508
        %v704 = vunpack.c.h.b16 %v508
        %v705 = vunpack.c.l.b16 %v509
        %v706 = vunpack.c.h.b16 %v509
        %v707 = vunpack.c.l.b16 %v510
        %v708 = vunpack.c.h.b16 %v510
        %v709 = vunpack.c.l.b16 %v511
        %v710 = vunpack.c.h.b16 %v511
        %v711 = vunpack.c.l.b16 %v512
        %v712 = vunpack.c.h.b16 %v512
        %v713 = vunpack.c.l.b16 %v513
        %v714 = vunpack.c.h.b16 %v513
        %v715 = vunpack.c.l.b16 %v514
        %v716 = vunpack.c.h.b16 %v514
        %v717 = vunpack.c.l.b16 %v515
        %v718 = vunpack.c.h.b16 %v515
        %v719 = vunpack.c.l.b16 %v516
        %v720 = vunpack.c.h.b16 %v516
        %v721 = vunpack.c.l.b16 %v517
        %v722 = vunpack.c.h.b16 %v517
        %v723 = vunpack.c.l.b16 %v518
        %v724 = vunpack.c.h.b16 %v518
        %v725 = vunpack.c.l.b16 %v519
        %v726 = vunpack.c.h.b16 %v519
        %v727 = vunpack.c.l.b16 %v520
        %v728 = vunpack.c.h.b16 %v520
        %v729 = vunpack.c.l.b16 %v521
        %v730 = vunpack.c.h.b16 %v521
        %v731 = vunpack.c.l.b16 %v522
        %v732 = vunpack.c.h.b16 %v522
        %v733 = vunpack.c.l.b16 %v523
        %v734 = vunpack.c.h.b16 %v523
        %v735 = vunpack.c.l.b16 %v524
        %v736 = vunpack.c.h.b16 %v524
        %v737 = vunpack.c.l.b16 %v525
        %v738 = vunpack.c.h.b16 %v525
        %v739 = vunpack.c.l.b16 %v526
        %v740 = vunpack.c.h.b16 %v526
        %v741 = vpack.c.b16 %v679, %v677
        %v742 = vpack.c.b16 %v680, %v678
        %v743 = vpack.c.b16 %v683, %v681
        %v744 = vpack.c.b16 %v684, %v682
        %v745 = vpack.c.b16 %v687, %v685
        %v746 = vpack.c.b16 %v688, %v686
        %v747 = vpack.c.b16 %v691, %v689
        %v748 = vpack.c.b16 %v692, %v690
        %v749 = vpack.c.b16 %v695, %v693
        %v750 = vpack.c.b16 %v696, %v694
        %v751 = vpack.c.b16 %v699, %v697
        %v752 = vpack.c.b16 %v700, %v698
        %v753 = vpack.c.b16 %v703, %v701
        %v754 = vpack.c.b16 %v704, %v702
        %v755 = vpack.c.b16 %v707, %v705
        %v756 = vpack.c.b16 %v708, %v706
        %v757 = vpack.c.b16 %v711, %v709
        %v758 = vpack.c.b16 %v712, %v710
        %v759 = vpack.c.b16 %v715, %v713
        %v760 = vpack.c.b16 %v716, %v714
        %v761 = vpack.c.b16 %v719, %v717
        %v762 = vpack.c.b16 %v720, %v718
        %v763 = vpack.c.b16 %v723, %v721
        %v764 = vpack.c.b16 %v724, %v722
        %v765 = vpack.c.b16 %v727, %v725
        %v766 = vpack.c.b16 %v728, %v726
        %v767 = vpack.c.b16 %v731, %v729
        %v768 = vpack.c.b16 %v732, %v730
        %v769 = vpack.c.b16 %v735, %v733
        %v770 = vpack.c.b16 %v736, %v734
        %v771 = vpack.c.b16 %v739, %v737
        %v772 = vpack.c.b16 %v740, %v738
        %805 = vmatpush.bf16.msra.mxu0 %v755
        %806 = vmatpush.bf16.msra.mxu0 %v753
        %807 = vmatpush.bf16.msra.mxu0 %v751
        %808 = vmatpush.bf16.msra.mxu0 %v749
        %809 = vmatpush.bf16.msra.mxu0 %v747
        %810 = vmatpush.bf16.msra.mxu0 %v745
        %811 = vmatpush.bf16.msra.mxu0 %v743
        %812 = vmatpush.bf16.msra.mxu0 %v741
        %813 = vmatmul.bf16.gmra.mxu0 %v576
        %v814 = vpop.f32.mrf.mxu0
        %v815 = vadd.f32 0.0, %v814
        %v816 = vpop.f32.mrf.mxu0
        %v817 = vadd.f32 0.0, %v816
        %818 = vmatmul.bf16.gmra.mxu0 %v596
        %v819 = vpop.f32.mrf.mxu0
        %v820 = vadd.f32 0.0, %v819
        %v821 = vpop.f32.mrf.mxu0
        %v822 = vadd.f32 0.0, %v821
        %823 = vmatmul.bf16.gmra.mxu0 %v612
        %v824 = vpop.f32.mrf.mxu0
        %v825 = vadd.f32 0.0, %v824
        %v826 = vpop.f32.mrf.mxu0
        %v827 = vadd.f32 0.0, %v826
        %828 = vmatmul.bf16.gmra.mxu0 %v628
        %v829 = vpop.f32.mrf.mxu0
        %v830 = vadd.f32 0.0, %v829
        %v831 = vpop.f32.mrf.mxu0
        %v832 = vadd.f32 0.0, %v831
        %833 = vdwg.mxu0
        %834 = vmatpush.bf16.msra.mxu0 %v771
        %835 = vmatpush.bf16.msra.mxu0 %v769
        %836 = vmatpush.bf16.msra.mxu0 %v767
        %837 = vmatpush.bf16.msra.mxu0 %v765
        %838 = vmatpush.bf16.msra.mxu0 %v763
        %839 = vmatpush.bf16.msra.mxu0 %v761
        %840 = vmatpush.bf16.msra.mxu0 %v759
        %841 = vmatpush.bf16.msra.mxu0 %v757
        %842 = vmatmul.bf16.gmra.mxu0 %v588
        %v843 = vpop.f32.mrf.mxu0
        %v844 = vadd.f32 %v815, %v843
        %v845 = vpop.f32.mrf.mxu0
        %v846 = vadd.f32 %v817, %v845
        %847 = vmatmul.bf16.gmra.mxu0 %v604
        %v848 = vpop.f32.mrf.mxu0
        %v849 = vadd.f32 %v820, %v848
        %v850 = vpop.f32.mrf.mxu0
        %v851 = vadd.f32 %v822, %v850
        %852 = vmatmul.bf16.gmra.mxu0 %v620
        %v853 = vpop.f32.mrf.mxu0
        %v854 = vadd.f32 %v825, %v853
        %v855 = vpop.f32.mrf.mxu0
        %v856 = vadd.f32 %v827, %v855
        %857 = vmatmul.bf16.gmra.mxu0 %v636
        %v858 = vpop.f32.mrf.mxu0
        %v859 = vadd.f32 %v830, %v858
        %v860 = vpop.f32.mrf.mxu0
        %v861 = vadd.f32 %v832, %v860
        %862 = vdwg.mxu0
        %863 = vmatpush.bf16.msra.mxu0 %v756
        %864 = vmatpush.bf16.msra.mxu0 %v754
        %865 = vmatpush.bf16.msra.mxu0 %v752
        %866 = vmatpush.bf16.msra.mxu0 %v750
        %867 = vmatpush.bf16.msra.mxu0 %v748
        %868 = vmatpush.bf16.msra.mxu0 %v746
        %869 = vmatpush.bf16.msra.mxu0 %v744
        %870 = vmatpush.bf16.msra.mxu0 %v742
        %871 = vmatmul.bf16.gmra.mxu0 %v576
        %v872 = vpop.f32.mrf.mxu0
        %v873 = vadd.f32 0.0, %v872
        %v874 = vpop.f32.mrf.mxu0
        %v875 = vadd.f32 0.0, %v874
        %876 = vmatmul.bf16.gmra.mxu0 %v596
        %v877 = vpop.f32.mrf.mxu0
        %v878 = vadd.f32 0.0, %v877
        %v879 = vpop.f32.mrf.mxu0
        %v880 = vadd.f32 0.0, %v879
        %881 = vmatmul.bf16.gmra.mxu0 %v612
        %v882 = vpop.f32.mrf.mxu0
        %v883 = vadd.f32 0.0, %v882
        %v884 = vpop.f32.mrf.mxu0
        %v885 = vadd.f32 0.0, %v884
        %886 = vmatmul.bf16.gmra.mxu0 %v628
        %v887 = vpop.f32.mrf.mxu0
        %v888 = vadd.f32 0.0, %v887
        %v889 = vpop.f32.mrf.mxu0
        %v890 = vadd.f32 0.0, %v889
        %891 = vdwg.mxu0
        %892 = vmatpush.bf16.msra.mxu0 %v772
        %893 = vmatpush.bf16.msra.mxu0 %v770
        %894 = vmatpush.bf16.msra.mxu0 %v768
        %895 = vmatpush.bf16.msra.mxu0 %v766
        %896 = vmatpush.bf16.msra.mxu0 %v764
        %897 = vmatpush.bf16.msra.mxu0 %v762
        %898 = vmatpush.bf16.msra.mxu0 %v760
        %899 = vmatpush.bf16.msra.mxu0 %v758
        %900 = vmatmul.bf16.gmra.mxu0 %v588
        %v901 = vpop.f32.mrf.mxu0
        %v902 = vadd.f32 %v873, %v901
        %v903 = vpop.f32.mrf.mxu0
        %v904 = vadd.f32 %v875, %v903
        %905 = vmatmul.bf16.gmra.mxu0 %v604
        %v906 = vpop.f32.mrf.mxu0
        %v907 = vadd.f32 %v878, %v906
        %v908 = vpop.f32.mrf.mxu0
        %v909 = vadd.f32 %v880, %v908
        %910 = vmatmul.bf16.gmra.mxu0 %v620
        %v911 = vpop.f32.mrf.mxu0
        %v912 = vadd.f32 %v883, %v911
        %v913 = vpop.f32.mrf.mxu0
        %v914 = vadd.f32 %v885, %v913
        %915 = vmatmul.bf16.gmra.mxu0 %v636
        %v916 = vpop.f32.mrf.mxu0
        %v917 = vadd.f32 %v888, %v916
        %v918 = vpop.f32.mrf.mxu0
        %v919 = vadd.f32 %v890, %v918
        %920 = vdwg.mxu0
        %v961 = vunpack.c.l.b16 %v461
        %v962 = vunpack.c.h.b16 %v461
        %v963 = vunpack.c.l.b16 %v462
        %v964 = vunpack.c.h.b16 %v462
        %v965 = vunpack.c.l.b16 %v463
        %v966 = vunpack.c.h.b16 %v463
        %v967 = vunpack.c.l.b16 %v464
        %v968 = vunpack.c.h.b16 %v464
        %v969 = vunpack.c.l.b16 %v465
        %v970 = vunpack.c.h.b16 %v465
        %v971 = vunpack.c.l.b16 %v466
        %v972 = vunpack.c.h.b16 %v466
        %v973 = vunpack.c.l.b16 %v467
        %v974 = vunpack.c.h.b16 %v467
        %v975 = vunpack.c.l.b16 %v468
        %v976 = vunpack.c.h.b16 %v468
        %v977 = vunpack.c.l.b16 %v469
        %v978 = vunpack.c.h.b16 %v469
        %v979 = vunpack.c.l.b16 %v470
        %v980 = vunpack.c.h.b16 %v470
        %v981 = vunpack.c.l.b16 %v471
        %v982 = vunpack.c.h.b16 %v471
        %v983 = vunpack.c.l.b16 %v472
        %v984 = vunpack.c.h.b16 %v472
        %v985 = vunpack.c.l.b16 %v473
        %v986 = vunpack.c.h.b16 %v473
        %v987 = vunpack.c.l.b16 %v474
        %v988 = vunpack.c.h.b16 %v474
        %v989 = vunpack.c.l.b16 %v475
        %v990 = vunpack.c.h.b16 %v475
        %v991 = vunpack.c.l.b16 %v476
        %v992 = vunpack.c.h.b16 %v476
        %v993 = vunpack.c.l.b16 %v477
        %v994 = vunpack.c.h.b16 %v477
        %v995 = vunpack.c.l.b16 %v478
        %v996 = vunpack.c.h.b16 %v478
        %v997 = vunpack.c.l.b16 %v479
        %v998 = vunpack.c.h.b16 %v479
        %v999 = vunpack.c.l.b16 %v480
        %v1000 = vunpack.c.h.b16 %v480
        %v1001 = vunpack.c.l.b16 %v481
        %v1002 = vunpack.c.h.b16 %v481
        %v1003 = vunpack.c.l.b16 %v482
        %v1004 = vunpack.c.h.b16 %v482
        %v1005 = vunpack.c.l.b16 %v483
        %v1006 = vunpack.c.h.b16 %v483
        %v1007 = vunpack.c.l.b16 %v484
        %v1008 = vunpack.c.h.b16 %v484
        %v1009 = vunpack.c.l.b16 %v485
        %v1010 = vunpack.c.h.b16 %v485
        %v1011 = vunpack.c.l.b16 %v486
        %v1012 = vunpack.c.h.b16 %v486
        %v1013 = vunpack.c.l.b16 %v487
        %v1014 = vunpack.c.h.b16 %v487
        %v1015 = vunpack.c.l.b16 %v488
        %v1016 = vunpack.c.h.b16 %v488
        %v1017 = vunpack.c.l.b16 %v489
        %v1018 = vunpack.c.h.b16 %v489
        %v1019 = vunpack.c.l.b16 %v490
        %v1020 = vunpack.c.h.b16 %v490
        %v1021 = vunpack.c.l.b16 %v491
        %v1022 = vunpack.c.h.b16 %v491
        %v1023 = vunpack.c.l.b16 %v492
        %v1024 = vunpack.c.h.b16 %v492
        %v1025 = vpack.c.b16 %v963, %v961
        %v1026 = vpack.c.b16 %v964, %v962
        %v1027 = vpack.c.b16 %v967, %v965
        %v1028 = vpack.c.b16 %v968, %v966
        %v1029 = vpack.c.b16 %v971, %v969
        %v1030 = vpack.c.b16 %v972, %v970
        %v1031 = vpack.c.b16 %v975, %v973
        %v1032 = vpack.c.b16 %v976, %v974
        %v1033 = vpack.c.b16 %v979, %v977
        %v1034 = vpack.c.b16 %v980, %v978
        %v1035 = vpack.c.b16 %v983, %v981
        %v1036 = vpack.c.b16 %v984, %v982
        %v1037 = vpack.c.b16 %v987, %v985
        %v1038 = vpack.c.b16 %v988, %v986
        %v1039 = vpack.c.b16 %v991, %v989
        %v1040 = vpack.c.b16 %v992, %v990
        %v1041 = vpack.c.b16 %v995, %v993
        %v1042 = vpack.c.b16 %v996, %v994
        %v1043 = vpack.c.b16 %v999, %v997
        %v1044 = vpack.c.b16 %v1000, %v998
        %v1045 = vpack.c.b16 %v1003, %v1001
        %v1046 = vpack.c.b16 %v1004, %v1002
        %v1047 = vpack.c.b16 %v1007, %v1005
        %v1048 = vpack.c.b16 %v1008, %v1006
        %v1049 = vpack.c.b16 %v1011, %v1009
        %v1050 = vpack.c.b16 %v1012, %v1010
        %v1051 = vpack.c.b16 %v1015, %v1013
        %v1052 = vpack.c.b16 %v1016, %v1014
        %v1053 = vpack.c.b16 %v1019, %v1017
        %v1054 = vpack.c.b16 %v1020, %v1018
        %v1055 = vpack.c.b16 %v1023, %v1021
        %v1056 = vpack.c.b16 %v1024, %v1022
        %1089 = vmatpush.bf16.msra.mxu0 %v1039
        %1090 = vmatpush.bf16.msra.mxu0 %v1037
        %1091 = vmatpush.bf16.msra.mxu0 %v1035
        %1092 = vmatpush.bf16.msra.mxu0 %v1033
        %1093 = vmatpush.bf16.msra.mxu0 %v1031
        %1094 = vmatpush.bf16.msra.mxu0 %v1029
        %1095 = vmatpush.bf16.msra.mxu0 %v1027
        %1096 = vmatpush.bf16.msra.mxu0 %v1025
        %1097 = vmatmul.bf16.gmra.mxu0 %v554
        %v1098 = vpop.f32.mrf.mxu0
        %v1099 = vadd.f32 %v844, %v1098
        %v1100 = vpop.f32.mrf.mxu0
        %v1101 = vadd.f32 %v846, %v1100
        %1102 = vmatmul.bf16.gmra.mxu0 %v556
        %v1103 = vpop.f32.mrf.mxu0
        %v1104 = vadd.f32 %v849, %v1103
        %v1105 = vpop.f32.mrf.mxu0
        %v1106 = vadd.f32 %v851, %v1105
        %1107 = vmatmul.bf16.gmra.mxu0 %v558
        %v1108 = vpop.f32.mrf.mxu0
        %v1109 = vadd.f32 %v854, %v1108
        %v1110 = vpop.f32.mrf.mxu0
        %v1111 = vadd.f32 %v856, %v1110
        %1112 = vmatmul.bf16.gmra.mxu0 %v560
        %v1113 = vpop.f32.mrf.mxu0
        %v1114 = vadd.f32 %v859, %v1113
        %v1115 = vpop.f32.mrf.mxu0
        %v1116 = vadd.f32 %v861, %v1115
        %1117 = vdwg.mxu0
        %1118 = vmatpush.bf16.msra.mxu0 %v1055
        %1119 = vmatpush.bf16.msra.mxu0 %v1053
        %1120 = vmatpush.bf16.msra.mxu0 %v1051
        %1121 = vmatpush.bf16.msra.mxu0 %v1049
        %1122 = vmatpush.bf16.msra.mxu0 %v1047
        %1123 = vmatpush.bf16.msra.mxu0 %v1045
        %1124 = vmatpush.bf16.msra.mxu0 %v1043
        %1125 = vmatpush.bf16.msra.mxu0 %v1041
        %1126 = vmatmul.bf16.gmra.mxu0 %v555
        %v1127 = vpop.f32.mrf.mxu0
        %v1128 = vadd.f32 %v1099, %v1127
        %v1129 = vpop.f32.mrf.mxu0
        %v1130 = vadd.f32 %v1101, %v1129
        %1131 = vmatmul.bf16.gmra.mxu0 %v557
        %v1132 = vpop.f32.mrf.mxu0
        %v1133 = vadd.f32 %v1104, %v1132
        %v1134 = vpop.f32.mrf.mxu0
        %v1135 = vadd.f32 %v1106, %v1134
        %1136 = vmatmul.bf16.gmra.mxu0 %v559
        %v1137 = vpop.f32.mrf.mxu0
        %v1138 = vadd.f32 %v1109, %v1137
        %v1139 = vpop.f32.mrf.mxu0
        %v1140 = vadd.f32 %v1111, %v1139
        %1141 = vmatmul.bf16.gmra.mxu0 %v561
        %v1142 = vpop.f32.mrf.mxu0
        %v1143 = vadd.f32 %v1114, %v1142
        %v1144 = vpop.f32.mrf.mxu0
        %v1145 = vadd.f32 %v1116, %v1144
        %1146 = vdwg.mxu0
        %1147 = vmatpush.bf16.msra.mxu0 %v1040
        %1148 = vmatpush.bf16.msra.mxu0 %v1038
        %1149 = vmatpush.bf16.msra.mxu0 %v1036
        %1150 = vmatpush.bf16.msra.mxu0 %v1034
        %1151 = vmatpush.bf16.msra.mxu0 %v1032
        %1152 = vmatpush.bf16.msra.mxu0 %v1030
        %1153 = vmatpush.bf16.msra.mxu0 %v1028
        %1154 = vmatpush.bf16.msra.mxu0 %v1026
        %1155 = vmatmul.bf16.gmra.mxu0 %v554
        %v1156 = vpop.f32.mrf.mxu0
        %v1157 = vadd.f32 %v902, %v1156
        %v1158 = vpop.f32.mrf.mxu0
        %v1159 = vadd.f32 %v904, %v1158
        %1160 = vmatmul.bf16.gmra.mxu0 %v556
        %v1161 = vpop.f32.mrf.mxu0
        %v1162 = vadd.f32 %v907, %v1161
        %v1163 = vpop.f32.mrf.mxu0
        %v1164 = vadd.f32 %v909, %v1163
        %1165 = vmatmul.bf16.gmra.mxu0 %v558
        %v1166 = vpop.f32.mrf.mxu0
        %v1167 = vadd.f32 %v912, %v1166
        %v1168 = vpop.f32.mrf.mxu0
        %v1169 = vadd.f32 %v914, %v1168
        %1170 = vmatmul.bf16.gmra.mxu0 %v560
        %v1171 = vpop.f32.mrf.mxu0
        %v1172 = vadd.f32 %v917, %v1171
        %v1173 = vpop.f32.mrf.mxu0
        %v1174 = vadd.f32 %v919, %v1173
        %1175 = vdwg.mxu0
        %1176 = vmatpush.bf16.msra.mxu0 %v1056
        %1177 = vmatpush.bf16.msra.mxu0 %v1054
        %1178 = vmatpush.bf16.msra.mxu0 %v1052
        %1179 = vmatpush.bf16.msra.mxu0 %v1050
        %1180 = vmatpush.bf16.msra.mxu0 %v1048
        %1181 = vmatpush.bf16.msra.mxu0 %v1046
        %1182 = vmatpush.bf16.msra.mxu0 %v1044
        %1183 = vmatpush.bf16.msra.mxu0 %v1042
        %1184 = vmatmul.bf16.gmra.mxu0 %v555
        %v1185 = vpop.f32.mrf.mxu0
        %v1186 = vadd.f32 %v1157, %v1185
        %v1187 = vpop.f32.mrf.mxu0
        %v1188 = vadd.f32 %v1159, %v1187
        %1189 = vmatmul.bf16.gmra.mxu0 %v557
        %v1190 = vpop.f32.mrf.mxu0
        %v1191 = vadd.f32 %v1162, %v1190
        %v1192 = vpop.f32.mrf.mxu0
        %v1193 = vadd.f32 %v1164, %v1192
        %1194 = vmatmul.bf16.gmra.mxu0 %v559
        %v1195 = vpop.f32.mrf.mxu0
        %v1196 = vadd.f32 %v1167, %v1195
        %v1197 = vpop.f32.mrf.mxu0
        %v1198 = vadd.f32 %v1169, %v1197
        %1199 = vmatmul.bf16.gmra.mxu0 %v561
        %v1200 = vpop.f32.mrf.mxu0
        %v1201 = vadd.f32 %v1172, %v1200
        %v1202 = vpop.f32.mrf.mxu0
        %v1203 = vadd.f32 %v1174, %v1202
        %1204 = vdwg.mxu0
        %v1205 = vld [vmem:[#allocation2] sm:$0xee]
        %s1206 = scalar_lea.vmem [#allocation3], 512
        %v1207 = vld [vmem:[%s1206] sm:$0xff]
        %v1208 = vld [vmem:[%s1206 + $0x8] sm:$0xff]
        %v1209 = vld [vmem:[%s1206 + $0x10] sm:$0xff]
        %v1210 = vld [vmem:[%s1206 + $0x18] sm:$0xff]
        %v1211 = vld [vmem:[%s1206 + $0x20] sm:$0xff]
        %v1212 = vld [vmem:[%s1206 + $0x28] sm:$0xff]
        %v1213 = vld [vmem:[%s1206 + $0x30] sm:$0xff]
        %v1214 = vld [vmem:[%s1206 + $0x38] sm:$0xff]
        %v1215 = vld [vmem:[%s1206 + $0x40] sm:$0xff]
        %v1216 = vld [vmem:[%s1206 + $0x48] sm:$0xff]
        %v1217 = vld [vmem:[%s1206 + $0x50] sm:$0xff]
        %v1218 = vld [vmem:[%s1206 + $0x58] sm:$0xff]
        %v1219 = vld [vmem:[%s1206 + $0x60] sm:$0xff]
        %v1220 = vld [vmem:[%s1206 + $0x68] sm:$0xff]
        %v1221 = vld [vmem:[%s1206 + $0x70] sm:$0xff]
        %v1222 = vld [vmem:[%s1206 + $0x78] sm:$0xff]
        %v1223 = vld [vmem:[%s1206 + $0x80] sm:$0xff]
        %v1224 = vld [vmem:[%s1206 + $0x88] sm:$0xff]
        %v1225 = vld [vmem:[%s1206 + $0x90] sm:$0xff]
        %v1226 = vld [vmem:[%s1206 + $0x98] sm:$0xff]
        %v1227 = vld [vmem:[%s1206 + $0xa0] sm:$0xff]
        %v1228 = vld [vmem:[%s1206 + $0xa8] sm:$0xff]
        %v1229 = vld [vmem:[%s1206 + $0xb0] sm:$0xff]
        %v1230 = vld [vmem:[%s1206 + $0xb8] sm:$0xff]
        %v1231 = vld [vmem:[%s1206 + $0xc0] sm:$0xff]
        %v1232 = vld [vmem:[%s1206 + $0xc8] sm:$0xff]
        %v1233 = vld [vmem:[%s1206 + $0xd0] sm:$0xff]
        %v1234 = vld [vmem:[%s1206 + $0xd8] sm:$0xff]
        %v1235 = vld [vmem:[%s1206 + $0xe0] sm:$0xff]
        %v1236 = vld [vmem:[%s1206 + $0xe8] sm:$0xff]
        %v1237 = vld [vmem:[%s1206 + $0xf0] sm:$0xff]
        %v1238 = vld [vmem:[%s1206 + $0xf8] sm:$0xff]
        %v1240 = vunpack.c.l.b16 %v1205
        %v1241 = vunpack.c.h.b16 %v1205
        %v1242 = vpack.c.b16 %v538, %v1240
        %v1243 = vpack.c.b16 %v539, %v1241
        %vm1244 = vcmask 1046528
        %v1245 = vrot.slane %v1242, 1
        %v1246 = vrot.slane %v556, 1
        %v1247 = vsel %vm1244, %v1245, %v1246
        %v1248 = vrot.slane %v1243, 1
        %v1249 = vrot.slane %v557, 1
        %v1250 = vsel %vm1244, %v1248, %v1249
        %v1251 = vrot.slane %v558, 1
        %v1252 = vsel %vm1244, %v1246, %v1251
        %v1253 = vrot.slane %v559, 1
        %v1254 = vsel %vm1244, %v1249, %v1253
        %v1255 = vrot.slane %v560, 1
        %v1256 = vsel %vm1244, %v1251, %v1255
        %v1257 = vrot.slane %v561, 1
        %v1258 = vsel %vm1244, %v1253, %v1257
        %v1259 = vrot.slane %v562, 1
        %v1260 = vsel %vm1244, %v1255, %v1259
        %v1261 = vrot.slane %v563, 1
        %v1262 = vsel %vm1244, %v1257, %v1261
        %v1303 = vunpack.c.l.b16 %v1207
        %v1304 = vunpack.c.h.b16 %v1207
        %v1305 = vunpack.c.l.b16 %v1208
        %v1306 = vunpack.c.h.b16 %v1208
        %v1307 = vunpack.c.l.b16 %v1209
        %v1308 = vunpack.c.h.b16 %v1209
        %v1309 = vunpack.c.l.b16 %v1210
        %v1310 = vunpack.c.h.b16 %v1210
        %v1311 = vunpack.c.l.b16 %v1211
        %v1312 = vunpack.c.h.b16 %v1211
        %v1313 = vunpack.c.l.b16 %v1212
        %v1314 = vunpack.c.h.b16 %v1212
        %v1315 = vunpack.c.l.b16 %v1213
        %v1316 = vunpack.c.h.b16 %v1213
        %v1317 = vunpack.c.l.b16 %v1214
        %v1318 = vunpack.c.h.b16 %v1214
        %v1319 = vunpack.c.l.b16 %v1215
        %v1320 = vunpack.c.h.b16 %v1215
        %v1321 = vunpack.c.l.b16 %v1216
        %v1322 = vunpack.c.h.b16 %v1216
        %v1323 = vunpack.c.l.b16 %v1217
        %v1324 = vunpack.c.h.b16 %v1217
        %v1325 = vunpack.c.l.b16 %v1218
        %v1326 = vunpack.c.h.b16 %v1218
        %v1327 = vunpack.c.l.b16 %v1219
        %v1328 = vunpack.c.h.b16 %v1219
        %v1329 = vunpack.c.l.b16 %v1220
        %v1330 = vunpack.c.h.b16 %v1220
        %v1331 = vunpack.c.l.b16 %v1221
        %v1332 = vunpack.c.h.b16 %v1221
        %v1333 = vunpack.c.l.b16 %v1222
        %v1334 = vunpack.c.h.b16 %v1222
        %v1335 = vunpack.c.l.b16 %v1223
        %v1336 = vunpack.c.h.b16 %v1223
        %v1337 = vunpack.c.l.b16 %v1224
        %v1338 = vunpack.c.h.b16 %v1224
        %v1339 = vunpack.c.l.b16 %v1225
        %v1340 = vunpack.c.h.b16 %v1225
        %v1341 = vunpack.c.l.b16 %v1226
        %v1342 = vunpack.c.h.b16 %v1226
        %v1343 = vunpack.c.l.b16 %v1227
        %v1344 = vunpack.c.h.b16 %v1227
        %v1345 = vunpack.c.l.b16 %v1228
        %v1346 = vunpack.c.h.b16 %v1228
        %v1347 = vunpack.c.l.b16 %v1229
        %v1348 = vunpack.c.h.b16 %v1229
        %v1349 = vunpack.c.l.b16 %v1230
        %v1350 = vunpack.c.h.b16 %v1230
        %v1351 = vunpack.c.l.b16 %v1231
        %v1352 = vunpack.c.h.b16 %v1231
        %v1353 = vunpack.c.l.b16 %v1232
        %v1354 = vunpack.c.h.b16 %v1232
        %v1355 = vunpack.c.l.b16 %v1233
        %v1356 = vunpack.c.h.b16 %v1233
        %v1357 = vunpack.c.l.b16 %v1234
        %v1358 = vunpack.c.h.b16 %v1234
        %v1359 = vunpack.c.l.b16 %v1235
        %v1360 = vunpack.c.h.b16 %v1235
        %v1361 = vunpack.c.l.b16 %v1236
        %v1362 = vunpack.c.h.b16 %v1236
        %v1363 = vunpack.c.l.b16 %v1237
        %v1364 = vunpack.c.h.b16 %v1237
        %v1365 = vunpack.c.l.b16 %v1238
        %v1366 = vunpack.c.h.b16 %v1238
        %v1367 = vpack.c.b16 %v1305, %v1303
        %v1368 = vpack.c.b16 %v1306, %v1304
        %v1369 = vpack.c.b16 %v1309, %v1307
        %v1370 = vpack.c.b16 %v1310, %v1308
        %v1371 = vpack.c.b16 %v1313, %v1311
        %v1372 = vpack.c.b16 %v1314, %v1312
        %v1373 = vpack.c.b16 %v1317, %v1315
        %v1374 = vpack.c.b16 %v1318, %v1316
        %v1375 = vpack.c.b16 %v1321, %v1319
        %v1376 = vpack.c.b16 %v1322, %v1320
        %v1377 = vpack.c.b16 %v1325, %v1323
        %v1378 = vpack.c.b16 %v1326, %v1324
        %v1379 = vpack.c.b16 %v1329, %v1327
        %v1380 = vpack.c.b16 %v1330, %v1328
        %v1381 = vpack.c.b16 %v1333, %v1331
        %v1382 = vpack.c.b16 %v1334, %v1332
        %v1383 = vpack.c.b16 %v1337, %v1335
        %v1384 = vpack.c.b16 %v1338, %v1336
        %v1385 = vpack.c.b16 %v1341, %v1339
        %v1386 = vpack.c.b16 %v1342, %v1340
        %v1387 = vpack.c.b16 %v1345, %v1343
        %v1388 = vpack.c.b16 %v1346, %v1344
        %v1389 = vpack.c.b16 %v1349, %v1347
        %v1390 = vpack.c.b16 %v1350, %v1348
        %v1391 = vpack.c.b16 %v1353, %v1351
        %v1392 = vpack.c.b16 %v1354, %v1352
        %v1393 = vpack.c.b16 %v1357, %v1355
        %v1394 = vpack.c.b16 %v1358, %v1356
        %v1395 = vpack.c.b16 %v1361, %v1359
        %v1396 = vpack.c.b16 %v1362, %v1360
        %v1397 = vpack.c.b16 %v1365, %v1363
        %v1398 = vpack.c.b16 %v1366, %v1364
        %1431 = vmatpush.bf16.msra.mxu0 %v1381
        %1432 = vmatpush.bf16.msra.mxu0 %v1379
        %1433 = vmatpush.bf16.msra.mxu0 %v1377
        %1434 = vmatpush.bf16.msra.mxu0 %v1375
        %1435 = vmatpush.bf16.msra.mxu0 %v1373
        %1436 = vmatpush.bf16.msra.mxu0 %v1371
        %1437 = vmatpush.bf16.msra.mxu0 %v1369
        %1438 = vmatpush.bf16.msra.mxu0 %v1367
        %1439 = vmatmul.bf16.gmra.mxu0 %v1247
        %v1440 = vpop.f32.mrf.mxu0
        %v1441 = vadd.f32 0.0, %v1440
        %v1442 = vpop.f32.mrf.mxu0
        %v1443 = vadd.f32 0.0, %v1442
        %1444 = vmatmul.bf16.gmra.mxu0 %v1252
        %v1445 = vpop.f32.mrf.mxu0
        %v1446 = vadd.f32 0.0, %v1445
        %v1447 = vpop.f32.mrf.mxu0
        %v1448 = vadd.f32 0.0, %v1447
        %1449 = vmatmul.bf16.gmra.mxu0 %v1256
        %v1450 = vpop.f32.mrf.mxu0
        %v1451 = vadd.f32 0.0, %v1450
        %v1452 = vpop.f32.mrf.mxu0
        %v1453 = vadd.f32 0.0, %v1452
        %1454 = vmatmul.bf16.gmra.mxu0 %v1260
        %v1455 = vpop.f32.mrf.mxu0
        %v1456 = vadd.f32 0.0, %v1455
        %v1457 = vpop.f32.mrf.mxu0
        %v1458 = vadd.f32 0.0, %v1457
        %1459 = vdwg.mxu0
        %1460 = vmatpush.bf16.msra.mxu0 %v1397
        %1461 = vmatpush.bf16.msra.mxu0 %v1395
        %1462 = vmatpush.bf16.msra.mxu0 %v1393
        %1463 = vmatpush.bf16.msra.mxu0 %v1391
        %1464 = vmatpush.bf16.msra.mxu0 %v1389
        %1465 = vmatpush.bf16.msra.mxu0 %v1387
        %1466 = vmatpush.bf16.msra.mxu0 %v1385
        %1467 = vmatpush.bf16.msra.mxu0 %v1383
        %1468 = vmatmul.bf16.gmra.mxu0 %v1250
        %v1469 = vpop.f32.mrf.mxu0
        %v1470 = vadd.f32 %v1441, %v1469
        %v1471 = vpop.f32.mrf.mxu0
        %v1472 = vadd.f32 %v1443, %v1471
        %1473 = vmatmul.bf16.gmra.mxu0 %v1254
        %v1474 = vpop.f32.mrf.mxu0
        %v1475 = vadd.f32 %v1446, %v1474
        %v1476 = vpop.f32.mrf.mxu0
        %v1477 = vadd.f32 %v1448, %v1476
        %1478 = vmatmul.bf16.gmra.mxu0 %v1258
        %v1479 = vpop.f32.mrf.mxu0
        %v1480 = vadd.f32 %v1451, %v1479
        %v1481 = vpop.f32.mrf.mxu0
        %v1482 = vadd.f32 %v1453, %v1481
        %1483 = vmatmul.bf16.gmra.mxu0 %v1262
        %v1484 = vpop.f32.mrf.mxu0
        %v1485 = vadd.f32 %v1456, %v1484
        %v1486 = vpop.f32.mrf.mxu0
        %v1487 = vadd.f32 %v1458, %v1486
        %1488 = vdwg.mxu0
        %1489 = vmatpush.bf16.msra.mxu0 %v1382
        %1490 = vmatpush.bf16.msra.mxu0 %v1380
        %1491 = vmatpush.bf16.msra.mxu0 %v1378
        %1492 = vmatpush.bf16.msra.mxu0 %v1376
        %1493 = vmatpush.bf16.msra.mxu0 %v1374
        %1494 = vmatpush.bf16.msra.mxu0 %v1372
        %1495 = vmatpush.bf16.msra.mxu0 %v1370
        %1496 = vmatpush.bf16.msra.mxu0 %v1368
        %1497 = vmatmul.bf16.gmra.mxu0 %v1247
        %v1498 = vpop.f32.mrf.mxu0
        %v1499 = vadd.f32 0.0, %v1498
        %v1500 = vpop.f32.mrf.mxu0
        %v1501 = vadd.f32 0.0, %v1500
        %1502 = vmatmul.bf16.gmra.mxu0 %v1252
        %v1503 = vpop.f32.mrf.mxu0
        %v1504 = vadd.f32 0.0, %v1503
        %v1505 = vpop.f32.mrf.mxu0
        %v1506 = vadd.f32 0.0, %v1505
        %1507 = vmatmul.bf16.gmra.mxu0 %v1256
        %v1508 = vpop.f32.mrf.mxu0
        %v1509 = vadd.f32 0.0, %v1508
        %v1510 = vpop.f32.mrf.mxu0
        %v1511 = vadd.f32 0.0, %v1510
        %1512 = vmatmul.bf16.gmra.mxu0 %v1260
        %v1513 = vpop.f32.mrf.mxu0
        %v1514 = vadd.f32 0.0, %v1513
        %v1515 = vpop.f32.mrf.mxu0
        %v1516 = vadd.f32 0.0, %v1515
        %1517 = vdwg.mxu0
        %1518 = vmatpush.bf16.msra.mxu0 %v1398
        %1519 = vmatpush.bf16.msra.mxu0 %v1396
        %1520 = vmatpush.bf16.msra.mxu0 %v1394
        %1521 = vmatpush.bf16.msra.mxu0 %v1392
        %1522 = vmatpush.bf16.msra.mxu0 %v1390
        %1523 = vmatpush.bf16.msra.mxu0 %v1388
        %1524 = vmatpush.bf16.msra.mxu0 %v1386
        %1525 = vmatpush.bf16.msra.mxu0 %v1384
        %1526 = vmatmul.bf16.gmra.mxu0 %v1250
        %v1527 = vpop.f32.mrf.mxu0
        %v1528 = vadd.f32 %v1499, %v1527
        %v1529 = vpop.f32.mrf.mxu0
        %v1530 = vadd.f32 %v1501, %v1529
        %1531 = vmatmul.bf16.gmra.mxu0 %v1254
        %v1532 = vpop.f32.mrf.mxu0
        %v1533 = vadd.f32 %v1504, %v1532
        %v1534 = vpop.f32.mrf.mxu0
        %v1535 = vadd.f32 %v1506, %v1534
        %1536 = vmatmul.bf16.gmra.mxu0 %v1258
        %v1537 = vpop.f32.mrf.mxu0
        %v1538 = vadd.f32 %v1509, %v1537
        %v1539 = vpop.f32.mrf.mxu0
        %v1540 = vadd.f32 %v1511, %v1539
        %1541 = vmatmul.bf16.gmra.mxu0 %v1262
        %v1542 = vpop.f32.mrf.mxu0
        %v1543 = vadd.f32 %v1514, %v1542
        %v1544 = vpop.f32.mrf.mxu0
        %v1545 = vadd.f32 %v1516, %v1544
        %1546 = vdwg.mxu0
        %v1547 = vadd.f32 %v1128, %v1470
        %v1548 = vadd.f32 %v1186, %v1528
        %v1549 = vadd.f32 %v1130, %v1472
        %v1550 = vadd.f32 %v1188, %v1530
        %v1551 = vadd.f32 %v1133, %v1475
        %v1552 = vadd.f32 %v1191, %v1533
        %v1553 = vadd.f32 %v1135, %v1477
        %v1554 = vadd.f32 %v1193, %v1535
        %v1555 = vadd.f32 %v1138, %v1480
        %v1556 = vadd.f32 %v1196, %v1538
        %v1557 = vadd.f32 %v1140, %v1482
        %v1558 = vadd.f32 %v1198, %v1540
        %v1559 = vadd.f32 %v1143, %v1485
        %v1560 = vadd.f32 %v1201, %v1543
        %v1561 = vadd.f32 %v1145, %v1487
        %v1562 = vadd.f32 %v1203, %v1545
        %v1563 = vld [vmem:[#allocation6] sm:$0x3]
        %v1565 = vperm.slane %v1563, 0
        %v1566 = vperm.slane %v1563, 1
        %v1569 = vadd.f32 %v1547, %v1565
        %v1570 = vadd.f32 %v1548, %v1566
        %v1571 = vadd.f32 %v1549, %v1565
        %v1572 = vadd.f32 %v1550, %v1566
        %v1573 = vadd.f32 %v1551, %v1565
        %v1574 = vadd.f32 %v1552, %v1566
        %v1575 = vadd.f32 %v1553, %v1565
        %v1576 = vadd.f32 %v1554, %v1566
        %v1577 = vadd.f32 %v1555, %v1565
        %v1578 = vadd.f32 %v1556, %v1566
        %v1579 = vadd.f32 %v1557, %v1565
        %v1580 = vadd.f32 %v1558, %v1566
        %v1581 = vadd.f32 %v1559, %v1565
        %v1582 = vadd.f32 %v1560, %v1566
        %v1583 = vadd.f32 %v1561, %v1565
        %v1584 = vadd.f32 %v1562, %v1566
        %v1585 = vmax.f32 %v1569, 0.0
        %v1586 = vmax.f32 %v1570, 0.0
        %v1587 = vmax.f32 %v1571, 0.0
        %v1588 = vmax.f32 %v1572, 0.0
        %v1589 = vmax.f32 %v1573, 0.0
        %v1590 = vmax.f32 %v1574, 0.0
        %v1591 = vmax.f32 %v1575, 0.0
        %v1592 = vmax.f32 %v1576, 0.0
        %v1593 = vmax.f32 %v1577, 0.0
        %v1594 = vmax.f32 %v1578, 0.0
        %v1595 = vmax.f32 %v1579, 0.0
        %v1596 = vmax.f32 %v1580, 0.0
        %v1597 = vmax.f32 %v1581, 0.0
        %v1598 = vmax.f32 %v1582, 0.0
        %v1599 = vmax.f32 %v1583, 0.0
        %v1600 = vmax.f32 %v1584, 0.0
        %v1601 = vpack.c.bf16 %v1586, %v1585
        %v1602 = vpack.c.bf16 %v1588, %v1587
        %v1603 = vpack.c.bf16 %v1590, %v1589
        %v1604 = vpack.c.bf16 %v1592, %v1591
        %v1605 = vpack.c.bf16 %v1594, %v1593
        %v1606 = vpack.c.bf16 %v1596, %v1595
        %v1607 = vpack.c.bf16 %v1598, %v1597
        %v1608 = vpack.c.bf16 %v1600, %v1599
        %1609 = vst [vmem:[%s325] sm:$0xff] %v1601
        %1610 = vst [vmem:[%s325 + $0x8] sm:$0xff] %v1602
        %1611 = vst [vmem:[%s325 + $0x10] sm:$0xff] %v1603
        %1612 = vst [vmem:[%s325 + $0x18] sm:$0xff] %v1604
        %1613 = vst [vmem:[%s325 + $0x20] sm:$0xff] %v1605
        %1614 = vst [vmem:[%s325 + $0x28] sm:$0xff] %v1606
        %1615 = vst [vmem:[%s325 + $0x30] sm:$0xff] %v1607
        %1616 = vst [vmem:[%s325 + $0x38] sm:$0xff] %v1608
        %v1617 = vld [vmem:[#allocation9] sm:$0x1]
        %v1618 = vld [vmem:[#allocation8] sm:$0xf]
        %v1619 = vld [vmem:[#allocation8 + $0x4] sm:$0xf]
        %v1620 = vld [vmem:[#allocation8 + $0x8] sm:$0xf]
        %v1621 = vld [vmem:[#allocation8 + $0xc] sm:$0xf]
        %v1622 = vld [vmem:[#allocation8 + $0x10] sm:$0xf]
        %v1623 = vld [vmem:[#allocation8 + $0x14] sm:$0xf]
        %v1624 = vld [vmem:[#allocation8 + $0x18] sm:$0xf]
        %v1625 = vld [vmem:[#allocation8 + $0x1c] sm:$0xf]
        %v1626 = vld [vmem:[#allocation8 + $0x20] sm:$0xf]
        %v1627 = vld [vmem:[#allocation8 + $0x24] sm:$0xf]
        %v1628 = vld [vmem:[#allocation8 + $0x28] sm:$0xf]
        %v1629 = vld [vmem:[#allocation8 + $0x2c] sm:$0xf]
        %v1630 = vld [vmem:[#allocation8 + $0x30] sm:$0xf]
        %v1631 = vld [vmem:[#allocation8 + $0x34] sm:$0xf]
        %v1632 = vld [vmem:[#allocation8 + $0x38] sm:$0xf]
        %v1633 = vld [vmem:[#allocation8 + $0x3c] sm:$0xf]
        %v1634 = vld [vmem:[#allocation8 + $0x40] sm:$0xf]
        %v1635 = vld [vmem:[#allocation8 + $0x44] sm:$0xf]
        %v1636 = vld [vmem:[#allocation8 + $0x48] sm:$0xf]
        %v1637 = vld [vmem:[#allocation8 + $0x4c] sm:$0xf]
        %v1638 = vld [vmem:[#allocation8 + $0x50] sm:$0xf]
        %v1639 = vld [vmem:[#allocation8 + $0x54] sm:$0xf]
        %v1640 = vld [vmem:[#allocation8 + $0x58] sm:$0xf]
        %v1641 = vld [vmem:[#allocation8 + $0x5c] sm:$0xf]
        %v1642 = vld [vmem:[#allocation8 + $0x60] sm:$0xf]
        %v1643 = vld [vmem:[#allocation8 + $0x64] sm:$0xf]
        %v1644 = vld [vmem:[#allocation8 + $0x68] sm:$0xf]
        %v1645 = vld [vmem:[#allocation8 + $0x6c] sm:$0xf]
        %v1646 = vld [vmem:[#allocation8 + $0x70] sm:$0xf]
        %v1647 = vld [vmem:[#allocation8 + $0x74] sm:$0xf]
        %v1648 = vld [vmem:[#allocation8 + $0x78] sm:$0xf]
        %v1649 = vld [vmem:[#allocation8 + $0x7c] sm:$0xf]
        %v1651 = vperm.slane %v1617, 0
        %1652 = vset.pattern.permute.xlu0 0
        %1653 = vperm.xlu0 %1652, %v1651
        %v1654 = vpop.permute.xlu0 %1653
        %v1664 = vunpack.c.l.b16 %v1601
        %v1665 = vunpack.c.h.b16 %v1601
        %v1666 = vunpack.c.l.b16 %v1602
        %v1667 = vunpack.c.h.b16 %v1602
        %v1668 = vunpack.c.l.b16 %v1603
        %v1669 = vunpack.c.h.b16 %v1603
        %v1670 = vunpack.c.l.b16 %v1604
        %v1671 = vunpack.c.h.b16 %v1604
        %v1672 = vunpack.c.l.b16 %v1605
        %v1673 = vunpack.c.h.b16 %v1605
        %v1674 = vunpack.c.l.b16 %v1606
        %v1675 = vunpack.c.h.b16 %v1606
        %v1676 = vunpack.c.l.b16 %v1607
        %v1677 = vunpack.c.h.b16 %v1607
        %v1678 = vunpack.c.l.b16 %v1608
        %v1679 = vunpack.c.h.b16 %v1608
        %v1680 = vpack.c.b16 %v1666, %v1664
        %v1681 = vpack.c.b16 %v1667, %v1665
        %v1682 = vpack.c.b16 %v1670, %v1668
        %v1683 = vpack.c.b16 %v1671, %v1669
        %v1684 = vpack.c.b16 %v1674, %v1672
        %v1685 = vpack.c.b16 %v1675, %v1673
        %v1686 = vpack.c.b16 %v1678, %v1676
        %v1687 = vpack.c.b16 %v1679, %v1677
        %v1728 = vunpack.c.l.b16 %v1618
        %v1729 = vunpack.c.l.b16 %v1619
        %v1730 = vunpack.c.l.b16 %v1620
        %v1731 = vunpack.c.l.b16 %v1621
        %v1732 = vunpack.c.l.b16 %v1622
        %v1733 = vunpack.c.l.b16 %v1623
        %v1734 = vunpack.c.l.b16 %v1624
        %v1735 = vunpack.c.l.b16 %v1625
        %v1736 = vunpack.c.l.b16 %v1626
        %v1737 = vunpack.c.l.b16 %v1627
        %v1738 = vunpack.c.l.b16 %v1628
        %v1739 = vunpack.c.l.b16 %v1629
        %v1740 = vunpack.c.l.b16 %v1630
        %v1741 = vunpack.c.l.b16 %v1631
        %v1742 = vunpack.c.l.b16 %v1632
        %v1743 = vunpack.c.l.b16 %v1633
        %v1744 = vunpack.c.l.b16 %v1634
        %v1745 = vunpack.c.l.b16 %v1635
        %v1746 = vunpack.c.l.b16 %v1636
        %v1747 = vunpack.c.l.b16 %v1637
        %v1748 = vunpack.c.l.b16 %v1638
        %v1749 = vunpack.c.l.b16 %v1639
        %v1750 = vunpack.c.l.b16 %v1640
        %v1751 = vunpack.c.l.b16 %v1641
        %v1752 = vunpack.c.l.b16 %v1642
        %v1753 = vunpack.c.l.b16 %v1643
        %v1754 = vunpack.c.l.b16 %v1644
        %v1755 = vunpack.c.l.b16 %v1645
        %v1756 = vunpack.c.l.b16 %v1646
        %v1757 = vunpack.c.l.b16 %v1647
        %v1758 = vunpack.c.l.b16 %v1648
        %v1759 = vunpack.c.l.b16 %v1649
        %v1760 = vpack.c.b16 %v1729, %v1728
        %v1761 = vpack.c.b16 %v1731, %v1730
        %v1762 = vpack.c.b16 %v1733, %v1732
        %v1763 = vpack.c.b16 %v1735, %v1734
        %v1764 = vpack.c.b16 %v1737, %v1736
        %v1765 = vpack.c.b16 %v1739, %v1738
        %v1766 = vpack.c.b16 %v1741, %v1740
        %v1767 = vpack.c.b16 %v1743, %v1742
        %v1768 = vpack.c.b16 %v1745, %v1744
        %v1769 = vpack.c.b16 %v1747, %v1746
        %v1770 = vpack.c.b16 %v1749, %v1748
        %v1771 = vpack.c.b16 %v1751, %v1750
        %v1772 = vpack.c.b16 %v1753, %v1752
        %v1773 = vpack.c.b16 %v1755, %v1754
        %v1774 = vpack.c.b16 %v1757, %v1756
        %v1775 = vpack.c.b16 %v1759, %v1758
        %1792 = vmatpush.bf16.msra.mxu0 %v1767
        %1793 = vmatpush.bf16.msra.mxu0 %v1766
        %1794 = vmatpush.bf16.msra.mxu0 %v1765
        %1795 = vmatpush.bf16.msra.mxu0 %v1764
        %1796 = vmatpush.bf16.msra.mxu0 %v1763
        %1797 = vmatpush.bf16.msra.mxu0 %v1762
        %1798 = vmatpush.bf16.msra.mxu0 %v1761
        %1799 = vmatpush.bf16.msra.mxu0 %v1760
        %1800 = vmatmul.bf16.gmra.mxu0 %v1680
        %v1801 = vpop.f32.mrf.mxu0
        %v1802 = vadd.f32 %v1654, %v1801
        %v1803 = vpop.f32.mrf.mxu0
        %v1804 = vadd.f32 %v1654, %v1803
        %1805 = vmatmul.bf16.gmra.mxu0 %v1682
        %v1806 = vpop.f32.mrf.mxu0
        %v1807 = vadd.f32 %v1654, %v1806
        %v1808 = vpop.f32.mrf.mxu0
        %v1809 = vadd.f32 %v1654, %v1808
        %1810 = vmatmul.bf16.gmra.mxu0 %v1684
        %v1811 = vpop.f32.mrf.mxu0
        %v1812 = vadd.f32 %v1654, %v1811
        %v1813 = vpop.f32.mrf.mxu0
        %v1814 = vadd.f32 %v1654, %v1813
        %1815 = vmatmul.bf16.gmra.mxu0 %v1686
        %v1816 = vpop.f32.mrf.mxu0
        %v1817 = vadd.f32 %v1654, %v1816
        %v1818 = vpop.f32.mrf.mxu0
        %v1819 = vadd.f32 %v1654, %v1818
        %1820 = vdwg.mxu0
        %1821 = vmatpush.bf16.msra.mxu0 %v1775
        %1822 = vmatpush.bf16.msra.mxu0 %v1774
        %1823 = vmatpush.bf16.msra.mxu0 %v1773
        %1824 = vmatpush.bf16.msra.mxu0 %v1772
        %1825 = vmatpush.bf16.msra.mxu0 %v1771
        %1826 = vmatpush.bf16.msra.mxu0 %v1770
        %1827 = vmatpush.bf16.msra.mxu0 %v1769
        %1828 = vmatpush.bf16.msra.mxu0 %v1768
        %1829 = vmatmul.bf16.gmra.mxu0 %v1681
        %v1830 = vpop.f32.mrf.mxu0
        %v1831 = vadd.f32 %v1802, %v1830
        %v1832 = vpop.f32.mrf.mxu0
        %v1833 = vadd.f32 %v1804, %v1832
        %1834 = vmatmul.bf16.gmra.mxu0 %v1683
        %v1835 = vpop.f32.mrf.mxu0
        %v1836 = vadd.f32 %v1807, %v1835
        %v1837 = vpop.f32.mrf.mxu0
        %v1838 = vadd.f32 %v1809, %v1837
        %1839 = vmatmul.bf16.gmra.mxu0 %v1685
        %v1840 = vpop.f32.mrf.mxu0
        %v1841 = vadd.f32 %v1812, %v1840
        %v1842 = vpop.f32.mrf.mxu0
        %v1843 = vadd.f32 %v1814, %v1842
        %1844 = vmatmul.bf16.gmra.mxu0 %v1687
        %v1845 = vpop.f32.mrf.mxu0
        %v1846 = vadd.f32 %v1817, %v1845
        %v1847 = vpop.f32.mrf.mxu0
        %v1848 = vadd.f32 %v1819, %v1847
        %1849 = vdwg.mxu0
        %s1850 = scalar_lea.vmem [#allocation8], 128
        %v1851 = vld [vmem:[%s1850] sm:$0xf]
        %v1852 = vld [vmem:[%s1850 + $0x4] sm:$0xf]
        %v1853 = vld [vmem:[%s1850 + $0x8] sm:$0xf]
        %v1854 = vld [vmem:[%s1850 + $0xc] sm:$0xf]
        %v1855 = vld [vmem:[%s1850 + $0x10] sm:$0xf]
        %v1856 = vld [vmem:[%s1850 + $0x14] sm:$0xf]
        %v1857 = vld [vmem:[%s1850 + $0x18] sm:$0xf]
        %v1858 = vld [vmem:[%s1850 + $0x1c] sm:$0xf]
        %v1859 = vld [vmem:[%s1850 + $0x20] sm:$0xf]
        %v1860 = vld [vmem:[%s1850 + $0x24] sm:$0xf]
        %v1861 = vld [vmem:[%s1850 + $0x28] sm:$0xf]
        %v1862 = vld [vmem:[%s1850 + $0x2c] sm:$0xf]
        %v1863 = vld [vmem:[%s1850 + $0x30] sm:$0xf]
        %v1864 = vld [vmem:[%s1850 + $0x34] sm:$0xf]
        %v1865 = vld [vmem:[%s1850 + $0x38] sm:$0xf]
        %v1866 = vld [vmem:[%s1850 + $0x3c] sm:$0xf]
        %v1867 = vld [vmem:[%s1850 + $0x40] sm:$0xf]
        %v1868 = vld [vmem:[%s1850 + $0x44] sm:$0xf]
        %v1869 = vld [vmem:[%s1850 + $0x48] sm:$0xf]
        %v1870 = vld [vmem:[%s1850 + $0x4c] sm:$0xf]
        %v1871 = vld [vmem:[%s1850 + $0x50] sm:$0xf]
        %v1872 = vld [vmem:[%s1850 + $0x54] sm:$0xf]
        %v1873 = vld [vmem:[%s1850 + $0x58] sm:$0xf]
        %v1874 = vld [vmem:[%s1850 + $0x5c] sm:$0xf]
        %v1875 = vld [vmem:[%s1850 + $0x60] sm:$0xf]
        %v1876 = vld [vmem:[%s1850 + $0x64] sm:$0xf]
        %v1877 = vld [vmem:[%s1850 + $0x68] sm:$0xf]
        %v1878 = vld [vmem:[%s1850 + $0x6c] sm:$0xf]
        %v1879 = vld [vmem:[%s1850 + $0x70] sm:$0xf]
        %v1880 = vld [vmem:[%s1850 + $0x74] sm:$0xf]
        %v1881 = vld [vmem:[%s1850 + $0x78] sm:$0xf]
        %v1882 = vld [vmem:[%s1850 + $0x7c] sm:$0xf]
        %1883 = vset.pattern.permute.xlu0 1
        %1884 = vperm.xlu0 %1883, %v1651
        %v1885 = vpop.permute.xlu0 %1884
        %v1919 = vunpack.c.l.b16 %v1851
        %v1920 = vunpack.c.l.b16 %v1852
        %v1921 = vunpack.c.l.b16 %v1853
        %v1922 = vunpack.c.l.b16 %v1854
        %v1923 = vunpack.c.l.b16 %v1855
        %v1924 = vunpack.c.l.b16 %v1856
        %v1925 = vunpack.c.l.b16 %v1857
        %v1926 = vunpack.c.l.b16 %v1858
        %v1927 = vunpack.c.l.b16 %v1859
        %v1928 = vunpack.c.l.b16 %v1860
        %v1929 = vunpack.c.l.b16 %v1861
        %v1930 = vunpack.c.l.b16 %v1862
        %v1931 = vunpack.c.l.b16 %v1863
        %v1932 = vunpack.c.l.b16 %v1864
        %v1933 = vunpack.c.l.b16 %v1865
        %v1934 = vunpack.c.l.b16 %v1866
        %v1935 = vunpack.c.l.b16 %v1867
        %v1936 = vunpack.c.l.b16 %v1868
        %v1937 = vunpack.c.l.b16 %v1869
        %v1938 = vunpack.c.l.b16 %v1870
        %v1939 = vunpack.c.l.b16 %v1871
        %v1940 = vunpack.c.l.b16 %v1872
        %v1941 = vunpack.c.l.b16 %v1873
        %v1942 = vunpack.c.l.b16 %v1874
        %v1943 = vunpack.c.l.b16 %v1875
        %v1944 = vunpack.c.l.b16 %v1876
        %v1945 = vunpack.c.l.b16 %v1877
        %v1946 = vunpack.c.l.b16 %v1878
        %v1947 = vunpack.c.l.b16 %v1879
        %v1948 = vunpack.c.l.b16 %v1880
        %v1949 = vunpack.c.l.b16 %v1881
        %v1950 = vunpack.c.l.b16 %v1882
        %v1951 = vpack.c.b16 %v1920, %v1919
        %v1952 = vpack.c.b16 %v1922, %v1921
        %v1953 = vpack.c.b16 %v1924, %v1923
        %v1954 = vpack.c.b16 %v1926, %v1925
        %v1955 = vpack.c.b16 %v1928, %v1927
        %v1956 = vpack.c.b16 %v1930, %v1929
        %v1957 = vpack.c.b16 %v1932, %v1931
        %v1958 = vpack.c.b16 %v1934, %v1933
        %v1959 = vpack.c.b16 %v1936, %v1935
        %v1960 = vpack.c.b16 %v1938, %v1937
        %v1961 = vpack.c.b16 %v1940, %v1939
        %v1962 = vpack.c.b16 %v1942, %v1941
        %v1963 = vpack.c.b16 %v1944, %v1943
        %v1964 = vpack.c.b16 %v1946, %v1945
        %v1965 = vpack.c.b16 %v1948, %v1947
        %v1966 = vpack.c.b16 %v1950, %v1949
        %1983 = vmatpush.bf16.msra.mxu0 %v1958
        %1984 = vmatpush.bf16.msra.mxu0 %v1957
        %1985 = vmatpush.bf16.msra.mxu0 %v1956
        %1986 = vmatpush.bf16.msra.mxu0 %v1955
        %1987 = vmatpush.bf16.msra.mxu0 %v1954
        %1988 = vmatpush.bf16.msra.mxu0 %v1953
        %1989 = vmatpush.bf16.msra.mxu0 %v1952
        %1990 = vmatpush.bf16.msra.mxu0 %v1951
        %1991 = vmatmul.bf16.gmra.mxu0 %v1680
        %v1992 = vpop.f32.mrf.mxu0
        %v1993 = vadd.f32 %v1885, %v1992
        %v1994 = vpop.f32.mrf.mxu0
        %v1995 = vadd.f32 %v1885, %v1994
        %1996 = vmatmul.bf16.gmra.mxu0 %v1682
        %v1997 = vpop.f32.mrf.mxu0
        %v1998 = vadd.f32 %v1885, %v1997
        %v1999 = vpop.f32.mrf.mxu0
        %v2000 = vadd.f32 %v1885, %v1999
        %2001 = vmatmul.bf16.gmra.mxu0 %v1684
        %v2002 = vpop.f32.mrf.mxu0
        %v2003 = vadd.f32 %v1885, %v2002
        %v2004 = vpop.f32.mrf.mxu0
        %v2005 = vadd.f32 %v1885, %v2004
        %2006 = vmatmul.bf16.gmra.mxu0 %v1686
        %v2007 = vpop.f32.mrf.mxu0
        %v2008 = vadd.f32 %v1885, %v2007
        %v2009 = vpop.f32.mrf.mxu0
        %v2010 = vadd.f32 %v1885, %v2009
        %2011 = vdwg.mxu0
        %2012 = vmatpush.bf16.msra.mxu0 %v1966
        %2013 = vmatpush.bf16.msra.mxu0 %v1965
        %2014 = vmatpush.bf16.msra.mxu0 %v1964
        %2015 = vmatpush.bf16.msra.mxu0 %v1963
        %2016 = vmatpush.bf16.msra.mxu0 %v1962
        %2017 = vmatpush.bf16.msra.mxu0 %v1961
        %2018 = vmatpush.bf16.msra.mxu0 %v1960
        %2019 = vmatpush.bf16.msra.mxu0 %v1959
        %2020 = vmatmul.bf16.gmra.mxu0 %v1681
        %v2021 = vpop.f32.mrf.mxu0
        %v2022 = vadd.f32 %v1993, %v2021
        %v2023 = vpop.f32.mrf.mxu0
        %v2024 = vadd.f32 %v1995, %v2023
        %2025 = vmatmul.bf16.gmra.mxu0 %v1683
        %v2026 = vpop.f32.mrf.mxu0
        %v2027 = vadd.f32 %v1998, %v2026
        %v2028 = vpop.f32.mrf.mxu0
        %v2029 = vadd.f32 %v2000, %v2028
        %2030 = vmatmul.bf16.gmra.mxu0 %v1685
        %v2031 = vpop.f32.mrf.mxu0
        %v2032 = vadd.f32 %v2003, %v2031
        %v2033 = vpop.f32.mrf.mxu0
        %v2034 = vadd.f32 %v2005, %v2033
        %2035 = vmatmul.bf16.gmra.mxu0 %v1687
        %v2036 = vpop.f32.mrf.mxu0
        %v2037 = vadd.f32 %v2008, %v2036
        %v2038 = vpop.f32.mrf.mxu0
        %v2039 = vadd.f32 %v2010, %v2038
        %2040 = vdwg.mxu0
        %v2041 = vmax.f32 %v1831, %v2022
        %v2042 = vmax.f32 %v1833, %v2024
        %v2043 = vmax.f32 %v1836, %v2027
        %v2044 = vmax.f32 %v1838, %v2029
        %v2045 = vmax.f32 %v1841, %v2032
        %v2046 = vmax.f32 %v1843, %v2034
        %v2047 = vmax.f32 %v1846, %v2037
        %v2048 = vmax.f32 %v1848, %v2039
        %v2049 = vsub.f32 %v1831, %v2041
        %v2050 = vsub.f32 %v1833, %v2042
        %v2051 = vsub.f32 %v1836, %v2043
        %v2052 = vsub.f32 %v1838, %v2044
        %v2053 = vsub.f32 %v1841, %v2045
        %v2054 = vsub.f32 %v1843, %v2046
        %v2055 = vsub.f32 %v1846, %v2047
        %v2056 = vsub.f32 %v1848, %v2048
        %v2057 = vmul.f32 %v2049, 1.442695
        %v2058 = vpow.pop %v2057
        %v2059 = vmul.f32 %v2050, 1.442695
        %v2060 = vpow.pop %v2059
        %v2061 = vmul.f32 %v2051, 1.442695
        %v2062 = vpow.pop %v2061
        %v2063 = vmul.f32 %v2052, 1.442695
        %v2064 = vpow.pop %v2063
        %v2065 = vmul.f32 %v2053, 1.442695
        %v2066 = vpow.pop %v2065
        %v2067 = vmul.f32 %v2054, 1.442695
        %v2068 = vpow.pop %v2067
        %v2069 = vmul.f32 %v2055, 1.442695
        %v2070 = vpow.pop %v2069
        %v2071 = vmul.f32 %v2056, 1.442695
        %v2072 = vpow.pop %v2071
        %v2073 = vsub.f32 %v2022, %v2041
        %v2074 = vsub.f32 %v2024, %v2042
        %v2075 = vsub.f32 %v2027, %v2043
        %v2076 = vsub.f32 %v2029, %v2044
        %v2077 = vsub.f32 %v2032, %v2045
        %v2078 = vsub.f32 %v2034, %v2046
        %v2079 = vsub.f32 %v2037, %v2047
        %v2080 = vsub.f32 %v2039, %v2048
        %v2081 = vmul.f32 %v2073, 1.442695
        %v2082 = vpow.pop %v2081
        %v2083 = vmul.f32 %v2074, 1.442695
        %v2084 = vpow.pop %v2083
        %v2085 = vmul.f32 %v2075, 1.442695
        %v2086 = vpow.pop %v2085
        %v2087 = vmul.f32 %v2076, 1.442695
        %v2088 = vpow.pop %v2087
        %v2089 = vmul.f32 %v2077, 1.442695
        %v2090 = vpow.pop %v2089
        %v2091 = vmul.f32 %v2078, 1.442695
        %v2092 = vpow.pop %v2091
        %v2093 = vmul.f32 %v2079, 1.442695
        %v2094 = vpow.pop %v2093
        %v2095 = vmul.f32 %v2080, 1.442695
        %v2096 = vpow.pop %v2095
        %v2097 = vadd.f32 %v2058, %v2082
        %v2098 = vadd.f32 %v2060, %v2084
        %v2099 = vadd.f32 %v2062, %v2086
        %v2100 = vadd.f32 %v2064, %v2088
        %v2101 = vadd.f32 %v2066, %v2090
        %v2102 = vadd.f32 %v2068, %v2092
        %v2103 = vadd.f32 %v2070, %v2094
        %v2104 = vadd.f32 %v2072, %v2096
        %v2105 = vrcp.pop %v2097
        %v2106 = vmul.f32 %v2097, %v2105
        %v2107 = vsub.f32 1.0, %v2106
        %v2108 = vmul.f32 %v2105, %v2107
        %v2109 = vadd.f32 %v2105, %v2108
        %vm2110 = vweird.f32 %v2097
        %vm2111 = vweird.f32 %v2105
        %vm2112 = vmor %vm2110, %vm2111
        %v2113 = vsel %vm2112, %v2105, %v2109
        %v2114 = vand.u32 2147483647, %v2097
        %vm2115 = vcmp.eq.f32.partialorder %v2114, 8.507059e+37
        %v2116 = vand.u32 %v2097, 2147483648
        %v2117 = vor.u32 1.1754944e-38, %v2116
        %v2118 = vsel %vm2115, %v2117, %v2113
        %v2119 = vmul.f32 1.0, %v2118
        %v2120 = vrcp.pop %v2098
        %v2121 = vmul.f32 %v2098, %v2120
        %v2122 = vsub.f32 1.0, %v2121
        %v2123 = vmul.f32 %v2120, %v2122
        %v2124 = vadd.f32 %v2120, %v2123
        %vm2125 = vweird.f32 %v2098
        %vm2126 = vweird.f32 %v2120
        %vm2127 = vmor %vm2125, %vm2126
        %v2128 = vsel %vm2127, %v2120, %v2124
        %v2129 = vand.u32 2147483647, %v2098
        %vm2130 = vcmp.eq.f32.partialorder %v2129, 8.507059e+37
        %v2131 = vand.u32 %v2098, 2147483648
        %v2132 = vor.u32 1.1754944e-38, %v2131
        %v2133 = vsel %vm2130, %v2132, %v2128
        %v2134 = vmul.f32 1.0, %v2133
        %v2135 = vrcp.pop %v2099
        %v2136 = vmul.f32 %v2099, %v2135
        %v2137 = vsub.f32 1.0, %v2136
        %v2138 = vmul.f32 %v2135, %v2137
        %v2139 = vadd.f32 %v2135, %v2138
        %vm2140 = vweird.f32 %v2099
        %vm2141 = vweird.f32 %v2135
        %vm2142 = vmor %vm2140, %vm2141
        %v2143 = vsel %vm2142, %v2135, %v2139
        %v2144 = vand.u32 2147483647, %v2099
        %vm2145 = vcmp.eq.f32.partialorder %v2144, 8.507059e+37
        %v2146 = vand.u32 %v2099, 2147483648
        %v2147 = vor.u32 1.1754944e-38, %v2146
        %v2148 = vsel %vm2145, %v2147, %v2143
        %v2149 = vmul.f32 1.0, %v2148
        %v2150 = vrcp.pop %v2100
        %v2151 = vmul.f32 %v2100, %v2150
        %v2152 = vsub.f32 1.0, %v2151
        %v2153 = vmul.f32 %v2150, %v2152
        %v2154 = vadd.f32 %v2150, %v2153
        %vm2155 = vweird.f32 %v2100
        %vm2156 = vweird.f32 %v2150
        %vm2157 = vmor %vm2155, %vm2156
        %v2158 = vsel %vm2157, %v2150, %v2154
        %v2159 = vand.u32 2147483647, %v2100
        %vm2160 = vcmp.eq.f32.partialorder %v2159, 8.507059e+37
        %v2161 = vand.u32 %v2100, 2147483648
        %v2162 = vor.u32 1.1754944e-38, %v2161
        %v2163 = vsel %vm2160, %v2162, %v2158
        %v2164 = vmul.f32 1.0, %v2163
        %v2165 = vrcp.pop %v2101
        %v2166 = vmul.f32 %v2101, %v2165
        %v2167 = vsub.f32 1.0, %v2166
        %v2168 = vmul.f32 %v2165, %v2167
        %v2169 = vadd.f32 %v2165, %v2168
        %vm2170 = vweird.f32 %v2101
        %vm2171 = vweird.f32 %v2165
        %vm2172 = vmor %vm2170, %vm2171
        %v2173 = vsel %vm2172, %v2165, %v2169
        %v2174 = vand.u32 2147483647, %v2101
        %vm2175 = vcmp.eq.f32.partialorder %v2174, 8.507059e+37
        %v2176 = vand.u32 %v2101, 2147483648
        %v2177 = vor.u32 1.1754944e-38, %v2176
        %v2178 = vsel %vm2175, %v2177, %v2173
        %v2179 = vmul.f32 1.0, %v2178
        %v2180 = vrcp.pop %v2102
        %v2181 = vmul.f32 %v2102, %v2180
        %v2182 = vsub.f32 1.0, %v2181
        %v2183 = vmul.f32 %v2180, %v2182
        %v2184 = vadd.f32 %v2180, %v2183
        %vm2185 = vweird.f32 %v2102
        %vm2186 = vweird.f32 %v2180
        %vm2187 = vmor %vm2185, %vm2186
        %v2188 = vsel %vm2187, %v2180, %v2184
        %v2189 = vand.u32 2147483647, %v2102
        %vm2190 = vcmp.eq.f32.partialorder %v2189, 8.507059e+37
        %v2191 = vand.u32 %v2102, 2147483648
        %v2192 = vor.u32 1.1754944e-38, %v2191
        %v2193 = vsel %vm2190, %v2192, %v2188
        %v2194 = vmul.f32 1.0, %v2193
        %v2195 = vrcp.pop %v2103
        %v2196 = vmul.f32 %v2103, %v2195
        %v2197 = vsub.f32 1.0, %v2196
        %v2198 = vmul.f32 %v2195, %v2197
        %v2199 = vadd.f32 %v2195, %v2198
        %vm2200 = vweird.f32 %v2103
        %vm2201 = vweird.f32 %v2195
        %vm2202 = vmor %vm2200, %vm2201
        %v2203 = vsel %vm2202, %v2195, %v2199
        %v2204 = vand.u32 2147483647, %v2103
        %vm2205 = vcmp.eq.f32.partialorder %v2204, 8.507059e+37
        %v2206 = vand.u32 %v2103, 2147483648
        %v2207 = vor.u32 1.1754944e-38, %v2206
        %v2208 = vsel %vm2205, %v2207, %v2203
        %v2209 = vmul.f32 1.0, %v2208
        %v2210 = vrcp.pop %v2104
        %v2211 = vmul.f32 %v2104, %v2210
        %v2212 = vsub.f32 1.0, %v2211
        %v2213 = vmul.f32 %v2210, %v2212
        %v2214 = vadd.f32 %v2210, %v2213
        %vm2215 = vweird.f32 %v2104
        %vm2216 = vweird.f32 %v2210
        %vm2217 = vmor %vm2215, %vm2216
        %v2218 = vsel %vm2217, %v2210, %v2214
        %v2219 = vand.u32 2147483647, %v2104
        %vm2220 = vcmp.eq.f32.partialorder %v2219, 8.507059e+37
        %v2221 = vand.u32 %v2104, 2147483648
        %v2222 = vor.u32 1.1754944e-38, %v2221
        %v2223 = vsel %vm2220, %v2222, %v2218
        %v2224 = vmul.f32 1.0, %v2223
        %v2225 = vmul.f32 %v2058, %v2119
        %v2226 = vmul.f32 %v2060, %v2134
        %v2227 = vmul.f32 %v2062, %v2149
        %v2228 = vmul.f32 %v2064, %v2164
        %v2229 = vmul.f32 %v2066, %v2179
        %v2230 = vmul.f32 %v2068, %v2194
        %v2231 = vmul.f32 %v2070, %v2209
        %v2232 = vmul.f32 %v2072, %v2224
        %vm2233 = vcmask 523264
        %2234 = vst.msk [vmem:[%s315] sm:$0xff] %vm2233, %v2225
        %2235 = vst.msk [vmem:[%s315 + $0x8] sm:$0xff] %vm2233, %v2226
        %2236 = vst.msk [vmem:[%s315 + $0x10] sm:$0xff] %vm2233, %v2227
        %2237 = vst.msk [vmem:[%s315 + $0x18] sm:$0xff] %vm2233, %v2228
        %2238 = vst.msk [vmem:[%s315 + $0x20] sm:$0xff] %vm2233, %v2229
        %2239 = vst.msk [vmem:[%s315 + $0x28] sm:$0xff] %vm2233, %v2230
        %2240 = vst.msk [vmem:[%s315 + $0x30] sm:$0xff] %vm2233, %v2231
        %2241 = vst.msk [vmem:[%s315 + $0x38] sm:$0xff] %vm2233, %v2232
        %v2242 = vmul.f32 %v2082, %v2119
        %v2243 = vmul.f32 %v2084, %v2134
        %v2244 = vmul.f32 %v2086, %v2149
        %v2245 = vmul.f32 %v2088, %v2164
        %v2246 = vmul.f32 %v2090, %v2179
        %v2247 = vmul.f32 %v2092, %v2194
        %v2248 = vmul.f32 %v2094, %v2209
        %v2249 = vmul.f32 %v2096, %v2224
        %s2250 = scalar_lea.vmem %s315, 64 [#allocation11]
        %2251 = vst.msk [vmem:[%s2250] sm:$0xff] %vm2233, %v2242
        %2252 = vst.msk [vmem:[%s2250 + $0x8] sm:$0xff] %vm2233, %v2243
        %2253 = vst.msk [vmem:[%s2250 + $0x10] sm:$0xff] %vm2233, %v2244
        %2254 = vst.msk [vmem:[%s2250 + $0x18] sm:$0xff] %vm2233, %v2245
        %2255 = vst.msk [vmem:[%s2250 + $0x20] sm:$0xff] %vm2233, %v2246
        %2256 = vst.msk [vmem:[%s2250 + $0x28] sm:$0xff] %vm2233, %v2247
        %2257 = vst.msk [vmem:[%s2250 + $0x30] sm:$0xff] %vm2233, %v2248
        %2258 = vst.msk [vmem:[%s2250 + $0x38] sm:$0xff] %vm2233, %v2249
        %p2259 = scmp.lt.s32.totalorder %s24, 1
        %s2260 = scalar_select %p2259, %s24, 1
        %s2261 = smul.addr %s2260, 16
        %s2262 = smul.addr %s2261, 4
        %s2263 = scalar_lea.vmem %s5, %s2262
        %s2264 = sand.u32 %s168, 1
        %s2265 = scalar_lea.sflag [#allocation5], %s2264
        %s2266 = sand.u32 %s168, 1
        %s2267 = smul.addr %s2266, 128
        %s2268 = scalar_lea.vmem [#allocation11], %s2267
        // Predicated region
        $region57: #{_lambda_.9} parent=39 // pred_check
          %p2269 = pneg %p152
        $region58: #{_lambda_.9} parent=39 // pred_check_branch
          %2271 = sbr.rel (%p2269) target = $region60
        $region59: #{_lambda_.9} parent=39 // pred_region
          _
        $region60: #{_lambda_.9} parent=39 // pred_fallthru
          _
        // Predicated region
        $region61: #{_lambda_.9} parent=39 // pred_check
          %p2272 = pneg %p178
        $region62: #{_lambda_.9} parent=39 // pred_check_branch
          %2274 = sbr.rel (%p2272) target = $region64
        $region63: #{_lambda_.9} parent=39 // pred_region
          %2276 = vsyncadd %s2265, 0
          %s2277 = smul.addr %s24, 16
          %s2278 = smul.addr %s2277, 8
          %s2279 = scalar_lea.hbm %s6, %s2278
          %s2280 = sshll.u32 %s2268, 4
          %s2281 = int_to_ptr.vmem [resolvable:$true] %s2280
          %s2282 = sshll.u32 %s2279, 4
          %s2283 = int_to_ptr.hbm [resolvable:$true] %s2282
          %2288 = dma.vmem_to_hbm [thread:$0]  %s2281, 2048, %s2283, %s2265, 128, 128, 8
        $region64: #{_lambda_.9} parent=39 // pred_fallthru
          _
      $region40: #{_lambda_.9} parent=5 // pred_fallthru
        _
      %p2289 = scmp.le.s32.totalorder 2, %s19
      // Predicated region
      $region65: #{_lambda_.9} parent=5 // pred_check
        %p2290 = pneg %p2289
      $region66: #{_lambda_.9} parent=5 // pred_check_branch
        %2292 = sbr.rel (%p2290) target = $region68
      $region67: #{_lambda_.9} parent=5 // pred_region
        %s2293 = ssub.s32 %s19, 2
        // Predicated region
        $region69: #{_lambda_.9} parent=67 // pred_check
          %p2294 = pneg %p158
        $region70: #{_lambda_.9} parent=67 // pred_check_branch
          %2296 = sbr.rel (%p2294) target = $region72
        $region71: #{_lambda_.9} parent=67 // pred_region
          %p2297 = scmp.lt.s32.totalorder %s25, 1
          %s2298 = scalar_select %p2297, %s25, 1
          %s2299 = smul.addr %s2298, 16
          %s2300 = smul.addr %s2299, 4
          %s2301 = scalar_lea.vmem %s5, %s2300
        $region72: #{_lambda_.9} parent=67 // pred_fallthru
          _
        // Predicated region
        $region73: #{_lambda_.9} parent=67 // pred_check
          %p2302 = pneg %p184
        $region74: #{_lambda_.9} parent=67 // pred_check_branch
          %2304 = sbr.rel (%p2302) target = $region76
        $region75: #{_lambda_.9} parent=67 // pred_region
          %s2305 = sand.u32 %s169, 1
          %s2306 = scalar_lea.sflag [#allocation5], %s2305
          %s2307 = sand.u32 %s169, 1
          %s2308 = smul.addr %s2307, 128
          %s2309 = scalar_lea.vmem [#allocation11], %s2308
          %2311 = dma.done %s2306, 2048
        $region76: #{_lambda_.9} parent=67 // pred_fallthru
          _
      $region68: #{_lambda_.9} parent=5 // pred_fallthru
        _
    $region6: #{_lambda_.9} parent=1 // loop_footer
      %s23 = sadd.s32 1, %s19
    $region7: #{_lambda_.9} parent=1 // loop_footer_branch
      %18 = sbr.rel target = $region3
    $region8: #{_lambda_.9} parent=1 // loop_exit
      _
    %2312 = vsyncpa [#allocation4], 1
    %s2313 = scalar_lea.sflag [#allocation4], 1
    %2314 = vsyncpa %s2313, 1
    %2315 = vsyncpa [#allocation7], 1
    %2316 = vsyncpa [#allocation10], 1
    %2317 = vsyncpa [#allocation5], 1
    %s2318 = scalar_lea.sflag [#allocation5], 1
    %2319 = vsyncpa %s2318, 1

</llo_original>
